<compile_context>
chip_gen: v5e
topology: v5e:2x2
jax: 0.10.0
libtpu: 0.0.40
codegen_flags: <defaults>
</compile_context>

<pallas_src>
import functools
import math

import numpy as np
import jax
import jax.numpy as jnp
from jax import lax
from jax.experimental import pallas as pl
from jax.experimental.pallas import tpu as pltpu  # noqa: F401  (TPU backend)

# ------------------------- synthetic BART config -------------------------
D_MODEL = 32
FFN_DIM = 64
N_HEADS = 4
HEAD_DIM = D_MODEL // N_HEADS
VOCAB = 50          # config.vocab_size
ABS_VOCAB = 40      # config.abs_vocab_size (absoutlin is dead in Test.forward)
MAX_POS = 16
PAD = 1             # config.pad_token_id
BOS = 0
EOS = 2
UNKID = 3
MAXLEN = 5          # BartGeneratorTest(maxlen=5)
NEG = -1e9          # additive mask value
SLAB_COLS = 128     # lane-dense packed weight slab width
# numbeam=None in the reference -> greedy decoding.


# --------------------------- packed weight layout ---------------------------
def _round_up(x, m):
    return (x + m - 1) // m * m


_WEIGHT_SHAPES = [
    ("tok_emb", (VOCAB, D_MODEL)),
    ("pos_emb", (MAX_POS, D_MODEL)),
    ("ln",      (5, 2 * D_MODEL)),            # rows: gamma | beta
    ("e_wqkv",  (D_MODEL, 3 * D_MODEL)), ("e_bqkv", (1, 3 * D_MODEL)),
    ("e_wo",    (D_MODEL, D_MODEL)),     ("e_bo",   (1, D_MODEL)),
    ("e_w1",    (D_MODEL, FFN_DIM)),     ("e_b1",   (1, FFN_DIM)),
    ("e_w2",    (FFN_DIM, D_MODEL)),     ("e_b2",   (1, D_MODEL)),
    ("ds_wqkv", (D_MODEL, 3 * D_MODEL)), ("ds_bqkv", (1, 3 * D_MODEL)),
    ("ds_wo",   (D_MODEL, D_MODEL)),     ("ds_bo",  (1, D_MODEL)),
    ("dc_wq",   (D_MODEL, D_MODEL)),     ("dc_bq",  (1, D_MODEL)),
    ("dc_wkv",  (D_MODEL, 2 * D_MODEL)), ("dc_bkv", (1, 2 * D_MODEL)),
    ("dc_wo",   (D_MODEL, D_MODEL)),     ("dc_bo",  (1, D_MODEL)),
    ("df_w1",   (D_MODEL, FFN_DIM)),     ("df_b1",  (1, FFN_DIM)),
    ("df_w2",   (FFN_DIM, D_MODEL)),     ("df_b2",  (1, D_MODEL)),
    ("out_w",   (D_MODEL, VOCAB)),       ("out_b",  (1, VOCAB)),
]


def _weight_layout():
    layout, off = {}, 0
    for name, (r, c) in _WEIGHT_SHAPES:
        layout[name] = (off, r, c)
        off += _round_up(r, 8)               # keep every piece 8-row aligned
    return layout, off


_WEIGHT_LAYOUT, _WSLAB_ROWS = _weight_layout()


def _int_layout(batch, src_len):
    """Row offsets inside the packed int32 data slab."""
    o_col = 0                                # input_ids as a (B*S, 1) column
    o_row = _round_up(batch * src_len, 8)    # input_ids as a (1, B*S) row
    o_gold = o_row + 8                       # gold output_ids (B, MAXLEN)
    rows = _round_up(o_gold + batch, 8)
    cols = max(batch * src_len, MAXLEN)
    return o_col, o_row, o_gold, rows, cols


# --------------------------- in-kernel helpers ---------------------------
def _layer_norm(x, g, b, eps=1e-5):
    m = jnp.mean(x, axis=-1, keepdims=True)
    v = jnp.mean((x - m) ** 2, axis=-1, keepdims=True)
    return (x - m) * lax.rsqrt(v + eps) * g + b


def _gelu(x):
    # TODO(synk): PyTorch/HF BART uses exact erf GELU; tanh approximation kept here.
    c = math.sqrt(2.0 / math.pi)
    return 0.5 * x * (1.0 + jnp.tanh(c * (x + 0.044715 * (x * x * x))))


def _softmax_last(s):
    s = s - jnp.max(s, axis=-1, keepdims=True)
    p = jnp.exp(s)
    return p * pl.reciprocal(jnp.sum(p, axis=-1, keepdims=True), approx=True)


def _mha(q2, k2, v2, addmask, w_o):
    """Batch-packed multi-head attention.

    q2: (Rq, D); k2, v2: (Rk, D) with all batch elements stacked along rows.
    addmask: additive (Rq, Rk) mask that is block-diagonal over the batch (it also
    carries key-padding / causal structure), so one matmul per head covers every
    batch element and cross-batch terms get probability exactly 0 after softmax.
    The per-head slice of the output projection w_o is folded in, so no lane
    concatenation of heads is needed.  Returns (Rq, D) (bias NOT added).
    """
    acc = None
    for h in range(N_HEADS):
        lo, hi = h * HEAD_DIM, (h + 1) * HEAD_DIM
        s = lax.dot_general(q2[:, lo:hi], k2[:, lo:hi],
                            (((1,), (1,)), ((), ())),
                            preferred_element_type=jnp.float32)
        p = _softmax_last(s + addmask)
        oh = jnp.dot(p, v2[:, lo:hi], preferred_element_type=jnp.float32)
        ctr = jnp.dot(oh, w_o[lo:hi, :], preferred_element_type=jnp.float32)
        acc = ctr if acc is None else acc + ctr
    return acc


# ------------------------------ fused kernel ------------------------------
def _bart_test_kernel(islab_ref, wslab_ref, dec_ref, metrics_ref,
                      *, batch, src_len, wl, ioff):
    B, S, T, D = batch, src_len, MAXLEN, D_MODEL
    f32 = jnp.float32
    o_col, o_row, o_gold = ioff

    def W(name):
        off, r, c = wl[name]
        return wslab_ref[off:off + r, 0:c]

    # ---- weights: each piece read exactly once from the packed slab ----
    tok_emb = W("tok_emb")                    # (VOCAB, D)
    pos_all = W("pos_emb")                    # (MAX_POS, D)
    ln = W("ln")                              # (5, 2D) : gamma | beta
    ln_g = [ln[i:i + 1, 0:D] for i in range(5)]
    ln_b = [ln[i:i + 1, D:2 * D] for i in range(5)]
    e_wqkv, e_bqkv = W("e_wqkv"), W("e_bqkv")
    e_wo, e_bo = W("e_wo"), W("e_bo")
    e_w1, e_b1, e_w2, e_b2 = W("e_w1"), W("e_b1"), W("e_w2"), W("e_b2")
    ds_wqkv, ds_bqkv = W("ds_wqkv"), W("ds_bqkv")
    ds_wo, ds_bo = W("ds_wo"), W("ds_bo")
    dc_wq, dc_bq = W("dc_wq"), W("dc_bq")
    dc_wkv, dc_bkv = W("dc_wkv"), W("dc_bkv")
    dc_wo, dc_bo = W("dc_wo"), W("dc_bo")
    df_w1, df_b1, df_w2, df_b2 = W("df_w1"), W("df_b1"), W("df_w2"), W("df_b2")
    out_w, out_b = W("out_w"), W("out_b")

    # ---- integer inputs (single packed slab) ----
    ids_col = islab_ref[o_col:o_col + B * S, 0:1]       # (B*S, 1) input_ids
    ids_row = islab_ref[o_row:o_row + 1, 0:B * S]       # (1, B*S) input_ids
    gold = islab_ref[o_gold:o_gold + B, 0:T]            # (B, T)   output_ids

    # ---- batch-block-diagonal additive masks (built once) ----
    def block_iota(rq, rk):
        r = lax.broadcasted_iota(jnp.int32, (rq, rk), 0)
        c = lax.broadcasted_iota(jnp.int32, (rq, rk), 1)
        return r, c

    def same_batch(r, c, tq, tk):
        blk = r < 0                                     # all-False, right shape
        for b in range(B):
            blk = blk | ((r >= b * tq) & (r < (b + 1) * tq) &
                         (c >= b * tk) & (c < (b + 1) * tk))
        return blk

    key_ok = ids_row != PAD                                              # (1, B*S)
    rE, cE = block_iota(B * S, B * S)
    m_enc = jnp.where(same_batch(rE, cE, S, S) & key_ok, f32(0.0), f32(NEG))
    rD, cD = block_iota(B * T, B * T)
    m_self = jnp.where(same_batch(rD, cD, T, T) & (cD <= rD), f32(0.0), f32(NEG))
    rX, cX = block_iota(B * T, B * S)
    m_cross = jnp.where(same_batch(rX, cX, T, S) & key_ok, f32(0.0), f32(NEG))

    # ---- encoder (runs once, stays resident) ----
    viota_enc = lax.broadcasted_iota(jnp.int32, (B * S, VOCAB), 1)
    oh_enc = (ids_col == viota_enc).astype(f32)                          # one-hot
    pos_enc = jnp.concatenate([pos_all[0:S, :]] * B, axis=0)
    x = jnp.dot(oh_enc, tok_emb, preferred_element_type=f32) + pos_enc
    qkv = jnp.dot(x, e_wqkv, preferred_element_type=f32) + e_bqkv
    a = _mha(qkv[:, :D], qkv[:, D:2 * D], qkv[:, 2 * D:], m_enc, e_wo) + e_bo
    x = _layer_norm(x + a, ln_g[0], ln_b[0])
    h = _gelu(jnp.dot(x, e_w1, preferred_element_type=f32) + e_b1)
    h = jnp.dot(h, e_w2, preferred_element_type=f32) + e_b2
    enc_out = _layer_norm(x + h, ln_g[1], ln_b[1])                       # (B*S, D)

    # cross-attention K/V are loop-invariant: project once.
    kv_c = jnp.dot(enc_out, dc_wkv, preferred_element_type=f32) + dc_bkv
    k_cross, v_cross = kv_c[:, :D], kv_c[:, D:]

    # ---- decode-loop invariants ----
    pos_dec = pos_all[0:T, :]                                            # (T, D)
    viota_B = lax.broadcasted_iota(jnp.int32, (B, VOCAB), 1)
    col_T = lax.broadcasted_iota(jnp.int32, (B, T), 1)
    rflat = lax.broadcasted_iota(jnp.int32, (B * T, 1), 0)
    rSel, cSel = block_iota(B, B * T)       # read-row-t selector iotas
    rSc, cSc = block_iota(B * T, B)         # write-row-(t+1) scatter iotas

    start = gold[:, 0:1]                                                 # (B, 1)
    emb0 = jnp.dot((start == viota_B).astype(f32), tok_emb,
                   preferred_element_type=f32)                           # (B, D)
    pad_emb = tok_emb[PAD:PAD + 1, :]                                    # (1, D)
    scat0 = (rSc == cSc * T).astype(f32)                                 # rows b*T
    hit0 = rflat < 0
    for b in range(B):
        hit0 = hit0 | (rflat == b * T)
    tokpart = jnp.where(hit0, jnp.dot(scat0, emb0, preferred_element_type=f32),
                        pad_emb)
    xemb = tokpart + jnp.concatenate([pos_dec] * B, axis=0)              # (B*T, D)

    gen = jnp.where(col_T == 0, start, PAD)                              # (B, T) i32
    fin = jnp.zeros((B, 1), jnp.int32)                                   # EOS flags

    # ---- greedy decode, fully unrolled (T - 1 = 4 static steps) ----
    for t in range(T - 1):
        xd = xemb
        # masked self-attention (batch-block-diag causal mask)
        qkv_d = jnp.dot(xd, ds_wqkv, preferred_element_type=f32) + ds_bqkv
        a = _mha(qkv_d[:, :D], qkv_d[:, D:2 * D], qkv_d[:, 2 * D:],
                 m_self, ds_wo) + ds_bo
        xd = _layer_norm(xd + a, ln_g[2], ln_b[2])
        # cross-attention over the resident encoder output
        q = jnp.dot(xd, dc_wq, preferred_element_type=f32) + dc_bq
        a = _mha(q, k_cross, v_cross, m_cross, dc_wo) + dc_bo
        xd = _layer_norm(xd + a, ln_g[3], ln_b[3])
        # FFN
        h = _gelu(jnp.dot(xd, df_w1, preferred_element_type=f32) + df_b1)
        h = jnp.dot(h, df_w2, preferred_element_type=f32) + df_b2
        xd = _layer_norm(xd + h, ln_g[4], ln_b[4])

        # output head only on the B rows at position t
        sel_t = (cSel == rSel * T + t).astype(f32)                       # (B, B*T)
        xt = jnp.dot(sel_t, xd, preferred_element_type=f32)              # (B, D)
        logits = jnp.dot(xt, out_w, preferred_element_type=f32) + out_b  # (B, VOCAB)

        # greedy argmax (first maximal index), PAD after EOS (HF behaviour)
        mmax = jnp.max(logits, axis=-1, keepdims=True)
        idx = jnp.min(jnp.where(logits >= mmax, viota_B, VOCAB),
                      axis=-1, keepdims=True)                            # (B, 1) i32
        idx = jnp.where(fin > 0, PAD, idx)
        fin = fin | (idx == EOS).astype(jnp.int32)
        gen = jnp.where(col_T == t + 1, idx, gen)

        # embed only the new tokens and scatter them into rows b*T + t + 1
        emb_nxt = (jnp.dot((idx == viota_B).astype(f32), tok_emb,
                           preferred_element_type=f32)
                   + pos_dec[t + 1:t + 2, :])                            # (B, D)
        scat = (rSc == cSc * T + (t + 1)).astype(f32)                    # (B*T, B)
        hit = rflat < 0
        for b in range(B):
            hit = hit | (rflat == b * T + t + 1)
        xemb = jnp.where(hit, jnp.dot(scat, emb_nxt, preferred_element_type=f32),
                         xemb)

    dec_ref[...] = gen

    # ---- SeqAccuracies (elem / seq accuracy over positions 1..T-1) ----
    valid = (gold != PAD) & (col_T >= 1)
    same = (gen == gold) & (gen != UNKID)
    good = jnp.where(valid & same, f32(1.0), f32(0.0))
    tot = jnp.where(valid, f32(1.0), f32(0.0))
    bad = jnp.where(valid & jnp.logical_not(same), f32(1.0), f32(0.0))
    good_s = jnp.sum(jnp.sum(good, axis=1, keepdims=True), axis=0, keepdims=True)
    tot_s = jnp.sum(jnp.sum(tot, axis=1, keepdims=True), axis=0, keepdims=True)
    badrow = jnp.sum(bad, axis=1, keepdims=True)                         # (B, 1)
    seq_ok = jnp.where(badrow == 0.0, f32(1.0), f32(0.0))
    elem_acc = good_s / jnp.maximum(tot_s, f32(1.0))                     # (1, 1)
    seq_acc = jnp.sum(seq_ok, axis=0, keepdims=True) * f32(1.0 / B)      # (1, 1)
    metrics_ref[...] = jnp.concatenate([elem_acc, seq_acc], axis=1)


# ------------------------------ host wrapper ------------------------------
def bart_generator_test_forward(params, input_ids, output_ids, abs_output_ids):
    del abs_output_ids  # BartGeneratorTest.forward only evaluates self.metrics
    B, S = input_ids.shape
    T = MAXLEN
    o_col, o_row, o_gold, rows, cols = _int_layout(B, S)

    # single packed int32 data slab (input_ids in two layouts + gold output_ids)
    flat = input_ids.reshape(B * S).astype(jnp.int32)
    islab = jnp.zeros((rows, cols), jnp.int32)
    islab = islab.at[o_col:o_col + B * S, 0].set(flat)
    islab = islab.at[o_row, 0:B * S].set(flat)
    islab = islab.at[o_gold:o_gold + B, 0:T].set(output_ids[:, :T].astype(jnp.int32))

    kernel = functools.partial(_bart_test_kernel, batch=B, src_len=S,
                               wl=_WEIGHT_LAYOUT, ioff=(o_col, o_row, o_gold))
    gen, metrics = pl.pallas_call(
        kernel,
        out_shape=(
            jax.ShapeDtypeStruct((B, T), jnp.int32),
            jax.ShapeDtypeStruct((1, 2), jnp.float32),
        ),
    )(islab, params["wslab"])

    outputs = {"elem_acc": metrics[0, 0], "seq_acc": metrics[0, 1]}
    # TODO(synk): TreeAccuracy needs the Python tensor2tree callable and string-tree
    # equality; no Pallas equivalent.
    return outputs, gen


# ------------------------------ parameter init ------------------------------
def init_params(key):
    keys = jax.random.split(key, 24)
    it = iter(keys)

    def w(shape):
        return np.asarray(jax.random.normal(next(it), shape, jnp.float32),
                          np.float32) * np.float32(0.02)

    scale = np.float32(1.0 / math.sqrt(HEAD_DIM))   # folded into Q projections

    def qkv_fused():
        wq, wk, wv = w((D_MODEL, D_MODEL)), w((D_MODEL, D_MODEL)), w((D_MODEL, D_MODEL))
        return np.concatenate([wq * scale, wk, wv], axis=1)

    tensors = {
        "tok_emb": w((VOCAB, D_MODEL)),
        "pos_emb": w((MAX_POS, D_MODEL)),
        # layernorm rows: 0=enc.attn 1=enc.ffn 2=dec.self 3=dec.cross 4=dec.ffn
        "ln": np.concatenate([np.ones((5, D_MODEL), np.float32),
                              np.zeros((5, D_MODEL), np.float32)], axis=1),
        "e_wqkv": qkv_fused(), "e_bqkv": np.zeros((1, 3 * D_MODEL), np.float32),
        "e_wo": w((D_MODEL, D_MODEL)), "e_bo": np.zeros((1, D_MODEL), np.float32),
        "e_w1": w((D_MODEL, FFN_DIM)), "e_b1": np.zeros((1, FFN_DIM), np.float32),
        "e_w2": w((FFN_DIM, D_MODEL)), "e_b2": np.zeros((1, D_MODEL), np.float32),
        "ds_wqkv": qkv_fused(), "ds_bqkv": np.zeros((1, 3 * D_MODEL), np.float32),
        "ds_wo": w((D_MODEL, D_MODEL)), "ds_bo": np.zeros((1, D_MODEL), np.float32),
        "dc_wq": w((D_MODEL, D_MODEL)) * scale,
        "dc_bq": np.zeros((1, D_MODEL), np.float32),
        "dc_wkv": np.concatenate([w((D_MODEL, D_MODEL)), w((D_MODEL, D_MODEL))], axis=1),
        "dc_bkv": np.zeros((1, 2 * D_MODEL), np.float32),
        "dc_wo": w((D_MODEL, D_MODEL)), "dc_bo": np.zeros((1, D_MODEL), np.float32),
        "df_w1": w((D_MODEL, FFN_DIM)), "df_b1": np.zeros((1, FFN_DIM), np.float32),
        "df_w2": w((FFN_DIM, D_MODEL)), "df_b2": np.zeros((1, D_MODEL), np.float32),
        # only the lm head; absoutlin output is dead in BartGeneratorTest.forward
        "out_w": w((D_MODEL, VOCAB)), "out_b": np.zeros((1, VOCAB), np.float32),
    }

    slab = np.zeros((_WSLAB_ROWS, SLAB_COLS), np.float32)
    for name, (off, r, c) in _WEIGHT_LAYOUT.items():
        arr = np.asarray(tensors[name], np.float32)
        assert arr.shape == (r, c), (name, arr.shape, (r, c))
        slab[off:off + r, :c] = arr
    return {"wslab": jnp.asarray(slab)}


# ------------------------------------ main ------------------------------------
if __name__ == "__main__":
    key = jax.random.PRNGKey(0)
    pkey, ikey, okey, akey = jax.random.split(key, 4)
    params = init_params(pkey)

    B, S = 2, 8
    input_ids = jax.random.randint(ikey, (B, S), 4, VOCAB).astype(jnp.int32)
    input_ids = input_ids.at[1, 6:].set(PAD)  # one shorter (padded) sequence
    output_ids = jax.random.randint(okey, (B, MAXLEN), 4, VOCAB).astype(jnp.int32)
    output_ids = output_ids.at[:, 0].set(BOS)
    abs_output_ids = jax.random.randint(akey, (B, MAXLEN), 4, ABS_VOCAB).astype(jnp.int32)

    fwd = jax.jit(bart_generator_test_forward)
    outputs, ret = fwd(params, input_ids, output_ids, abs_output_ids)
    jax.block_until_ready((outputs, ret))
    print("KERNEL_OK")
</pallas_src>

<mosaic_0001>
module attributes {stable_mosaic.version = 11 : i64} {
  func.func @_bart_test_kernel(%arg0: memref<32x16xi32, #tpu.memory_space<vmem>>, %arg1: memref<624x128xf32, #tpu.memory_space<vmem>>, %arg2: memref<2x5xi32, #tpu.memory_space<vmem>>, %arg3: memref<1x2xf32, #tpu.memory_space<vmem>>) attributes {dimension_semantics = [], scalar_prefetch = 0 : i64, scratch_operands = 0 : i64, tpu.core_type = #tpu.core_type<tc>} {
    %c0 = arith.constant 0 : index
    %c0_0 = arith.constant 0 : index
    %0 = vector.load %arg1[%c0, %c0_0] : memref<624x128xf32, #tpu.memory_space<vmem>>, vector<50x32xf32>
    %c56 = arith.constant 56 : index
    %c0_1 = arith.constant 0 : index
    %1 = vector.load %arg1[%c56, %c0_1] : memref<624x128xf32, #tpu.memory_space<vmem>>, vector<16x32xf32>
    %c72 = arith.constant 72 : index
    %c0_2 = arith.constant 0 : index
    %2 = vector.load %arg1[%c72, %c0_2] : memref<624x128xf32, #tpu.memory_space<vmem>>, vector<5x64xf32>
    %3 = vector.extract_strided_slice %2 {offsets = [0, 0], sizes = [1, 32], strides = [1, 1]} : vector<5x64xf32> to vector<1x32xf32>
    %4 = vector.extract_strided_slice %2 {offsets = [1, 0], sizes = [1, 32], strides = [1, 1]} : vector<5x64xf32> to vector<1x32xf32>
    %5 = vector.extract_strided_slice %2 {offsets = [2, 0], sizes = [1, 32], strides = [1, 1]} : vector<5x64xf32> to vector<1x32xf32>
    %6 = vector.extract_strided_slice %2 {offsets = [3, 0], sizes = [1, 32], strides = [1, 1]} : vector<5x64xf32> to vector<1x32xf32>
    %7 = vector.extract_strided_slice %2 {offsets = [4, 0], sizes = [1, 32], strides = [1, 1]} : vector<5x64xf32> to vector<1x32xf32>
    %8 = vector.extract_strided_slice %2 {offsets = [0, 32], sizes = [1, 32], strides = [1, 1]} : vector<5x64xf32> to vector<1x32xf32>
    %9 = vector.extract_strided_slice %2 {offsets = [1, 32], sizes = [1, 32], strides = [1, 1]} : vector<5x64xf32> to vector<1x32xf32>
    %10 = vector.extract_strided_slice %2 {offsets = [2, 32], sizes = [1, 32], strides = [1, 1]} : vector<5x64xf32> to vector<1x32xf32>
    %11 = vector.extract_strided_slice %2 {offsets = [3, 32], sizes = [1, 32], strides = [1, 1]} : vector<5x64xf32> to vector<1x32xf32>
    %12 = vector.extract_strided_slice %2 {offsets = [4, 32], sizes = [1, 32], strides = [1, 1]} : vector<5x64xf32> to vector<1x32xf32>
    %c80 = arith.constant 80 : index
    %c0_3 = arith.constant 0 : index
    %13 = vector.load %arg1[%c80, %c0_3] : memref<624x128xf32, #tpu.memory_space<vmem>>, vector<32x96xf32>
    %c112 = arith.constant 112 : index
    %c0_4 = arith.constant 0 : index
    %14 = vector.load %arg1[%c112, %c0_4] : memref<624x128xf32, #tpu.memory_space<vmem>>, vector<1x96xf32>
    %c120 = arith.constant 120 : index
    %c0_5 = arith.constant 0 : index
    %15 = vector.load %arg1[%c120, %c0_5] : memref<624x128xf32, #tpu.memory_space<vmem>>, vector<32x32xf32>
    %c152 = arith.constant 152 : index
    %c0_6 = arith.constant 0 : index
    %16 = vector.load %arg1[%c152, %c0_6] : memref<624x128xf32, #tpu.memory_space<vmem>>, vector<1x32xf32>
    %c160 = arith.constant 160 : index
    %c0_7 = arith.constant 0 : index
    %17 = vector.load %arg1[%c160, %c0_7] : memref<624x128xf32, #tpu.memory_space<vmem>>, vector<32x64xf32>
    %c192 = arith.constant 192 : index
    %c0_8 = arith.constant 0 : index
    %18 = vector.load %arg1[%c192, %c0_8] : memref<624x128xf32, #tpu.memory_space<vmem>>, vector<1x64xf32>
    %c200 = arith.constant 200 : index
    %c0_9 = arith.constant 0 : index
    %19 = vector.load %arg1[%c200, %c0_9] : memref<624x128xf32, #tpu.memory_space<vmem>>, vector<64x32xf32>
    %c264 = arith.constant 264 : index
    %c0_10 = arith.constant 0 : index
    %20 = vector.load %arg1[%c264, %c0_10] : memref<624x128xf32, #tpu.memory_space<vmem>>, vector<1x32xf32>
    %c272 = arith.constant 272 : index
    %c0_11 = arith.constant 0 : index
    %21 = vector.load %arg1[%c272, %c0_11] : memref<624x128xf32, #tpu.memory_space<vmem>>, vector<32x96xf32>
    %c304 = arith.constant 304 : index
    %c0_12 = arith.constant 0 : index
    %22 = vector.load %arg1[%c304, %c0_12] : memref<624x128xf32, #tpu.memory_space<vmem>>, vector<1x96xf32>
    %c312 = arith.constant 312 : index
    %c0_13 = arith.constant 0 : index
    %23 = vector.load %arg1[%c312, %c0_13] : memref<624x128xf32, #tpu.memory_space<vmem>>, vector<32x32xf32>
    %c344 = arith.constant 344 : index
    %c0_14 = arith.constant 0 : index
    %24 = vector.load %arg1[%c344, %c0_14] : memref<624x128xf32, #tpu.memory_space<vmem>>, vector<1x32xf32>
    %c352 = arith.constant 352 : index
    %c0_15 = arith.constant 0 : index
    %25 = vector.load %arg1[%c352, %c0_15] : memref<624x128xf32, #tpu.memory_space<vmem>>, vector<32x32xf32>
    %c384 = arith.constant 384 : index
    %c0_16 = arith.constant 0 : index
    %26 = vector.load %arg1[%c384, %c0_16] : memref<624x128xf32, #tpu.memory_space<vmem>>, vector<1x32xf32>
    %c392 = arith.constant 392 : index
    %c0_17 = arith.constant 0 : index
    %27 = vector.load %arg1[%c392, %c0_17] : memref<624x128xf32, #tpu.memory_space<vmem>>, vector<32x64xf32>
    %c424 = arith.constant 424 : index
    %c0_18 = arith.constant 0 : index
    %28 = vector.load %arg1[%c424, %c0_18] : memref<624x128xf32, #tpu.memory_space<vmem>>, vector<1x64xf32>
    %c432 = arith.constant 432 : index
    %c0_19 = arith.constant 0 : index
    %29 = vector.load %arg1[%c432, %c0_19] : memref<624x128xf32, #tpu.memory_space<vmem>>, vector<32x32xf32>
    %c464 = arith.constant 464 : index
    %c0_20 = arith.constant 0 : index
    %30 = vector.load %arg1[%c464, %c0_20] : memref<624x128xf32, #tpu.memory_space<vmem>>, vector<1x32xf32>
    %c472 = arith.constant 472 : index
    %c0_21 = arith.constant 0 : index
    %31 = vector.load %arg1[%c472, %c0_21] : memref<624x128xf32, #tpu.memory_space<vmem>>, vector<32x64xf32>
    %c504 = arith.constant 504 : index
    %c0_22 = arith.constant 0 : index
    %32 = vector.load %arg1[%c504, %c0_22] : memref<624x128xf32, #tpu.memory_space<vmem>>, vector<1x64xf32>
    %c512 = arith.constant 512 : index
    %c0_23 = arith.constant 0 : index
    %33 = vector.load %arg1[%c512, %c0_23] : memref<624x128xf32, #tpu.memory_space<vmem>>, vector<64x32xf32>
    %c576 = arith.constant 576 : index
    %c0_24 = arith.constant 0 : index
    %34 = vector.load %arg1[%c576, %c0_24] : memref<624x128xf32, #tpu.memory_space<vmem>>, vector<1x32xf32>
    %c584 = arith.constant 584 : index
    %c0_25 = arith.constant 0 : index
    %35 = vector.load %arg1[%c584, %c0_25] : memref<624x128xf32, #tpu.memory_space<vmem>>, vector<32x50xf32>
    %c616 = arith.constant 616 : index
    %c0_26 = arith.constant 0 : index
    %36 = vector.load %arg1[%c616, %c0_26] : memref<624x128xf32, #tpu.memory_space<vmem>>, vector<1x50xf32>
    %c0_27 = arith.constant 0 : index
    %c0_28 = arith.constant 0 : index
    %37 = vector.load %arg0[%c0_27, %c0_28] : memref<32x16xi32, #tpu.memory_space<vmem>>, vector<16x1xi32>
    %c16 = arith.constant 16 : index
    %c0_29 = arith.constant 0 : index
    %38 = vector.load %arg0[%c16, %c0_29] : memref<32x16xi32, #tpu.memory_space<vmem>>, vector<1x16xi32>
    %c24 = arith.constant 24 : index
    %c0_30 = arith.constant 0 : index
    %39 = vector.load %arg0[%c24, %c0_30] : memref<32x16xi32, #tpu.memory_space<vmem>>, vector<2x5xi32>
    %c1_i32 = arith.constant 1 : i32
    %40 = vector.broadcast %c1_i32 : i32 to vector<1x16xi32>
    %41 = arith.cmpi ne, %38, %40 : vector<1x16xi32>
    %42 = tpu.iota {dimensions = array<i32: 0>} : vector<16x16xi32>
    %43 = tpu.iota {dimensions = array<i32: 1>} : vector<16x16xi32>
    %c0_i32 = arith.constant 0 : i32
    %44 = vector.broadcast %c0_i32 : i32 to vector<16x16xi32>
    %45 = arith.cmpi slt, %42, %44 : vector<16x16xi32>
    %c0_i32_31 = arith.constant 0 : i32
    %46 = vector.broadcast %c0_i32_31 : i32 to vector<16x16xi32>
    %47 = arith.cmpi sge, %42, %46 : vector<16x16xi32>
    %c8_i32 = arith.constant 8 : i32
    %48 = vector.broadcast %c8_i32 : i32 to vector<16x16xi32>
    %49 = arith.cmpi slt, %42, %48 : vector<16x16xi32>
    %50 = arith.andi %47, %49 : vector<16x16xi1>
    %c0_i32_32 = arith.constant 0 : i32
    %51 = vector.broadcast %c0_i32_32 : i32 to vector<16x16xi32>
    %52 = arith.cmpi sge, %43, %51 : vector<16x16xi32>
    %53 = arith.andi %50, %52 : vector<16x16xi1>
    %c8_i32_33 = arith.constant 8 : i32
    %54 = vector.broadcast %c8_i32_33 : i32 to vector<16x16xi32>
    %55 = arith.cmpi slt, %43, %54 : vector<16x16xi32>
    %56 = arith.andi %53, %55 : vector<16x16xi1>
    %57 = arith.ori %45, %56 : vector<16x16xi1>
    %c8_i32_34 = arith.constant 8 : i32
    %58 = vector.broadcast %c8_i32_34 : i32 to vector<16x16xi32>
    %59 = arith.cmpi sge, %42, %58 : vector<16x16xi32>
    %c16_i32 = arith.constant 16 : i32
    %60 = vector.broadcast %c16_i32 : i32 to vector<16x16xi32>
    %61 = arith.cmpi slt, %42, %60 : vector<16x16xi32>
    %62 = arith.andi %59, %61 : vector<16x16xi1>
    %c8_i32_35 = arith.constant 8 : i32
    %63 = vector.broadcast %c8_i32_35 : i32 to vector<16x16xi32>
    %64 = arith.cmpi sge, %43, %63 : vector<16x16xi32>
    %65 = arith.andi %62, %64 : vector<16x16xi1>
    %c16_i32_36 = arith.constant 16 : i32
    %66 = vector.broadcast %c16_i32_36 : i32 to vector<16x16xi32>
    %67 = arith.cmpi slt, %43, %66 : vector<16x16xi32>
    %68 = arith.andi %65, %67 : vector<16x16xi1>
    %69 = arith.ori %57, %68 : vector<16x16xi1>
    %70 = vector.broadcast %41 : vector<1x16xi1> to vector<16x16xi1>
    %71 = arith.andi %69, %70 : vector<16x16xi1>
    %cst = arith.constant 0.000000e+00 : f32
    %cst_37 = arith.constant -1.000000e+09 : f32
    %72 = vector.broadcast %cst : f32 to vector<16x16xf32>
    %73 = vector.broadcast %cst_37 : f32 to vector<16x16xf32>
    %74 = arith.select %71, %72, %73 : vector<16x16xi1>, vector<16x16xf32>
    %75 = tpu.iota {dimensions = array<i32: 0>} : vector<10x10xi32>
    %76 = tpu.iota {dimensions = array<i32: 1>} : vector<10x10xi32>
    %c0_i32_38 = arith.constant 0 : i32
    %77 = vector.broadcast %c0_i32_38 : i32 to vector<10x10xi32>
    %78 = arith.cmpi slt, %75, %77 : vector<10x10xi32>
    %c0_i32_39 = arith.constant 0 : i32
    %79 = vector.broadcast %c0_i32_39 : i32 to vector<10x10xi32>
    %80 = arith.cmpi sge, %75, %79 : vector<10x10xi32>
    %c5_i32 = arith.constant 5 : i32
    %81 = vector.broadcast %c5_i32 : i32 to vector<10x10xi32>
    %82 = arith.cmpi slt, %75, %81 : vector<10x10xi32>
    %83 = arith.andi %80, %82 : vector<10x10xi1>
    %c0_i32_40 = arith.constant 0 : i32
    %84 = vector.broadcast %c0_i32_40 : i32 to vector<10x10xi32>
    %85 = arith.cmpi sge, %76, %84 : vector<10x10xi32>
    %86 = arith.andi %83, %85 : vector<10x10xi1>
    %c5_i32_41 = arith.constant 5 : i32
    %87 = vector.broadcast %c5_i32_41 : i32 to vector<10x10xi32>
    %88 = arith.cmpi slt, %76, %87 : vector<10x10xi32>
    %89 = arith.andi %86, %88 : vector<10x10xi1>
    %90 = arith.ori %78, %89 : vector<10x10xi1>
    %c5_i32_42 = arith.constant 5 : i32
    %91 = vector.broadcast %c5_i32_42 : i32 to vector<10x10xi32>
    %92 = arith.cmpi sge, %75, %91 : vector<10x10xi32>
    %c10_i32 = arith.constant 10 : i32
    %93 = vector.broadcast %c10_i32 : i32 to vector<10x10xi32>
    %94 = arith.cmpi slt, %75, %93 : vector<10x10xi32>
    %95 = arith.andi %92, %94 : vector<10x10xi1>
    %c5_i32_43 = arith.constant 5 : i32
    %96 = vector.broadcast %c5_i32_43 : i32 to vector<10x10xi32>
    %97 = arith.cmpi sge, %76, %96 : vector<10x10xi32>
    %98 = arith.andi %95, %97 : vector<10x10xi1>
    %c10_i32_44 = arith.constant 10 : i32
    %99 = vector.broadcast %c10_i32_44 : i32 to vector<10x10xi32>
    %100 = arith.cmpi slt, %76, %99 : vector<10x10xi32>
    %101 = arith.andi %98, %100 : vector<10x10xi1>
    %102 = arith.ori %90, %101 : vector<10x10xi1>
    %103 = arith.cmpi sle, %76, %75 : vector<10x10xi32>
    %104 = arith.andi %102, %103 : vector<10x10xi1>
    %cst_45 = arith.constant 0.000000e+00 : f32
    %cst_46 = arith.constant -1.000000e+09 : f32
    %105 = vector.broadcast %cst_45 : f32 to vector<10x10xf32>
    %106 = vector.broadcast %cst_46 : f32 to vector<10x10xf32>
    %107 = arith.select %104, %105, %106 : vector<10x10xi1>, vector<10x10xf32>
    %108 = tpu.iota {dimensions = array<i32: 0>} : vector<10x16xi32>
    %109 = tpu.iota {dimensions = array<i32: 1>} : vector<10x16xi32>
    %c0_i32_47 = arith.constant 0 : i32
    %110 = vector.broadcast %c0_i32_47 : i32 to vector<10x16xi32>
    %111 = arith.cmpi slt, %108, %110 : vector<10x16xi32>
    %c0_i32_48 = arith.constant 0 : i32
    %112 = vector.broadcast %c0_i32_48 : i32 to vector<10x16xi32>
    %113 = arith.cmpi sge, %108, %112 : vector<10x16xi32>
    %c5_i32_49 = arith.constant 5 : i32
    %114 = vector.broadcast %c5_i32_49 : i32 to vector<10x16xi32>
    %115 = arith.cmpi slt, %108, %114 : vector<10x16xi32>
    %116 = arith.andi %113, %115 : vector<10x16xi1>
    %c0_i32_50 = arith.constant 0 : i32
    %117 = vector.broadcast %c0_i32_50 : i32 to vector<10x16xi32>
    %118 = arith.cmpi sge, %109, %117 : vector<10x16xi32>
    %119 = arith.andi %116, %118 : vector<10x16xi1>
    %c8_i32_51 = arith.constant 8 : i32
    %120 = vector.broadcast %c8_i32_51 : i32 to vector<10x16xi32>
    %121 = arith.cmpi slt, %109, %120 : vector<10x16xi32>
    %122 = arith.andi %119, %121 : vector<10x16xi1>
    %123 = arith.ori %111, %122 : vector<10x16xi1>
    %c5_i32_52 = arith.constant 5 : i32
    %124 = vector.broadcast %c5_i32_52 : i32 to vector<10x16xi32>
    %125 = arith.cmpi sge, %108, %124 : vector<10x16xi32>
    %c10_i32_53 = arith.constant 10 : i32
    %126 = vector.broadcast %c10_i32_53 : i32 to vector<10x16xi32>
    %127 = arith.cmpi slt, %108, %126 : vector<10x16xi32>
    %128 = arith.andi %125, %127 : vector<10x16xi1>
    %c8_i32_54 = arith.constant 8 : i32
    %129 = vector.broadcast %c8_i32_54 : i32 to vector<10x16xi32>
    %130 = arith.cmpi sge, %109, %129 : vector<10x16xi32>
    %131 = arith.andi %128, %130 : vector<10x16xi1>
    %c16_i32_55 = arith.constant 16 : i32
    %132 = vector.broadcast %c16_i32_55 : i32 to vector<10x16xi32>
    %133 = arith.cmpi slt, %109, %132 : vector<10x16xi32>
    %134 = arith.andi %131, %133 : vector<10x16xi1>
    %135 = arith.ori %123, %134 : vector<10x16xi1>
    %136 = vector.broadcast %41 : vector<1x16xi1> to vector<10x16xi1>
    %137 = arith.andi %135, %136 : vector<10x16xi1>
    %cst_56 = arith.constant 0.000000e+00 : f32
    %cst_57 = arith.constant -1.000000e+09 : f32
    %138 = vector.broadcast %cst_56 : f32 to vector<10x16xf32>
    %139 = vector.broadcast %cst_57 : f32 to vector<10x16xf32>
    %140 = arith.select %137, %138, %139 : vector<10x16xi1>, vector<10x16xf32>
    %141 = tpu.iota {dimensions = array<i32: 1>} : vector<16x50xi32>
    %142 = vector.broadcast %37 : vector<16x1xi32> to vector<16x50xi32>
    %143 = arith.cmpi eq, %142, %141 : vector<16x50xi32>
    %144 = arith.extui %143 : vector<16x50xi1> to vector<16x50xi32>
    %145 = arith.sitofp %144 : vector<16x50xi32> to vector<16x50xf32>
    %146 = vector.extract_strided_slice %1 {offsets = [0, 0], sizes = [8, 32], strides = [1, 1]} : vector<16x32xf32> to vector<8x32xf32>
    %147 = tpu.concatenate %146, %146 in 0 : vector<8x32xf32>, vector<8x32xf32> -> vector<16x32xf32>
    %cst_58 = arith.constant dense<0.000000e+00> : vector<16x32xf32>
    %148 = tpu.matmul %145, %0, %cst_58 {dimension_numbers = #tpu.dot_dimension_numbers<[1], [0], [0], [1], [0, 0, 1, 1], [], []>} : vector<16x50xf32>, vector<50x32xf32>, vector<16x32xf32> -> vector<16x32xf32>
    %149 = arith.addf %148, %147 : vector<16x32xf32>
    %cst_59 = arith.constant dense<0.000000e+00> : vector<16x96xf32>
    %150 = tpu.matmul %149, %13, %cst_59 {dimension_numbers = #tpu.dot_dimension_numbers<[1], [0], [0], [1], [0, 0, 1, 1], [], []>} : vector<16x32xf32>, vector<32x96xf32>, vector<16x96xf32> -> vector<16x96xf32>
    %151 = vector.broadcast %14 : vector<1x96xf32> to vector<16x96xf32>
    %152 = arith.addf %150, %151 : vector<16x96xf32>
    %153 = vector.extract_strided_slice %152 {offsets = [0, 0], sizes = [16, 32], strides = [1, 1]} : vector<16x96xf32> to vector<16x32xf32>
    %154 = vector.extract_strided_slice %152 {offsets = [0, 32], sizes = [16, 32], strides = [1, 1]} : vector<16x96xf32> to vector<16x32xf32>
    %155 = vector.extract_strided_slice %152 {offsets = [0, 64], sizes = [16, 32], strides = [1, 1]} : vector<16x96xf32> to vector<16x32xf32>
    %156 = vector.extract_strided_slice %153 {offsets = [0, 0], sizes = [16, 8], strides = [1, 1]} : vector<16x32xf32> to vector<16x8xf32>
    %157 = vector.extract_strided_slice %154 {offsets = [0, 0], sizes = [16, 8], strides = [1, 1]} : vector<16x32xf32> to vector<16x8xf32>
    %cst_60 = arith.constant dense<0.000000e+00> : vector<16x16xf32>
    %158 = tpu.matmul %156, %157, %cst_60 {dimension_numbers = #tpu.dot_dimension_numbers<[1], [1], [0], [0], [0, 0, 1, 0], [], []>} : vector<16x8xf32>, vector<16x8xf32>, vector<16x16xf32> -> vector<16x16xf32>
    %159 = arith.addf %158, %74 : vector<16x16xf32>
    %cst_61 = arith.constant dense<0xFF800000> : vector<16xf32>
    %160 = vector.multi_reduction <maximumf>, %159, %cst_61 [1] : vector<16x16xf32> to vector<16xf32>
    %161 = vector.shape_cast %160 : vector<16xf32> to vector<16x1xf32>
    %162 = vector.broadcast %161 : vector<16x1xf32> to vector<16x16xf32>
    %163 = arith.subf %159, %162 : vector<16x16xf32>
    %164 = math.exp %163 : vector<16x16xf32>
    %cst_62 = arith.constant dense<0.000000e+00> : vector<16xf32>
    %165 = vector.multi_reduction <add>, %164, %cst_62 [1] : vector<16x16xf32> to vector<16xf32>
    %166 = vector.shape_cast %165 : vector<16xf32> to vector<16x1xf32>
    %167 = tpu.reciprocal %166 {approx = true} : vector<16x1xf32> -> vector<16x1xf32>
    %168 = vector.broadcast %167 : vector<16x1xf32> to vector<16x16xf32>
    %169 = arith.mulf %164, %168 : vector<16x16xf32>
    %170 = vector.extract_strided_slice %155 {offsets = [0, 0], sizes = [16, 8], strides = [1, 1]} : vector<16x32xf32> to vector<16x8xf32>
    %cst_63 = arith.constant dense<0.000000e+00> : vector<16x8xf32>
    %171 = tpu.matmul %169, %170, %cst_63 {dimension_numbers = #tpu.dot_dimension_numbers<[1], [0], [0], [1], [0, 0, 1, 1], [], []>} : vector<16x16xf32>, vector<16x8xf32>, vector<16x8xf32> -> vector<16x8xf32>
    %172 = vector.extract_strided_slice %15 {offsets = [0, 0], sizes = [8, 32], strides = [1, 1]} : vector<32x32xf32> to vector<8x32xf32>
    %cst_64 = arith.constant dense<0.000000e+00> : vector<16x32xf32>
    %173 = tpu.matmul %171, %172, %cst_64 {dimension_numbers = #tpu.dot_dimension_numbers<[1], [0], [0], [1], [0, 0, 1, 1], [], []>} : vector<16x8xf32>, vector<8x32xf32>, vector<16x32xf32> -> vector<16x32xf32>
    %174 = vector.extract_strided_slice %153 {offsets = [0, 8], sizes = [16, 8], strides = [1, 1]} : vector<16x32xf32> to vector<16x8xf32>
    %175 = vector.extract_strided_slice %154 {offsets = [0, 8], sizes = [16, 8], strides = [1, 1]} : vector<16x32xf32> to vector<16x8xf32>
    %cst_65 = arith.constant dense<0.000000e+00> : vector<16x16xf32>
    %176 = tpu.matmul %174, %175, %cst_65 {dimension_numbers = #tpu.dot_dimension_numbers<[1], [1], [0], [0], [0, 0, 1, 0], [], []>} : vector<16x8xf32>, vector<16x8xf32>, vector<16x16xf32> -> vector<16x16xf32>
    %177 = arith.addf %176, %74 : vector<16x16xf32>
    %cst_66 = arith.constant dense<0xFF800000> : vector<16xf32>
    %178 = vector.multi_reduction <maximumf>, %177, %cst_66 [1] : vector<16x16xf32> to vector<16xf32>
    %179 = vector.shape_cast %178 : vector<16xf32> to vector<16x1xf32>
    %180 = vector.broadcast %179 : vector<16x1xf32> to vector<16x16xf32>
    %181 = arith.subf %177, %180 : vector<16x16xf32>
    %182 = math.exp %181 : vector<16x16xf32>
    %cst_67 = arith.constant dense<0.000000e+00> : vector<16xf32>
    %183 = vector.multi_reduction <add>, %182, %cst_67 [1] : vector<16x16xf32> to vector<16xf32>
    %184 = vector.shape_cast %183 : vector<16xf32> to vector<16x1xf32>
    %185 = tpu.reciprocal %184 {approx = true} : vector<16x1xf32> -> vector<16x1xf32>
    %186 = vector.broadcast %185 : vector<16x1xf32> to vector<16x16xf32>
    %187 = arith.mulf %182, %186 : vector<16x16xf32>
    %188 = vector.extract_strided_slice %155 {offsets = [0, 8], sizes = [16, 8], strides = [1, 1]} : vector<16x32xf32> to vector<16x8xf32>
    %cst_68 = arith.constant dense<0.000000e+00> : vector<16x8xf32>
    %189 = tpu.matmul %187, %188, %cst_68 {dimension_numbers = #tpu.dot_dimension_numbers<[1], [0], [0], [1], [0, 0, 1, 1], [], []>} : vector<16x16xf32>, vector<16x8xf32>, vector<16x8xf32> -> vector<16x8xf32>
    %190 = vector.extract_strided_slice %15 {offsets = [8, 0], sizes = [8, 32], strides = [1, 1]} : vector<32x32xf32> to vector<8x32xf32>
    %cst_69 = arith.constant dense<0.000000e+00> : vector<16x32xf32>
    %191 = tpu.matmul %189, %190, %cst_69 {dimension_numbers = #tpu.dot_dimension_numbers<[1], [0], [0], [1], [0, 0, 1, 1], [], []>} : vector<16x8xf32>, vector<8x32xf32>, vector<16x32xf32> -> vector<16x32xf32>
    %192 = arith.addf %173, %191 : vector<16x32xf32>
    %193 = vector.extract_strided_slice %153 {offsets = [0, 16], sizes = [16, 8], strides = [1, 1]} : vector<16x32xf32> to vector<16x8xf32>
    %194 = vector.extract_strided_slice %154 {offsets = [0, 16], sizes = [16, 8], strides = [1, 1]} : vector<16x32xf32> to vector<16x8xf32>
    %cst_70 = arith.constant dense<0.000000e+00> : vector<16x16xf32>
    %195 = tpu.matmul %193, %194, %cst_70 {dimension_numbers = #tpu.dot_dimension_numbers<[1], [1], [0], [0], [0, 0, 1, 0], [], []>} : vector<16x8xf32>, vector<16x8xf32>, vector<16x16xf32> -> vector<16x16xf32>
    %196 = arith.addf %195, %74 : vector<16x16xf32>
    %cst_71 = arith.constant dense<0xFF800000> : vector<16xf32>
    %197 = vector.multi_reduction <maximumf>, %196, %cst_71 [1] : vector<16x16xf32> to vector<16xf32>
    %198 = vector.shape_cast %197 : vector<16xf32> to vector<16x1xf32>
    %199 = vector.broadcast %198 : vector<16x1xf32> to vector<16x16xf32>
    %200 = arith.subf %196, %199 : vector<16x16xf32>
    %201 = math.exp %200 : vector<16x16xf32>
    %cst_72 = arith.constant dense<0.000000e+00> : vector<16xf32>
    %202 = vector.multi_reduction <add>, %201, %cst_72 [1] : vector<16x16xf32> to vector<16xf32>
    %203 = vector.shape_cast %202 : vector<16xf32> to vector<16x1xf32>
    %204 = tpu.reciprocal %203 {approx = true} : vector<16x1xf32> -> vector<16x1xf32>
    %205 = vector.broadcast %204 : vector<16x1xf32> to vector<16x16xf32>
    %206 = arith.mulf %201, %205 : vector<16x16xf32>
    %207 = vector.extract_strided_slice %155 {offsets = [0, 16], sizes = [16, 8], strides = [1, 1]} : vector<16x32xf32> to vector<16x8xf32>
    %cst_73 = arith.constant dense<0.000000e+00> : vector<16x8xf32>
    %208 = tpu.matmul %206, %207, %cst_73 {dimension_numbers = #tpu.dot_dimension_numbers<[1], [0], [0], [1], [0, 0, 1, 1], [], []>} : vector<16x16xf32>, vector<16x8xf32>, vector<16x8xf32> -> vector<16x8xf32>
    %209 = vector.extract_strided_slice %15 {offsets = [16, 0], sizes = [8, 32], strides = [1, 1]} : vector<32x32xf32> to vector<8x32xf32>
    %cst_74 = arith.constant dense<0.000000e+00> : vector<16x32xf32>
    %210 = tpu.matmul %208, %209, %cst_74 {dimension_numbers = #tpu.dot_dimension_numbers<[1], [0], [0], [1], [0, 0, 1, 1], [], []>} : vector<16x8xf32>, vector<8x32xf32>, vector<16x32xf32> -> vector<16x32xf32>
    %211 = arith.addf %192, %210 : vector<16x32xf32>
    %212 = vector.extract_strided_slice %153 {offsets = [0, 24], sizes = [16, 8], strides = [1, 1]} : vector<16x32xf32> to vector<16x8xf32>
    %213 = vector.extract_strided_slice %154 {offsets = [0, 24], sizes = [16, 8], strides = [1, 1]} : vector<16x32xf32> to vector<16x8xf32>
    %cst_75 = arith.constant dense<0.000000e+00> : vector<16x16xf32>
    %214 = tpu.matmul %212, %213, %cst_75 {dimension_numbers = #tpu.dot_dimension_numbers<[1], [1], [0], [0], [0, 0, 1, 0], [], []>} : vector<16x8xf32>, vector<16x8xf32>, vector<16x16xf32> -> vector<16x16xf32>
    %215 = arith.addf %214, %74 : vector<16x16xf32>
    %cst_76 = arith.constant dense<0xFF800000> : vector<16xf32>
    %216 = vector.multi_reduction <maximumf>, %215, %cst_76 [1] : vector<16x16xf32> to vector<16xf32>
    %217 = vector.shape_cast %216 : vector<16xf32> to vector<16x1xf32>
    %218 = vector.broadcast %217 : vector<16x1xf32> to vector<16x16xf32>
    %219 = arith.subf %215, %218 : vector<16x16xf32>
    %220 = math.exp %219 : vector<16x16xf32>
    %cst_77 = arith.constant dense<0.000000e+00> : vector<16xf32>
    %221 = vector.multi_reduction <add>, %220, %cst_77 [1] : vector<16x16xf32> to vector<16xf32>
    %222 = vector.shape_cast %221 : vector<16xf32> to vector<16x1xf32>
    %223 = tpu.reciprocal %222 {approx = true} : vector<16x1xf32> -> vector<16x1xf32>
    %224 = vector.broadcast %223 : vector<16x1xf32> to vector<16x16xf32>
    %225 = arith.mulf %220, %224 : vector<16x16xf32>
    %226 = vector.extract_strided_slice %155 {offsets = [0, 24], sizes = [16, 8], strides = [1, 1]} : vector<16x32xf32> to vector<16x8xf32>
    %cst_78 = arith.constant dense<0.000000e+00> : vector<16x8xf32>
    %227 = tpu.matmul %225, %226, %cst_78 {dimension_numbers = #tpu.dot_dimension_numbers<[1], [0], [0], [1], [0, 0, 1, 1], [], []>} : vector<16x16xf32>, vector<16x8xf32>, vector<16x8xf32> -> vector<16x8xf32>
    %228 = vector.extract_strided_slice %15 {offsets = [24, 0], sizes = [8, 32], strides = [1, 1]} : vector<32x32xf32> to vector<8x32xf32>
    %cst_79 = arith.constant dense<0.000000e+00> : vector<16x32xf32>
    %229 = tpu.matmul %227, %228, %cst_79 {dimension_numbers = #tpu.dot_dimension_numbers<[1], [0], [0], [1], [0, 0, 1, 1], [], []>} : vector<16x8xf32>, vector<8x32xf32>, vector<16x32xf32> -> vector<16x32xf32>
    %230 = arith.addf %211, %229 : vector<16x32xf32>
    %231 = vector.broadcast %16 : vector<1x32xf32> to vector<16x32xf32>
    %232 = arith.addf %230, %231 : vector<16x32xf32>
    %233 = arith.addf %149, %232 : vector<16x32xf32>
    %cst_80 = arith.constant dense<0.000000e+00> : vector<16xf32>
    %234 = vector.multi_reduction <add>, %233, %cst_80 [1] : vector<16x32xf32> to vector<16xf32>
    %235 = vector.shape_cast %234 : vector<16xf32> to vector<16x1xf32>
    %cst_81 = arith.constant 3.200000e+01 : f32
    %236 = vector.broadcast %cst_81 : f32 to vector<16x1xf32>
    %237 = arith.divf %235, %236 : vector<16x1xf32>
    %238 = vector.broadcast %237 : vector<16x1xf32> to vector<16x32xf32>
    %239 = arith.subf %233, %238 : vector<16x32xf32>
    %240 = arith.mulf %239, %239 : vector<16x32xf32>
    %cst_82 = arith.constant dense<0.000000e+00> : vector<16xf32>
    %241 = vector.multi_reduction <add>, %240, %cst_82 [1] : vector<16x32xf32> to vector<16xf32>
    %242 = vector.shape_cast %241 : vector<16xf32> to vector<16x1xf32>
    %cst_83 = arith.constant 3.200000e+01 : f32
    %243 = vector.broadcast %cst_83 : f32 to vector<16x1xf32>
    %244 = arith.divf %242, %243 : vector<16x1xf32>
    %245 = vector.broadcast %237 : vector<16x1xf32> to vector<16x32xf32>
    %246 = arith.subf %233, %245 : vector<16x32xf32>
    %cst_84 = arith.constant 9.99999974E-6 : f32
    %247 = vector.broadcast %cst_84 : f32 to vector<16x1xf32>
    %248 = arith.addf %244, %247 : vector<16x1xf32>
    %249 = math.rsqrt %248 : vector<16x1xf32>
    %250 = vector.broadcast %249 : vector<16x1xf32> to vector<16x32xf32>
    %251 = arith.mulf %246, %250 : vector<16x32xf32>
    %252 = vector.broadcast %3 : vector<1x32xf32> to vector<16x32xf32>
    %253 = arith.mulf %251, %252 : vector<16x32xf32>
    %254 = vector.broadcast %8 : vector<1x32xf32> to vector<16x32xf32>
    %255 = arith.addf %253, %254 : vector<16x32xf32>
    %cst_85 = arith.constant dense<0.000000e+00> : vector<16x64xf32>
    %256 = tpu.matmul %255, %17, %cst_85 {dimension_numbers = #tpu.dot_dimension_numbers<[1], [0], [0], [1], [0, 0, 1, 1], [], []>} : vector<16x32xf32>, vector<32x64xf32>, vector<16x64xf32> -> vector<16x64xf32>
    %257 = vector.broadcast %18 : vector<1x64xf32> to vector<16x64xf32>
    %258 = arith.addf %256, %257 : vector<16x64xf32>
    %cst_86 = arith.constant 5.000000e-01 : f32
    %259 = vector.broadcast %cst_86 : f32 to vector<16x64xf32>
    %260 = arith.mulf %259, %258 : vector<16x64xf32>
    %261 = arith.mulf %258, %258 : vector<16x64xf32>
    %262 = arith.mulf %261, %258 : vector<16x64xf32>
    %cst_87 = arith.constant 4.471500e-02 : f32
    %263 = vector.broadcast %cst_87 : f32 to vector<16x64xf32>
    %264 = arith.mulf %263, %262 : vector<16x64xf32>
    %265 = arith.addf %258, %264 : vector<16x64xf32>
    %cst_88 = arith.constant 0.797884583 : f32
    %266 = vector.broadcast %cst_88 : f32 to vector<16x64xf32>
    %267 = arith.mulf %266, %265 : vector<16x64xf32>
    %268 = math.tanh %267 : vector<16x64xf32>
    %cst_89 = arith.constant 1.000000e+00 : f32
    %269 = vector.broadcast %cst_89 : f32 to vector<16x64xf32>
    %270 = arith.addf %269, %268 : vector<16x64xf32>
    %271 = arith.mulf %260, %270 : vector<16x64xf32>
    %cst_90 = arith.constant dense<0.000000e+00> : vector<16x32xf32>
    %272 = tpu.matmul %271, %19, %cst_90 {dimension_numbers = #tpu.dot_dimension_numbers<[1], [0], [0], [1], [0, 0, 1, 1], [], []>} : vector<16x64xf32>, vector<64x32xf32>, vector<16x32xf32> -> vector<16x32xf32>
    %273 = vector.broadcast %20 : vector<1x32xf32> to vector<16x32xf32>
    %274 = arith.addf %272, %273 : vector<16x32xf32>
    %275 = arith.addf %255, %274 : vector<16x32xf32>
    %cst_91 = arith.constant dense<0.000000e+00> : vector<16xf32>
    %276 = vector.multi_reduction <add>, %275, %cst_91 [1] : vector<16x32xf32> to vector<16xf32>
    %277 = vector.shape_cast %276 : vector<16xf32> to vector<16x1xf32>
    %cst_92 = arith.constant 3.200000e+01 : f32
    %278 = vector.broadcast %cst_92 : f32 to vector<16x1xf32>
    %279 = arith.divf %277, %278 : vector<16x1xf32>
    %280 = vector.broadcast %279 : vector<16x1xf32> to vector<16x32xf32>
    %281 = arith.subf %275, %280 : vector<16x32xf32>
    %282 = arith.mulf %281, %281 : vector<16x32xf32>
    %cst_93 = arith.constant dense<0.000000e+00> : vector<16xf32>
    %283 = vector.multi_reduction <add>, %282, %cst_93 [1] : vector<16x32xf32> to vector<16xf32>
    %284 = vector.shape_cast %283 : vector<16xf32> to vector<16x1xf32>
    %cst_94 = arith.constant 3.200000e+01 : f32
    %285 = vector.broadcast %cst_94 : f32 to vector<16x1xf32>
    %286 = arith.divf %284, %285 : vector<16x1xf32>
    %287 = vector.broadcast %279 : vector<16x1xf32> to vector<16x32xf32>
    %288 = arith.subf %275, %287 : vector<16x32xf32>
    %cst_95 = arith.constant 9.99999974E-6 : f32
    %289 = vector.broadcast %cst_95 : f32 to vector<16x1xf32>
    %290 = arith.addf %286, %289 : vector<16x1xf32>
    %291 = math.rsqrt %290 : vector<16x1xf32>
    %292 = vector.broadcast %291 : vector<16x1xf32> to vector<16x32xf32>
    %293 = arith.mulf %288, %292 : vector<16x32xf32>
    %294 = vector.broadcast %4 : vector<1x32xf32> to vector<16x32xf32>
    %295 = arith.mulf %293, %294 : vector<16x32xf32>
    %296 = vector.broadcast %9 : vector<1x32xf32> to vector<16x32xf32>
    %297 = arith.addf %295, %296 : vector<16x32xf32>
    %cst_96 = arith.constant dense<0.000000e+00> : vector<16x64xf32>
    %298 = tpu.matmul %297, %27, %cst_96 {dimension_numbers = #tpu.dot_dimension_numbers<[1], [0], [0], [1], [0, 0, 1, 1], [], []>} : vector<16x32xf32>, vector<32x64xf32>, vector<16x64xf32> -> vector<16x64xf32>
    %299 = vector.broadcast %28 : vector<1x64xf32> to vector<16x64xf32>
    %300 = arith.addf %298, %299 : vector<16x64xf32>
    %301 = vector.extract_strided_slice %300 {offsets = [0, 0], sizes = [16, 32], strides = [1, 1]} : vector<16x64xf32> to vector<16x32xf32>
    %302 = vector.extract_strided_slice %300 {offsets = [0, 32], sizes = [16, 32], strides = [1, 1]} : vector<16x64xf32> to vector<16x32xf32>
    %303 = vector.extract_strided_slice %1 {offsets = [0, 0], sizes = [5, 32], strides = [1, 1]} : vector<16x32xf32> to vector<5x32xf32>
    %304 = tpu.iota {dimensions = array<i32: 1>} : vector<2x50xi32>
    %305 = tpu.iota {dimensions = array<i32: 1>} : vector<2x5xi32>
    %306 = tpu.iota {dimensions = array<i32: 0>} : vector<10x1xi32>
    %307 = tpu.iota {dimensions = array<i32: 0>} : vector<2x10xi32>
    %308 = tpu.iota {dimensions = array<i32: 1>} : vector<2x10xi32>
    %309 = tpu.iota {dimensions = array<i32: 0>} : vector<10x2xi32>
    %310 = tpu.iota {dimensions = array<i32: 1>} : vector<10x2xi32>
    %311 = vector.extract_strided_slice %39 {offsets = [0, 0], sizes = [2, 1], strides = [1, 1]} : vector<2x5xi32> to vector<2x1xi32>
    %312 = vector.broadcast %311 : vector<2x1xi32> to vector<2x50xi32>
    %313 = arith.cmpi eq, %312, %304 : vector<2x50xi32>
    %314 = arith.extui %313 : vector<2x50xi1> to vector<2x50xi32>
    %315 = arith.sitofp %314 : vector<2x50xi32> to vector<2x50xf32>
    %cst_97 = arith.constant dense<0.000000e+00> : vector<2x32xf32>
    %316 = tpu.matmul %315, %0, %cst_97 {dimension_numbers = #tpu.dot_dimension_numbers<[1], [0], [0], [1], [0, 0, 1, 1], [], []>} : vector<2x50xf32>, vector<50x32xf32>, vector<2x32xf32> -> vector<2x32xf32>
    %317 = vector.extract_strided_slice %0 {offsets = [1, 0], sizes = [1, 32], strides = [1, 1]} : vector<50x32xf32> to vector<1x32xf32>
    %c5_i32_98 = arith.constant 5 : i32
    %318 = vector.broadcast %c5_i32_98 : i32 to vector<10x2xi32>
    %319 = arith.muli %310, %318 : vector<10x2xi32>
    %320 = arith.cmpi eq, %309, %319 : vector<10x2xi32>
    %321 = arith.extui %320 : vector<10x2xi1> to vector<10x2xi32>
    %322 = arith.sitofp %321 : vector<10x2xi32> to vector<10x2xf32>
    %c0_i32_99 = arith.constant 0 : i32
    %323 = vector.broadcast %c0_i32_99 : i32 to vector<10x1xi32>
    %324 = arith.cmpi slt, %306, %323 : vector<10x1xi32>
    %c0_i32_100 = arith.constant 0 : i32
    %325 = vector.broadcast %c0_i32_100 : i32 to vector<10x1xi32>
    %326 = arith.cmpi eq, %306, %325 : vector<10x1xi32>
    %327 = arith.ori %324, %326 : vector<10x1xi1>
    %c5_i32_101 = arith.constant 5 : i32
    %328 = vector.broadcast %c5_i32_101 : i32 to vector<10x1xi32>
    %329 = arith.cmpi eq, %306, %328 : vector<10x1xi32>
    %330 = arith.ori %327, %329 : vector<10x1xi1>
    %cst_102 = arith.constant dense<0.000000e+00> : vector<10x32xf32>
    %331 = tpu.matmul %322, %316, %cst_102 {dimension_numbers = #tpu.dot_dimension_numbers<[1], [0], [0], [1], [0, 0, 1, 1], [], []>} : vector<10x2xf32>, vector<2x32xf32>, vector<10x32xf32> -> vector<10x32xf32>
    %332 = vector.shape_cast %330 : vector<10x1xi1> to vector<10x1xi1>
    %333 = vector.broadcast %332 : vector<10x1xi1> to vector<10x32xi1>
    %334 = vector.shape_cast %317 : vector<1x32xf32> to vector<1x32xf32>
    %335 = vector.broadcast %334 : vector<1x32xf32> to vector<10x32xf32>
    %336 = arith.select %333, %331, %335 : vector<10x32xi1>, vector<10x32xf32>
    %337 = tpu.concatenate %303, %303 in 0 : vector<5x32xf32>, vector<5x32xf32> -> vector<10x32xf32>
    %338 = arith.addf %336, %337 : vector<10x32xf32>
    %c0_i32_103 = arith.constant 0 : i32
    %339 = vector.broadcast %c0_i32_103 : i32 to vector<2x5xi32>
    %340 = arith.cmpi eq, %305, %339 : vector<2x5xi32>
    %c1_i32_104 = arith.constant 1 : i32
    %341 = vector.shape_cast %311 : vector<2x1xi32> to vector<2x1xi32>
    %342 = vector.broadcast %341 : vector<2x1xi32> to vector<2x5xi32>
    %343 = vector.broadcast %c1_i32_104 : i32 to vector<2x5xi32>
    %344 = arith.select %340, %342, %343 : vector<2x5xi1>, vector<2x5xi32>
    %c0_i32_105 = arith.constant 0 : i32
    %345 = vector.broadcast %c0_i32_105 : i32 to vector<2x1xi32>
    %cst_106 = arith.constant dense<0.000000e+00> : vector<10x96xf32>
    %346 = tpu.matmul %338, %21, %cst_106 {dimension_numbers = #tpu.dot_dimension_numbers<[1], [0], [0], [1], [0, 0, 1, 1], [], []>} : vector<10x32xf32>, vector<32x96xf32>, vector<10x96xf32> -> vector<10x96xf32>
    %347 = vector.broadcast %22 : vector<1x96xf32> to vector<10x96xf32>
    %348 = arith.addf %346, %347 : vector<10x96xf32>
    %349 = vector.extract_strided_slice %348 {offsets = [0, 0], sizes = [10, 32], strides = [1, 1]} : vector<10x96xf32> to vector<10x32xf32>
    %350 = vector.extract_strided_slice %348 {offsets = [0, 32], sizes = [10, 32], strides = [1, 1]} : vector<10x96xf32> to vector<10x32xf32>
    %351 = vector.extract_strided_slice %348 {offsets = [0, 64], sizes = [10, 32], strides = [1, 1]} : vector<10x96xf32> to vector<10x32xf32>
    %352 = vector.extract_strided_slice %349 {offsets = [0, 0], sizes = [10, 8], strides = [1, 1]} : vector<10x32xf32> to vector<10x8xf32>
    %353 = vector.extract_strided_slice %350 {offsets = [0, 0], sizes = [10, 8], strides = [1, 1]} : vector<10x32xf32> to vector<10x8xf32>
    %cst_107 = arith.constant dense<0.000000e+00> : vector<10x10xf32>
    %354 = tpu.matmul %352, %353, %cst_107 {dimension_numbers = #tpu.dot_dimension_numbers<[1], [1], [0], [0], [0, 0, 1, 0], [], []>} : vector<10x8xf32>, vector<10x8xf32>, vector<10x10xf32> -> vector<10x10xf32>
    %355 = arith.addf %354, %107 : vector<10x10xf32>
    %cst_108 = arith.constant dense<0xFF800000> : vector<10xf32>
    %356 = vector.multi_reduction <maximumf>, %355, %cst_108 [1] : vector<10x10xf32> to vector<10xf32>
    %357 = vector.shape_cast %356 : vector<10xf32> to vector<10x1xf32>
    %358 = vector.broadcast %357 : vector<10x1xf32> to vector<10x10xf32>
    %359 = arith.subf %355, %358 : vector<10x10xf32>
    %360 = math.exp %359 : vector<10x10xf32>
    %cst_109 = arith.constant dense<0.000000e+00> : vector<10xf32>
    %361 = vector.multi_reduction <add>, %360, %cst_109 [1] : vector<10x10xf32> to vector<10xf32>
    %362 = vector.shape_cast %361 : vector<10xf32> to vector<10x1xf32>
    %363 = tpu.reciprocal %362 {approx = true} : vector<10x1xf32> -> vector<10x1xf32>
    %364 = vector.broadcast %363 : vector<10x1xf32> to vector<10x10xf32>
    %365 = arith.mulf %360, %364 : vector<10x10xf32>
    %366 = vector.extract_strided_slice %351 {offsets = [0, 0], sizes = [10, 8], strides = [1, 1]} : vector<10x32xf32> to vector<10x8xf32>
    %cst_110 = arith.constant dense<0.000000e+00> : vector<10x8xf32>
    %367 = tpu.matmul %365, %366, %cst_110 {dimension_numbers = #tpu.dot_dimension_numbers<[1], [0], [0], [1], [0, 0, 1, 1], [], []>} : vector<10x10xf32>, vector<10x8xf32>, vector<10x8xf32> -> vector<10x8xf32>
    %368 = vector.extract_strided_slice %23 {offsets = [0, 0], sizes = [8, 32], strides = [1, 1]} : vector<32x32xf32> to vector<8x32xf32>
    %cst_111 = arith.constant dense<0.000000e+00> : vector<10x32xf32>
    %369 = tpu.matmul %367, %368, %cst_111 {dimension_numbers = #tpu.dot_dimension_numbers<[1], [0], [0], [1], [0, 0, 1, 1], [], []>} : vector<10x8xf32>, vector<8x32xf32>, vector<10x32xf32> -> vector<10x32xf32>
    %370 = vector.extract_strided_slice %349 {offsets = [0, 8], sizes = [10, 8], strides = [1, 1]} : vector<10x32xf32> to vector<10x8xf32>
    %371 = vector.extract_strided_slice %350 {offsets = [0, 8], sizes = [10, 8], strides = [1, 1]} : vector<10x32xf32> to vector<10x8xf32>
    %cst_112 = arith.constant dense<0.000000e+00> : vector<10x10xf32>
    %372 = tpu.matmul %370, %371, %cst_112 {dimension_numbers = #tpu.dot_dimension_numbers<[1], [1], [0], [0], [0, 0, 1, 0], [], []>} : vector<10x8xf32>, vector<10x8xf32>, vector<10x10xf32> -> vector<10x10xf32>
    %373 = arith.addf %372, %107 : vector<10x10xf32>
    %cst_113 = arith.constant dense<0xFF800000> : vector<10xf32>
    %374 = vector.multi_reduction <maximumf>, %373, %cst_113 [1] : vector<10x10xf32> to vector<10xf32>
    %375 = vector.shape_cast %374 : vector<10xf32> to vector<10x1xf32>
    %376 = vector.broadcast %375 : vector<10x1xf32> to vector<10x10xf32>
    %377 = arith.subf %373, %376 : vector<10x10xf32>
    %378 = math.exp %377 : vector<10x10xf32>
    %cst_114 = arith.constant dense<0.000000e+00> : vector<10xf32>
    %379 = vector.multi_reduction <add>, %378, %cst_114 [1] : vector<10x10xf32> to vector<10xf32>
    %380 = vector.shape_cast %379 : vector<10xf32> to vector<10x1xf32>
    %381 = tpu.reciprocal %380 {approx = true} : vector<10x1xf32> -> vector<10x1xf32>
    %382 = vector.broadcast %381 : vector<10x1xf32> to vector<10x10xf32>
    %383 = arith.mulf %378, %382 : vector<10x10xf32>
    %384 = vector.extract_strided_slice %351 {offsets = [0, 8], sizes = [10, 8], strides = [1, 1]} : vector<10x32xf32> to vector<10x8xf32>
    %cst_115 = arith.constant dense<0.000000e+00> : vector<10x8xf32>
    %385 = tpu.matmul %383, %384, %cst_115 {dimension_numbers = #tpu.dot_dimension_numbers<[1], [0], [0], [1], [0, 0, 1, 1], [], []>} : vector<10x10xf32>, vector<10x8xf32>, vector<10x8xf32> -> vector<10x8xf32>
    %386 = vector.extract_strided_slice %23 {offsets = [8, 0], sizes = [8, 32], strides = [1, 1]} : vector<32x32xf32> to vector<8x32xf32>
    %cst_116 = arith.constant dense<0.000000e+00> : vector<10x32xf32>
    %387 = tpu.matmul %385, %386, %cst_116 {dimension_numbers = #tpu.dot_dimension_numbers<[1], [0], [0], [1], [0, 0, 1, 1], [], []>} : vector<10x8xf32>, vector<8x32xf32>, vector<10x32xf32> -> vector<10x32xf32>
    %388 = arith.addf %369, %387 : vector<10x32xf32>
    %389 = vector.extract_strided_slice %349 {offsets = [0, 16], sizes = [10, 8], strides = [1, 1]} : vector<10x32xf32> to vector<10x8xf32>
    %390 = vector.extract_strided_slice %350 {offsets = [0, 16], sizes = [10, 8], strides = [1, 1]} : vector<10x32xf32> to vector<10x8xf32>
    %cst_117 = arith.constant dense<0.000000e+00> : vector<10x10xf32>
    %391 = tpu.matmul %389, %390, %cst_117 {dimension_numbers = #tpu.dot_dimension_numbers<[1], [1], [0], [0], [0, 0, 1, 0], [], []>} : vector<10x8xf32>, vector<10x8xf32>, vector<10x10xf32> -> vector<10x10xf32>
    %392 = arith.addf %391, %107 : vector<10x10xf32>
    %cst_118 = arith.constant dense<0xFF800000> : vector<10xf32>
    %393 = vector.multi_reduction <maximumf>, %392, %cst_118 [1] : vector<10x10xf32> to vector<10xf32>
    %394 = vector.shape_cast %393 : vector<10xf32> to vector<10x1xf32>
    %395 = vector.broadcast %394 : vector<10x1xf32> to vector<10x10xf32>
    %396 = arith.subf %392, %395 : vector<10x10xf32>
    %397 = math.exp %396 : vector<10x10xf32>
    %cst_119 = arith.constant dense<0.000000e+00> : vector<10xf32>
    %398 = vector.multi_reduction <add>, %397, %cst_119 [1] : vector<10x10xf32> to vector<10xf32>
    %399 = vector.shape_cast %398 : vector<10xf32> to vector<10x1xf32>
    %400 = tpu.reciprocal %399 {approx = true} : vector<10x1xf32> -> vector<10x1xf32>
    %401 = vector.broadcast %400 : vector<10x1xf32> to vector<10x10xf32>
    %402 = arith.mulf %397, %401 : vector<10x10xf32>
    %403 = vector.extract_strided_slice %351 {offsets = [0, 16], sizes = [10, 8], strides = [1, 1]} : vector<10x32xf32> to vector<10x8xf32>
    %cst_120 = arith.constant dense<0.000000e+00> : vector<10x8xf32>
    %404 = tpu.matmul %402, %403, %cst_120 {dimension_numbers = #tpu.dot_dimension_numbers<[1], [0], [0], [1], [0, 0, 1, 1], [], []>} : vector<10x10xf32>, vector<10x8xf32>, vector<10x8xf32> -> vector<10x8xf32>
    %405 = vector.extract_strided_slice %23 {offsets = [16, 0], sizes = [8, 32], strides = [1, 1]} : vector<32x32xf32> to vector<8x32xf32>
    %cst_121 = arith.constant dense<0.000000e+00> : vector<10x32xf32>
    %406 = tpu.matmul %404, %405, %cst_121 {dimension_numbers = #tpu.dot_dimension_numbers<[1], [0], [0], [1], [0, 0, 1, 1], [], []>} : vector<10x8xf32>, vector<8x32xf32>, vector<10x32xf32> -> vector<10x32xf32>
    %407 = arith.addf %388, %406 : vector<10x32xf32>
    %408 = vector.extract_strided_slice %349 {offsets = [0, 24], sizes = [10, 8], strides = [1, 1]} : vector<10x32xf32> to vector<10x8xf32>
    %409 = vector.extract_strided_slice %350 {offsets = [0, 24], sizes = [10, 8], strides = [1, 1]} : vector<10x32xf32> to vector<10x8xf32>
    %cst_122 = arith.constant dense<0.000000e+00> : vector<10x10xf32>
    %410 = tpu.matmul %408, %409, %cst_122 {dimension_numbers = #tpu.dot_dimension_numbers<[1], [1], [0], [0], [0, 0, 1, 0], [], []>} : vector<10x8xf32>, vector<10x8xf32>, vector<10x10xf32> -> vector<10x10xf32>
    %411 = arith.addf %410, %107 : vector<10x10xf32>
    %cst_123 = arith.constant dense<0xFF800000> : vector<10xf32>
    %412 = vector.multi_reduction <maximumf>, %411, %cst_123 [1] : vector<10x10xf32> to vector<10xf32>
    %413 = vector.shape_cast %412 : vector<10xf32> to vector<10x1xf32>
    %414 = vector.broadcast %413 : vector<10x1xf32> to vector<10x10xf32>
    %415 = arith.subf %411, %414 : vector<10x10xf32>
    %416 = math.exp %415 : vector<10x10xf32>
    %cst_124 = arith.constant dense<0.000000e+00> : vector<10xf32>
    %417 = vector.multi_reduction <add>, %416, %cst_124 [1] : vector<10x10xf32> to vector<10xf32>
    %418 = vector.shape_cast %417 : vector<10xf32> to vector<10x1xf32>
    %419 = tpu.reciprocal %418 {approx = true} : vector<10x1xf32> -> vector<10x1xf32>
    %420 = vector.broadcast %419 : vector<10x1xf32> to vector<10x10xf32>
    %421 = arith.mulf %416, %420 : vector<10x10xf32>
    %422 = vector.extract_strided_slice %351 {offsets = [0, 24], sizes = [10, 8], strides = [1, 1]} : vector<10x32xf32> to vector<10x8xf32>
    %cst_125 = arith.constant dense<0.000000e+00> : vector<10x8xf32>
    %423 = tpu.matmul %421, %422, %cst_125 {dimension_numbers = #tpu.dot_dimension_numbers<[1], [0], [0], [1], [0, 0, 1, 1], [], []>} : vector<10x10xf32>, vector<10x8xf32>, vector<10x8xf32> -> vector<10x8xf32>
    %424 = vector.extract_strided_slice %23 {offsets = [24, 0], sizes = [8, 32], strides = [1, 1]} : vector<32x32xf32> to vector<8x32xf32>
    %cst_126 = arith.constant dense<0.000000e+00> : vector<10x32xf32>
    %425 = tpu.matmul %423, %424, %cst_126 {dimension_numbers = #tpu.dot_dimension_numbers<[1], [0], [0], [1], [0, 0, 1, 1], [], []>} : vector<10x8xf32>, vector<8x32xf32>, vector<10x32xf32> -> vector<10x32xf32>
    %426 = arith.addf %407, %425 : vector<10x32xf32>
    %427 = vector.broadcast %24 : vector<1x32xf32> to vector<10x32xf32>
    %428 = arith.addf %426, %427 : vector<10x32xf32>
    %429 = arith.addf %338, %428 : vector<10x32xf32>
    %cst_127 = arith.constant dense<0.000000e+00> : vector<10xf32>
    %430 = vector.multi_reduction <add>, %429, %cst_127 [1] : vector<10x32xf32> to vector<10xf32>
    %431 = vector.shape_cast %430 : vector<10xf32> to vector<10x1xf32>
    %cst_128 = arith.constant 3.200000e+01 : f32
    %432 = vector.broadcast %cst_128 : f32 to vector<10x1xf32>
    %433 = arith.divf %431, %432 : vector<10x1xf32>
    %434 = vector.broadcast %433 : vector<10x1xf32> to vector<10x32xf32>
    %435 = arith.subf %429, %434 : vector<10x32xf32>
    %436 = arith.mulf %435, %435 : vector<10x32xf32>
    %cst_129 = arith.constant dense<0.000000e+00> : vector<10xf32>
    %437 = vector.multi_reduction <add>, %436, %cst_129 [1] : vector<10x32xf32> to vector<10xf32>
    %438 = vector.shape_cast %437 : vector<10xf32> to vector<10x1xf32>
    %cst_130 = arith.constant 3.200000e+01 : f32
    %439 = vector.broadcast %cst_130 : f32 to vector<10x1xf32>
    %440 = arith.divf %438, %439 : vector<10x1xf32>
    %441 = vector.broadcast %433 : vector<10x1xf32> to vector<10x32xf32>
    %442 = arith.subf %429, %441 : vector<10x32xf32>
    %cst_131 = arith.constant 9.99999974E-6 : f32
    %443 = vector.broadcast %cst_131 : f32 to vector<10x1xf32>
    %444 = arith.addf %440, %443 : vector<10x1xf32>
    %445 = math.rsqrt %444 : vector<10x1xf32>
    %446 = vector.broadcast %445 : vector<10x1xf32> to vector<10x32xf32>
    %447 = arith.mulf %442, %446 : vector<10x32xf32>
    %448 = vector.broadcast %5 : vector<1x32xf32> to vector<10x32xf32>
    %449 = arith.mulf %447, %448 : vector<10x32xf32>
    %450 = vector.broadcast %10 : vector<1x32xf32> to vector<10x32xf32>
    %451 = arith.addf %449, %450 : vector<10x32xf32>
    %cst_132 = arith.constant dense<0.000000e+00> : vector<10x32xf32>
    %452 = tpu.matmul %451, %25, %cst_132 {dimension_numbers = #tpu.dot_dimension_numbers<[1], [0], [0], [1], [0, 0, 1, 1], [], []>} : vector<10x32xf32>, vector<32x32xf32>, vector<10x32xf32> -> vector<10x32xf32>
    %453 = vector.broadcast %26 : vector<1x32xf32> to vector<10x32xf32>
    %454 = arith.addf %452, %453 : vector<10x32xf32>
    %455 = vector.extract_strided_slice %454 {offsets = [0, 0], sizes = [10, 8], strides = [1, 1]} : vector<10x32xf32> to vector<10x8xf32>
    %456 = vector.extract_strided_slice %301 {offsets = [0, 0], sizes = [16, 8], strides = [1, 1]} : vector<16x32xf32> to vector<16x8xf32>
    %cst_133 = arith.constant dense<0.000000e+00> : vector<10x16xf32>
    %457 = tpu.matmul %455, %456, %cst_133 {dimension_numbers = #tpu.dot_dimension_numbers<[1], [1], [0], [0], [0, 0, 1, 0], [], []>} : vector<10x8xf32>, vector<16x8xf32>, vector<10x16xf32> -> vector<10x16xf32>
    %458 = arith.addf %457, %140 : vector<10x16xf32>
    %cst_134 = arith.constant dense<0xFF800000> : vector<10xf32>
    %459 = vector.multi_reduction <maximumf>, %458, %cst_134 [1] : vector<10x16xf32> to vector<10xf32>
    %460 = vector.shape_cast %459 : vector<10xf32> to vector<10x1xf32>
    %461 = vector.broadcast %460 : vector<10x1xf32> to vector<10x16xf32>
    %462 = arith.subf %458, %461 : vector<10x16xf32>
    %463 = math.exp %462 : vector<10x16xf32>
    %cst_135 = arith.constant dense<0.000000e+00> : vector<10xf32>
    %464 = vector.multi_reduction <add>, %463, %cst_135 [1] : vector<10x16xf32> to vector<10xf32>
    %465 = vector.shape_cast %464 : vector<10xf32> to vector<10x1xf32>
    %466 = tpu.reciprocal %465 {approx = true} : vector<10x1xf32> -> vector<10x1xf32>
    %467 = vector.broadcast %466 : vector<10x1xf32> to vector<10x16xf32>
    %468 = arith.mulf %463, %467 : vector<10x16xf32>
    %469 = vector.extract_strided_slice %302 {offsets = [0, 0], sizes = [16, 8], strides = [1, 1]} : vector<16x32xf32> to vector<16x8xf32>
    %cst_136 = arith.constant dense<0.000000e+00> : vector<10x8xf32>
    %470 = tpu.matmul %468, %469, %cst_136 {dimension_numbers = #tpu.dot_dimension_numbers<[1], [0], [0], [1], [0, 0, 1, 1], [], []>} : vector<10x16xf32>, vector<16x8xf32>, vector<10x8xf32> -> vector<10x8xf32>
    %471 = vector.extract_strided_slice %29 {offsets = [0, 0], sizes = [8, 32], strides = [1, 1]} : vector<32x32xf32> to vector<8x32xf32>
    %cst_137 = arith.constant dense<0.000000e+00> : vector<10x32xf32>
    %472 = tpu.matmul %470, %471, %cst_137 {dimension_numbers = #tpu.dot_dimension_numbers<[1], [0], [0], [1], [0, 0, 1, 1], [], []>} : vector<10x8xf32>, vector<8x32xf32>, vector<10x32xf32> -> vector<10x32xf32>
    %473 = vector.extract_strided_slice %454 {offsets = [0, 8], sizes = [10, 8], strides = [1, 1]} : vector<10x32xf32> to vector<10x8xf32>
    %474 = vector.extract_strided_slice %301 {offsets = [0, 8], sizes = [16, 8], strides = [1, 1]} : vector<16x32xf32> to vector<16x8xf32>
    %cst_138 = arith.constant dense<0.000000e+00> : vector<10x16xf32>
    %475 = tpu.matmul %473, %474, %cst_138 {dimension_numbers = #tpu.dot_dimension_numbers<[1], [1], [0], [0], [0, 0, 1, 0], [], []>} : vector<10x8xf32>, vector<16x8xf32>, vector<10x16xf32> -> vector<10x16xf32>
    %476 = arith.addf %475, %140 : vector<10x16xf32>
    %cst_139 = arith.constant dense<0xFF800000> : vector<10xf32>
    %477 = vector.multi_reduction <maximumf>, %476, %cst_139 [1] : vector<10x16xf32> to vector<10xf32>
    %478 = vector.shape_cast %477 : vector<10xf32> to vector<10x1xf32>
    %479 = vector.broadcast %478 : vector<10x1xf32> to vector<10x16xf32>
    %480 = arith.subf %476, %479 : vector<10x16xf32>
    %481 = math.exp %480 : vector<10x16xf32>
    %cst_140 = arith.constant dense<0.000000e+00> : vector<10xf32>
    %482 = vector.multi_reduction <add>, %481, %cst_140 [1] : vector<10x16xf32> to vector<10xf32>
    %483 = vector.shape_cast %482 : vector<10xf32> to vector<10x1xf32>
    %484 = tpu.reciprocal %483 {approx = true} : vector<10x1xf32> -> vector<10x1xf32>
    %485 = vector.broadcast %484 : vector<10x1xf32> to vector<10x16xf32>
    %486 = arith.mulf %481, %485 : vector<10x16xf32>
    %487 = vector.extract_strided_slice %302 {offsets = [0, 8], sizes = [16, 8], strides = [1, 1]} : vector<16x32xf32> to vector<16x8xf32>
    %cst_141 = arith.constant dense<0.000000e+00> : vector<10x8xf32>
    %488 = tpu.matmul %486, %487, %cst_141 {dimension_numbers = #tpu.dot_dimension_numbers<[1], [0], [0], [1], [0, 0, 1, 1], [], []>} : vector<10x16xf32>, vector<16x8xf32>, vector<10x8xf32> -> vector<10x8xf32>
    %489 = vector.extract_strided_slice %29 {offsets = [8, 0], sizes = [8, 32], strides = [1, 1]} : vector<32x32xf32> to vector<8x32xf32>
    %cst_142 = arith.constant dense<0.000000e+00> : vector<10x32xf32>
    %490 = tpu.matmul %488, %489, %cst_142 {dimension_numbers = #tpu.dot_dimension_numbers<[1], [0], [0], [1], [0, 0, 1, 1], [], []>} : vector<10x8xf32>, vector<8x32xf32>, vector<10x32xf32> -> vector<10x32xf32>
    %491 = arith.addf %472, %490 : vector<10x32xf32>
    %492 = vector.extract_strided_slice %454 {offsets = [0, 16], sizes = [10, 8], strides = [1, 1]} : vector<10x32xf32> to vector<10x8xf32>
    %493 = vector.extract_strided_slice %301 {offsets = [0, 16], sizes = [16, 8], strides = [1, 1]} : vector<16x32xf32> to vector<16x8xf32>
    %cst_143 = arith.constant dense<0.000000e+00> : vector<10x16xf32>
    %494 = tpu.matmul %492, %493, %cst_143 {dimension_numbers = #tpu.dot_dimension_numbers<[1], [1], [0], [0], [0, 0, 1, 0], [], []>} : vector<10x8xf32>, vector<16x8xf32>, vector<10x16xf32> -> vector<10x16xf32>
    %495 = arith.addf %494, %140 : vector<10x16xf32>
    %cst_144 = arith.constant dense<0xFF800000> : vector<10xf32>
    %496 = vector.multi_reduction <maximumf>, %495, %cst_144 [1] : vector<10x16xf32> to vector<10xf32>
    %497 = vector.shape_cast %496 : vector<10xf32> to vector<10x1xf32>
    %498 = vector.broadcast %497 : vector<10x1xf32> to vector<10x16xf32>
    %499 = arith.subf %495, %498 : vector<10x16xf32>
    %500 = math.exp %499 : vector<10x16xf32>
    %cst_145 = arith.constant dense<0.000000e+00> : vector<10xf32>
    %501 = vector.multi_reduction <add>, %500, %cst_145 [1] : vector<10x16xf32> to vector<10xf32>
    %502 = vector.shape_cast %501 : vector<10xf32> to vector<10x1xf32>
    %503 = tpu.reciprocal %502 {approx = true} : vector<10x1xf32> -> vector<10x1xf32>
    %504 = vector.broadcast %503 : vector<10x1xf32> to vector<10x16xf32>
    %505 = arith.mulf %500, %504 : vector<10x16xf32>
    %506 = vector.extract_strided_slice %302 {offsets = [0, 16], sizes = [16, 8], strides = [1, 1]} : vector<16x32xf32> to vector<16x8xf32>
    %cst_146 = arith.constant dense<0.000000e+00> : vector<10x8xf32>
    %507 = tpu.matmul %505, %506, %cst_146 {dimension_numbers = #tpu.dot_dimension_numbers<[1], [0], [0], [1], [0, 0, 1, 1], [], []>} : vector<10x16xf32>, vector<16x8xf32>, vector<10x8xf32> -> vector<10x8xf32>
    %508 = vector.extract_strided_slice %29 {offsets = [16, 0], sizes = [8, 32], strides = [1, 1]} : vector<32x32xf32> to vector<8x32xf32>
    %cst_147 = arith.constant dense<0.000000e+00> : vector<10x32xf32>
    %509 = tpu.matmul %507, %508, %cst_147 {dimension_numbers = #tpu.dot_dimension_numbers<[1], [0], [0], [1], [0, 0, 1, 1], [], []>} : vector<10x8xf32>, vector<8x32xf32>, vector<10x32xf32> -> vector<10x32xf32>
    %510 = arith.addf %491, %509 : vector<10x32xf32>
    %511 = vector.extract_strided_slice %454 {offsets = [0, 24], sizes = [10, 8], strides = [1, 1]} : vector<10x32xf32> to vector<10x8xf32>
    %512 = vector.extract_strided_slice %301 {offsets = [0, 24], sizes = [16, 8], strides = [1, 1]} : vector<16x32xf32> to vector<16x8xf32>
    %cst_148 = arith.constant dense<0.000000e+00> : vector<10x16xf32>
    %513 = tpu.matmul %511, %512, %cst_148 {dimension_numbers = #tpu.dot_dimension_numbers<[1], [1], [0], [0], [0, 0, 1, 0], [], []>} : vector<10x8xf32>, vector<16x8xf32>, vector<10x16xf32> -> vector<10x16xf32>
    %514 = arith.addf %513, %140 : vector<10x16xf32>
    %cst_149 = arith.constant dense<0xFF800000> : vector<10xf32>
    %515 = vector.multi_reduction <maximumf>, %514, %cst_149 [1] : vector<10x16xf32> to vector<10xf32>
    %516 = vector.shape_cast %515 : vector<10xf32> to vector<10x1xf32>
    %517 = vector.broadcast %516 : vector<10x1xf32> to vector<10x16xf32>
    %518 = arith.subf %514, %517 : vector<10x16xf32>
    %519 = math.exp %518 : vector<10x16xf32>
    %cst_150 = arith.constant dense<0.000000e+00> : vector<10xf32>
    %520 = vector.multi_reduction <add>, %519, %cst_150 [1] : vector<10x16xf32> to vector<10xf32>
    %521 = vector.shape_cast %520 : vector<10xf32> to vector<10x1xf32>
    %522 = tpu.reciprocal %521 {approx = true} : vector<10x1xf32> -> vector<10x1xf32>
    %523 = vector.broadcast %522 : vector<10x1xf32> to vector<10x16xf32>
    %524 = arith.mulf %519, %523 : vector<10x16xf32>
    %525 = vector.extract_strided_slice %302 {offsets = [0, 24], sizes = [16, 8], strides = [1, 1]} : vector<16x32xf32> to vector<16x8xf32>
    %cst_151 = arith.constant dense<0.000000e+00> : vector<10x8xf32>
    %526 = tpu.matmul %524, %525, %cst_151 {dimension_numbers = #tpu.dot_dimension_numbers<[1], [0], [0], [1], [0, 0, 1, 1], [], []>} : vector<10x16xf32>, vector<16x8xf32>, vector<10x8xf32> -> vector<10x8xf32>
    %527 = vector.extract_strided_slice %29 {offsets = [24, 0], sizes = [8, 32], strides = [1, 1]} : vector<32x32xf32> to vector<8x32xf32>
    %cst_152 = arith.constant dense<0.000000e+00> : vector<10x32xf32>
    %528 = tpu.matmul %526, %527, %cst_152 {dimension_numbers = #tpu.dot_dimension_numbers<[1], [0], [0], [1], [0, 0, 1, 1], [], []>} : vector<10x8xf32>, vector<8x32xf32>, vector<10x32xf32> -> vector<10x32xf32>
    %529 = arith.addf %510, %528 : vector<10x32xf32>
    %530 = vector.broadcast %30 : vector<1x32xf32> to vector<10x32xf32>
    %531 = arith.addf %529, %530 : vector<10x32xf32>
    %532 = arith.addf %451, %531 : vector<10x32xf32>
    %cst_153 = arith.constant dense<0.000000e+00> : vector<10xf32>
    %533 = vector.multi_reduction <add>, %532, %cst_153 [1] : vector<10x32xf32> to vector<10xf32>
    %534 = vector.shape_cast %533 : vector<10xf32> to vector<10x1xf32>
    %cst_154 = arith.constant 3.200000e+01 : f32
    %535 = vector.broadcast %cst_154 : f32 to vector<10x1xf32>
    %536 = arith.divf %534, %535 : vector<10x1xf32>
    %537 = vector.broadcast %536 : vector<10x1xf32> to vector<10x32xf32>
    %538 = arith.subf %532, %537 : vector<10x32xf32>
    %539 = arith.mulf %538, %538 : vector<10x32xf32>
    %cst_155 = arith.constant dense<0.000000e+00> : vector<10xf32>
    %540 = vector.multi_reduction <add>, %539, %cst_155 [1] : vector<10x32xf32> to vector<10xf32>
    %541 = vector.shape_cast %540 : vector<10xf32> to vector<10x1xf32>
    %cst_156 = arith.constant 3.200000e+01 : f32
    %542 = vector.broadcast %cst_156 : f32 to vector<10x1xf32>
    %543 = arith.divf %541, %542 : vector<10x1xf32>
    %544 = vector.broadcast %536 : vector<10x1xf32> to vector<10x32xf32>
    %545 = arith.subf %532, %544 : vector<10x32xf32>
    %cst_157 = arith.constant 9.99999974E-6 : f32
    %546 = vector.broadcast %cst_157 : f32 to vector<10x1xf32>
    %547 = arith.addf %543, %546 : vector<10x1xf32>
    %548 = math.rsqrt %547 : vector<10x1xf32>
    %549 = vector.broadcast %548 : vector<10x1xf32> to vector<10x32xf32>
    %550 = arith.mulf %545, %549 : vector<10x32xf32>
    %551 = vector.broadcast %6 : vector<1x32xf32> to vector<10x32xf32>
    %552 = arith.mulf %550, %551 : vector<10x32xf32>
    %553 = vector.broadcast %11 : vector<1x32xf32> to vector<10x32xf32>
    %554 = arith.addf %552, %553 : vector<10x32xf32>
    %cst_158 = arith.constant dense<0.000000e+00> : vector<10x64xf32>
    %555 = tpu.matmul %554, %31, %cst_158 {dimension_numbers = #tpu.dot_dimension_numbers<[1], [0], [0], [1], [0, 0, 1, 1], [], []>} : vector<10x32xf32>, vector<32x64xf32>, vector<10x64xf32> -> vector<10x64xf32>
    %556 = vector.broadcast %32 : vector<1x64xf32> to vector<10x64xf32>
    %557 = arith.addf %555, %556 : vector<10x64xf32>
    %cst_159 = arith.constant 5.000000e-01 : f32
    %558 = vector.broadcast %cst_159 : f32 to vector<10x64xf32>
    %559 = arith.mulf %558, %557 : vector<10x64xf32>
    %560 = arith.mulf %557, %557 : vector<10x64xf32>
    %561 = arith.mulf %560, %557 : vector<10x64xf32>
    %cst_160 = arith.constant 4.471500e-02 : f32
    %562 = vector.broadcast %cst_160 : f32 to vector<10x64xf32>
    %563 = arith.mulf %562, %561 : vector<10x64xf32>
    %564 = arith.addf %557, %563 : vector<10x64xf32>
    %cst_161 = arith.constant 0.797884583 : f32
    %565 = vector.broadcast %cst_161 : f32 to vector<10x64xf32>
    %566 = arith.mulf %565, %564 : vector<10x64xf32>
    %567 = math.tanh %566 : vector<10x64xf32>
    %cst_162 = arith.constant 1.000000e+00 : f32
    %568 = vector.broadcast %cst_162 : f32 to vector<10x64xf32>
    %569 = arith.addf %568, %567 : vector<10x64xf32>
    %570 = arith.mulf %559, %569 : vector<10x64xf32>
    %cst_163 = arith.constant dense<0.000000e+00> : vector<10x32xf32>
    %571 = tpu.matmul %570, %33, %cst_163 {dimension_numbers = #tpu.dot_dimension_numbers<[1], [0], [0], [1], [0, 0, 1, 1], [], []>} : vector<10x64xf32>, vector<64x32xf32>, vector<10x32xf32> -> vector<10x32xf32>
    %572 = vector.broadcast %34 : vector<1x32xf32> to vector<10x32xf32>
    %573 = arith.addf %571, %572 : vector<10x32xf32>
    %574 = arith.addf %554, %573 : vector<10x32xf32>
    %cst_164 = arith.constant dense<0.000000e+00> : vector<10xf32>
    %575 = vector.multi_reduction <add>, %574, %cst_164 [1] : vector<10x32xf32> to vector<10xf32>
    %576 = vector.shape_cast %575 : vector<10xf32> to vector<10x1xf32>
    %cst_165 = arith.constant 3.200000e+01 : f32
    %577 = vector.broadcast %cst_165 : f32 to vector<10x1xf32>
    %578 = arith.divf %576, %577 : vector<10x1xf32>
    %579 = vector.broadcast %578 : vector<10x1xf32> to vector<10x32xf32>
    %580 = arith.subf %574, %579 : vector<10x32xf32>
    %581 = arith.mulf %580, %580 : vector<10x32xf32>
    %cst_166 = arith.constant dense<0.000000e+00> : vector<10xf32>
    %582 = vector.multi_reduction <add>, %581, %cst_166 [1] : vector<10x32xf32> to vector<10xf32>
    %583 = vector.shape_cast %582 : vector<10xf32> to vector<10x1xf32>
    %cst_167 = arith.constant 3.200000e+01 : f32
    %584 = vector.broadcast %cst_167 : f32 to vector<10x1xf32>
    %585 = arith.divf %583, %584 : vector<10x1xf32>
    %586 = vector.broadcast %578 : vector<10x1xf32> to vector<10x32xf32>
    %587 = arith.subf %574, %586 : vector<10x32xf32>
    %cst_168 = arith.constant 9.99999974E-6 : f32
    %588 = vector.broadcast %cst_168 : f32 to vector<10x1xf32>
    %589 = arith.addf %585, %588 : vector<10x1xf32>
    %590 = math.rsqrt %589 : vector<10x1xf32>
    %591 = vector.broadcast %590 : vector<10x1xf32> to vector<10x32xf32>
    %592 = arith.mulf %587, %591 : vector<10x32xf32>
    %593 = vector.broadcast %7 : vector<1x32xf32> to vector<10x32xf32>
    %594 = arith.mulf %592, %593 : vector<10x32xf32>
    %595 = vector.broadcast %12 : vector<1x32xf32> to vector<10x32xf32>
    %596 = arith.addf %594, %595 : vector<10x32xf32>
    %c5_i32_169 = arith.constant 5 : i32
    %597 = vector.broadcast %c5_i32_169 : i32 to vector<2x10xi32>
    %598 = arith.muli %307, %597 : vector<2x10xi32>
    %c0_i32_170 = arith.constant 0 : i32
    %599 = vector.broadcast %c0_i32_170 : i32 to vector<2x10xi32>
    %600 = arith.addi %598, %599 : vector<2x10xi32>
    %601 = arith.cmpi eq, %308, %600 : vector<2x10xi32>
    %602 = arith.extui %601 : vector<2x10xi1> to vector<2x10xi32>
    %603 = arith.sitofp %602 : vector<2x10xi32> to vector<2x10xf32>
    %cst_171 = arith.constant dense<0.000000e+00> : vector<2x32xf32>
    %604 = tpu.matmul %603, %596, %cst_171 {dimension_numbers = #tpu.dot_dimension_numbers<[1], [0], [0], [1], [0, 0, 1, 1], [], []>} : vector<2x10xf32>, vector<10x32xf32>, vector<2x32xf32> -> vector<2x32xf32>
    %cst_172 = arith.constant dense<0.000000e+00> : vector<2x50xf32>
    %605 = tpu.matmul %604, %35, %cst_172 {dimension_numbers = #tpu.dot_dimension_numbers<[1], [0], [0], [1], [0, 0, 1, 1], [], []>} : vector<2x32xf32>, vector<32x50xf32>, vector<2x50xf32> -> vector<2x50xf32>
    %606 = vector.broadcast %36 : vector<1x50xf32> to vector<2x50xf32>
    %607 = arith.addf %605, %606 : vector<2x50xf32>
    %cst_173 = arith.constant dense<0xFF800000> : vector<2xf32>
    %608 = vector.multi_reduction <maximumf>, %607, %cst_173 [1] : vector<2x50xf32> to vector<2xf32>
    %609 = vector.shape_cast %608 : vector<2xf32> to vector<2x1xf32>
    %610 = vector.broadcast %609 : vector<2x1xf32> to vector<2x50xf32>
    %611 = arith.cmpf oge, %607, %610 : vector<2x50xf32>
    %c50_i32 = arith.constant 50 : i32
    %612 = vector.broadcast %c50_i32 : i32 to vector<2x50xi32>
    %613 = arith.select %611, %304, %612 : vector<2x50xi1>, vector<2x50xi32>
    %cst_174 = arith.constant dense<2147483647> : vector<2xi32>
    %614 = vector.multi_reduction <minsi>, %613, %cst_174 [1] : vector<2x50xi32> to vector<2xi32>
    %615 = vector.shape_cast %614 : vector<2xi32> to vector<2x1xi32>
    %c0_i32_175 = arith.constant 0 : i32
    %616 = vector.broadcast %c0_i32_175 : i32 to vector<2x1xi32>
    %617 = arith.cmpi sgt, %345, %616 : vector<2x1xi32>
    %c1_i32_176 = arith.constant 1 : i32
    %618 = vector.broadcast %c1_i32_176 : i32 to vector<2x1xi32>
    %619 = arith.select %617, %618, %615 : vector<2x1xi1>, vector<2x1xi32>
    %c2_i32 = arith.constant 2 : i32
    %620 = vector.broadcast %c2_i32 : i32 to vector<2x1xi32>
    %621 = arith.cmpi eq, %619, %620 : vector<2x1xi32>
    %622 = arith.extui %621 : vector<2x1xi1> to vector<2x1xi32>
    %623 = arith.ori %345, %622 : vector<2x1xi32>
    %c1_i32_177 = arith.constant 1 : i32
    %624 = vector.broadcast %c1_i32_177 : i32 to vector<2x5xi32>
    %625 = arith.cmpi eq, %305, %624 : vector<2x5xi32>
    %626 = vector.shape_cast %619 : vector<2x1xi32> to vector<2x1xi32>
    %627 = vector.broadcast %626 : vector<2x1xi32> to vector<2x5xi32>
    %628 = arith.select %625, %627, %344 : vector<2x5xi1>, vector<2x5xi32>
    %629 = vector.broadcast %619 : vector<2x1xi32> to vector<2x50xi32>
    %630 = arith.cmpi eq, %629, %304 : vector<2x50xi32>
    %631 = arith.extui %630 : vector<2x50xi1> to vector<2x50xi32>
    %632 = arith.sitofp %631 : vector<2x50xi32> to vector<2x50xf32>
    %cst_178 = arith.constant dense<0.000000e+00> : vector<2x32xf32>
    %633 = tpu.matmul %632, %0, %cst_178 {dimension_numbers = #tpu.dot_dimension_numbers<[1], [0], [0], [1], [0, 0, 1, 1], [], []>} : vector<2x50xf32>, vector<50x32xf32>, vector<2x32xf32> -> vector<2x32xf32>
    %634 = vector.extract_strided_slice %303 {offsets = [1, 0], sizes = [1, 32], strides = [1, 1]} : vector<5x32xf32> to vector<1x32xf32>
    %635 = vector.broadcast %634 : vector<1x32xf32> to vector<2x32xf32>
    %636 = arith.addf %633, %635 : vector<2x32xf32>
    %c5_i32_179 = arith.constant 5 : i32
    %637 = vector.broadcast %c5_i32_179 : i32 to vector<10x2xi32>
    %638 = arith.muli %310, %637 : vector<10x2xi32>
    %c1_i32_180 = arith.constant 1 : i32
    %639 = vector.broadcast %c1_i32_180 : i32 to vector<10x2xi32>
    %640 = arith.addi %638, %639 : vector<10x2xi32>
    %641 = arith.cmpi eq, %309, %640 : vector<10x2xi32>
    %642 = arith.extui %641 : vector<10x2xi1> to vector<10x2xi32>
    %643 = arith.sitofp %642 : vector<10x2xi32> to vector<10x2xf32>
    %c0_i32_181 = arith.constant 0 : i32
    %644 = vector.broadcast %c0_i32_181 : i32 to vector<10x1xi32>
    %645 = arith.cmpi slt, %306, %644 : vector<10x1xi32>
    %c1_i32_182 = arith.constant 1 : i32
    %646 = vector.broadcast %c1_i32_182 : i32 to vector<10x1xi32>
    %647 = arith.cmpi eq, %306, %646 : vector<10x1xi32>
    %648 = arith.ori %645, %647 : vector<10x1xi1>
    %c6_i32 = arith.constant 6 : i32
    %649 = vector.broadcast %c6_i32 : i32 to vector<10x1xi32>
    %650 = arith.cmpi eq, %306, %649 : vector<10x1xi32>
    %651 = arith.ori %648, %650 : vector<10x1xi1>
    %cst_183 = arith.constant dense<0.000000e+00> : vector<10x32xf32>
    %652 = tpu.matmul %643, %636, %cst_183 {dimension_numbers = #tpu.dot_dimension_numbers<[1], [0], [0], [1], [0, 0, 1, 1], [], []>} : vector<10x2xf32>, vector<2x32xf32>, vector<10x32xf32> -> vector<10x32xf32>
    %653 = vector.shape_cast %651 : vector<10x1xi1> to vector<10x1xi1>
    %654 = vector.broadcast %653 : vector<10x1xi1> to vector<10x32xi1>
    %655 = arith.select %654, %652, %338 : vector<10x32xi1>, vector<10x32xf32>
    %cst_184 = arith.constant dense<0.000000e+00> : vector<10x96xf32>
    %656 = tpu.matmul %655, %21, %cst_184 {dimension_numbers = #tpu.dot_dimension_numbers<[1], [0], [0], [1], [0, 0, 1, 1], [], []>} : vector<10x32xf32>, vector<32x96xf32>, vector<10x96xf32> -> vector<10x96xf32>
    %657 = vector.broadcast %22 : vector<1x96xf32> to vector<10x96xf32>
    %658 = arith.addf %656, %657 : vector<10x96xf32>
    %659 = vector.extract_strided_slice %658 {offsets = [0, 0], sizes = [10, 32], strides = [1, 1]} : vector<10x96xf32> to vector<10x32xf32>
    %660 = vector.extract_strided_slice %658 {offsets = [0, 32], sizes = [10, 32], strides = [1, 1]} : vector<10x96xf32> to vector<10x32xf32>
    %661 = vector.extract_strided_slice %658 {offsets = [0, 64], sizes = [10, 32], strides = [1, 1]} : vector<10x96xf32> to vector<10x32xf32>
    %662 = vector.extract_strided_slice %659 {offsets = [0, 0], sizes = [10, 8], strides = [1, 1]} : vector<10x32xf32> to vector<10x8xf32>
    %663 = vector.extract_strided_slice %660 {offsets = [0, 0], sizes = [10, 8], strides = [1, 1]} : vector<10x32xf32> to vector<10x8xf32>
    %cst_185 = arith.constant dense<0.000000e+00> : vector<10x10xf32>
    %664 = tpu.matmul %662, %663, %cst_185 {dimension_numbers = #tpu.dot_dimension_numbers<[1], [1], [0], [0], [0, 0, 1, 0], [], []>} : vector<10x8xf32>, vector<10x8xf32>, vector<10x10xf32> -> vector<10x10xf32>
    %665 = arith.addf %664, %107 : vector<10x10xf32>
    %cst_186 = arith.constant dense<0xFF800000> : vector<10xf32>
    %666 = vector.multi_reduction <maximumf>, %665, %cst_186 [1] : vector<10x10xf32> to vector<10xf32>
    %667 = vector.shape_cast %666 : vector<10xf32> to vector<10x1xf32>
    %668 = vector.broadcast %667 : vector<10x1xf32> to vector<10x10xf32>
    %669 = arith.subf %665, %668 : vector<10x10xf32>
    %670 = math.exp %669 : vector<10x10xf32>
    %cst_187 = arith.constant dense<0.000000e+00> : vector<10xf32>
    %671 = vector.multi_reduction <add>, %670, %cst_187 [1] : vector<10x10xf32> to vector<10xf32>
    %672 = vector.shape_cast %671 : vector<10xf32> to vector<10x1xf32>
    %673 = tpu.reciprocal %672 {approx = true} : vector<10x1xf32> -> vector<10x1xf32>
    %674 = vector.broadcast %673 : vector<10x1xf32> to vector<10x10xf32>
    %675 = arith.mulf %670, %674 : vector<10x10xf32>
    %676 = vector.extract_strided_slice %661 {offsets = [0, 0], sizes = [10, 8], strides = [1, 1]} : vector<10x32xf32> to vector<10x8xf32>
    %cst_188 = arith.constant dense<0.000000e+00> : vector<10x8xf32>
    %677 = tpu.matmul %675, %676, %cst_188 {dimension_numbers = #tpu.dot_dimension_numbers<[1], [0], [0], [1], [0, 0, 1, 1], [], []>} : vector<10x10xf32>, vector<10x8xf32>, vector<10x8xf32> -> vector<10x8xf32>
    %678 = vector.extract_strided_slice %23 {offsets = [0, 0], sizes = [8, 32], strides = [1, 1]} : vector<32x32xf32> to vector<8x32xf32>
    %cst_189 = arith.constant dense<0.000000e+00> : vector<10x32xf32>
    %679 = tpu.matmul %677, %678, %cst_189 {dimension_numbers = #tpu.dot_dimension_numbers<[1], [0], [0], [1], [0, 0, 1, 1], [], []>} : vector<10x8xf32>, vector<8x32xf32>, vector<10x32xf32> -> vector<10x32xf32>
    %680 = vector.extract_strided_slice %659 {offsets = [0, 8], sizes = [10, 8], strides = [1, 1]} : vector<10x32xf32> to vector<10x8xf32>
    %681 = vector.extract_strided_slice %660 {offsets = [0, 8], sizes = [10, 8], strides = [1, 1]} : vector<10x32xf32> to vector<10x8xf32>
    %cst_190 = arith.constant dense<0.000000e+00> : vector<10x10xf32>
    %682 = tpu.matmul %680, %681, %cst_190 {dimension_numbers = #tpu.dot_dimension_numbers<[1], [1], [0], [0], [0, 0, 1, 0], [], []>} : vector<10x8xf32>, vector<10x8xf32>, vector<10x10xf32> -> vector<10x10xf32>
    %683 = arith.addf %682, %107 : vector<10x10xf32>
    %cst_191 = arith.constant dense<0xFF800000> : vector<10xf32>
    %684 = vector.multi_reduction <maximumf>, %683, %cst_191 [1] : vector<10x10xf32> to vector<10xf32>
    %685 = vector.shape_cast %684 : vector<10xf32> to vector<10x1xf32>
    %686 = vector.broadcast %685 : vector<10x1xf32> to vector<10x10xf32>
    %687 = arith.subf %683, %686 : vector<10x10xf32>
    %688 = math.exp %687 : vector<10x10xf32>
    %cst_192 = arith.constant dense<0.000000e+00> : vector<10xf32>
    %689 = vector.multi_reduction <add>, %688, %cst_192 [1] : vector<10x10xf32> to vector<10xf32>
    %690 = vector.shape_cast %689 : vector<10xf32> to vector<10x1xf32>
    %691 = tpu.reciprocal %690 {approx = true} : vector<10x1xf32> -> vector<10x1xf32>
    %692 = vector.broadcast %691 : vector<10x1xf32> to vector<10x10xf32>
    %693 = arith.mulf %688, %692 : vector<10x10xf32>
    %694 = vector.extract_strided_slice %661 {offsets = [0, 8], sizes = [10, 8], strides = [1, 1]} : vector<10x32xf32> to vector<10x8xf32>
    %cst_193 = arith.constant dense<0.000000e+00> : vector<10x8xf32>
    %695 = tpu.matmul %693, %694, %cst_193 {dimension_numbers = #tpu.dot_dimension_numbers<[1], [0], [0], [1], [0, 0, 1, 1], [], []>} : vector<10x10xf32>, vector<10x8xf32>, vector<10x8xf32> -> vector<10x8xf32>
    %696 = vector.extract_strided_slice %23 {offsets = [8, 0], sizes = [8, 32], strides = [1, 1]} : vector<32x32xf32> to vector<8x32xf32>
    %cst_194 = arith.constant dense<0.000000e+00> : vector<10x32xf32>
    %697 = tpu.matmul %695, %696, %cst_194 {dimension_numbers = #tpu.dot_dimension_numbers<[1], [0], [0], [1], [0, 0, 1, 1], [], []>} : vector<10x8xf32>, vector<8x32xf32>, vector<10x32xf32> -> vector<10x32xf32>
    %698 = arith.addf %679, %697 : vector<10x32xf32>
    %699 = vector.extract_strided_slice %659 {offsets = [0, 16], sizes = [10, 8], strides = [1, 1]} : vector<10x32xf32> to vector<10x8xf32>
    %700 = vector.extract_strided_slice %660 {offsets = [0, 16], sizes = [10, 8], strides = [1, 1]} : vector<10x32xf32> to vector<10x8xf32>
    %cst_195 = arith.constant dense<0.000000e+00> : vector<10x10xf32>
    %701 = tpu.matmul %699, %700, %cst_195 {dimension_numbers = #tpu.dot_dimension_numbers<[1], [1], [0], [0], [0, 0, 1, 0], [], []>} : vector<10x8xf32>, vector<10x8xf32>, vector<10x10xf32> -> vector<10x10xf32>
    %702 = arith.addf %701, %107 : vector<10x10xf32>
    %cst_196 = arith.constant dense<0xFF800000> : vector<10xf32>
    %703 = vector.multi_reduction <maximumf>, %702, %cst_196 [1] : vector<10x10xf32> to vector<10xf32>
    %704 = vector.shape_cast %703 : vector<10xf32> to vector<10x1xf32>
    %705 = vector.broadcast %704 : vector<10x1xf32> to vector<10x10xf32>
    %706 = arith.subf %702, %705 : vector<10x10xf32>
    %707 = math.exp %706 : vector<10x10xf32>
    %cst_197 = arith.constant dense<0.000000e+00> : vector<10xf32>
    %708 = vector.multi_reduction <add>, %707, %cst_197 [1] : vector<10x10xf32> to vector<10xf32>
    %709 = vector.shape_cast %708 : vector<10xf32> to vector<10x1xf32>
    %710 = tpu.reciprocal %709 {approx = true} : vector<10x1xf32> -> vector<10x1xf32>
    %711 = vector.broadcast %710 : vector<10x1xf32> to vector<10x10xf32>
    %712 = arith.mulf %707, %711 : vector<10x10xf32>
    %713 = vector.extract_strided_slice %661 {offsets = [0, 16], sizes = [10, 8], strides = [1, 1]} : vector<10x32xf32> to vector<10x8xf32>
    %cst_198 = arith.constant dense<0.000000e+00> : vector<10x8xf32>
    %714 = tpu.matmul %712, %713, %cst_198 {dimension_numbers = #tpu.dot_dimension_numbers<[1], [0], [0], [1], [0, 0, 1, 1], [], []>} : vector<10x10xf32>, vector<10x8xf32>, vector<10x8xf32> -> vector<10x8xf32>
    %715 = vector.extract_strided_slice %23 {offsets = [16, 0], sizes = [8, 32], strides = [1, 1]} : vector<32x32xf32> to vector<8x32xf32>
    %cst_199 = arith.constant dense<0.000000e+00> : vector<10x32xf32>
    %716 = tpu.matmul %714, %715, %cst_199 {dimension_numbers = #tpu.dot_dimension_numbers<[1], [0], [0], [1], [0, 0, 1, 1], [], []>} : vector<10x8xf32>, vector<8x32xf32>, vector<10x32xf32> -> vector<10x32xf32>
    %717 = arith.addf %698, %716 : vector<10x32xf32>
    %718 = vector.extract_strided_slice %659 {offsets = [0, 24], sizes = [10, 8], strides = [1, 1]} : vector<10x32xf32> to vector<10x8xf32>
    %719 = vector.extract_strided_slice %660 {offsets = [0, 24], sizes = [10, 8], strides = [1, 1]} : vector<10x32xf32> to vector<10x8xf32>
    %cst_200 = arith.constant dense<0.000000e+00> : vector<10x10xf32>
    %720 = tpu.matmul %718, %719, %cst_200 {dimension_numbers = #tpu.dot_dimension_numbers<[1], [1], [0], [0], [0, 0, 1, 0], [], []>} : vector<10x8xf32>, vector<10x8xf32>, vector<10x10xf32> -> vector<10x10xf32>
    %721 = arith.addf %720, %107 : vector<10x10xf32>
    %cst_201 = arith.constant dense<0xFF800000> : vector<10xf32>
    %722 = vector.multi_reduction <maximumf>, %721, %cst_201 [1] : vector<10x10xf32> to vector<10xf32>
    %723 = vector.shape_cast %722 : vector<10xf32> to vector<10x1xf32>
    %724 = vector.broadcast %723 : vector<10x1xf32> to vector<10x10xf32>
    %725 = arith.subf %721, %724 : vector<10x10xf32>
    %726 = math.exp %725 : vector<10x10xf32>
    %cst_202 = arith.constant dense<0.000000e+00> : vector<10xf32>
    %727 = vector.multi_reduction <add>, %726, %cst_202 [1] : vector<10x10xf32> to vector<10xf32>
    %728 = vector.shape_cast %727 : vector<10xf32> to vector<10x1xf32>
    %729 = tpu.reciprocal %728 {approx = true} : vector<10x1xf32> -> vector<10x1xf32>
    %730 = vector.broadcast %729 : vector<10x1xf32> to vector<10x10xf32>
    %731 = arith.mulf %726, %730 : vector<10x10xf32>
    %732 = vector.extract_strided_slice %661 {offsets = [0, 24], sizes = [10, 8], strides = [1, 1]} : vector<10x32xf32> to vector<10x8xf32>
    %cst_203 = arith.constant dense<0.000000e+00> : vector<10x8xf32>
    %733 = tpu.matmul %731, %732, %cst_203 {dimension_numbers = #tpu.dot_dimension_numbers<[1], [0], [0], [1], [0, 0, 1, 1], [], []>} : vector<10x10xf32>, vector<10x8xf32>, vector<10x8xf32> -> vector<10x8xf32>
    %734 = vector.extract_strided_slice %23 {offsets = [24, 0], sizes = [8, 32], strides = [1, 1]} : vector<32x32xf32> to vector<8x32xf32>
    %cst_204 = arith.constant dense<0.000000e+00> : vector<10x32xf32>
    %735 = tpu.matmul %733, %734, %cst_204 {dimension_numbers = #tpu.dot_dimension_numbers<[1], [0], [0], [1], [0, 0, 1, 1], [], []>} : vector<10x8xf32>, vector<8x32xf32>, vector<10x32xf32> -> vector<10x32xf32>
    %736 = arith.addf %717, %735 : vector<10x32xf32>
    %737 = vector.broadcast %24 : vector<1x32xf32> to vector<10x32xf32>
    %738 = arith.addf %736, %737 : vector<10x32xf32>
    %739 = arith.addf %655, %738 : vector<10x32xf32>
    %cst_205 = arith.constant dense<0.000000e+00> : vector<10xf32>
    %740 = vector.multi_reduction <add>, %739, %cst_205 [1] : vector<10x32xf32> to vector<10xf32>
    %741 = vector.shape_cast %740 : vector<10xf32> to vector<10x1xf32>
    %cst_206 = arith.constant 3.200000e+01 : f32
    %742 = vector.broadcast %cst_206 : f32 to vector<10x1xf32>
    %743 = arith.divf %741, %742 : vector<10x1xf32>
    %744 = vector.broadcast %743 : vector<10x1xf32> to vector<10x32xf32>
    %745 = arith.subf %739, %744 : vector<10x32xf32>
    %746 = arith.mulf %745, %745 : vector<10x32xf32>
    %cst_207 = arith.constant dense<0.000000e+00> : vector<10xf32>
    %747 = vector.multi_reduction <add>, %746, %cst_207 [1] : vector<10x32xf32> to vector<10xf32>
    %748 = vector.shape_cast %747 : vector<10xf32> to vector<10x1xf32>
    %cst_208 = arith.constant 3.200000e+01 : f32
    %749 = vector.broadcast %cst_208 : f32 to vector<10x1xf32>
    %750 = arith.divf %748, %749 : vector<10x1xf32>
    %751 = vector.broadcast %743 : vector<10x1xf32> to vector<10x32xf32>
    %752 = arith.subf %739, %751 : vector<10x32xf32>
    %cst_209 = arith.constant 9.99999974E-6 : f32
    %753 = vector.broadcast %cst_209 : f32 to vector<10x1xf32>
    %754 = arith.addf %750, %753 : vector<10x1xf32>
    %755 = math.rsqrt %754 : vector<10x1xf32>
    %756 = vector.broadcast %755 : vector<10x1xf32> to vector<10x32xf32>
    %757 = arith.mulf %752, %756 : vector<10x32xf32>
    %758 = vector.broadcast %5 : vector<1x32xf32> to vector<10x32xf32>
    %759 = arith.mulf %757, %758 : vector<10x32xf32>
    %760 = vector.broadcast %10 : vector<1x32xf32> to vector<10x32xf32>
    %761 = arith.addf %759, %760 : vector<10x32xf32>
    %cst_210 = arith.constant dense<0.000000e+00> : vector<10x32xf32>
    %762 = tpu.matmul %761, %25, %cst_210 {dimension_numbers = #tpu.dot_dimension_numbers<[1], [0], [0], [1], [0, 0, 1, 1], [], []>} : vector<10x32xf32>, vector<32x32xf32>, vector<10x32xf32> -> vector<10x32xf32>
    %763 = vector.broadcast %26 : vector<1x32xf32> to vector<10x32xf32>
    %764 = arith.addf %762, %763 : vector<10x32xf32>
    %765 = vector.extract_strided_slice %764 {offsets = [0, 0], sizes = [10, 8], strides = [1, 1]} : vector<10x32xf32> to vector<10x8xf32>
    %766 = vector.extract_strided_slice %301 {offsets = [0, 0], sizes = [16, 8], strides = [1, 1]} : vector<16x32xf32> to vector<16x8xf32>
    %cst_211 = arith.constant dense<0.000000e+00> : vector<10x16xf32>
    %767 = tpu.matmul %765, %766, %cst_211 {dimension_numbers = #tpu.dot_dimension_numbers<[1], [1], [0], [0], [0, 0, 1, 0], [], []>} : vector<10x8xf32>, vector<16x8xf32>, vector<10x16xf32> -> vector<10x16xf32>
    %768 = arith.addf %767, %140 : vector<10x16xf32>
    %cst_212 = arith.constant dense<0xFF800000> : vector<10xf32>
    %769 = vector.multi_reduction <maximumf>, %768, %cst_212 [1] : vector<10x16xf32> to vector<10xf32>
    %770 = vector.shape_cast %769 : vector<10xf32> to vector<10x1xf32>
    %771 = vector.broadcast %770 : vector<10x1xf32> to vector<10x16xf32>
    %772 = arith.subf %768, %771 : vector<10x16xf32>
    %773 = math.exp %772 : vector<10x16xf32>
    %cst_213 = arith.constant dense<0.000000e+00> : vector<10xf32>
    %774 = vector.multi_reduction <add>, %773, %cst_213 [1] : vector<10x16xf32> to vector<10xf32>
    %775 = vector.shape_cast %774 : vector<10xf32> to vector<10x1xf32>
    %776 = tpu.reciprocal %775 {approx = true} : vector<10x1xf32> -> vector<10x1xf32>
    %777 = vector.broadcast %776 : vector<10x1xf32> to vector<10x16xf32>
    %778 = arith.mulf %773, %777 : vector<10x16xf32>
    %779 = vector.extract_strided_slice %302 {offsets = [0, 0], sizes = [16, 8], strides = [1, 1]} : vector<16x32xf32> to vector<16x8xf32>
    %cst_214 = arith.constant dense<0.000000e+00> : vector<10x8xf32>
    %780 = tpu.matmul %778, %779, %cst_214 {dimension_numbers = #tpu.dot_dimension_numbers<[1], [0], [0], [1], [0, 0, 1, 1], [], []>} : vector<10x16xf32>, vector<16x8xf32>, vector<10x8xf32> -> vector<10x8xf32>
    %781 = vector.extract_strided_slice %29 {offsets = [0, 0], sizes = [8, 32], strides = [1, 1]} : vector<32x32xf32> to vector<8x32xf32>
    %cst_215 = arith.constant dense<0.000000e+00> : vector<10x32xf32>
    %782 = tpu.matmul %780, %781, %cst_215 {dimension_numbers = #tpu.dot_dimension_numbers<[1], [0], [0], [1], [0, 0, 1, 1], [], []>} : vector<10x8xf32>, vector<8x32xf32>, vector<10x32xf32> -> vector<10x32xf32>
    %783 = vector.extract_strided_slice %764 {offsets = [0, 8], sizes = [10, 8], strides = [1, 1]} : vector<10x32xf32> to vector<10x8xf32>
    %784 = vector.extract_strided_slice %301 {offsets = [0, 8], sizes = [16, 8], strides = [1, 1]} : vector<16x32xf32> to vector<16x8xf32>
    %cst_216 = arith.constant dense<0.000000e+00> : vector<10x16xf32>
    %785 = tpu.matmul %783, %784, %cst_216 {dimension_numbers = #tpu.dot_dimension_numbers<[1], [1], [0], [0], [0, 0, 1, 0], [], []>} : vector<10x8xf32>, vector<16x8xf32>, vector<10x16xf32> -> vector<10x16xf32>
    %786 = arith.addf %785, %140 : vector<10x16xf32>
    %cst_217 = arith.constant dense<0xFF800000> : vector<10xf32>
    %787 = vector.multi_reduction <maximumf>, %786, %cst_217 [1] : vector<10x16xf32> to vector<10xf32>
    %788 = vector.shape_cast %787 : vector<10xf32> to vector<10x1xf32>
    %789 = vector.broadcast %788 : vector<10x1xf32> to vector<10x16xf32>
    %790 = arith.subf %786, %789 : vector<10x16xf32>
    %791 = math.exp %790 : vector<10x16xf32>
    %cst_218 = arith.constant dense<0.000000e+00> : vector<10xf32>
    %792 = vector.multi_reduction <add>, %791, %cst_218 [1] : vector<10x16xf32> to vector<10xf32>
    %793 = vector.shape_cast %792 : vector<10xf32> to vector<10x1xf32>
    %794 = tpu.reciprocal %793 {approx = true} : vector<10x1xf32> -> vector<10x1xf32>
    %795 = vector.broadcast %794 : vector<10x1xf32> to vector<10x16xf32>
    %796 = arith.mulf %791, %795 : vector<10x16xf32>
    %797 = vector.extract_strided_slice %302 {offsets = [0, 8], sizes = [16, 8], strides = [1, 1]} : vector<16x32xf32> to vector<16x8xf32>
    %cst_219 = arith.constant dense<0.000000e+00> : vector<10x8xf32>
    %798 = tpu.matmul %796, %797, %cst_219 {dimension_numbers = #tpu.dot_dimension_numbers<[1], [0], [0], [1], [0, 0, 1, 1], [], []>} : vector<10x16xf32>, vector<16x8xf32>, vector<10x8xf32> -> vector<10x8xf32>
    %799 = vector.extract_strided_slice %29 {offsets = [8, 0], sizes = [8, 32], strides = [1, 1]} : vector<32x32xf32> to vector<8x32xf32>
    %cst_220 = arith.constant dense<0.000000e+00> : vector<10x32xf32>
    %800 = tpu.matmul %798, %799, %cst_220 {dimension_numbers = #tpu.dot_dimension_numbers<[1], [0], [0], [1], [0, 0, 1, 1], [], []>} : vector<10x8xf32>, vector<8x32xf32>, vector<10x32xf32> -> vector<10x32xf32>
    %801 = arith.addf %782, %800 : vector<10x32xf32>
    %802 = vector.extract_strided_slice %764 {offsets = [0, 16], sizes = [10, 8], strides = [1, 1]} : vector<10x32xf32> to vector<10x8xf32>
    %803 = vector.extract_strided_slice %301 {offsets = [0, 16], sizes = [16, 8], strides = [1, 1]} : vector<16x32xf32> to vector<16x8xf32>
    %cst_221 = arith.constant dense<0.000000e+00> : vector<10x16xf32>
    %804 = tpu.matmul %802, %803, %cst_221 {dimension_numbers = #tpu.dot_dimension_numbers<[1], [1], [0], [0], [0, 0, 1, 0], [], []>} : vector<10x8xf32>, vector<16x8xf32>, vector<10x16xf32> -> vector<10x16xf32>
    %805 = arith.addf %804, %140 : vector<10x16xf32>
    %cst_222 = arith.constant dense<0xFF800000> : vector<10xf32>
    %806 = vector.multi_reduction <maximumf>, %805, %cst_222 [1] : vector<10x16xf32> to vector<10xf32>
    %807 = vector.shape_cast %806 : vector<10xf32> to vector<10x1xf32>
    %808 = vector.broadcast %807 : vector<10x1xf32> to vector<10x16xf32>
    %809 = arith.subf %805, %808 : vector<10x16xf32>
    %810 = math.exp %809 : vector<10x16xf32>
    %cst_223 = arith.constant dense<0.000000e+00> : vector<10xf32>
    %811 = vector.multi_reduction <add>, %810, %cst_223 [1] : vector<10x16xf32> to vector<10xf32>
    %812 = vector.shape_cast %811 : vector<10xf32> to vector<10x1xf32>
    %813 = tpu.reciprocal %812 {approx = true} : vector<10x1xf32> -> vector<10x1xf32>
    %814 = vector.broadcast %813 : vector<10x1xf32> to vector<10x16xf32>
    %815 = arith.mulf %810, %814 : vector<10x16xf32>
    %816 = vector.extract_strided_slice %302 {offsets = [0, 16], sizes = [16, 8], strides = [1, 1]} : vector<16x32xf32> to vector<16x8xf32>
    %cst_224 = arith.constant dense<0.000000e+00> : vector<10x8xf32>
    %817 = tpu.matmul %815, %816, %cst_224 {dimension_numbers = #tpu.dot_dimension_numbers<[1], [0], [0], [1], [0, 0, 1, 1], [], []>} : vector<10x16xf32>, vector<16x8xf32>, vector<10x8xf32> -> vector<10x8xf32>
    %818 = vector.extract_strided_slice %29 {offsets = [16, 0], sizes = [8, 32], strides = [1, 1]} : vector<32x32xf32> to vector<8x32xf32>
    %cst_225 = arith.constant dense<0.000000e+00> : vector<10x32xf32>
    %819 = tpu.matmul %817, %818, %cst_225 {dimension_numbers = #tpu.dot_dimension_numbers<[1], [0], [0], [1], [0, 0, 1, 1], [], []>} : vector<10x8xf32>, vector<8x32xf32>, vector<10x32xf32> -> vector<10x32xf32>
    %820 = arith.addf %801, %819 : vector<10x32xf32>
    %821 = vector.extract_strided_slice %764 {offsets = [0, 24], sizes = [10, 8], strides = [1, 1]} : vector<10x32xf32> to vector<10x8xf32>
    %822 = vector.extract_strided_slice %301 {offsets = [0, 24], sizes = [16, 8], strides = [1, 1]} : vector<16x32xf32> to vector<16x8xf32>
    %cst_226 = arith.constant dense<0.000000e+00> : vector<10x16xf32>
    %823 = tpu.matmul %821, %822, %cst_226 {dimension_numbers = #tpu.dot_dimension_numbers<[1], [1], [0], [0], [0, 0, 1, 0], [], []>} : vector<10x8xf32>, vector<16x8xf32>, vector<10x16xf32> -> vector<10x16xf32>
    %824 = arith.addf %823, %140 : vector<10x16xf32>
    %cst_227 = arith.constant dense<0xFF800000> : vector<10xf32>
    %825 = vector.multi_reduction <maximumf>, %824, %cst_227 [1] : vector<10x16xf32> to vector<10xf32>
    %826 = vector.shape_cast %825 : vector<10xf32> to vector<10x1xf32>
    %827 = vector.broadcast %826 : vector<10x1xf32> to vector<10x16xf32>
    %828 = arith.subf %824, %827 : vector<10x16xf32>
    %829 = math.exp %828 : vector<10x16xf32>
    %cst_228 = arith.constant dense<0.000000e+00> : vector<10xf32>
    %830 = vector.multi_reduction <add>, %829, %cst_228 [1] : vector<10x16xf32> to vector<10xf32>
    %831 = vector.shape_cast %830 : vector<10xf32> to vector<10x1xf32>
    %832 = tpu.reciprocal %831 {approx = true} : vector<10x1xf32> -> vector<10x1xf32>
    %833 = vector.broadcast %832 : vector<10x1xf32> to vector<10x16xf32>
    %834 = arith.mulf %829, %833 : vector<10x16xf32>
    %835 = vector.extract_strided_slice %302 {offsets = [0, 24], sizes = [16, 8], strides = [1, 1]} : vector<16x32xf32> to vector<16x8xf32>
    %cst_229 = arith.constant dense<0.000000e+00> : vector<10x8xf32>
    %836 = tpu.matmul %834, %835, %cst_229 {dimension_numbers = #tpu.dot_dimension_numbers<[1], [0], [0], [1], [0, 0, 1, 1], [], []>} : vector<10x16xf32>, vector<16x8xf32>, vector<10x8xf32> -> vector<10x8xf32>
    %837 = vector.extract_strided_slice %29 {offsets = [24, 0], sizes = [8, 32], strides = [1, 1]} : vector<32x32xf32> to vector<8x32xf32>
    %cst_230 = arith.constant dense<0.000000e+00> : vector<10x32xf32>
    %838 = tpu.matmul %836, %837, %cst_230 {dimension_numbers = #tpu.dot_dimension_numbers<[1], [0], [0], [1], [0, 0, 1, 1], [], []>} : vector<10x8xf32>, vector<8x32xf32>, vector<10x32xf32> -> vector<10x32xf32>
    %839 = arith.addf %820, %838 : vector<10x32xf32>
    %840 = vector.broadcast %30 : vector<1x32xf32> to vector<10x32xf32>
    %841 = arith.addf %839, %840 : vector<10x32xf32>
    %842 = arith.addf %761, %841 : vector<10x32xf32>
    %cst_231 = arith.constant dense<0.000000e+00> : vector<10xf32>
    %843 = vector.multi_reduction <add>, %842, %cst_231 [1] : vector<10x32xf32> to vector<10xf32>
    %844 = vector.shape_cast %843 : vector<10xf32> to vector<10x1xf32>
    %cst_232 = arith.constant 3.200000e+01 : f32
    %845 = vector.broadcast %cst_232 : f32 to vector<10x1xf32>
    %846 = arith.divf %844, %845 : vector<10x1xf32>
    %847 = vector.broadcast %846 : vector<10x1xf32> to vector<10x32xf32>
    %848 = arith.subf %842, %847 : vector<10x32xf32>
    %849 = arith.mulf %848, %848 : vector<10x32xf32>
    %cst_233 = arith.constant dense<0.000000e+00> : vector<10xf32>
    %850 = vector.multi_reduction <add>, %849, %cst_233 [1] : vector<10x32xf32> to vector<10xf32>
    %851 = vector.shape_cast %850 : vector<10xf32> to vector<10x1xf32>
    %cst_234 = arith.constant 3.200000e+01 : f32
    %852 = vector.broadcast %cst_234 : f32 to vector<10x1xf32>
    %853 = arith.divf %851, %852 : vector<10x1xf32>
    %854 = vector.broadcast %846 : vector<10x1xf32> to vector<10x32xf32>
    %855 = arith.subf %842, %854 : vector<10x32xf32>
    %cst_235 = arith.constant 9.99999974E-6 : f32
    %856 = vector.broadcast %cst_235 : f32 to vector<10x1xf32>
    %857 = arith.addf %853, %856 : vector<10x1xf32>
    %858 = math.rsqrt %857 : vector<10x1xf32>
    %859 = vector.broadcast %858 : vector<10x1xf32> to vector<10x32xf32>
    %860 = arith.mulf %855, %859 : vector<10x32xf32>
    %861 = vector.broadcast %6 : vector<1x32xf32> to vector<10x32xf32>
    %862 = arith.mulf %860, %861 : vector<10x32xf32>
    %863 = vector.broadcast %11 : vector<1x32xf32> to vector<10x32xf32>
    %864 = arith.addf %862, %863 : vector<10x32xf32>
    %cst_236 = arith.constant dense<0.000000e+00> : vector<10x64xf32>
    %865 = tpu.matmul %864, %31, %cst_236 {dimension_numbers = #tpu.dot_dimension_numbers<[1], [0], [0], [1], [0, 0, 1, 1], [], []>} : vector<10x32xf32>, vector<32x64xf32>, vector<10x64xf32> -> vector<10x64xf32>
    %866 = vector.broadcast %32 : vector<1x64xf32> to vector<10x64xf32>
    %867 = arith.addf %865, %866 : vector<10x64xf32>
    %cst_237 = arith.constant 5.000000e-01 : f32
    %868 = vector.broadcast %cst_237 : f32 to vector<10x64xf32>
    %869 = arith.mulf %868, %867 : vector<10x64xf32>
    %870 = arith.mulf %867, %867 : vector<10x64xf32>
    %871 = arith.mulf %870, %867 : vector<10x64xf32>
    %cst_238 = arith.constant 4.471500e-02 : f32
    %872 = vector.broadcast %cst_238 : f32 to vector<10x64xf32>
    %873 = arith.mulf %872, %871 : vector<10x64xf32>
    %874 = arith.addf %867, %873 : vector<10x64xf32>
    %cst_239 = arith.constant 0.797884583 : f32
    %875 = vector.broadcast %cst_239 : f32 to vector<10x64xf32>
    %876 = arith.mulf %875, %874 : vector<10x64xf32>
    %877 = math.tanh %876 : vector<10x64xf32>
    %cst_240 = arith.constant 1.000000e+00 : f32
    %878 = vector.broadcast %cst_240 : f32 to vector<10x64xf32>
    %879 = arith.addf %878, %877 : vector<10x64xf32>
    %880 = arith.mulf %869, %879 : vector<10x64xf32>
    %cst_241 = arith.constant dense<0.000000e+00> : vector<10x32xf32>
    %881 = tpu.matmul %880, %33, %cst_241 {dimension_numbers = #tpu.dot_dimension_numbers<[1], [0], [0], [1], [0, 0, 1, 1], [], []>} : vector<10x64xf32>, vector<64x32xf32>, vector<10x32xf32> -> vector<10x32xf32>
    %882 = vector.broadcast %34 : vector<1x32xf32> to vector<10x32xf32>
    %883 = arith.addf %881, %882 : vector<10x32xf32>
    %884 = arith.addf %864, %883 : vector<10x32xf32>
    %cst_242 = arith.constant dense<0.000000e+00> : vector<10xf32>
    %885 = vector.multi_reduction <add>, %884, %cst_242 [1] : vector<10x32xf32> to vector<10xf32>
    %886 = vector.shape_cast %885 : vector<10xf32> to vector<10x1xf32>
    %cst_243 = arith.constant 3.200000e+01 : f32
    %887 = vector.broadcast %cst_243 : f32 to vector<10x1xf32>
    %888 = arith.divf %886, %887 : vector<10x1xf32>
    %889 = vector.broadcast %888 : vector<10x1xf32> to vector<10x32xf32>
    %890 = arith.subf %884, %889 : vector<10x32xf32>
    %891 = arith.mulf %890, %890 : vector<10x32xf32>
    %cst_244 = arith.constant dense<0.000000e+00> : vector<10xf32>
    %892 = vector.multi_reduction <add>, %891, %cst_244 [1] : vector<10x32xf32> to vector<10xf32>
    %893 = vector.shape_cast %892 : vector<10xf32> to vector<10x1xf32>
    %cst_245 = arith.constant 3.200000e+01 : f32
    %894 = vector.broadcast %cst_245 : f32 to vector<10x1xf32>
    %895 = arith.divf %893, %894 : vector<10x1xf32>
    %896 = vector.broadcast %888 : vector<10x1xf32> to vector<10x32xf32>
    %897 = arith.subf %884, %896 : vector<10x32xf32>
    %cst_246 = arith.constant 9.99999974E-6 : f32
    %898 = vector.broadcast %cst_246 : f32 to vector<10x1xf32>
    %899 = arith.addf %895, %898 : vector<10x1xf32>
    %900 = math.rsqrt %899 : vector<10x1xf32>
    %901 = vector.broadcast %900 : vector<10x1xf32> to vector<10x32xf32>
    %902 = arith.mulf %897, %901 : vector<10x32xf32>
    %903 = vector.broadcast %7 : vector<1x32xf32> to vector<10x32xf32>
    %904 = arith.mulf %902, %903 : vector<10x32xf32>
    %905 = vector.broadcast %12 : vector<1x32xf32> to vector<10x32xf32>
    %906 = arith.addf %904, %905 : vector<10x32xf32>
    %c5_i32_247 = arith.constant 5 : i32
    %907 = vector.broadcast %c5_i32_247 : i32 to vector<2x10xi32>
    %908 = arith.muli %307, %907 : vector<2x10xi32>
    %c1_i32_248 = arith.constant 1 : i32
    %909 = vector.broadcast %c1_i32_248 : i32 to vector<2x10xi32>
    %910 = arith.addi %908, %909 : vector<2x10xi32>
    %911 = arith.cmpi eq, %308, %910 : vector<2x10xi32>
    %912 = arith.extui %911 : vector<2x10xi1> to vector<2x10xi32>
    %913 = arith.sitofp %912 : vector<2x10xi32> to vector<2x10xf32>
    %cst_249 = arith.constant dense<0.000000e+00> : vector<2x32xf32>
    %914 = tpu.matmul %913, %906, %cst_249 {dimension_numbers = #tpu.dot_dimension_numbers<[1], [0], [0], [1], [0, 0, 1, 1], [], []>} : vector<2x10xf32>, vector<10x32xf32>, vector<2x32xf32> -> vector<2x32xf32>
    %cst_250 = arith.constant dense<0.000000e+00> : vector<2x50xf32>
    %915 = tpu.matmul %914, %35, %cst_250 {dimension_numbers = #tpu.dot_dimension_numbers<[1], [0], [0], [1], [0, 0, 1, 1], [], []>} : vector<2x32xf32>, vector<32x50xf32>, vector<2x50xf32> -> vector<2x50xf32>
    %916 = vector.broadcast %36 : vector<1x50xf32> to vector<2x50xf32>
    %917 = arith.addf %915, %916 : vector<2x50xf32>
    %cst_251 = arith.constant dense<0xFF800000> : vector<2xf32>
    %918 = vector.multi_reduction <maximumf>, %917, %cst_251 [1] : vector<2x50xf32> to vector<2xf32>
    %919 = vector.shape_cast %918 : vector<2xf32> to vector<2x1xf32>
    %920 = vector.broadcast %919 : vector<2x1xf32> to vector<2x50xf32>
    %921 = arith.cmpf oge, %917, %920 : vector<2x50xf32>
    %c50_i32_252 = arith.constant 50 : i32
    %922 = vector.broadcast %c50_i32_252 : i32 to vector<2x50xi32>
    %923 = arith.select %921, %304, %922 : vector<2x50xi1>, vector<2x50xi32>
    %cst_253 = arith.constant dense<2147483647> : vector<2xi32>
    %924 = vector.multi_reduction <minsi>, %923, %cst_253 [1] : vector<2x50xi32> to vector<2xi32>
    %925 = vector.shape_cast %924 : vector<2xi32> to vector<2x1xi32>
    %c0_i32_254 = arith.constant 0 : i32
    %926 = vector.broadcast %c0_i32_254 : i32 to vector<2x1xi32>
    %927 = arith.cmpi sgt, %623, %926 : vector<2x1xi32>
    %c1_i32_255 = arith.constant 1 : i32
    %928 = vector.broadcast %c1_i32_255 : i32 to vector<2x1xi32>
    %929 = arith.select %927, %928, %925 : vector<2x1xi1>, vector<2x1xi32>
    %c2_i32_256 = arith.constant 2 : i32
    %930 = vector.broadcast %c2_i32_256 : i32 to vector<2x1xi32>
    %931 = arith.cmpi eq, %929, %930 : vector<2x1xi32>
    %932 = arith.extui %931 : vector<2x1xi1> to vector<2x1xi32>
    %933 = arith.ori %623, %932 : vector<2x1xi32>
    %c2_i32_257 = arith.constant 2 : i32
    %934 = vector.broadcast %c2_i32_257 : i32 to vector<2x5xi32>
    %935 = arith.cmpi eq, %305, %934 : vector<2x5xi32>
    %936 = vector.shape_cast %929 : vector<2x1xi32> to vector<2x1xi32>
    %937 = vector.broadcast %936 : vector<2x1xi32> to vector<2x5xi32>
    %938 = arith.select %935, %937, %628 : vector<2x5xi1>, vector<2x5xi32>
    %939 = vector.broadcast %929 : vector<2x1xi32> to vector<2x50xi32>
    %940 = arith.cmpi eq, %939, %304 : vector<2x50xi32>
    %941 = arith.extui %940 : vector<2x50xi1> to vector<2x50xi32>
    %942 = arith.sitofp %941 : vector<2x50xi32> to vector<2x50xf32>
    %cst_258 = arith.constant dense<0.000000e+00> : vector<2x32xf32>
    %943 = tpu.matmul %942, %0, %cst_258 {dimension_numbers = #tpu.dot_dimension_numbers<[1], [0], [0], [1], [0, 0, 1, 1], [], []>} : vector<2x50xf32>, vector<50x32xf32>, vector<2x32xf32> -> vector<2x32xf32>
    %944 = vector.extract_strided_slice %303 {offsets = [2, 0], sizes = [1, 32], strides = [1, 1]} : vector<5x32xf32> to vector<1x32xf32>
    %945 = vector.broadcast %944 : vector<1x32xf32> to vector<2x32xf32>
    %946 = arith.addf %943, %945 : vector<2x32xf32>
    %c5_i32_259 = arith.constant 5 : i32
    %947 = vector.broadcast %c5_i32_259 : i32 to vector<10x2xi32>
    %948 = arith.muli %310, %947 : vector<10x2xi32>
    %c2_i32_260 = arith.constant 2 : i32
    %949 = vector.broadcast %c2_i32_260 : i32 to vector<10x2xi32>
    %950 = arith.addi %948, %949 : vector<10x2xi32>
    %951 = arith.cmpi eq, %309, %950 : vector<10x2xi32>
    %952 = arith.extui %951 : vector<10x2xi1> to vector<10x2xi32>
    %953 = arith.sitofp %952 : vector<10x2xi32> to vector<10x2xf32>
    %c0_i32_261 = arith.constant 0 : i32
    %954 = vector.broadcast %c0_i32_261 : i32 to vector<10x1xi32>
    %955 = arith.cmpi slt, %306, %954 : vector<10x1xi32>
    %c2_i32_262 = arith.constant 2 : i32
    %956 = vector.broadcast %c2_i32_262 : i32 to vector<10x1xi32>
    %957 = arith.cmpi eq, %306, %956 : vector<10x1xi32>
    %958 = arith.ori %955, %957 : vector<10x1xi1>
    %c7_i32 = arith.constant 7 : i32
    %959 = vector.broadcast %c7_i32 : i32 to vector<10x1xi32>
    %960 = arith.cmpi eq, %306, %959 : vector<10x1xi32>
    %961 = arith.ori %958, %960 : vector<10x1xi1>
    %cst_263 = arith.constant dense<0.000000e+00> : vector<10x32xf32>
    %962 = tpu.matmul %953, %946, %cst_263 {dimension_numbers = #tpu.dot_dimension_numbers<[1], [0], [0], [1], [0, 0, 1, 1], [], []>} : vector<10x2xf32>, vector<2x32xf32>, vector<10x32xf32> -> vector<10x32xf32>
    %963 = vector.shape_cast %961 : vector<10x1xi1> to vector<10x1xi1>
    %964 = vector.broadcast %963 : vector<10x1xi1> to vector<10x32xi1>
    %965 = arith.select %964, %962, %655 : vector<10x32xi1>, vector<10x32xf32>
    %cst_264 = arith.constant dense<0.000000e+00> : vector<10x96xf32>
    %966 = tpu.matmul %965, %21, %cst_264 {dimension_numbers = #tpu.dot_dimension_numbers<[1], [0], [0], [1], [0, 0, 1, 1], [], []>} : vector<10x32xf32>, vector<32x96xf32>, vector<10x96xf32> -> vector<10x96xf32>
    %967 = vector.broadcast %22 : vector<1x96xf32> to vector<10x96xf32>
    %968 = arith.addf %966, %967 : vector<10x96xf32>
    %969 = vector.extract_strided_slice %968 {offsets = [0, 0], sizes = [10, 32], strides = [1, 1]} : vector<10x96xf32> to vector<10x32xf32>
    %970 = vector.extract_strided_slice %968 {offsets = [0, 32], sizes = [10, 32], strides = [1, 1]} : vector<10x96xf32> to vector<10x32xf32>
    %971 = vector.extract_strided_slice %968 {offsets = [0, 64], sizes = [10, 32], strides = [1, 1]} : vector<10x96xf32> to vector<10x32xf32>
    %972 = vector.extract_strided_slice %969 {offsets = [0, 0], sizes = [10, 8], strides = [1, 1]} : vector<10x32xf32> to vector<10x8xf32>
    %973 = vector.extract_strided_slice %970 {offsets = [0, 0], sizes = [10, 8], strides = [1, 1]} : vector<10x32xf32> to vector<10x8xf32>
    %cst_265 = arith.constant dense<0.000000e+00> : vector<10x10xf32>
    %974 = tpu.matmul %972, %973, %cst_265 {dimension_numbers = #tpu.dot_dimension_numbers<[1], [1], [0], [0], [0, 0, 1, 0], [], []>} : vector<10x8xf32>, vector<10x8xf32>, vector<10x10xf32> -> vector<10x10xf32>
    %975 = arith.addf %974, %107 : vector<10x10xf32>
    %cst_266 = arith.constant dense<0xFF800000> : vector<10xf32>
    %976 = vector.multi_reduction <maximumf>, %975, %cst_266 [1] : vector<10x10xf32> to vector<10xf32>
    %977 = vector.shape_cast %976 : vector<10xf32> to vector<10x1xf32>
    %978 = vector.broadcast %977 : vector<10x1xf32> to vector<10x10xf32>
    %979 = arith.subf %975, %978 : vector<10x10xf32>
    %980 = math.exp %979 : vector<10x10xf32>
    %cst_267 = arith.constant dense<0.000000e+00> : vector<10xf32>
    %981 = vector.multi_reduction <add>, %980, %cst_267 [1] : vector<10x10xf32> to vector<10xf32>
    %982 = vector.shape_cast %981 : vector<10xf32> to vector<10x1xf32>
    %983 = tpu.reciprocal %982 {approx = true} : vector<10x1xf32> -> vector<10x1xf32>
    %984 = vector.broadcast %983 : vector<10x1xf32> to vector<10x10xf32>
    %985 = arith.mulf %980, %984 : vector<10x10xf32>
    %986 = vector.extract_strided_slice %971 {offsets = [0, 0], sizes = [10, 8], strides = [1, 1]} : vector<10x32xf32> to vector<10x8xf32>
    %cst_268 = arith.constant dense<0.000000e+00> : vector<10x8xf32>
    %987 = tpu.matmul %985, %986, %cst_268 {dimension_numbers = #tpu.dot_dimension_numbers<[1], [0], [0], [1], [0, 0, 1, 1], [], []>} : vector<10x10xf32>, vector<10x8xf32>, vector<10x8xf32> -> vector<10x8xf32>
    %988 = vector.extract_strided_slice %23 {offsets = [0, 0], sizes = [8, 32], strides = [1, 1]} : vector<32x32xf32> to vector<8x32xf32>
    %cst_269 = arith.constant dense<0.000000e+00> : vector<10x32xf32>
    %989 = tpu.matmul %987, %988, %cst_269 {dimension_numbers = #tpu.dot_dimension_numbers<[1], [0], [0], [1], [0, 0, 1, 1], [], []>} : vector<10x8xf32>, vector<8x32xf32>, vector<10x32xf32> -> vector<10x32xf32>
    %990 = vector.extract_strided_slice %969 {offsets = [0, 8], sizes = [10, 8], strides = [1, 1]} : vector<10x32xf32> to vector<10x8xf32>
    %991 = vector.extract_strided_slice %970 {offsets = [0, 8], sizes = [10, 8], strides = [1, 1]} : vector<10x32xf32> to vector<10x8xf32>
    %cst_270 = arith.constant dense<0.000000e+00> : vector<10x10xf32>
    %992 = tpu.matmul %990, %991, %cst_270 {dimension_numbers = #tpu.dot_dimension_numbers<[1], [1], [0], [0], [0, 0, 1, 0], [], []>} : vector<10x8xf32>, vector<10x8xf32>, vector<10x10xf32> -> vector<10x10xf32>
    %993 = arith.addf %992, %107 : vector<10x10xf32>
    %cst_271 = arith.constant dense<0xFF800000> : vector<10xf32>
    %994 = vector.multi_reduction <maximumf>, %993, %cst_271 [1] : vector<10x10xf32> to vector<10xf32>
    %995 = vector.shape_cast %994 : vector<10xf32> to vector<10x1xf32>
    %996 = vector.broadcast %995 : vector<10x1xf32> to vector<10x10xf32>
    %997 = arith.subf %993, %996 : vector<10x10xf32>
    %998 = math.exp %997 : vector<10x10xf32>
    %cst_272 = arith.constant dense<0.000000e+00> : vector<10xf32>
    %999 = vector.multi_reduction <add>, %998, %cst_272 [1] : vector<10x10xf32> to vector<10xf32>
    %1000 = vector.shape_cast %999 : vector<10xf32> to vector<10x1xf32>
    %1001 = tpu.reciprocal %1000 {approx = true} : vector<10x1xf32> -> vector<10x1xf32>
    %1002 = vector.broadcast %1001 : vector<10x1xf32> to vector<10x10xf32>
    %1003 = arith.mulf %998, %1002 : vector<10x10xf32>
    %1004 = vector.extract_strided_slice %971 {offsets = [0, 8], sizes = [10, 8], strides = [1, 1]} : vector<10x32xf32> to vector<10x8xf32>
    %cst_273 = arith.constant dense<0.000000e+00> : vector<10x8xf32>
    %1005 = tpu.matmul %1003, %1004, %cst_273 {dimension_numbers = #tpu.dot_dimension_numbers<[1], [0], [0], [1], [0, 0, 1, 1], [], []>} : vector<10x10xf32>, vector<10x8xf32>, vector<10x8xf32> -> vector<10x8xf32>
    %1006 = vector.extract_strided_slice %23 {offsets = [8, 0], sizes = [8, 32], strides = [1, 1]} : vector<32x32xf32> to vector<8x32xf32>
    %cst_274 = arith.constant dense<0.000000e+00> : vector<10x32xf32>
    %1007 = tpu.matmul %1005, %1006, %cst_274 {dimension_numbers = #tpu.dot_dimension_numbers<[1], [0], [0], [1], [0, 0, 1, 1], [], []>} : vector<10x8xf32>, vector<8x32xf32>, vector<10x32xf32> -> vector<10x32xf32>
    %1008 = arith.addf %989, %1007 : vector<10x32xf32>
    %1009 = vector.extract_strided_slice %969 {offsets = [0, 16], sizes = [10, 8], strides = [1, 1]} : vector<10x32xf32> to vector<10x8xf32>
    %1010 = vector.extract_strided_slice %970 {offsets = [0, 16], sizes = [10, 8], strides = [1, 1]} : vector<10x32xf32> to vector<10x8xf32>
    %cst_275 = arith.constant dense<0.000000e+00> : vector<10x10xf32>
    %1011 = tpu.matmul %1009, %1010, %cst_275 {dimension_numbers = #tpu.dot_dimension_numbers<[1], [1], [0], [0], [0, 0, 1, 0], [], []>} : vector<10x8xf32>, vector<10x8xf32>, vector<10x10xf32> -> vector<10x10xf32>
    %1012 = arith.addf %1011, %107 : vector<10x10xf32>
    %cst_276 = arith.constant dense<0xFF800000> : vector<10xf32>
    %1013 = vector.multi_reduction <maximumf>, %1012, %cst_276 [1] : vector<10x10xf32> to vector<10xf32>
    %1014 = vector.shape_cast %1013 : vector<10xf32> to vector<10x1xf32>
    %1015 = vector.broadcast %1014 : vector<10x1xf32> to vector<10x10xf32>
    %1016 = arith.subf %1012, %1015 : vector<10x10xf32>
    %1017 = math.exp %1016 : vector<10x10xf32>
    %cst_277 = arith.constant dense<0.000000e+00> : vector<10xf32>
    %1018 = vector.multi_reduction <add>, %1017, %cst_277 [1] : vector<10x10xf32> to vector<10xf32>
    %1019 = vector.shape_cast %1018 : vector<10xf32> to vector<10x1xf32>
    %1020 = tpu.reciprocal %1019 {approx = true} : vector<10x1xf32> -> vector<10x1xf32>
    %1021 = vector.broadcast %1020 : vector<10x1xf32> to vector<10x10xf32>
    %1022 = arith.mulf %1017, %1021 : vector<10x10xf32>
    %1023 = vector.extract_strided_slice %971 {offsets = [0, 16], sizes = [10, 8], strides = [1, 1]} : vector<10x32xf32> to vector<10x8xf32>
    %cst_278 = arith.constant dense<0.000000e+00> : vector<10x8xf32>
    %1024 = tpu.matmul %1022, %1023, %cst_278 {dimension_numbers = #tpu.dot_dimension_numbers<[1], [0], [0], [1], [0, 0, 1, 1], [], []>} : vector<10x10xf32>, vector<10x8xf32>, vector<10x8xf32> -> vector<10x8xf32>
    %1025 = vector.extract_strided_slice %23 {offsets = [16, 0], sizes = [8, 32], strides = [1, 1]} : vector<32x32xf32> to vector<8x32xf32>
    %cst_279 = arith.constant dense<0.000000e+00> : vector<10x32xf32>
    %1026 = tpu.matmul %1024, %1025, %cst_279 {dimension_numbers = #tpu.dot_dimension_numbers<[1], [0], [0], [1], [0, 0, 1, 1], [], []>} : vector<10x8xf32>, vector<8x32xf32>, vector<10x32xf32> -> vector<10x32xf32>
    %1027 = arith.addf %1008, %1026 : vector<10x32xf32>
    %1028 = vector.extract_strided_slice %969 {offsets = [0, 24], sizes = [10, 8], strides = [1, 1]} : vector<10x32xf32> to vector<10x8xf32>
    %1029 = vector.extract_strided_slice %970 {offsets = [0, 24], sizes = [10, 8], strides = [1, 1]} : vector<10x32xf32> to vector<10x8xf32>
    %cst_280 = arith.constant dense<0.000000e+00> : vector<10x10xf32>
    %1030 = tpu.matmul %1028, %1029, %cst_280 {dimension_numbers = #tpu.dot_dimension_numbers<[1], [1], [0], [0], [0, 0, 1, 0], [], []>} : vector<10x8xf32>, vector<10x8xf32>, vector<10x10xf32> -> vector<10x10xf32>
    %1031 = arith.addf %1030, %107 : vector<10x10xf32>
    %cst_281 = arith.constant dense<0xFF800000> : vector<10xf32>
    %1032 = vector.multi_reduction <maximumf>, %1031, %cst_281 [1] : vector<10x10xf32> to vector<10xf32>
    %1033 = vector.shape_cast %1032 : vector<10xf32> to vector<10x1xf32>
    %1034 = vector.broadcast %1033 : vector<10x1xf32> to vector<10x10xf32>
    %1035 = arith.subf %1031, %1034 : vector<10x10xf32>
    %1036 = math.exp %1035 : vector<10x10xf32>
    %cst_282 = arith.constant dense<0.000000e+00> : vector<10xf32>
    %1037 = vector.multi_reduction <add>, %1036, %cst_282 [1] : vector<10x10xf32> to vector<10xf32>
    %1038 = vector.shape_cast %1037 : vector<10xf32> to vector<10x1xf32>
    %1039 = tpu.reciprocal %1038 {approx = true} : vector<10x1xf32> -> vector<10x1xf32>
    %1040 = vector.broadcast %1039 : vector<10x1xf32> to vector<10x10xf32>
    %1041 = arith.mulf %1036, %1040 : vector<10x10xf32>
    %1042 = vector.extract_strided_slice %971 {offsets = [0, 24], sizes = [10, 8], strides = [1, 1]} : vector<10x32xf32> to vector<10x8xf32>
    %cst_283 = arith.constant dense<0.000000e+00> : vector<10x8xf32>
    %1043 = tpu.matmul %1041, %1042, %cst_283 {dimension_numbers = #tpu.dot_dimension_numbers<[1], [0], [0], [1], [0, 0, 1, 1], [], []>} : vector<10x10xf32>, vector<10x8xf32>, vector<10x8xf32> -> vector<10x8xf32>
    %1044 = vector.extract_strided_slice %23 {offsets = [24, 0], sizes = [8, 32], strides = [1, 1]} : vector<32x32xf32> to vector<8x32xf32>
    %cst_284 = arith.constant dense<0.000000e+00> : vector<10x32xf32>
    %1045 = tpu.matmul %1043, %1044, %cst_284 {dimension_numbers = #tpu.dot_dimension_numbers<[1], [0], [0], [1], [0, 0, 1, 1], [], []>} : vector<10x8xf32>, vector<8x32xf32>, vector<10x32xf32> -> vector<10x32xf32>
    %1046 = arith.addf %1027, %1045 : vector<10x32xf32>
    %1047 = vector.broadcast %24 : vector<1x32xf32> to vector<10x32xf32>
    %1048 = arith.addf %1046, %1047 : vector<10x32xf32>
    %1049 = arith.addf %965, %1048 : vector<10x32xf32>
    %cst_285 = arith.constant dense<0.000000e+00> : vector<10xf32>
    %1050 = vector.multi_reduction <add>, %1049, %cst_285 [1] : vector<10x32xf32> to vector<10xf32>
    %1051 = vector.shape_cast %1050 : vector<10xf32> to vector<10x1xf32>
    %cst_286 = arith.constant 3.200000e+01 : f32
    %1052 = vector.broadcast %cst_286 : f32 to vector<10x1xf32>
    %1053 = arith.divf %1051, %1052 : vector<10x1xf32>
    %1054 = vector.broadcast %1053 : vector<10x1xf32> to vector<10x32xf32>
    %1055 = arith.subf %1049, %1054 : vector<10x32xf32>
    %1056 = arith.mulf %1055, %1055 : vector<10x32xf32>
    %cst_287 = arith.constant dense<0.000000e+00> : vector<10xf32>
    %1057 = vector.multi_reduction <add>, %1056, %cst_287 [1] : vector<10x32xf32> to vector<10xf32>
    %1058 = vector.shape_cast %1057 : vector<10xf32> to vector<10x1xf32>
    %cst_288 = arith.constant 3.200000e+01 : f32
    %1059 = vector.broadcast %cst_288 : f32 to vector<10x1xf32>
    %1060 = arith.divf %1058, %1059 : vector<10x1xf32>
    %1061 = vector.broadcast %1053 : vector<10x1xf32> to vector<10x32xf32>
    %1062 = arith.subf %1049, %1061 : vector<10x32xf32>
    %cst_289 = arith.constant 9.99999974E-6 : f32
    %1063 = vector.broadcast %cst_289 : f32 to vector<10x1xf32>
    %1064 = arith.addf %1060, %1063 : vector<10x1xf32>
    %1065 = math.rsqrt %1064 : vector<10x1xf32>
    %1066 = vector.broadcast %1065 : vector<10x1xf32> to vector<10x32xf32>
    %1067 = arith.mulf %1062, %1066 : vector<10x32xf32>
    %1068 = vector.broadcast %5 : vector<1x32xf32> to vector<10x32xf32>
    %1069 = arith.mulf %1067, %1068 : vector<10x32xf32>
    %1070 = vector.broadcast %10 : vector<1x32xf32> to vector<10x32xf32>
    %1071 = arith.addf %1069, %1070 : vector<10x32xf32>
    %cst_290 = arith.constant dense<0.000000e+00> : vector<10x32xf32>
    %1072 = tpu.matmul %1071, %25, %cst_290 {dimension_numbers = #tpu.dot_dimension_numbers<[1], [0], [0], [1], [0, 0, 1, 1], [], []>} : vector<10x32xf32>, vector<32x32xf32>, vector<10x32xf32> -> vector<10x32xf32>
    %1073 = vector.broadcast %26 : vector<1x32xf32> to vector<10x32xf32>
    %1074 = arith.addf %1072, %1073 : vector<10x32xf32>
    %1075 = vector.extract_strided_slice %1074 {offsets = [0, 0], sizes = [10, 8], strides = [1, 1]} : vector<10x32xf32> to vector<10x8xf32>
    %1076 = vector.extract_strided_slice %301 {offsets = [0, 0], sizes = [16, 8], strides = [1, 1]} : vector<16x32xf32> to vector<16x8xf32>
    %cst_291 = arith.constant dense<0.000000e+00> : vector<10x16xf32>
    %1077 = tpu.matmul %1075, %1076, %cst_291 {dimension_numbers = #tpu.dot_dimension_numbers<[1], [1], [0], [0], [0, 0, 1, 0], [], []>} : vector<10x8xf32>, vector<16x8xf32>, vector<10x16xf32> -> vector<10x16xf32>
    %1078 = arith.addf %1077, %140 : vector<10x16xf32>
    %cst_292 = arith.constant dense<0xFF800000> : vector<10xf32>
    %1079 = vector.multi_reduction <maximumf>, %1078, %cst_292 [1] : vector<10x16xf32> to vector<10xf32>
    %1080 = vector.shape_cast %1079 : vector<10xf32> to vector<10x1xf32>
    %1081 = vector.broadcast %1080 : vector<10x1xf32> to vector<10x16xf32>
    %1082 = arith.subf %1078, %1081 : vector<10x16xf32>
    %1083 = math.exp %1082 : vector<10x16xf32>
    %cst_293 = arith.constant dense<0.000000e+00> : vector<10xf32>
    %1084 = vector.multi_reduction <add>, %1083, %cst_293 [1] : vector<10x16xf32> to vector<10xf32>
    %1085 = vector.shape_cast %1084 : vector<10xf32> to vector<10x1xf32>
    %1086 = tpu.reciprocal %1085 {approx = true} : vector<10x1xf32> -> vector<10x1xf32>
    %1087 = vector.broadcast %1086 : vector<10x1xf32> to vector<10x16xf32>
    %1088 = arith.mulf %1083, %1087 : vector<10x16xf32>
    %1089 = vector.extract_strided_slice %302 {offsets = [0, 0], sizes = [16, 8], strides = [1, 1]} : vector<16x32xf32> to vector<16x8xf32>
    %cst_294 = arith.constant dense<0.000000e+00> : vector<10x8xf32>
    %1090 = tpu.matmul %1088, %1089, %cst_294 {dimension_numbers = #tpu.dot_dimension_numbers<[1], [0], [0], [1], [0, 0, 1, 1], [], []>} : vector<10x16xf32>, vector<16x8xf32>, vector<10x8xf32> -> vector<10x8xf32>
    %1091 = vector.extract_strided_slice %29 {offsets = [0, 0], sizes = [8, 32], strides = [1, 1]} : vector<32x32xf32> to vector<8x32xf32>
    %cst_295 = arith.constant dense<0.000000e+00> : vector<10x32xf32>
    %1092 = tpu.matmul %1090, %1091, %cst_295 {dimension_numbers = #tpu.dot_dimension_numbers<[1], [0], [0], [1], [0, 0, 1, 1], [], []>} : vector<10x8xf32>, vector<8x32xf32>, vector<10x32xf32> -> vector<10x32xf32>
    %1093 = vector.extract_strided_slice %1074 {offsets = [0, 8], sizes = [10, 8], strides = [1, 1]} : vector<10x32xf32> to vector<10x8xf32>
    %1094 = vector.extract_strided_slice %301 {offsets = [0, 8], sizes = [16, 8], strides = [1, 1]} : vector<16x32xf32> to vector<16x8xf32>
    %cst_296 = arith.constant dense<0.000000e+00> : vector<10x16xf32>
    %1095 = tpu.matmul %1093, %1094, %cst_296 {dimension_numbers = #tpu.dot_dimension_numbers<[1], [1], [0], [0], [0, 0, 1, 0], [], []>} : vector<10x8xf32>, vector<16x8xf32>, vector<10x16xf32> -> vector<10x16xf32>
    %1096 = arith.addf %1095, %140 : vector<10x16xf32>
    %cst_297 = arith.constant dense<0xFF800000> : vector<10xf32>
    %1097 = vector.multi_reduction <maximumf>, %1096, %cst_297 [1] : vector<10x16xf32> to vector<10xf32>
    %1098 = vector.shape_cast %1097 : vector<10xf32> to vector<10x1xf32>
    %1099 = vector.broadcast %1098 : vector<10x1xf32> to vector<10x16xf32>
    %1100 = arith.subf %1096, %1099 : vector<10x16xf32>
    %1101 = math.exp %1100 : vector<10x16xf32>
    %cst_298 = arith.constant dense<0.000000e+00> : vector<10xf32>
    %1102 = vector.multi_reduction <add>, %1101, %cst_298 [1] : vector<10x16xf32> to vector<10xf32>
    %1103 = vector.shape_cast %1102 : vector<10xf32> to vector<10x1xf32>
    %1104 = tpu.reciprocal %1103 {approx = true} : vector<10x1xf32> -> vector<10x1xf32>
    %1105 = vector.broadcast %1104 : vector<10x1xf32> to vector<10x16xf32>
    %1106 = arith.mulf %1101, %1105 : vector<10x16xf32>
    %1107 = vector.extract_strided_slice %302 {offsets = [0, 8], sizes = [16, 8], strides = [1, 1]} : vector<16x32xf32> to vector<16x8xf32>
    %cst_299 = arith.constant dense<0.000000e+00> : vector<10x8xf32>
    %1108 = tpu.matmul %1106, %1107, %cst_299 {dimension_numbers = #tpu.dot_dimension_numbers<[1], [0], [0], [1], [0, 0, 1, 1], [], []>} : vector<10x16xf32>, vector<16x8xf32>, vector<10x8xf32> -> vector<10x8xf32>
    %1109 = vector.extract_strided_slice %29 {offsets = [8, 0], sizes = [8, 32], strides = [1, 1]} : vector<32x32xf32> to vector<8x32xf32>
    %cst_300 = arith.constant dense<0.000000e+00> : vector<10x32xf32>
    %1110 = tpu.matmul %1108, %1109, %cst_300 {dimension_numbers = #tpu.dot_dimension_numbers<[1], [0], [0], [1], [0, 0, 1, 1], [], []>} : vector<10x8xf32>, vector<8x32xf32>, vector<10x32xf32> -> vector<10x32xf32>
    %1111 = arith.addf %1092, %1110 : vector<10x32xf32>
    %1112 = vector.extract_strided_slice %1074 {offsets = [0, 16], sizes = [10, 8], strides = [1, 1]} : vector<10x32xf32> to vector<10x8xf32>
    %1113 = vector.extract_strided_slice %301 {offsets = [0, 16], sizes = [16, 8], strides = [1, 1]} : vector<16x32xf32> to vector<16x8xf32>
    %cst_301 = arith.constant dense<0.000000e+00> : vector<10x16xf32>
    %1114 = tpu.matmul %1112, %1113, %cst_301 {dimension_numbers = #tpu.dot_dimension_numbers<[1], [1], [0], [0], [0, 0, 1, 0], [], []>} : vector<10x8xf32>, vector<16x8xf32>, vector<10x16xf32> -> vector<10x16xf32>
    %1115 = arith.addf %1114, %140 : vector<10x16xf32>
    %cst_302 = arith.constant dense<0xFF800000> : vector<10xf32>
    %1116 = vector.multi_reduction <maximumf>, %1115, %cst_302 [1] : vector<10x16xf32> to vector<10xf32>
    %1117 = vector.shape_cast %1116 : vector<10xf32> to vector<10x1xf32>
    %1118 = vector.broadcast %1117 : vector<10x1xf32> to vector<10x16xf32>
    %1119 = arith.subf %1115, %1118 : vector<10x16xf32>
    %1120 = math.exp %1119 : vector<10x16xf32>
    %cst_303 = arith.constant dense<0.000000e+00> : vector<10xf32>
    %1121 = vector.multi_reduction <add>, %1120, %cst_303 [1] : vector<10x16xf32> to vector<10xf32>
    %1122 = vector.shape_cast %1121 : vector<10xf32> to vector<10x1xf32>
    %1123 = tpu.reciprocal %1122 {approx = true} : vector<10x1xf32> -> vector<10x1xf32>
    %1124 = vector.broadcast %1123 : vector<10x1xf32> to vector<10x16xf32>
    %1125 = arith.mulf %1120, %1124 : vector<10x16xf32>
    %1126 = vector.extract_strided_slice %302 {offsets = [0, 16], sizes = [16, 8], strides = [1, 1]} : vector<16x32xf32> to vector<16x8xf32>
    %cst_304 = arith.constant dense<0.000000e+00> : vector<10x8xf32>
    %1127 = tpu.matmul %1125, %1126, %cst_304 {dimension_numbers = #tpu.dot_dimension_numbers<[1], [0], [0], [1], [0, 0, 1, 1], [], []>} : vector<10x16xf32>, vector<16x8xf32>, vector<10x8xf32> -> vector<10x8xf32>
    %1128 = vector.extract_strided_slice %29 {offsets = [16, 0], sizes = [8, 32], strides = [1, 1]} : vector<32x32xf32> to vector<8x32xf32>
    %cst_305 = arith.constant dense<0.000000e+00> : vector<10x32xf32>
    %1129 = tpu.matmul %1127, %1128, %cst_305 {dimension_numbers = #tpu.dot_dimension_numbers<[1], [0], [0], [1], [0, 0, 1, 1], [], []>} : vector<10x8xf32>, vector<8x32xf32>, vector<10x32xf32> -> vector<10x32xf32>
    %1130 = arith.addf %1111, %1129 : vector<10x32xf32>
    %1131 = vector.extract_strided_slice %1074 {offsets = [0, 24], sizes = [10, 8], strides = [1, 1]} : vector<10x32xf32> to vector<10x8xf32>
    %1132 = vector.extract_strided_slice %301 {offsets = [0, 24], sizes = [16, 8], strides = [1, 1]} : vector<16x32xf32> to vector<16x8xf32>
    %cst_306 = arith.constant dense<0.000000e+00> : vector<10x16xf32>
    %1133 = tpu.matmul %1131, %1132, %cst_306 {dimension_numbers = #tpu.dot_dimension_numbers<[1], [1], [0], [0], [0, 0, 1, 0], [], []>} : vector<10x8xf32>, vector<16x8xf32>, vector<10x16xf32> -> vector<10x16xf32>
    %1134 = arith.addf %1133, %140 : vector<10x16xf32>
    %cst_307 = arith.constant dense<0xFF800000> : vector<10xf32>
    %1135 = vector.multi_reduction <maximumf>, %1134, %cst_307 [1] : vector<10x16xf32> to vector<10xf32>
    %1136 = vector.shape_cast %1135 : vector<10xf32> to vector<10x1xf32>
    %1137 = vector.broadcast %1136 : vector<10x1xf32> to vector<10x16xf32>
    %1138 = arith.subf %1134, %1137 : vector<10x16xf32>
    %1139 = math.exp %1138 : vector<10x16xf32>
    %cst_308 = arith.constant dense<0.000000e+00> : vector<10xf32>
    %1140 = vector.multi_reduction <add>, %1139, %cst_308 [1] : vector<10x16xf32> to vector<10xf32>
    %1141 = vector.shape_cast %1140 : vector<10xf32> to vector<10x1xf32>
    %1142 = tpu.reciprocal %1141 {approx = true} : vector<10x1xf32> -> vector<10x1xf32>
    %1143 = vector.broadcast %1142 : vector<10x1xf32> to vector<10x16xf32>
    %1144 = arith.mulf %1139, %1143 : vector<10x16xf32>
    %1145 = vector.extract_strided_slice %302 {offsets = [0, 24], sizes = [16, 8], strides = [1, 1]} : vector<16x32xf32> to vector<16x8xf32>
    %cst_309 = arith.constant dense<0.000000e+00> : vector<10x8xf32>
    %1146 = tpu.matmul %1144, %1145, %cst_309 {dimension_numbers = #tpu.dot_dimension_numbers<[1], [0], [0], [1], [0, 0, 1, 1], [], []>} : vector<10x16xf32>, vector<16x8xf32>, vector<10x8xf32> -> vector<10x8xf32>
    %1147 = vector.extract_strided_slice %29 {offsets = [24, 0], sizes = [8, 32], strides = [1, 1]} : vector<32x32xf32> to vector<8x32xf32>
    %cst_310 = arith.constant dense<0.000000e+00> : vector<10x32xf32>
    %1148 = tpu.matmul %1146, %1147, %cst_310 {dimension_numbers = #tpu.dot_dimension_numbers<[1], [0], [0], [1], [0, 0, 1, 1], [], []>} : vector<10x8xf32>, vector<8x32xf32>, vector<10x32xf32> -> vector<10x32xf32>
    %1149 = arith.addf %1130, %1148 : vector<10x32xf32>
    %1150 = vector.broadcast %30 : vector<1x32xf32> to vector<10x32xf32>
    %1151 = arith.addf %1149, %1150 : vector<10x32xf32>
    %1152 = arith.addf %1071, %1151 : vector<10x32xf32>
    %cst_311 = arith.constant dense<0.000000e+00> : vector<10xf32>
    %1153 = vector.multi_reduction <add>, %1152, %cst_311 [1] : vector<10x32xf32> to vector<10xf32>
    %1154 = vector.shape_cast %1153 : vector<10xf32> to vector<10x1xf32>
    %cst_312 = arith.constant 3.200000e+01 : f32
    %1155 = vector.broadcast %cst_312 : f32 to vector<10x1xf32>
    %1156 = arith.divf %1154, %1155 : vector<10x1xf32>
    %1157 = vector.broadcast %1156 : vector<10x1xf32> to vector<10x32xf32>
    %1158 = arith.subf %1152, %1157 : vector<10x32xf32>
    %1159 = arith.mulf %1158, %1158 : vector<10x32xf32>
    %cst_313 = arith.constant dense<0.000000e+00> : vector<10xf32>
    %1160 = vector.multi_reduction <add>, %1159, %cst_313 [1] : vector<10x32xf32> to vector<10xf32>
    %1161 = vector.shape_cast %1160 : vector<10xf32> to vector<10x1xf32>
    %cst_314 = arith.constant 3.200000e+01 : f32
    %1162 = vector.broadcast %cst_314 : f32 to vector<10x1xf32>
    %1163 = arith.divf %1161, %1162 : vector<10x1xf32>
    %1164 = vector.broadcast %1156 : vector<10x1xf32> to vector<10x32xf32>
    %1165 = arith.subf %1152, %1164 : vector<10x32xf32>
    %cst_315 = arith.constant 9.99999974E-6 : f32
    %1166 = vector.broadcast %cst_315 : f32 to vector<10x1xf32>
    %1167 = arith.addf %1163, %1166 : vector<10x1xf32>
    %1168 = math.rsqrt %1167 : vector<10x1xf32>
    %1169 = vector.broadcast %1168 : vector<10x1xf32> to vector<10x32xf32>
    %1170 = arith.mulf %1165, %1169 : vector<10x32xf32>
    %1171 = vector.broadcast %6 : vector<1x32xf32> to vector<10x32xf32>
    %1172 = arith.mulf %1170, %1171 : vector<10x32xf32>
    %1173 = vector.broadcast %11 : vector<1x32xf32> to vector<10x32xf32>
    %1174 = arith.addf %1172, %1173 : vector<10x32xf32>
    %cst_316 = arith.constant dense<0.000000e+00> : vector<10x64xf32>
    %1175 = tpu.matmul %1174, %31, %cst_316 {dimension_numbers = #tpu.dot_dimension_numbers<[1], [0], [0], [1], [0, 0, 1, 1], [], []>} : vector<10x32xf32>, vector<32x64xf32>, vector<10x64xf32> -> vector<10x64xf32>
    %1176 = vector.broadcast %32 : vector<1x64xf32> to vector<10x64xf32>
    %1177 = arith.addf %1175, %1176 : vector<10x64xf32>
    %cst_317 = arith.constant 5.000000e-01 : f32
    %1178 = vector.broadcast %cst_317 : f32 to vector<10x64xf32>
    %1179 = arith.mulf %1178, %1177 : vector<10x64xf32>
    %1180 = arith.mulf %1177, %1177 : vector<10x64xf32>
    %1181 = arith.mulf %1180, %1177 : vector<10x64xf32>
    %cst_318 = arith.constant 4.471500e-02 : f32
    %1182 = vector.broadcast %cst_318 : f32 to vector<10x64xf32>
    %1183 = arith.mulf %1182, %1181 : vector<10x64xf32>
    %1184 = arith.addf %1177, %1183 : vector<10x64xf32>
    %cst_319 = arith.constant 0.797884583 : f32
    %1185 = vector.broadcast %cst_319 : f32 to vector<10x64xf32>
    %1186 = arith.mulf %1185, %1184 : vector<10x64xf32>
    %1187 = math.tanh %1186 : vector<10x64xf32>
    %cst_320 = arith.constant 1.000000e+00 : f32
    %1188 = vector.broadcast %cst_320 : f32 to vector<10x64xf32>
    %1189 = arith.addf %1188, %1187 : vector<10x64xf32>
    %1190 = arith.mulf %1179, %1189 : vector<10x64xf32>
    %cst_321 = arith.constant dense<0.000000e+00> : vector<10x32xf32>
    %1191 = tpu.matmul %1190, %33, %cst_321 {dimension_numbers = #tpu.dot_dimension_numbers<[1], [0], [0], [1], [0, 0, 1, 1], [], []>} : vector<10x64xf32>, vector<64x32xf32>, vector<10x32xf32> -> vector<10x32xf32>
    %1192 = vector.broadcast %34 : vector<1x32xf32> to vector<10x32xf32>
    %1193 = arith.addf %1191, %1192 : vector<10x32xf32>
    %1194 = arith.addf %1174, %1193 : vector<10x32xf32>
    %cst_322 = arith.constant dense<0.000000e+00> : vector<10xf32>
    %1195 = vector.multi_reduction <add>, %1194, %cst_322 [1] : vector<10x32xf32> to vector<10xf32>
    %1196 = vector.shape_cast %1195 : vector<10xf32> to vector<10x1xf32>
    %cst_323 = arith.constant 3.200000e+01 : f32
    %1197 = vector.broadcast %cst_323 : f32 to vector<10x1xf32>
    %1198 = arith.divf %1196, %1197 : vector<10x1xf32>
    %1199 = vector.broadcast %1198 : vector<10x1xf32> to vector<10x32xf32>
    %1200 = arith.subf %1194, %1199 : vector<10x32xf32>
    %1201 = arith.mulf %1200, %1200 : vector<10x32xf32>
    %cst_324 = arith.constant dense<0.000000e+00> : vector<10xf32>
    %1202 = vector.multi_reduction <add>, %1201, %cst_324 [1] : vector<10x32xf32> to vector<10xf32>
    %1203 = vector.shape_cast %1202 : vector<10xf32> to vector<10x1xf32>
    %cst_325 = arith.constant 3.200000e+01 : f32
    %1204 = vector.broadcast %cst_325 : f32 to vector<10x1xf32>
    %1205 = arith.divf %1203, %1204 : vector<10x1xf32>
    %1206 = vector.broadcast %1198 : vector<10x1xf32> to vector<10x32xf32>
    %1207 = arith.subf %1194, %1206 : vector<10x32xf32>
    %cst_326 = arith.constant 9.99999974E-6 : f32
    %1208 = vector.broadcast %cst_326 : f32 to vector<10x1xf32>
    %1209 = arith.addf %1205, %1208 : vector<10x1xf32>
    %1210 = math.rsqrt %1209 : vector<10x1xf32>
    %1211 = vector.broadcast %1210 : vector<10x1xf32> to vector<10x32xf32>
    %1212 = arith.mulf %1207, %1211 : vector<10x32xf32>
    %1213 = vector.broadcast %7 : vector<1x32xf32> to vector<10x32xf32>
    %1214 = arith.mulf %1212, %1213 : vector<10x32xf32>
    %1215 = vector.broadcast %12 : vector<1x32xf32> to vector<10x32xf32>
    %1216 = arith.addf %1214, %1215 : vector<10x32xf32>
    %c5_i32_327 = arith.constant 5 : i32
    %1217 = vector.broadcast %c5_i32_327 : i32 to vector<2x10xi32>
    %1218 = arith.muli %307, %1217 : vector<2x10xi32>
    %c2_i32_328 = arith.constant 2 : i32
    %1219 = vector.broadcast %c2_i32_328 : i32 to vector<2x10xi32>
    %1220 = arith.addi %1218, %1219 : vector<2x10xi32>
    %1221 = arith.cmpi eq, %308, %1220 : vector<2x10xi32>
    %1222 = arith.extui %1221 : vector<2x10xi1> to vector<2x10xi32>
    %1223 = arith.sitofp %1222 : vector<2x10xi32> to vector<2x10xf32>
    %cst_329 = arith.constant dense<0.000000e+00> : vector<2x32xf32>
    %1224 = tpu.matmul %1223, %1216, %cst_329 {dimension_numbers = #tpu.dot_dimension_numbers<[1], [0], [0], [1], [0, 0, 1, 1], [], []>} : vector<2x10xf32>, vector<10x32xf32>, vector<2x32xf32> -> vector<2x32xf32>
    %cst_330 = arith.constant dense<0.000000e+00> : vector<2x50xf32>
    %1225 = tpu.matmul %1224, %35, %cst_330 {dimension_numbers = #tpu.dot_dimension_numbers<[1], [0], [0], [1], [0, 0, 1, 1], [], []>} : vector<2x32xf32>, vector<32x50xf32>, vector<2x50xf32> -> vector<2x50xf32>
    %1226 = vector.broadcast %36 : vector<1x50xf32> to vector<2x50xf32>
    %1227 = arith.addf %1225, %1226 : vector<2x50xf32>
    %cst_331 = arith.constant dense<0xFF800000> : vector<2xf32>
    %1228 = vector.multi_reduction <maximumf>, %1227, %cst_331 [1] : vector<2x50xf32> to vector<2xf32>
    %1229 = vector.shape_cast %1228 : vector<2xf32> to vector<2x1xf32>
    %1230 = vector.broadcast %1229 : vector<2x1xf32> to vector<2x50xf32>
    %1231 = arith.cmpf oge, %1227, %1230 : vector<2x50xf32>
    %c50_i32_332 = arith.constant 50 : i32
    %1232 = vector.broadcast %c50_i32_332 : i32 to vector<2x50xi32>
    %1233 = arith.select %1231, %304, %1232 : vector<2x50xi1>, vector<2x50xi32>
    %cst_333 = arith.constant dense<2147483647> : vector<2xi32>
    %1234 = vector.multi_reduction <minsi>, %1233, %cst_333 [1] : vector<2x50xi32> to vector<2xi32>
    %1235 = vector.shape_cast %1234 : vector<2xi32> to vector<2x1xi32>
    %c0_i32_334 = arith.constant 0 : i32
    %1236 = vector.broadcast %c0_i32_334 : i32 to vector<2x1xi32>
    %1237 = arith.cmpi sgt, %933, %1236 : vector<2x1xi32>
    %c1_i32_335 = arith.constant 1 : i32
    %1238 = vector.broadcast %c1_i32_335 : i32 to vector<2x1xi32>
    %1239 = arith.select %1237, %1238, %1235 : vector<2x1xi1>, vector<2x1xi32>
    %c2_i32_336 = arith.constant 2 : i32
    %1240 = vector.broadcast %c2_i32_336 : i32 to vector<2x1xi32>
    %1241 = arith.cmpi eq, %1239, %1240 : vector<2x1xi32>
    %1242 = arith.extui %1241 : vector<2x1xi1> to vector<2x1xi32>
    %1243 = arith.ori %933, %1242 : vector<2x1xi32>
    %c3_i32 = arith.constant 3 : i32
    %1244 = vector.broadcast %c3_i32 : i32 to vector<2x5xi32>
    %1245 = arith.cmpi eq, %305, %1244 : vector<2x5xi32>
    %1246 = vector.shape_cast %1239 : vector<2x1xi32> to vector<2x1xi32>
    %1247 = vector.broadcast %1246 : vector<2x1xi32> to vector<2x5xi32>
    %1248 = arith.select %1245, %1247, %938 : vector<2x5xi1>, vector<2x5xi32>
    %1249 = vector.broadcast %1239 : vector<2x1xi32> to vector<2x50xi32>
    %1250 = arith.cmpi eq, %1249, %304 : vector<2x50xi32>
    %1251 = arith.extui %1250 : vector<2x50xi1> to vector<2x50xi32>
    %1252 = arith.sitofp %1251 : vector<2x50xi32> to vector<2x50xf32>
    %cst_337 = arith.constant dense<0.000000e+00> : vector<2x32xf32>
    %1253 = tpu.matmul %1252, %0, %cst_337 {dimension_numbers = #tpu.dot_dimension_numbers<[1], [0], [0], [1], [0, 0, 1, 1], [], []>} : vector<2x50xf32>, vector<50x32xf32>, vector<2x32xf32> -> vector<2x32xf32>
    %1254 = vector.extract_strided_slice %303 {offsets = [3, 0], sizes = [1, 32], strides = [1, 1]} : vector<5x32xf32> to vector<1x32xf32>
    %1255 = vector.broadcast %1254 : vector<1x32xf32> to vector<2x32xf32>
    %1256 = arith.addf %1253, %1255 : vector<2x32xf32>
    %c5_i32_338 = arith.constant 5 : i32
    %1257 = vector.broadcast %c5_i32_338 : i32 to vector<10x2xi32>
    %1258 = arith.muli %310, %1257 : vector<10x2xi32>
    %c3_i32_339 = arith.constant 3 : i32
    %1259 = vector.broadcast %c3_i32_339 : i32 to vector<10x2xi32>
    %1260 = arith.addi %1258, %1259 : vector<10x2xi32>
    %1261 = arith.cmpi eq, %309, %1260 : vector<10x2xi32>
    %1262 = arith.extui %1261 : vector<10x2xi1> to vector<10x2xi32>
    %1263 = arith.sitofp %1262 : vector<10x2xi32> to vector<10x2xf32>
    %c0_i32_340 = arith.constant 0 : i32
    %1264 = vector.broadcast %c0_i32_340 : i32 to vector<10x1xi32>
    %1265 = arith.cmpi slt, %306, %1264 : vector<10x1xi32>
    %c3_i32_341 = arith.constant 3 : i32
    %1266 = vector.broadcast %c3_i32_341 : i32 to vector<10x1xi32>
    %1267 = arith.cmpi eq, %306, %1266 : vector<10x1xi32>
    %1268 = arith.ori %1265, %1267 : vector<10x1xi1>
    %c8_i32_342 = arith.constant 8 : i32
    %1269 = vector.broadcast %c8_i32_342 : i32 to vector<10x1xi32>
    %1270 = arith.cmpi eq, %306, %1269 : vector<10x1xi32>
    %1271 = arith.ori %1268, %1270 : vector<10x1xi1>
    %cst_343 = arith.constant dense<0.000000e+00> : vector<10x32xf32>
    %1272 = tpu.matmul %1263, %1256, %cst_343 {dimension_numbers = #tpu.dot_dimension_numbers<[1], [0], [0], [1], [0, 0, 1, 1], [], []>} : vector<10x2xf32>, vector<2x32xf32>, vector<10x32xf32> -> vector<10x32xf32>
    %1273 = vector.shape_cast %1271 : vector<10x1xi1> to vector<10x1xi1>
    %1274 = vector.broadcast %1273 : vector<10x1xi1> to vector<10x32xi1>
    %1275 = arith.select %1274, %1272, %965 : vector<10x32xi1>, vector<10x32xf32>
    %cst_344 = arith.constant dense<0.000000e+00> : vector<10x96xf32>
    %1276 = tpu.matmul %1275, %21, %cst_344 {dimension_numbers = #tpu.dot_dimension_numbers<[1], [0], [0], [1], [0, 0, 1, 1], [], []>} : vector<10x32xf32>, vector<32x96xf32>, vector<10x96xf32> -> vector<10x96xf32>
    %1277 = vector.broadcast %22 : vector<1x96xf32> to vector<10x96xf32>
    %1278 = arith.addf %1276, %1277 : vector<10x96xf32>
    %1279 = vector.extract_strided_slice %1278 {offsets = [0, 0], sizes = [10, 32], strides = [1, 1]} : vector<10x96xf32> to vector<10x32xf32>
    %1280 = vector.extract_strided_slice %1278 {offsets = [0, 32], sizes = [10, 32], strides = [1, 1]} : vector<10x96xf32> to vector<10x32xf32>
    %1281 = vector.extract_strided_slice %1278 {offsets = [0, 64], sizes = [10, 32], strides = [1, 1]} : vector<10x96xf32> to vector<10x32xf32>
    %1282 = vector.extract_strided_slice %1279 {offsets = [0, 0], sizes = [10, 8], strides = [1, 1]} : vector<10x32xf32> to vector<10x8xf32>
    %1283 = vector.extract_strided_slice %1280 {offsets = [0, 0], sizes = [10, 8], strides = [1, 1]} : vector<10x32xf32> to vector<10x8xf32>
    %cst_345 = arith.constant dense<0.000000e+00> : vector<10x10xf32>
    %1284 = tpu.matmul %1282, %1283, %cst_345 {dimension_numbers = #tpu.dot_dimension_numbers<[1], [1], [0], [0], [0, 0, 1, 0], [], []>} : vector<10x8xf32>, vector<10x8xf32>, vector<10x10xf32> -> vector<10x10xf32>
    %1285 = arith.addf %1284, %107 : vector<10x10xf32>
    %cst_346 = arith.constant dense<0xFF800000> : vector<10xf32>
    %1286 = vector.multi_reduction <maximumf>, %1285, %cst_346 [1] : vector<10x10xf32> to vector<10xf32>
    %1287 = vector.shape_cast %1286 : vector<10xf32> to vector<10x1xf32>
    %1288 = vector.broadcast %1287 : vector<10x1xf32> to vector<10x10xf32>
    %1289 = arith.subf %1285, %1288 : vector<10x10xf32>
    %1290 = math.exp %1289 : vector<10x10xf32>
    %cst_347 = arith.constant dense<0.000000e+00> : vector<10xf32>
    %1291 = vector.multi_reduction <add>, %1290, %cst_347 [1] : vector<10x10xf32> to vector<10xf32>
    %1292 = vector.shape_cast %1291 : vector<10xf32> to vector<10x1xf32>
    %1293 = tpu.reciprocal %1292 {approx = true} : vector<10x1xf32> -> vector<10x1xf32>
    %1294 = vector.broadcast %1293 : vector<10x1xf32> to vector<10x10xf32>
    %1295 = arith.mulf %1290, %1294 : vector<10x10xf32>
    %1296 = vector.extract_strided_slice %1281 {offsets = [0, 0], sizes = [10, 8], strides = [1, 1]} : vector<10x32xf32> to vector<10x8xf32>
    %cst_348 = arith.constant dense<0.000000e+00> : vector<10x8xf32>
    %1297 = tpu.matmul %1295, %1296, %cst_348 {dimension_numbers = #tpu.dot_dimension_numbers<[1], [0], [0], [1], [0, 0, 1, 1], [], []>} : vector<10x10xf32>, vector<10x8xf32>, vector<10x8xf32> -> vector<10x8xf32>
    %1298 = vector.extract_strided_slice %23 {offsets = [0, 0], sizes = [8, 32], strides = [1, 1]} : vector<32x32xf32> to vector<8x32xf32>
    %cst_349 = arith.constant dense<0.000000e+00> : vector<10x32xf32>
    %1299 = tpu.matmul %1297, %1298, %cst_349 {dimension_numbers = #tpu.dot_dimension_numbers<[1], [0], [0], [1], [0, 0, 1, 1], [], []>} : vector<10x8xf32>, vector<8x32xf32>, vector<10x32xf32> -> vector<10x32xf32>
    %1300 = vector.extract_strided_slice %1279 {offsets = [0, 8], sizes = [10, 8], strides = [1, 1]} : vector<10x32xf32> to vector<10x8xf32>
    %1301 = vector.extract_strided_slice %1280 {offsets = [0, 8], sizes = [10, 8], strides = [1, 1]} : vector<10x32xf32> to vector<10x8xf32>
    %cst_350 = arith.constant dense<0.000000e+00> : vector<10x10xf32>
    %1302 = tpu.matmul %1300, %1301, %cst_350 {dimension_numbers = #tpu.dot_dimension_numbers<[1], [1], [0], [0], [0, 0, 1, 0], [], []>} : vector<10x8xf32>, vector<10x8xf32>, vector<10x10xf32> -> vector<10x10xf32>
    %1303 = arith.addf %1302, %107 : vector<10x10xf32>
    %cst_351 = arith.constant dense<0xFF800000> : vector<10xf32>
    %1304 = vector.multi_reduction <maximumf>, %1303, %cst_351 [1] : vector<10x10xf32> to vector<10xf32>
    %1305 = vector.shape_cast %1304 : vector<10xf32> to vector<10x1xf32>
    %1306 = vector.broadcast %1305 : vector<10x1xf32> to vector<10x10xf32>
    %1307 = arith.subf %1303, %1306 : vector<10x10xf32>
    %1308 = math.exp %1307 : vector<10x10xf32>
    %cst_352 = arith.constant dense<0.000000e+00> : vector<10xf32>
    %1309 = vector.multi_reduction <add>, %1308, %cst_352 [1] : vector<10x10xf32> to vector<10xf32>
    %1310 = vector.shape_cast %1309 : vector<10xf32> to vector<10x1xf32>
    %1311 = tpu.reciprocal %1310 {approx = true} : vector<10x1xf32> -> vector<10x1xf32>
    %1312 = vector.broadcast %1311 : vector<10x1xf32> to vector<10x10xf32>
    %1313 = arith.mulf %1308, %1312 : vector<10x10xf32>
    %1314 = vector.extract_strided_slice %1281 {offsets = [0, 8], sizes = [10, 8], strides = [1, 1]} : vector<10x32xf32> to vector<10x8xf32>
    %cst_353 = arith.constant dense<0.000000e+00> : vector<10x8xf32>
    %1315 = tpu.matmul %1313, %1314, %cst_353 {dimension_numbers = #tpu.dot_dimension_numbers<[1], [0], [0], [1], [0, 0, 1, 1], [], []>} : vector<10x10xf32>, vector<10x8xf32>, vector<10x8xf32> -> vector<10x8xf32>
    %1316 = vector.extract_strided_slice %23 {offsets = [8, 0], sizes = [8, 32], strides = [1, 1]} : vector<32x32xf32> to vector<8x32xf32>
    %cst_354 = arith.constant dense<0.000000e+00> : vector<10x32xf32>
    %1317 = tpu.matmul %1315, %1316, %cst_354 {dimension_numbers = #tpu.dot_dimension_numbers<[1], [0], [0], [1], [0, 0, 1, 1], [], []>} : vector<10x8xf32>, vector<8x32xf32>, vector<10x32xf32> -> vector<10x32xf32>
    %1318 = arith.addf %1299, %1317 : vector<10x32xf32>
    %1319 = vector.extract_strided_slice %1279 {offsets = [0, 16], sizes = [10, 8], strides = [1, 1]} : vector<10x32xf32> to vector<10x8xf32>
    %1320 = vector.extract_strided_slice %1280 {offsets = [0, 16], sizes = [10, 8], strides = [1, 1]} : vector<10x32xf32> to vector<10x8xf32>
    %cst_355 = arith.constant dense<0.000000e+00> : vector<10x10xf32>
    %1321 = tpu.matmul %1319, %1320, %cst_355 {dimension_numbers = #tpu.dot_dimension_numbers<[1], [1], [0], [0], [0, 0, 1, 0], [], []>} : vector<10x8xf32>, vector<10x8xf32>, vector<10x10xf32> -> vector<10x10xf32>
    %1322 = arith.addf %1321, %107 : vector<10x10xf32>
    %cst_356 = arith.constant dense<0xFF800000> : vector<10xf32>
    %1323 = vector.multi_reduction <maximumf>, %1322, %cst_356 [1] : vector<10x10xf32> to vector<10xf32>
    %1324 = vector.shape_cast %1323 : vector<10xf32> to vector<10x1xf32>
    %1325 = vector.broadcast %1324 : vector<10x1xf32> to vector<10x10xf32>
    %1326 = arith.subf %1322, %1325 : vector<10x10xf32>
    %1327 = math.exp %1326 : vector<10x10xf32>
    %cst_357 = arith.constant dense<0.000000e+00> : vector<10xf32>
    %1328 = vector.multi_reduction <add>, %1327, %cst_357 [1] : vector<10x10xf32> to vector<10xf32>
    %1329 = vector.shape_cast %1328 : vector<10xf32> to vector<10x1xf32>
    %1330 = tpu.reciprocal %1329 {approx = true} : vector<10x1xf32> -> vector<10x1xf32>
    %1331 = vector.broadcast %1330 : vector<10x1xf32> to vector<10x10xf32>
    %1332 = arith.mulf %1327, %1331 : vector<10x10xf32>
    %1333 = vector.extract_strided_slice %1281 {offsets = [0, 16], sizes = [10, 8], strides = [1, 1]} : vector<10x32xf32> to vector<10x8xf32>
    %cst_358 = arith.constant dense<0.000000e+00> : vector<10x8xf32>
    %1334 = tpu.matmul %1332, %1333, %cst_358 {dimension_numbers = #tpu.dot_dimension_numbers<[1], [0], [0], [1], [0, 0, 1, 1], [], []>} : vector<10x10xf32>, vector<10x8xf32>, vector<10x8xf32> -> vector<10x8xf32>
    %1335 = vector.extract_strided_slice %23 {offsets = [16, 0], sizes = [8, 32], strides = [1, 1]} : vector<32x32xf32> to vector<8x32xf32>
    %cst_359 = arith.constant dense<0.000000e+00> : vector<10x32xf32>
    %1336 = tpu.matmul %1334, %1335, %cst_359 {dimension_numbers = #tpu.dot_dimension_numbers<[1], [0], [0], [1], [0, 0, 1, 1], [], []>} : vector<10x8xf32>, vector<8x32xf32>, vector<10x32xf32> -> vector<10x32xf32>
    %1337 = arith.addf %1318, %1336 : vector<10x32xf32>
    %1338 = vector.extract_strided_slice %1279 {offsets = [0, 24], sizes = [10, 8], strides = [1, 1]} : vector<10x32xf32> to vector<10x8xf32>
    %1339 = vector.extract_strided_slice %1280 {offsets = [0, 24], sizes = [10, 8], strides = [1, 1]} : vector<10x32xf32> to vector<10x8xf32>
    %cst_360 = arith.constant dense<0.000000e+00> : vector<10x10xf32>
    %1340 = tpu.matmul %1338, %1339, %cst_360 {dimension_numbers = #tpu.dot_dimension_numbers<[1], [1], [0], [0], [0, 0, 1, 0], [], []>} : vector<10x8xf32>, vector<10x8xf32>, vector<10x10xf32> -> vector<10x10xf32>
    %1341 = arith.addf %1340, %107 : vector<10x10xf32>
    %cst_361 = arith.constant dense<0xFF800000> : vector<10xf32>
    %1342 = vector.multi_reduction <maximumf>, %1341, %cst_361 [1] : vector<10x10xf32> to vector<10xf32>
    %1343 = vector.shape_cast %1342 : vector<10xf32> to vector<10x1xf32>
    %1344 = vector.broadcast %1343 : vector<10x1xf32> to vector<10x10xf32>
    %1345 = arith.subf %1341, %1344 : vector<10x10xf32>
    %1346 = math.exp %1345 : vector<10x10xf32>
    %cst_362 = arith.constant dense<0.000000e+00> : vector<10xf32>
    %1347 = vector.multi_reduction <add>, %1346, %cst_362 [1] : vector<10x10xf32> to vector<10xf32>
    %1348 = vector.shape_cast %1347 : vector<10xf32> to vector<10x1xf32>
    %1349 = tpu.reciprocal %1348 {approx = true} : vector<10x1xf32> -> vector<10x1xf32>
    %1350 = vector.broadcast %1349 : vector<10x1xf32> to vector<10x10xf32>
    %1351 = arith.mulf %1346, %1350 : vector<10x10xf32>
    %1352 = vector.extract_strided_slice %1281 {offsets = [0, 24], sizes = [10, 8], strides = [1, 1]} : vector<10x32xf32> to vector<10x8xf32>
    %cst_363 = arith.constant dense<0.000000e+00> : vector<10x8xf32>
    %1353 = tpu.matmul %1351, %1352, %cst_363 {dimension_numbers = #tpu.dot_dimension_numbers<[1], [0], [0], [1], [0, 0, 1, 1], [], []>} : vector<10x10xf32>, vector<10x8xf32>, vector<10x8xf32> -> vector<10x8xf32>
    %1354 = vector.extract_strided_slice %23 {offsets = [24, 0], sizes = [8, 32], strides = [1, 1]} : vector<32x32xf32> to vector<8x32xf32>
    %cst_364 = arith.constant dense<0.000000e+00> : vector<10x32xf32>
    %1355 = tpu.matmul %1353, %1354, %cst_364 {dimension_numbers = #tpu.dot_dimension_numbers<[1], [0], [0], [1], [0, 0, 1, 1], [], []>} : vector<10x8xf32>, vector<8x32xf32>, vector<10x32xf32> -> vector<10x32xf32>
    %1356 = arith.addf %1337, %1355 : vector<10x32xf32>
    %1357 = vector.broadcast %24 : vector<1x32xf32> to vector<10x32xf32>
    %1358 = arith.addf %1356, %1357 : vector<10x32xf32>
    %1359 = arith.addf %1275, %1358 : vector<10x32xf32>
    %cst_365 = arith.constant dense<0.000000e+00> : vector<10xf32>
    %1360 = vector.multi_reduction <add>, %1359, %cst_365 [1] : vector<10x32xf32> to vector<10xf32>
    %1361 = vector.shape_cast %1360 : vector<10xf32> to vector<10x1xf32>
    %cst_366 = arith.constant 3.200000e+01 : f32
    %1362 = vector.broadcast %cst_366 : f32 to vector<10x1xf32>
    %1363 = arith.divf %1361, %1362 : vector<10x1xf32>
    %1364 = vector.broadcast %1363 : vector<10x1xf32> to vector<10x32xf32>
    %1365 = arith.subf %1359, %1364 : vector<10x32xf32>
    %1366 = arith.mulf %1365, %1365 : vector<10x32xf32>
    %cst_367 = arith.constant dense<0.000000e+00> : vector<10xf32>
    %1367 = vector.multi_reduction <add>, %1366, %cst_367 [1] : vector<10x32xf32> to vector<10xf32>
    %1368 = vector.shape_cast %1367 : vector<10xf32> to vector<10x1xf32>
    %cst_368 = arith.constant 3.200000e+01 : f32
    %1369 = vector.broadcast %cst_368 : f32 to vector<10x1xf32>
    %1370 = arith.divf %1368, %1369 : vector<10x1xf32>
    %1371 = vector.broadcast %1363 : vector<10x1xf32> to vector<10x32xf32>
    %1372 = arith.subf %1359, %1371 : vector<10x32xf32>
    %cst_369 = arith.constant 9.99999974E-6 : f32
    %1373 = vector.broadcast %cst_369 : f32 to vector<10x1xf32>
    %1374 = arith.addf %1370, %1373 : vector<10x1xf32>
    %1375 = math.rsqrt %1374 : vector<10x1xf32>
    %1376 = vector.broadcast %1375 : vector<10x1xf32> to vector<10x32xf32>
    %1377 = arith.mulf %1372, %1376 : vector<10x32xf32>
    %1378 = vector.broadcast %5 : vector<1x32xf32> to vector<10x32xf32>
    %1379 = arith.mulf %1377, %1378 : vector<10x32xf32>
    %1380 = vector.broadcast %10 : vector<1x32xf32> to vector<10x32xf32>
    %1381 = arith.addf %1379, %1380 : vector<10x32xf32>
    %cst_370 = arith.constant dense<0.000000e+00> : vector<10x32xf32>
    %1382 = tpu.matmul %1381, %25, %cst_370 {dimension_numbers = #tpu.dot_dimension_numbers<[1], [0], [0], [1], [0, 0, 1, 1], [], []>} : vector<10x32xf32>, vector<32x32xf32>, vector<10x32xf32> -> vector<10x32xf32>
    %1383 = vector.broadcast %26 : vector<1x32xf32> to vector<10x32xf32>
    %1384 = arith.addf %1382, %1383 : vector<10x32xf32>
    %1385 = vector.extract_strided_slice %1384 {offsets = [0, 0], sizes = [10, 8], strides = [1, 1]} : vector<10x32xf32> to vector<10x8xf32>
    %1386 = vector.extract_strided_slice %301 {offsets = [0, 0], sizes = [16, 8], strides = [1, 1]} : vector<16x32xf32> to vector<16x8xf32>
    %cst_371 = arith.constant dense<0.000000e+00> : vector<10x16xf32>
    %1387 = tpu.matmul %1385, %1386, %cst_371 {dimension_numbers = #tpu.dot_dimension_numbers<[1], [1], [0], [0], [0, 0, 1, 0], [], []>} : vector<10x8xf32>, vector<16x8xf32>, vector<10x16xf32> -> vector<10x16xf32>
    %1388 = arith.addf %1387, %140 : vector<10x16xf32>
    %cst_372 = arith.constant dense<0xFF800000> : vector<10xf32>
    %1389 = vector.multi_reduction <maximumf>, %1388, %cst_372 [1] : vector<10x16xf32> to vector<10xf32>
    %1390 = vector.shape_cast %1389 : vector<10xf32> to vector<10x1xf32>
    %1391 = vector.broadcast %1390 : vector<10x1xf32> to vector<10x16xf32>
    %1392 = arith.subf %1388, %1391 : vector<10x16xf32>
    %1393 = math.exp %1392 : vector<10x16xf32>
    %cst_373 = arith.constant dense<0.000000e+00> : vector<10xf32>
    %1394 = vector.multi_reduction <add>, %1393, %cst_373 [1] : vector<10x16xf32> to vector<10xf32>
    %1395 = vector.shape_cast %1394 : vector<10xf32> to vector<10x1xf32>
    %1396 = tpu.reciprocal %1395 {approx = true} : vector<10x1xf32> -> vector<10x1xf32>
    %1397 = vector.broadcast %1396 : vector<10x1xf32> to vector<10x16xf32>
    %1398 = arith.mulf %1393, %1397 : vector<10x16xf32>
    %1399 = vector.extract_strided_slice %302 {offsets = [0, 0], sizes = [16, 8], strides = [1, 1]} : vector<16x32xf32> to vector<16x8xf32>
    %cst_374 = arith.constant dense<0.000000e+00> : vector<10x8xf32>
    %1400 = tpu.matmul %1398, %1399, %cst_374 {dimension_numbers = #tpu.dot_dimension_numbers<[1], [0], [0], [1], [0, 0, 1, 1], [], []>} : vector<10x16xf32>, vector<16x8xf32>, vector<10x8xf32> -> vector<10x8xf32>
    %1401 = vector.extract_strided_slice %29 {offsets = [0, 0], sizes = [8, 32], strides = [1, 1]} : vector<32x32xf32> to vector<8x32xf32>
    %cst_375 = arith.constant dense<0.000000e+00> : vector<10x32xf32>
    %1402 = tpu.matmul %1400, %1401, %cst_375 {dimension_numbers = #tpu.dot_dimension_numbers<[1], [0], [0], [1], [0, 0, 1, 1], [], []>} : vector<10x8xf32>, vector<8x32xf32>, vector<10x32xf32> -> vector<10x32xf32>
    %1403 = vector.extract_strided_slice %1384 {offsets = [0, 8], sizes = [10, 8], strides = [1, 1]} : vector<10x32xf32> to vector<10x8xf32>
    %1404 = vector.extract_strided_slice %301 {offsets = [0, 8], sizes = [16, 8], strides = [1, 1]} : vector<16x32xf32> to vector<16x8xf32>
    %cst_376 = arith.constant dense<0.000000e+00> : vector<10x16xf32>
    %1405 = tpu.matmul %1403, %1404, %cst_376 {dimension_numbers = #tpu.dot_dimension_numbers<[1], [1], [0], [0], [0, 0, 1, 0], [], []>} : vector<10x8xf32>, vector<16x8xf32>, vector<10x16xf32> -> vector<10x16xf32>
    %1406 = arith.addf %1405, %140 : vector<10x16xf32>
    %cst_377 = arith.constant dense<0xFF800000> : vector<10xf32>
    %1407 = vector.multi_reduction <maximumf>, %1406, %cst_377 [1] : vector<10x16xf32> to vector<10xf32>
    %1408 = vector.shape_cast %1407 : vector<10xf32> to vector<10x1xf32>
    %1409 = vector.broadcast %1408 : vector<10x1xf32> to vector<10x16xf32>
    %1410 = arith.subf %1406, %1409 : vector<10x16xf32>
    %1411 = math.exp %1410 : vector<10x16xf32>
    %cst_378 = arith.constant dense<0.000000e+00> : vector<10xf32>
    %1412 = vector.multi_reduction <add>, %1411, %cst_378 [1] : vector<10x16xf32> to vector<10xf32>
    %1413 = vector.shape_cast %1412 : vector<10xf32> to vector<10x1xf32>
    %1414 = tpu.reciprocal %1413 {approx = true} : vector<10x1xf32> -> vector<10x1xf32>
    %1415 = vector.broadcast %1414 : vector<10x1xf32> to vector<10x16xf32>
    %1416 = arith.mulf %1411, %1415 : vector<10x16xf32>
    %1417 = vector.extract_strided_slice %302 {offsets = [0, 8], sizes = [16, 8], strides = [1, 1]} : vector<16x32xf32> to vector<16x8xf32>
    %cst_379 = arith.constant dense<0.000000e+00> : vector<10x8xf32>
    %1418 = tpu.matmul %1416, %1417, %cst_379 {dimension_numbers = #tpu.dot_dimension_numbers<[1], [0], [0], [1], [0, 0, 1, 1], [], []>} : vector<10x16xf32>, vector<16x8xf32>, vector<10x8xf32> -> vector<10x8xf32>
    %1419 = vector.extract_strided_slice %29 {offsets = [8, 0], sizes = [8, 32], strides = [1, 1]} : vector<32x32xf32> to vector<8x32xf32>
    %cst_380 = arith.constant dense<0.000000e+00> : vector<10x32xf32>
    %1420 = tpu.matmul %1418, %1419, %cst_380 {dimension_numbers = #tpu.dot_dimension_numbers<[1], [0], [0], [1], [0, 0, 1, 1], [], []>} : vector<10x8xf32>, vector<8x32xf32>, vector<10x32xf32> -> vector<10x32xf32>
    %1421 = arith.addf %1402, %1420 : vector<10x32xf32>
    %1422 = vector.extract_strided_slice %1384 {offsets = [0, 16], sizes = [10, 8], strides = [1, 1]} : vector<10x32xf32> to vector<10x8xf32>
    %1423 = vector.extract_strided_slice %301 {offsets = [0, 16], sizes = [16, 8], strides = [1, 1]} : vector<16x32xf32> to vector<16x8xf32>
    %cst_381 = arith.constant dense<0.000000e+00> : vector<10x16xf32>
    %1424 = tpu.matmul %1422, %1423, %cst_381 {dimension_numbers = #tpu.dot_dimension_numbers<[1], [1], [0], [0], [0, 0, 1, 0], [], []>} : vector<10x8xf32>, vector<16x8xf32>, vector<10x16xf32> -> vector<10x16xf32>
    %1425 = arith.addf %1424, %140 : vector<10x16xf32>
    %cst_382 = arith.constant dense<0xFF800000> : vector<10xf32>
    %1426 = vector.multi_reduction <maximumf>, %1425, %cst_382 [1] : vector<10x16xf32> to vector<10xf32>
    %1427 = vector.shape_cast %1426 : vector<10xf32> to vector<10x1xf32>
    %1428 = vector.broadcast %1427 : vector<10x1xf32> to vector<10x16xf32>
    %1429 = arith.subf %1425, %1428 : vector<10x16xf32>
    %1430 = math.exp %1429 : vector<10x16xf32>
    %cst_383 = arith.constant dense<0.000000e+00> : vector<10xf32>
    %1431 = vector.multi_reduction <add>, %1430, %cst_383 [1] : vector<10x16xf32> to vector<10xf32>
    %1432 = vector.shape_cast %1431 : vector<10xf32> to vector<10x1xf32>
    %1433 = tpu.reciprocal %1432 {approx = true} : vector<10x1xf32> -> vector<10x1xf32>
    %1434 = vector.broadcast %1433 : vector<10x1xf32> to vector<10x16xf32>
    %1435 = arith.mulf %1430, %1434 : vector<10x16xf32>
    %1436 = vector.extract_strided_slice %302 {offsets = [0, 16], sizes = [16, 8], strides = [1, 1]} : vector<16x32xf32> to vector<16x8xf32>
    %cst_384 = arith.constant dense<0.000000e+00> : vector<10x8xf32>
    %1437 = tpu.matmul %1435, %1436, %cst_384 {dimension_numbers = #tpu.dot_dimension_numbers<[1], [0], [0], [1], [0, 0, 1, 1], [], []>} : vector<10x16xf32>, vector<16x8xf32>, vector<10x8xf32> -> vector<10x8xf32>
    %1438 = vector.extract_strided_slice %29 {offsets = [16, 0], sizes = [8, 32], strides = [1, 1]} : vector<32x32xf32> to vector<8x32xf32>
    %cst_385 = arith.constant dense<0.000000e+00> : vector<10x32xf32>
    %1439 = tpu.matmul %1437, %1438, %cst_385 {dimension_numbers = #tpu.dot_dimension_numbers<[1], [0], [0], [1], [0, 0, 1, 1], [], []>} : vector<10x8xf32>, vector<8x32xf32>, vector<10x32xf32> -> vector<10x32xf32>
    %1440 = arith.addf %1421, %1439 : vector<10x32xf32>
    %1441 = vector.extract_strided_slice %1384 {offsets = [0, 24], sizes = [10, 8], strides = [1, 1]} : vector<10x32xf32> to vector<10x8xf32>
    %1442 = vector.extract_strided_slice %301 {offsets = [0, 24], sizes = [16, 8], strides = [1, 1]} : vector<16x32xf32> to vector<16x8xf32>
    %cst_386 = arith.constant dense<0.000000e+00> : vector<10x16xf32>
    %1443 = tpu.matmul %1441, %1442, %cst_386 {dimension_numbers = #tpu.dot_dimension_numbers<[1], [1], [0], [0], [0, 0, 1, 0], [], []>} : vector<10x8xf32>, vector<16x8xf32>, vector<10x16xf32> -> vector<10x16xf32>
    %1444 = arith.addf %1443, %140 : vector<10x16xf32>
    %cst_387 = arith.constant dense<0xFF800000> : vector<10xf32>
    %1445 = vector.multi_reduction <maximumf>, %1444, %cst_387 [1] : vector<10x16xf32> to vector<10xf32>
    %1446 = vector.shape_cast %1445 : vector<10xf32> to vector<10x1xf32>
    %1447 = vector.broadcast %1446 : vector<10x1xf32> to vector<10x16xf32>
    %1448 = arith.subf %1444, %1447 : vector<10x16xf32>
    %1449 = math.exp %1448 : vector<10x16xf32>
    %cst_388 = arith.constant dense<0.000000e+00> : vector<10xf32>
    %1450 = vector.multi_reduction <add>, %1449, %cst_388 [1] : vector<10x16xf32> to vector<10xf32>
    %1451 = vector.shape_cast %1450 : vector<10xf32> to vector<10x1xf32>
    %1452 = tpu.reciprocal %1451 {approx = true} : vector<10x1xf32> -> vector<10x1xf32>
    %1453 = vector.broadcast %1452 : vector<10x1xf32> to vector<10x16xf32>
    %1454 = arith.mulf %1449, %1453 : vector<10x16xf32>
    %1455 = vector.extract_strided_slice %302 {offsets = [0, 24], sizes = [16, 8], strides = [1, 1]} : vector<16x32xf32> to vector<16x8xf32>
    %cst_389 = arith.constant dense<0.000000e+00> : vector<10x8xf32>
    %1456 = tpu.matmul %1454, %1455, %cst_389 {dimension_numbers = #tpu.dot_dimension_numbers<[1], [0], [0], [1], [0, 0, 1, 1], [], []>} : vector<10x16xf32>, vector<16x8xf32>, vector<10x8xf32> -> vector<10x8xf32>
    %1457 = vector.extract_strided_slice %29 {offsets = [24, 0], sizes = [8, 32], strides = [1, 1]} : vector<32x32xf32> to vector<8x32xf32>
    %cst_390 = arith.constant dense<0.000000e+00> : vector<10x32xf32>
    %1458 = tpu.matmul %1456, %1457, %cst_390 {dimension_numbers = #tpu.dot_dimension_numbers<[1], [0], [0], [1], [0, 0, 1, 1], [], []>} : vector<10x8xf32>, vector<8x32xf32>, vector<10x32xf32> -> vector<10x32xf32>
    %1459 = arith.addf %1440, %1458 : vector<10x32xf32>
    %1460 = vector.broadcast %30 : vector<1x32xf32> to vector<10x32xf32>
    %1461 = arith.addf %1459, %1460 : vector<10x32xf32>
    %1462 = arith.addf %1381, %1461 : vector<10x32xf32>
    %cst_391 = arith.constant dense<0.000000e+00> : vector<10xf32>
    %1463 = vector.multi_reduction <add>, %1462, %cst_391 [1] : vector<10x32xf32> to vector<10xf32>
    %1464 = vector.shape_cast %1463 : vector<10xf32> to vector<10x1xf32>
    %cst_392 = arith.constant 3.200000e+01 : f32
    %1465 = vector.broadcast %cst_392 : f32 to vector<10x1xf32>
    %1466 = arith.divf %1464, %1465 : vector<10x1xf32>
    %1467 = vector.broadcast %1466 : vector<10x1xf32> to vector<10x32xf32>
    %1468 = arith.subf %1462, %1467 : vector<10x32xf32>
    %1469 = arith.mulf %1468, %1468 : vector<10x32xf32>
    %cst_393 = arith.constant dense<0.000000e+00> : vector<10xf32>
    %1470 = vector.multi_reduction <add>, %1469, %cst_393 [1] : vector<10x32xf32> to vector<10xf32>
    %1471 = vector.shape_cast %1470 : vector<10xf32> to vector<10x1xf32>
    %cst_394 = arith.constant 3.200000e+01 : f32
    %1472 = vector.broadcast %cst_394 : f32 to vector<10x1xf32>
    %1473 = arith.divf %1471, %1472 : vector<10x1xf32>
    %1474 = vector.broadcast %1466 : vector<10x1xf32> to vector<10x32xf32>
    %1475 = arith.subf %1462, %1474 : vector<10x32xf32>
    %cst_395 = arith.constant 9.99999974E-6 : f32
    %1476 = vector.broadcast %cst_395 : f32 to vector<10x1xf32>
    %1477 = arith.addf %1473, %1476 : vector<10x1xf32>
    %1478 = math.rsqrt %1477 : vector<10x1xf32>
    %1479 = vector.broadcast %1478 : vector<10x1xf32> to vector<10x32xf32>
    %1480 = arith.mulf %1475, %1479 : vector<10x32xf32>
    %1481 = vector.broadcast %6 : vector<1x32xf32> to vector<10x32xf32>
    %1482 = arith.mulf %1480, %1481 : vector<10x32xf32>
    %1483 = vector.broadcast %11 : vector<1x32xf32> to vector<10x32xf32>
    %1484 = arith.addf %1482, %1483 : vector<10x32xf32>
    %cst_396 = arith.constant dense<0.000000e+00> : vector<10x64xf32>
    %1485 = tpu.matmul %1484, %31, %cst_396 {dimension_numbers = #tpu.dot_dimension_numbers<[1], [0], [0], [1], [0, 0, 1, 1], [], []>} : vector<10x32xf32>, vector<32x64xf32>, vector<10x64xf32> -> vector<10x64xf32>
    %1486 = vector.broadcast %32 : vector<1x64xf32> to vector<10x64xf32>
    %1487 = arith.addf %1485, %1486 : vector<10x64xf32>
    %cst_397 = arith.constant 5.000000e-01 : f32
    %1488 = vector.broadcast %cst_397 : f32 to vector<10x64xf32>
    %1489 = arith.mulf %1488, %1487 : vector<10x64xf32>
    %1490 = arith.mulf %1487, %1487 : vector<10x64xf32>
    %1491 = arith.mulf %1490, %1487 : vector<10x64xf32>
    %cst_398 = arith.constant 4.471500e-02 : f32
    %1492 = vector.broadcast %cst_398 : f32 to vector<10x64xf32>
    %1493 = arith.mulf %1492, %1491 : vector<10x64xf32>
    %1494 = arith.addf %1487, %1493 : vector<10x64xf32>
    %cst_399 = arith.constant 0.797884583 : f32
    %1495 = vector.broadcast %cst_399 : f32 to vector<10x64xf32>
    %1496 = arith.mulf %1495, %1494 : vector<10x64xf32>
    %1497 = math.tanh %1496 : vector<10x64xf32>
    %cst_400 = arith.constant 1.000000e+00 : f32
    %1498 = vector.broadcast %cst_400 : f32 to vector<10x64xf32>
    %1499 = arith.addf %1498, %1497 : vector<10x64xf32>
    %1500 = arith.mulf %1489, %1499 : vector<10x64xf32>
    %cst_401 = arith.constant dense<0.000000e+00> : vector<10x32xf32>
    %1501 = tpu.matmul %1500, %33, %cst_401 {dimension_numbers = #tpu.dot_dimension_numbers<[1], [0], [0], [1], [0, 0, 1, 1], [], []>} : vector<10x64xf32>, vector<64x32xf32>, vector<10x32xf32> -> vector<10x32xf32>
    %1502 = vector.broadcast %34 : vector<1x32xf32> to vector<10x32xf32>
    %1503 = arith.addf %1501, %1502 : vector<10x32xf32>
    %1504 = arith.addf %1484, %1503 : vector<10x32xf32>
    %cst_402 = arith.constant dense<0.000000e+00> : vector<10xf32>
    %1505 = vector.multi_reduction <add>, %1504, %cst_402 [1] : vector<10x32xf32> to vector<10xf32>
    %1506 = vector.shape_cast %1505 : vector<10xf32> to vector<10x1xf32>
    %cst_403 = arith.constant 3.200000e+01 : f32
    %1507 = vector.broadcast %cst_403 : f32 to vector<10x1xf32>
    %1508 = arith.divf %1506, %1507 : vector<10x1xf32>
    %1509 = vector.broadcast %1508 : vector<10x1xf32> to vector<10x32xf32>
    %1510 = arith.subf %1504, %1509 : vector<10x32xf32>
    %1511 = arith.mulf %1510, %1510 : vector<10x32xf32>
    %cst_404 = arith.constant dense<0.000000e+00> : vector<10xf32>
    %1512 = vector.multi_reduction <add>, %1511, %cst_404 [1] : vector<10x32xf32> to vector<10xf32>
    %1513 = vector.shape_cast %1512 : vector<10xf32> to vector<10x1xf32>
    %cst_405 = arith.constant 3.200000e+01 : f32
    %1514 = vector.broadcast %cst_405 : f32 to vector<10x1xf32>
    %1515 = arith.divf %1513, %1514 : vector<10x1xf32>
    %1516 = vector.broadcast %1508 : vector<10x1xf32> to vector<10x32xf32>
    %1517 = arith.subf %1504, %1516 : vector<10x32xf32>
    %cst_406 = arith.constant 9.99999974E-6 : f32
    %1518 = vector.broadcast %cst_406 : f32 to vector<10x1xf32>
    %1519 = arith.addf %1515, %1518 : vector<10x1xf32>
    %1520 = math.rsqrt %1519 : vector<10x1xf32>
    %1521 = vector.broadcast %1520 : vector<10x1xf32> to vector<10x32xf32>
    %1522 = arith.mulf %1517, %1521 : vector<10x32xf32>
    %1523 = vector.broadcast %7 : vector<1x32xf32> to vector<10x32xf32>
    %1524 = arith.mulf %1522, %1523 : vector<10x32xf32>
    %1525 = vector.broadcast %12 : vector<1x32xf32> to vector<10x32xf32>
    %1526 = arith.addf %1524, %1525 : vector<10x32xf32>
    %c5_i32_407 = arith.constant 5 : i32
    %1527 = vector.broadcast %c5_i32_407 : i32 to vector<2x10xi32>
    %1528 = arith.muli %307, %1527 : vector<2x10xi32>
    %c3_i32_408 = arith.constant 3 : i32
    %1529 = vector.broadcast %c3_i32_408 : i32 to vector<2x10xi32>
    %1530 = arith.addi %1528, %1529 : vector<2x10xi32>
    %1531 = arith.cmpi eq, %308, %1530 : vector<2x10xi32>
    %1532 = arith.extui %1531 : vector<2x10xi1> to vector<2x10xi32>
    %1533 = arith.sitofp %1532 : vector<2x10xi32> to vector<2x10xf32>
    %cst_409 = arith.constant dense<0.000000e+00> : vector<2x32xf32>
    %1534 = tpu.matmul %1533, %1526, %cst_409 {dimension_numbers = #tpu.dot_dimension_numbers<[1], [0], [0], [1], [0, 0, 1, 1], [], []>} : vector<2x10xf32>, vector<10x32xf32>, vector<2x32xf32> -> vector<2x32xf32>
    %cst_410 = arith.constant dense<0.000000e+00> : vector<2x50xf32>
    %1535 = tpu.matmul %1534, %35, %cst_410 {dimension_numbers = #tpu.dot_dimension_numbers<[1], [0], [0], [1], [0, 0, 1, 1], [], []>} : vector<2x32xf32>, vector<32x50xf32>, vector<2x50xf32> -> vector<2x50xf32>
    %1536 = vector.broadcast %36 : vector<1x50xf32> to vector<2x50xf32>
    %1537 = arith.addf %1535, %1536 : vector<2x50xf32>
    %cst_411 = arith.constant dense<0xFF800000> : vector<2xf32>
    %1538 = vector.multi_reduction <maximumf>, %1537, %cst_411 [1] : vector<2x50xf32> to vector<2xf32>
    %1539 = vector.shape_cast %1538 : vector<2xf32> to vector<2x1xf32>
    %1540 = vector.broadcast %1539 : vector<2x1xf32> to vector<2x50xf32>
    %1541 = arith.cmpf oge, %1537, %1540 : vector<2x50xf32>
    %c50_i32_412 = arith.constant 50 : i32
    %1542 = vector.broadcast %c50_i32_412 : i32 to vector<2x50xi32>
    %1543 = arith.select %1541, %304, %1542 : vector<2x50xi1>, vector<2x50xi32>
    %cst_413 = arith.constant dense<2147483647> : vector<2xi32>
    %1544 = vector.multi_reduction <minsi>, %1543, %cst_413 [1] : vector<2x50xi32> to vector<2xi32>
    %1545 = vector.shape_cast %1544 : vector<2xi32> to vector<2x1xi32>
    %c0_i32_414 = arith.constant 0 : i32
    %1546 = vector.broadcast %c0_i32_414 : i32 to vector<2x1xi32>
    %1547 = arith.cmpi sgt, %1243, %1546 : vector<2x1xi32>
    %c1_i32_415 = arith.constant 1 : i32
    %1548 = vector.broadcast %c1_i32_415 : i32 to vector<2x1xi32>
    %1549 = arith.select %1547, %1548, %1545 : vector<2x1xi1>, vector<2x1xi32>
    %c4_i32 = arith.constant 4 : i32
    %1550 = vector.broadcast %c4_i32 : i32 to vector<2x5xi32>
    %1551 = arith.cmpi eq, %305, %1550 : vector<2x5xi32>
    %1552 = vector.shape_cast %1549 : vector<2x1xi32> to vector<2x1xi32>
    %1553 = vector.broadcast %1552 : vector<2x1xi32> to vector<2x5xi32>
    %1554 = arith.select %1551, %1553, %1248 : vector<2x5xi1>, vector<2x5xi32>
    %c0_416 = arith.constant 0 : index
    %c0_417 = arith.constant 0 : index
    %1555 = vector.load %arg2[%c0_416, %c0_417] : memref<2x5xi32, #tpu.memory_space<vmem>>, vector<2x5xi32>
    tpu.vector_store %arg2[%c0_416, %c0_417], %1554 {strides = array<i32>} : memref<2x5xi32, #tpu.memory_space<vmem>>, vector<2x5xi32>,
    %c1_i32_418 = arith.constant 1 : i32
    %1556 = vector.broadcast %c1_i32_418 : i32 to vector<2x5xi32>
    %1557 = arith.cmpi ne, %39, %1556 : vector<2x5xi32>
    %c1_i32_419 = arith.constant 1 : i32
    %1558 = vector.broadcast %c1_i32_419 : i32 to vector<2x5xi32>
    %1559 = arith.cmpi sge, %305, %1558 : vector<2x5xi32>
    %1560 = arith.andi %1557, %1559 : vector<2x5xi1>
    %1561 = arith.cmpi eq, %1554, %39 : vector<2x5xi32>
    %c3_i32_420 = arith.constant 3 : i32
    %1562 = vector.broadcast %c3_i32_420 : i32 to vector<2x5xi32>
    %1563 = arith.cmpi ne, %1554, %1562 : vector<2x5xi32>
    %1564 = arith.andi %1561, %1563 : vector<2x5xi1>
    %1565 = arith.andi %1560, %1564 : vector<2x5xi1>
    %cst_421 = arith.constant 1.000000e+00 : f32
    %cst_422 = arith.constant 0.000000e+00 : f32
    %1566 = vector.broadcast %cst_421 : f32 to vector<2x5xf32>
    %1567 = vector.broadcast %cst_422 : f32 to vector<2x5xf32>
    %1568 = arith.select %1565, %1566, %1567 : vector<2x5xi1>, vector<2x5xf32>
    %cst_423 = arith.constant 1.000000e+00 : f32
    %cst_424 = arith.constant 0.000000e+00 : f32
    %1569 = vector.broadcast %cst_423 : f32 to vector<2x5xf32>
    %1570 = vector.broadcast %cst_424 : f32 to vector<2x5xf32>
    %1571 = arith.select %1560, %1569, %1570 : vector<2x5xi1>, vector<2x5xf32>
    %cst_425 = arith.constant dense<true> : vector<2x5xi1>
    %1572 = arith.xori %1564, %cst_425 : vector<2x5xi1>
    %1573 = arith.andi %1560, %1572 : vector<2x5xi1>
    %cst_426 = arith.constant 1.000000e+00 : f32
    %cst_427 = arith.constant 0.000000e+00 : f32
    %1574 = vector.broadcast %cst_426 : f32 to vector<2x5xf32>
    %1575 = vector.broadcast %cst_427 : f32 to vector<2x5xf32>
    %1576 = arith.select %1573, %1574, %1575 : vector<2x5xi1>, vector<2x5xf32>
    %cst_428 = arith.constant dense<0.000000e+00> : vector<2xf32>
    %1577 = vector.multi_reduction <add>, %1568, %cst_428 [1] : vector<2x5xf32> to vector<2xf32>
    %1578 = vector.shape_cast %1577 : vector<2xf32> to vector<2x1xf32>
    %cst_429 = arith.constant dense<0.000000e+00> : vector<1xf32>
    %1579 = vector.multi_reduction <add>, %1578, %cst_429 [0] : vector<2x1xf32> to vector<1xf32>
    %1580 = vector.shape_cast %1579 : vector<1xf32> to vector<1x1xf32>
    %cst_430 = arith.constant dense<0.000000e+00> : vector<2xf32>
    %1581 = vector.multi_reduction <add>, %1571, %cst_430 [1] : vector<2x5xf32> to vector<2xf32>
    %1582 = vector.shape_cast %1581 : vector<2xf32> to vector<2x1xf32>
    %cst_431 = arith.constant dense<0.000000e+00> : vector<1xf32>
    %1583 = vector.multi_reduction <add>, %1582, %cst_431 [0] : vector<2x1xf32> to vector<1xf32>
    %1584 = vector.shape_cast %1583 : vector<1xf32> to vector<1x1xf32>
    %cst_432 = arith.constant dense<0.000000e+00> : vector<2xf32>
    %1585 = vector.multi_reduction <add>, %1576, %cst_432 [1] : vector<2x5xf32> to vector<2xf32>
    %1586 = vector.shape_cast %1585 : vector<2xf32> to vector<2x1xf32>
    %cst_433 = arith.constant 0.000000e+00 : f32
    %1587 = vector.broadcast %cst_433 : f32 to vector<2x1xf32>
    %1588 = arith.cmpf oeq, %1586, %1587 : vector<2x1xf32>
    %cst_434 = arith.constant 1.000000e+00 : f32
    %cst_435 = arith.constant 0.000000e+00 : f32
    %1589 = vector.broadcast %cst_434 : f32 to vector<2x1xf32>
    %1590 = vector.broadcast %cst_435 : f32 to vector<2x1xf32>
    %1591 = arith.select %1588, %1589, %1590 : vector<2x1xi1>, vector<2x1xf32>
    %cst_436 = arith.constant 1.000000e+00 : f32
    %1592 = vector.broadcast %cst_436 : f32 to vector<1x1xf32>
    %1593 = arith.maximumf %1584, %1592 : vector<1x1xf32>
    %1594 = arith.divf %1580, %1593 : vector<1x1xf32>
    %cst_437 = arith.constant dense<0.000000e+00> : vector<1xf32>
    %1595 = vector.multi_reduction <add>, %1591, %cst_437 [0] : vector<2x1xf32> to vector<1xf32>
    %1596 = vector.shape_cast %1595 : vector<1xf32> to vector<1x1xf32>
    %cst_438 = arith.constant 5.000000e-01 : f32
    %1597 = vector.broadcast %cst_438 : f32 to vector<1x1xf32>
    %1598 = arith.mulf %1596, %1597 : vector<1x1xf32>
    %1599 = tpu.concatenate %1594, %1598 in 1 : vector<1x1xf32>, vector<1x1xf32> -> vector<1x2xf32>
    %c0_439 = arith.constant 0 : index
    %c0_440 = arith.constant 0 : index
    %1600 = vector.load %arg3[%c0_439, %c0_440] : memref<1x2xf32, #tpu.memory_space<vmem>>, vector<1x2xf32>
    tpu.vector_store %arg3[%c0_439, %c0_440], %1599 {strides = array<i32>} : memref<1x2xf32, #tpu.memory_space<vmem>>, vector<1x2xf32>,
    return
  }
}

</mosaic_0001>

<llo_original>
// kernel: bart_generator_test_forward.1
$region0: #{bart_generator_test_forward.1}
  #allocation0 [shape = 'u32[]', space=smem, size = 0x4, offset = 0x4, fixed_abs, tag = 'smem constant byte address 0x4 - core index']
  #allocation1 [shape = 'u32[72,128]{1,0:T(1,128)}', space=vmem, size = 0x9000, scoped, tag = 'internal scratch']
  %s0 = inlined_call_operand.vmem [shape: s32[32,16], index: 0, kind: input, shape index: {}]
  %s1 = inlined_call_operand.hbm [shape: f32[624,128], index: 1, kind: input, shape index: {}]
  %s2 = inlined_call_operand.hbm [shape: s32[2,5], index: 2, kind: output, shape index: {0}]
  %s3 = inlined_call_operand.vmem [shape: f32[1,2], index: 3, kind: output, shape index: {1}]
  %4 = xla_tuple %s2, %s3
  %s5 = sld [smem:[#allocation0]]
  $region30: #{bart_generator_test_forward.1} parent=0
    _
  %s7 = ssub.s32 1, %s5
  %s8 = scalar_select 0, %s7, %s5
  $region1: #{bart_generator_test_forward.1} parent=0
    #allocation2 [shape = 'u8[319488]{0}', space=vmem, size = 0x4e000, scoped, tag = 'input window, operand 1, single buffered']
    #allocation3 [shape = 's32[1]{0}', space=sflag, size = 0x4, scoped, tag = 'scoped memory for bart_generator_test_forward.1']
    #allocation4 [shape = 's32[1]{0}', space=sflag, size = 0x4, scoped, tag = 'scoped memory for bart_generator_test_forward.1']
    #allocation5 [shape = 'u8[1024]{0}', space=vmem, size = 0x400, scoped, tag = 'output window, operand 0, single buffered']
    %9 = vsyncpa [#allocation3], 0
    %10 = vsyncpa [#allocation4], 0
    // Predicated region
    $region2: #{bart_generator_test_forward.1} parent=1 // pred_check
      _
    $region3: #{bart_generator_test_forward.1} parent=1 // pred_check_branch
      %12 = sbr.rel (0) target = $region5
    $region4: #{bart_generator_test_forward.1} parent=1 // pred_region
      _
    $region5: #{bart_generator_test_forward.1} parent=1 // pred_fallthru
      _
    // Predicated region
    $region6: #{bart_generator_test_forward.1} parent=1 // pred_check
      _
    $region7: #{bart_generator_test_forward.1} parent=1 // pred_check_branch
      %14 = sbr.rel (0) target = $region9
    $region8: #{bart_generator_test_forward.1} parent=1 // pred_region
      %16 = vsyncadd [#allocation3], 0
      %s17 = sshll.u32 %s1, 4
      %s18 = int_to_ptr.hbm [resolvable:$true] %s17
      %s19 = sshll.u32 [#allocation2], 4
      %s20 = int_to_ptr.vmem [resolvable:$true] %s19
      %25 = dma.hbm_to_vmem [thread:$0]  %s18, 9984, %s20, [#allocation3], 128, 128, 8
    $region9: #{bart_generator_test_forward.1} parent=1 // pred_fallthru
      _
    // Predicated region
    $region10: #{bart_generator_test_forward.1} parent=1 // pred_check
      _
    $region11: #{bart_generator_test_forward.1} parent=1 // pred_check_branch
      %27 = sbr.rel (0) target = $region13
    $region12: #{bart_generator_test_forward.1} parent=1 // pred_region
      %29 = dma.done [#allocation3], 9984
    $region13: #{bart_generator_test_forward.1} parent=1 // pred_fallthru
      _
    %v30 = vld [vmem:[#allocation2] sm:$0xff]
    %v31 = vld [vmem:[#allocation2 + $0x8] sm:$0xff]
    %v32 = vld [vmem:[#allocation2 + $0x10] sm:$0xff]
    %v33 = vld [vmem:[#allocation2 + $0x18] sm:$0xff]
    %v34 = vld [vmem:[#allocation2 + $0x20] sm:$0xff]
    %v35 = vld [vmem:[#allocation2 + $0x28] sm:$0xff]
    %v36 = vld [vmem:[#allocation2 + $0x30] sm:$0x3]
    %v37 = vld [vmem:[#allocation2 + $0x38] sm:$0xff]
    %v38 = vld [vmem:[#allocation2 + $0x48] sm:$0x1f]
    %v39 = vld [vmem:[#allocation2 + $0x50] sm:$0xff]
    %v40 = vld [vmem:[#allocation2 + $0x58] sm:$0xff]
    %v41 = vld [vmem:[#allocation2 + $0x60] sm:$0xff]
    %v42 = vld [vmem:[#allocation2 + $0x68] sm:$0xff]
    %v43 = vld [vmem:[#allocation2 + $0x70] sm:$0x1]
    %v44 = vld [vmem:[#allocation2 + $0x78] sm:$0xff]
    %v45 = vld [vmem:[#allocation2 + $0x80] sm:$0xff]
    %v46 = vld [vmem:[#allocation2 + $0x88] sm:$0xff]
    %v47 = vld [vmem:[#allocation2 + $0x90] sm:$0xff]
    %v48 = vld [vmem:[#allocation2 + $0x98] sm:$0x1]
    %v49 = vld [vmem:[#allocation2 + $0xa0] sm:$0xff]
    %v50 = vld [vmem:[#allocation2 + $0xa8] sm:$0xff]
    %v51 = vld [vmem:[#allocation2 + $0xb0] sm:$0xff]
    %v52 = vld [vmem:[#allocation2 + $0xb8] sm:$0xff]
    %v53 = vld [vmem:[#allocation2 + $0xc0] sm:$0x1]
    %v54 = vld [vmem:[#allocation2 + $0xc8] sm:$0xff]
    %v55 = vld [vmem:[#allocation2 + $0xd0] sm:$0xff]
    %v56 = vld [vmem:[#allocation2 + $0xd8] sm:$0xff]
    %v57 = vld [vmem:[#allocation2 + $0xe0] sm:$0xff]
    %v58 = vld [vmem:[#allocation2 + $0xe8] sm:$0xff]
    %v59 = vld [vmem:[#allocation2 + $0xf0] sm:$0xff]
    %v60 = vld [vmem:[#allocation2 + $0xf8] sm:$0xff]
    %v61 = vld [vmem:[#allocation2 + $0x100] sm:$0xff]
    %v62 = vld [vmem:[#allocation2 + $0x108] sm:$0x1]
    %v63 = vld [vmem:[#allocation2 + $0x110] sm:$0xff]
    %v64 = vld [vmem:[#allocation2 + $0x118] sm:$0xff]
    %v65 = vld [vmem:[#allocation2 + $0x120] sm:$0xff]
    %v66 = vld [vmem:[#allocation2 + $0x128] sm:$0xff]
    %v67 = vld [vmem:[#allocation2 + $0x130] sm:$0x1]
    %v68 = vld [vmem:[#allocation2 + $0x138] sm:$0xff]
    %v69 = vld [vmem:[#allocation2 + $0x140] sm:$0xff]
    %v70 = vld [vmem:[#allocation2 + $0x148] sm:$0xff]
    %v71 = vld [vmem:[#allocation2 + $0x150] sm:$0xff]
    %v72 = vld [vmem:[#allocation2 + $0x158] sm:$0x1]
    %v73 = vld [vmem:[#allocation2 + $0x160] sm:$0xff]
    %v74 = vld [vmem:[#allocation2 + $0x168] sm:$0xff]
    %v75 = vld [vmem:[#allocation2 + $0x170] sm:$0xff]
    %v76 = vld [vmem:[#allocation2 + $0x178] sm:$0xff]
    %v77 = vld [vmem:[#allocation2 + $0x180] sm:$0x1]
    %v78 = vld [vmem:[#allocation2 + $0x188] sm:$0xff]
    %v79 = vld [vmem:[#allocation2 + $0x190] sm:$0xff]
    %v80 = vld [vmem:[#allocation2 + $0x198] sm:$0xff]
    %v81 = vld [vmem:[#allocation2 + $0x1a0] sm:$0xff]
    %v82 = vld [vmem:[#allocation2 + $0x1a8] sm:$0x1]
    %v83 = vld [vmem:[#allocation2 + $0x1b0] sm:$0xff]
    %v84 = vld [vmem:[#allocation2 + $0x1b8] sm:$0xff]
    %v85 = vld [vmem:[#allocation2 + $0x1c0] sm:$0xff]
    %v86 = vld [vmem:[#allocation2 + $0x1c8] sm:$0xff]
    %v87 = vld [vmem:[#allocation2 + $0x1d0] sm:$0x1]
    %v88 = vld [vmem:[#allocation2 + $0x1d8] sm:$0xff]
    %v89 = vld [vmem:[#allocation2 + $0x1e0] sm:$0xff]
    %v90 = vld [vmem:[#allocation2 + $0x1e8] sm:$0xff]
    %v91 = vld [vmem:[#allocation2 + $0x1f0] sm:$0xff]
    %v92 = vld [vmem:[#allocation2 + $0x1f8] sm:$0x1]
    %v93 = vld [vmem:[#allocation2 + $0x200] sm:$0xff]
    %v94 = vld [vmem:[#allocation2 + $0x208] sm:$0xff]
    %v95 = vld [vmem:[#allocation2 + $0x210] sm:$0xff]
    %v96 = vld [vmem:[#allocation2 + $0x218] sm:$0xff]
    %v97 = vld [vmem:[#allocation2 + $0x220] sm:$0xff]
    %v98 = vld [vmem:[#allocation2 + $0x228] sm:$0xff]
    %v99 = vld [vmem:[#allocation2 + $0x230] sm:$0xff]
    %v100 = vld [vmem:[#allocation2 + $0x238] sm:$0xff]
    %v101 = vld [vmem:[#allocation2 + $0x240] sm:$0x1]
    %v102 = vld [vmem:[#allocation2 + $0x248] sm:$0xff]
    %v103 = vld [vmem:[#allocation2 + $0x250] sm:$0xff]
    %v104 = vld [vmem:[#allocation2 + $0x258] sm:$0xff]
    %v105 = vld [vmem:[#allocation2 + $0x260] sm:$0xff]
    %v106 = vld [vmem:[#allocation2 + $0x268] sm:$0x1]
    %v107 = vld [vmem:[%s0] sm:$0xff]
    %v108 = vld [vmem:[%s0 + $0x8] sm:$0xff]
    %v109 = vld [vmem:[%s0 + $0x10] sm:$0x1]
    %v110 = vld [vmem:[%s0 + $0x18] sm:$0x3]
    %vm111 = vcmp.ne.s32.totalorder %v109, 1
    %v112 = vlaneseq
    %v113 = vshrl.u32 %v112, 7
    %v114 = vadd.s32 %v113, 8
    %v115 = vlaneseq
    %v116 = vand.u32 %v115, 127
    %vm117 = vcmp.lt.s32.totalorder %v113, 0
    %vm118 = vcmp.lt.s32.totalorder %v114, 0
    %vm119 = vcmp.ge.s32.totalorder %v113, 0
    %vm120 = vcmp.ge.s32.totalorder %v114, 0
    %vm121 = vcmp.lt.s32.totalorder %v113, 8
    %vm122 = vcmp.lt.s32.totalorder %v114, 8
    %vm123 = vmand %vm119, %vm121
    %vm124 = vmand %vm120, %vm122
    %vm125 = vcmp.ge.s32.totalorder %v116, 0
    %vm126 = vmand %vm123, %vm125
    %vm127 = vmand %vm124, %vm125
    %vm128 = vcmp.lt.s32.totalorder %v116, 8
    %vm129 = vmand %vm126, %vm128
    %vm130 = vmand %vm127, %vm128
    %vm131 = vmor %vm117, %vm129
    %vm132 = vmor %vm118, %vm130
    %vm133 = vcmp.ge.s32.totalorder %v113, 8
    %vm134 = vcmp.ge.s32.totalorder %v114, 8
    %vm135 = vcmp.lt.s32.totalorder %v113, 16
    %vm136 = vcmp.lt.s32.totalorder %v114, 16
    %vm137 = vmand %vm133, %vm135
    %vm138 = vmand %vm134, %vm136
    %vm139 = vcmp.ge.s32.totalorder %v116, 8
    %vm140 = vmand %vm137, %vm139
    %vm141 = vmand %vm138, %vm139
    %vm142 = vcmp.lt.s32.totalorder %v116, 16
    %vm143 = vmand %vm140, %vm142
    %vm144 = vmand %vm141, %vm142
    %vm145 = vmor %vm131, %vm143
    %vm146 = vmor %vm132, %vm144
    %v147 = vsel %vm111, 1, 0
    %v148 = vperm.slane %v147, 0
    %vm149 = vcmp.eq.s32.totalorder %v148, 1
    %vm150 = vmand %vm145, %vm149
    %vm151 = vmand %vm146, %vm149
    %v152 = vsel %vm150, 0.0, -1e+09
    %v153 = vsel %vm151, 0.0, -1e+09
    %vm154 = vcmp.lt.s32.totalorder %v113, 5
    %vm155 = vcmp.lt.s32.totalorder %v114, 5
    %vm156 = vmand %vm119, %vm154
    %vm157 = vmand %vm120, %vm155
    %vm158 = vmand %vm156, %vm125
    %vm159 = vmand %vm157, %vm125
    %vm160 = vcmp.lt.s32.totalorder %v116, 5
    %vm161 = vmand %vm158, %vm160
    %vm162 = vmand %vm159, %vm160
    %vm163 = vmor %vm117, %vm161
    %vm164 = vmor %vm118, %vm162
    %vm165 = vcmp.ge.s32.totalorder %v113, 5
    %vm166 = vcmp.ge.s32.totalorder %v114, 5
    %vm167 = vcmp.lt.s32.totalorder %v113, 10
    %vm168 = vcmp.lt.s32.totalorder %v114, 10
    %vm169 = vmand %vm165, %vm167
    %vm170 = vmand %vm166, %vm168
    %vm171 = vcmp.ge.s32.totalorder %v116, 5
    %vm172 = vmand %vm169, %vm171
    %vm173 = vmand %vm170, %vm171
    %vm174 = vcmp.lt.s32.totalorder %v116, 10
    %vm175 = vmand %vm172, %vm174
    %vm176 = vmand %vm173, %vm174
    %vm177 = vmor %vm163, %vm175
    %vm178 = vmor %vm164, %vm176
    %vm179 = vcmp.le.s32.totalorder %v116, %v113
    %vm180 = vcmp.le.s32.totalorder %v116, %v114
    %vm181 = vmand %vm177, %vm179
    %vm182 = vmand %vm178, %vm180
    %v183 = vsel %vm181, 0.0, -1e+09
    %v184 = vsel %vm182, 0.0, -1e+09
    %vm185 = vmand %vm158, %vm128
    %vm186 = vmand %vm159, %vm128
    %vm187 = vmor %vm117, %vm185
    %vm188 = vmor %vm118, %vm186
    %vm189 = vmand %vm169, %vm139
    %vm190 = vmand %vm170, %vm139
    %vm191 = vmand %vm189, %vm142
    %vm192 = vmand %vm190, %vm142
    %vm193 = vmor %vm187, %vm191
    %vm194 = vmor %vm188, %vm192
    %vm195 = vmand %vm193, %vm149
    %vm196 = vmand %vm194, %vm149
    %v197 = vsel %vm195, 0.0, -1e+09
    %v198 = vsel %vm196, 0.0, -1e+09
    %199 = vset.pattern.permute.xlu0 0
    %200 = vperm.xlu0 %199, %v107
    %v201 = vpop.permute.xlu0 %200
    %202 = vset.pattern.permute.xlu0 0
    %203 = vperm.xlu0 %202, %v108
    %v204 = vpop.permute.xlu0 %203
    %vm205 = vcmp.eq.s32.totalorder %v201, %v116
    %vm206 = vcmp.eq.s32.totalorder %v204, %v116
    %v207 = vsel %vm205, 1, 0
    %v208 = vsel %vm206, 1, 0
    %v209 = vcvt.s32.f32 %v207
    %v210 = vcvt.s32.f32 %v208
    %vm211 = vcmask 408576
    %v213 = vsel %vm211, %v209, 0
    %v216 = vsel %vm211, %v210, 0
    %vm218 = vcmask 1041408
    %v220 = vsel %vm218, %v36, 0
    %222 = vmatpush.msra.mxu0 0.0
    %223 = vmatpush.msra.mxu0 0.0
    %224 = vmatpush.msra.mxu0 0.0
    %225 = vmatpush.msra.mxu0 0.0
    %226 = vmatpush.msra.mxu0 0.0
    %227 = vmatpush.msra.mxu0 0.0
    %228 = vmatpush.msra.mxu0 0.0
    %229 = vmatpush.msra.mxu0 0.0
    %230 = vmatpush.msra.mxu0 0.0
    %231 = vmatpush.msra.mxu0 %v220
    %232 = vmatpush.msra.mxu0 %v35
    %233 = vmatpush.msra.mxu0 %v34
    %234 = vmatpush.msra.mxu0 %v33
    %235 = vmatpush.msra.mxu0 %v32
    %236 = vmatpush.msra.mxu0 %v31
    %237 = vmatpush.msra.mxu0 %v30
    %238 = vmatmul.f32.gmra.mxu0 %v213
    %v239 = vpop.f32.mrf.mxu0
    %v240 = vadd.f32 %v37, %v239
    %241 = vmatmul.f32.gmra.mxu0 %v216
    %v242 = vpop.f32.mrf.mxu0
    %v243 = vadd.f32 %v37, %v242
    %244 = vdwg.mxu0
    %v245 = vperm.slane %v43, 0
    %vm246 = vcmask 261120
    %v248 = vsel %vm246, %v240, 0
    %v251 = vsel %vm246, %v243, 0
    %253 = vmatpush.msra.mxu0 0.0
    %254 = vmatpush.msra.mxu0 0.0
    %255 = vmatpush.msra.mxu0 0.0
    %256 = vmatpush.msra.mxu0 0.0
    %257 = vmatpush.msra.mxu0 0.0
    %258 = vmatpush.msra.mxu0 0.0
    %259 = vmatpush.msra.mxu0 0.0
    %260 = vmatpush.msra.mxu0 0.0
    %261 = vmatpush.msra.mxu0 0.0
    %262 = vmatpush.msra.mxu0 0.0
    %263 = vmatpush.msra.mxu0 0.0
    %264 = vmatpush.msra.mxu0 0.0
    %265 = vmatpush.msra.mxu0 %v42
    %266 = vmatpush.msra.mxu0 %v41
    %267 = vmatpush.msra.mxu0 %v40
    %268 = vmatpush.msra.mxu0 %v39
    %269 = vmatmul.f32.gmra.mxu0 %v248
    %v270 = vpop.f32.mrf.mxu0
    %v271 = vadd.f32 %v245, %v270
    %272 = vmatmul.f32.gmra.mxu0 %v251
    %v273 = vpop.f32.mrf.mxu0
    %v274 = vadd.f32 %v245, %v273
    %275 = vdwg.mxu0
    %278 = vrot.lane.b32.xlu0 %v271, 96
    %v279 = vpop.permute.xlu0 %278
    %280 = vrot.lane.b32.xlu0 %v274, 96
    %v281 = vpop.permute.xlu0 %280
    %vm282 = vcmask 64512
    %v283 = vsel %vm282, %v271, 0
    %v285 = vsel %vm282, %v274, 0
    %v287 = vsel %vm282, %v279, 0
    %v289 = vsel %vm282, %v281, 0
    %291 = vmatpush.xpose.msra.mxu0 0.0
    %292 = vmatpush.xpose.msra.mxu0 0.0
    %293 = vmatpush.xpose.msra.mxu0 0.0
    %294 = vmatpush.xpose.msra.mxu0 0.0
    %295 = vmatpush.xpose.msra.mxu0 0.0
    %296 = vmatpush.xpose.msra.mxu0 0.0
    %297 = vmatpush.xpose.msra.mxu0 0.0
    %298 = vmatpush.xpose.msra.mxu0 0.0
    %299 = vmatpush.xpose.msra.mxu0 0.0
    %300 = vmatpush.xpose.msra.mxu0 0.0
    %301 = vmatpush.xpose.msra.mxu0 0.0
    %302 = vmatpush.xpose.msra.mxu0 0.0
    %303 = vmatpush.xpose.msra.mxu0 0.0
    %304 = vmatpush.xpose.msra.mxu0 0.0
    %305 = vmatpush.xpose.msra.mxu0 %v289
    %306 = vmatpush.xpose.msra.mxu0 %v287
    %307 = vmatmul.f32.gmra.mxu0 %v283
    %v308 = vpop.f32.mrf.mxu0
    %v309 = vadd.f32 %v152, %v308
    %310 = vmatmul.f32.gmra.mxu0 %v285
    %v311 = vpop.f32.mrf.mxu0
    %v312 = vadd.f32 %v153, %v311
    %313 = vdwg.mxu0
    %vm314 = vcmask 130048
    %v315 = vsel %vm314, %v309, -inf
    %316 = vmax.xlane.f32.xlu0 %v315
    %v317 = vpop.xlane.xlu0 %316
    %v318 = vsel %vm314, %v312, -inf
    %319 = vmax.xlane.f32.xlu0 %v318
    %v320 = vpop.xlane.xlu0 %319
    %v321 = vsub.f32 %v309, %v317
    %v322 = vsub.f32 %v312, %v320
    %v323 = vmul.f32 %v321, 1.442695
    %v324 = vpow.pop %v323
    %v325 = vmul.f32 %v322, 1.442695
    %v326 = vpow.pop %v325
    %v327 = vsel %vm314, %v324, 0.0
    %328 = vadd.xlane.f32.xlu0 %v327
    %v329 = vpop.xlane.xlu0 %328
    %v330 = vsel %vm314, %v326, 0.0
    %331 = vadd.xlane.f32.xlu0 %v330
    %v332 = vpop.xlane.xlu0 %331
    %v333 = vrcp.pop %v329
    %v334 = vrcp.pop %v332
    %v335 = vmul.f32 %v324, %v333
    %v336 = vmul.f32 %v326, %v334
    %337 = vrot.lane.b32.xlu0 %v271, 64
    %v338 = vpop.permute.xlu0 %337
    %339 = vrot.lane.b32.xlu0 %v274, 64
    %v340 = vpop.permute.xlu0 %339
    %v344 = vsel %vm314, %v335, 0
    %v347 = vsel %vm314, %v336, 0
    %349 = vmatpush.msra.mxu0 0.0
    %350 = vmatpush.msra.mxu0 0.0
    %351 = vmatpush.msra.mxu0 0.0
    %352 = vmatpush.msra.mxu0 0.0
    %353 = vmatpush.msra.mxu0 0.0
    %354 = vmatpush.msra.mxu0 0.0
    %355 = vmatpush.msra.mxu0 0.0
    %356 = vmatpush.msra.mxu0 0.0
    %357 = vmatpush.msra.mxu0 0.0
    %358 = vmatpush.msra.mxu0 0.0
    %359 = vmatpush.msra.mxu0 0.0
    %360 = vmatpush.msra.mxu0 0.0
    %361 = vmatpush.msra.mxu0 0.0
    %362 = vmatpush.msra.mxu0 0.0
    %363 = vmatpush.msra.mxu0 %v340
    %364 = vmatpush.msra.mxu0 %v338
    %365 = vmatmul.f32.gmra.mxu0 %v344
    %v366 = vpop.f32.mrf.mxu0
    %v367 = vadd.f32 0.0, %v366
    %368 = vmatmul.f32.gmra.mxu0 %v347
    %v369 = vpop.f32.mrf.mxu0
    %v370 = vadd.f32 0.0, %v369
    %371 = vdwg.mxu0
    %372 = vrot.lane.b32.xlu0 %v271, 120
    %v373 = vpop.permute.xlu0 %372
    %374 = vrot.lane.b32.xlu0 %v274, 120
    %v375 = vpop.permute.xlu0 %374
    %376 = vrot.lane.b32.xlu0 %v271, 88
    %v377 = vpop.permute.xlu0 %376
    %378 = vrot.lane.b32.xlu0 %v274, 88
    %v379 = vpop.permute.xlu0 %378
    %v380 = vsel %vm282, %v373, 0
    %v382 = vsel %vm282, %v375, 0
    %v384 = vsel %vm282, %v377, 0
    %v386 = vsel %vm282, %v379, 0
    %388 = vmatpush.xpose.msra.mxu0 0.0
    %389 = vmatpush.xpose.msra.mxu0 0.0
    %390 = vmatpush.xpose.msra.mxu0 0.0
    %391 = vmatpush.xpose.msra.mxu0 0.0
    %392 = vmatpush.xpose.msra.mxu0 0.0
    %393 = vmatpush.xpose.msra.mxu0 0.0
    %394 = vmatpush.xpose.msra.mxu0 0.0
    %395 = vmatpush.xpose.msra.mxu0 0.0
    %396 = vmatpush.xpose.msra.mxu0 0.0
    %397 = vmatpush.xpose.msra.mxu0 0.0
    %398 = vmatpush.xpose.msra.mxu0 0.0
    %399 = vmatpush.xpose.msra.mxu0 0.0
    %400 = vmatpush.xpose.msra.mxu0 0.0
    %401 = vmatpush.xpose.msra.mxu0 0.0
    %402 = vmatpush.xpose.msra.mxu0 %v386
    %403 = vmatpush.xpose.msra.mxu0 %v384
    %404 = vmatmul.f32.gmra.mxu0 %v380
    %v405 = vpop.f32.mrf.mxu0
    %v406 = vadd.f32 %v152, %v405
    %407 = vmatmul.f32.gmra.mxu0 %v382
    %v408 = vpop.f32.mrf.mxu0
    %v409 = vadd.f32 %v153, %v408
    %410 = vdwg.mxu0
    %v411 = vsel %vm314, %v406, -inf
    %412 = vmax.xlane.f32.xlu0 %v411
    %v413 = vpop.xlane.xlu0 %412
    %v414 = vsel %vm314, %v409, -inf
    %415 = vmax.xlane.f32.xlu0 %v414
    %v416 = vpop.xlane.xlu0 %415
    %v417 = vsub.f32 %v406, %v413
    %v418 = vsub.f32 %v409, %v416
    %v419 = vmul.f32 %v417, 1.442695
    %v420 = vpow.pop %v419
    %v421 = vmul.f32 %v418, 1.442695
    %v422 = vpow.pop %v421
    %v423 = vsel %vm314, %v420, 0.0
    %424 = vadd.xlane.f32.xlu0 %v423
    %v425 = vpop.xlane.xlu0 %424
    %v426 = vsel %vm314, %v422, 0.0
    %427 = vadd.xlane.f32.xlu0 %v426
    %v428 = vpop.xlane.xlu0 %427
    %v429 = vrcp.pop %v425
    %v430 = vrcp.pop %v428
    %v431 = vmul.f32 %v420, %v429
    %v432 = vmul.f32 %v422, %v430
    %433 = vrot.lane.b32.xlu0 %v271, 56
    %v434 = vpop.permute.xlu0 %433
    %435 = vrot.lane.b32.xlu0 %v274, 56
    %v436 = vpop.permute.xlu0 %435
    %v440 = vsel %vm314, %v431, 0
    %v443 = vsel %vm314, %v432, 0
    %445 = vmatpush.msra.mxu0 0.0
    %446 = vmatpush.msra.mxu0 0.0
    %447 = vmatpush.msra.mxu0 0.0
    %448 = vmatpush.msra.mxu0 0.0
    %449 = vmatpush.msra.mxu0 0.0
    %450 = vmatpush.msra.mxu0 0.0
    %451 = vmatpush.msra.mxu0 0.0
    %452 = vmatpush.msra.mxu0 0.0
    %453 = vmatpush.msra.mxu0 0.0
    %454 = vmatpush.msra.mxu0 0.0
    %455 = vmatpush.msra.mxu0 0.0
    %456 = vmatpush.msra.mxu0 0.0
    %457 = vmatpush.msra.mxu0 0.0
    %458 = vmatpush.msra.mxu0 0.0
    %459 = vmatpush.msra.mxu0 %v436
    %460 = vmatpush.msra.mxu0 %v434
    %461 = vmatmul.f32.gmra.mxu0 %v440
    %v462 = vpop.f32.mrf.mxu0
    %v463 = vadd.f32 0.0, %v462
    %464 = vmatmul.f32.gmra.mxu0 %v443
    %v465 = vpop.f32.mrf.mxu0
    %v466 = vadd.f32 0.0, %v465
    %467 = vdwg.mxu0
    %v469 = vsel %vm282, %v463, 0
    %v472 = vsel %vm282, %v466, 0
    %474 = vmatpush.msra.mxu0 0.0
    %475 = vmatpush.msra.mxu0 0.0
    %476 = vmatpush.msra.mxu0 0.0
    %477 = vmatpush.msra.mxu0 0.0
    %478 = vmatpush.msra.mxu0 0.0
    %479 = vmatpush.msra.mxu0 0.0
    %480 = vmatpush.msra.mxu0 0.0
    %481 = vmatpush.msra.mxu0 0.0
    %482 = vmatpush.msra.mxu0 0.0
    %483 = vmatpush.msra.mxu0 0.0
    %484 = vmatpush.msra.mxu0 0.0
    %485 = vmatpush.msra.mxu0 0.0
    %486 = vmatpush.msra.mxu0 0.0
    %487 = vmatpush.msra.mxu0 0.0
    %488 = vmatpush.msra.mxu0 0.0
    %489 = vmatpush.msra.mxu0 %v45
    %490 = vmatmul.f32.gmra.mxu0 %v469
    %v491 = vpop.f32.mrf.mxu0
    %v492 = vadd.f32 0.0, %v491
    %493 = vmatmul.f32.gmra.mxu0 %v472
    %v494 = vpop.f32.mrf.mxu0
    %v495 = vadd.f32 0.0, %v494
    %496 = vdwg.mxu0
    %v498 = vsel %vm282, %v367, 0
    %v501 = vsel %vm282, %v370, 0
    %503 = vmatpush.msra.mxu0 0.0
    %504 = vmatpush.msra.mxu0 0.0
    %505 = vmatpush.msra.mxu0 0.0
    %506 = vmatpush.msra.mxu0 0.0
    %507 = vmatpush.msra.mxu0 0.0
    %508 = vmatpush.msra.mxu0 0.0
    %509 = vmatpush.msra.mxu0 0.0
    %510 = vmatpush.msra.mxu0 0.0
    %511 = vmatpush.msra.mxu0 0.0
    %512 = vmatpush.msra.mxu0 0.0
    %513 = vmatpush.msra.mxu0 0.0
    %514 = vmatpush.msra.mxu0 0.0
    %515 = vmatpush.msra.mxu0 0.0
    %516 = vmatpush.msra.mxu0 0.0
    %517 = vmatpush.msra.mxu0 0.0
    %518 = vmatpush.msra.mxu0 %v44
    %519 = vmatmul.f32.gmra.mxu0 %v498
    %v520 = vpop.f32.mrf.mxu0
    %v521 = vadd.f32 %v492, %v520
    %522 = vmatmul.f32.gmra.mxu0 %v501
    %v523 = vpop.f32.mrf.mxu0
    %v524 = vadd.f32 %v495, %v523
    %525 = vdwg.mxu0
    %526 = vrot.lane.b32.xlu0 %v271, 112
    %v527 = vpop.permute.xlu0 %526
    %528 = vrot.lane.b32.xlu0 %v274, 112
    %v529 = vpop.permute.xlu0 %528
    %530 = vrot.lane.b32.xlu0 %v271, 80
    %v531 = vpop.permute.xlu0 %530
    %532 = vrot.lane.b32.xlu0 %v274, 80
    %v533 = vpop.permute.xlu0 %532
    %v534 = vsel %vm282, %v527, 0
    %v536 = vsel %vm282, %v529, 0
    %v538 = vsel %vm282, %v531, 0
    %v540 = vsel %vm282, %v533, 0
    %542 = vmatpush.xpose.msra.mxu0 0.0
    %543 = vmatpush.xpose.msra.mxu0 0.0
    %544 = vmatpush.xpose.msra.mxu0 0.0
    %545 = vmatpush.xpose.msra.mxu0 0.0
    %546 = vmatpush.xpose.msra.mxu0 0.0
    %547 = vmatpush.xpose.msra.mxu0 0.0
    %548 = vmatpush.xpose.msra.mxu0 0.0
    %549 = vmatpush.xpose.msra.mxu0 0.0
    %550 = vmatpush.xpose.msra.mxu0 0.0
    %551 = vmatpush.xpose.msra.mxu0 0.0
    %552 = vmatpush.xpose.msra.mxu0 0.0
    %553 = vmatpush.xpose.msra.mxu0 0.0
    %554 = vmatpush.xpose.msra.mxu0 0.0
    %555 = vmatpush.xpose.msra.mxu0 0.0
    %556 = vmatpush.xpose.msra.mxu0 %v540
    %557 = vmatpush.xpose.msra.mxu0 %v538
    %558 = vmatmul.f32.gmra.mxu0 %v534
    %v559 = vpop.f32.mrf.mxu0
    %v560 = vadd.f32 %v152, %v559
    %561 = vmatmul.f32.gmra.mxu0 %v536
    %v562 = vpop.f32.mrf.mxu0
    %v563 = vadd.f32 %v153, %v562
    %564 = vdwg.mxu0
    %v565 = vsel %vm314, %v560, -inf
    %566 = vmax.xlane.f32.xlu0 %v565
    %v567 = vpop.xlane.xlu0 %566
    %v568 = vsel %vm314, %v563, -inf
    %569 = vmax.xlane.f32.xlu0 %v568
    %v570 = vpop.xlane.xlu0 %569
    %v571 = vsub.f32 %v560, %v567
    %v572 = vsub.f32 %v563, %v570
    %v573 = vmul.f32 %v571, 1.442695
    %v574 = vpow.pop %v573
    %v575 = vmul.f32 %v572, 1.442695
    %v576 = vpow.pop %v575
    %v577 = vsel %vm314, %v574, 0.0
    %578 = vadd.xlane.f32.xlu0 %v577
    %v579 = vpop.xlane.xlu0 %578
    %v580 = vsel %vm314, %v576, 0.0
    %581 = vadd.xlane.f32.xlu0 %v580
    %v582 = vpop.xlane.xlu0 %581
    %v583 = vrcp.pop %v579
    %v584 = vrcp.pop %v582
    %v585 = vmul.f32 %v574, %v583
    %v586 = vmul.f32 %v576, %v584
    %587 = vrot.lane.b32.xlu0 %v271, 48
    %v588 = vpop.permute.xlu0 %587
    %589 = vrot.lane.b32.xlu0 %v274, 48
    %v590 = vpop.permute.xlu0 %589
    %v594 = vsel %vm314, %v585, 0
    %v597 = vsel %vm314, %v586, 0
    %599 = vmatpush.msra.mxu0 0.0
    %600 = vmatpush.msra.mxu0 0.0
    %601 = vmatpush.msra.mxu0 0.0
    %602 = vmatpush.msra.mxu0 0.0
    %603 = vmatpush.msra.mxu0 0.0
    %604 = vmatpush.msra.mxu0 0.0
    %605 = vmatpush.msra.mxu0 0.0
    %606 = vmatpush.msra.mxu0 0.0
    %607 = vmatpush.msra.mxu0 0.0
    %608 = vmatpush.msra.mxu0 0.0
    %609 = vmatpush.msra.mxu0 0.0
    %610 = vmatpush.msra.mxu0 0.0
    %611 = vmatpush.msra.mxu0 0.0
    %612 = vmatpush.msra.mxu0 0.0
    %613 = vmatpush.msra.mxu0 %v590
    %614 = vmatpush.msra.mxu0 %v588
    %615 = vmatmul.f32.gmra.mxu0 %v594
    %v616 = vpop.f32.mrf.mxu0
    %v617 = vadd.f32 0.0, %v616
    %618 = vmatmul.f32.gmra.mxu0 %v597
    %v619 = vpop.f32.mrf.mxu0
    %v620 = vadd.f32 0.0, %v619
    %621 = vdwg.mxu0
    %v623 = vsel %vm282, %v617, 0
    %v626 = vsel %vm282, %v620, 0
    %628 = vmatpush.msra.mxu0 0.0
    %629 = vmatpush.msra.mxu0 0.0
    %630 = vmatpush.msra.mxu0 0.0
    %631 = vmatpush.msra.mxu0 0.0
    %632 = vmatpush.msra.mxu0 0.0
    %633 = vmatpush.msra.mxu0 0.0
    %634 = vmatpush.msra.mxu0 0.0
    %635 = vmatpush.msra.mxu0 0.0
    %636 = vmatpush.msra.mxu0 0.0
    %637 = vmatpush.msra.mxu0 0.0
    %638 = vmatpush.msra.mxu0 0.0
    %639 = vmatpush.msra.mxu0 0.0
    %640 = vmatpush.msra.mxu0 0.0
    %641 = vmatpush.msra.mxu0 0.0
    %642 = vmatpush.msra.mxu0 0.0
    %643 = vmatpush.msra.mxu0 %v46
    %644 = vmatmul.f32.gmra.mxu0 %v623
    %v645 = vpop.f32.mrf.mxu0
    %v646 = vadd.f32 0.0, %v645
    %647 = vmatmul.f32.gmra.mxu0 %v626
    %v648 = vpop.f32.mrf.mxu0
    %v649 = vadd.f32 0.0, %v648
    %650 = vdwg.mxu0
    %v651 = vadd.f32 %v521, %v646
    %v652 = vadd.f32 %v524, %v649
    %653 = vrot.lane.b32.xlu0 %v271, 104
    %v654 = vpop.permute.xlu0 %653
    %655 = vrot.lane.b32.xlu0 %v274, 104
    %v656 = vpop.permute.xlu0 %655
    %657 = vrot.lane.b32.xlu0 %v271, 72
    %v658 = vpop.permute.xlu0 %657
    %659 = vrot.lane.b32.xlu0 %v274, 72
    %v660 = vpop.permute.xlu0 %659
    %v661 = vsel %vm282, %v654, 0
    %v663 = vsel %vm282, %v656, 0
    %v665 = vsel %vm282, %v658, 0
    %v667 = vsel %vm282, %v660, 0
    %669 = vmatpush.xpose.msra.mxu0 0.0
    %670 = vmatpush.xpose.msra.mxu0 0.0
    %671 = vmatpush.xpose.msra.mxu0 0.0
    %672 = vmatpush.xpose.msra.mxu0 0.0
    %673 = vmatpush.xpose.msra.mxu0 0.0
    %674 = vmatpush.xpose.msra.mxu0 0.0
    %675 = vmatpush.xpose.msra.mxu0 0.0
    %676 = vmatpush.xpose.msra.mxu0 0.0
    %677 = vmatpush.xpose.msra.mxu0 0.0
    %678 = vmatpush.xpose.msra.mxu0 0.0
    %679 = vmatpush.xpose.msra.mxu0 0.0
    %680 = vmatpush.xpose.msra.mxu0 0.0
    %681 = vmatpush.xpose.msra.mxu0 0.0
    %682 = vmatpush.xpose.msra.mxu0 0.0
    %683 = vmatpush.xpose.msra.mxu0 %v667
    %684 = vmatpush.xpose.msra.mxu0 %v665
    %685 = vmatmul.f32.gmra.mxu0 %v661
    %v686 = vpop.f32.mrf.mxu0
    %v687 = vadd.f32 %v152, %v686
    %688 = vmatmul.f32.gmra.mxu0 %v663
    %v689 = vpop.f32.mrf.mxu0
    %v690 = vadd.f32 %v153, %v689
    %691 = vdwg.mxu0
    %v692 = vsel %vm314, %v687, -inf
    %693 = vmax.xlane.f32.xlu0 %v692
    %v694 = vpop.xlane.xlu0 %693
    %v695 = vsel %vm314, %v690, -inf
    %696 = vmax.xlane.f32.xlu0 %v695
    %v697 = vpop.xlane.xlu0 %696
    %v698 = vsub.f32 %v687, %v694
    %v699 = vsub.f32 %v690, %v697
    %v700 = vmul.f32 %v698, 1.442695
    %v701 = vpow.pop %v700
    %v702 = vmul.f32 %v699, 1.442695
    %v703 = vpow.pop %v702
    %v704 = vsel %vm314, %v701, 0.0
    %705 = vadd.xlane.f32.xlu0 %v704
    %v706 = vpop.xlane.xlu0 %705
    %v707 = vsel %vm314, %v703, 0.0
    %708 = vadd.xlane.f32.xlu0 %v707
    %v709 = vpop.xlane.xlu0 %708
    %v710 = vrcp.pop %v706
    %v711 = vrcp.pop %v709
    %v712 = vmul.f32 %v701, %v710
    %v713 = vmul.f32 %v703, %v711
    %714 = vrot.lane.b32.xlu0 %v271, 40
    %v715 = vpop.permute.xlu0 %714
    %716 = vrot.lane.b32.xlu0 %v274, 40
    %v717 = vpop.permute.xlu0 %716
    %v721 = vsel %vm314, %v712, 0
    %v724 = vsel %vm314, %v713, 0
    %726 = vmatpush.msra.mxu0 0.0
    %727 = vmatpush.msra.mxu0 0.0
    %728 = vmatpush.msra.mxu0 0.0
    %729 = vmatpush.msra.mxu0 0.0
    %730 = vmatpush.msra.mxu0 0.0
    %731 = vmatpush.msra.mxu0 0.0
    %732 = vmatpush.msra.mxu0 0.0
    %733 = vmatpush.msra.mxu0 0.0
    %734 = vmatpush.msra.mxu0 0.0
    %735 = vmatpush.msra.mxu0 0.0
    %736 = vmatpush.msra.mxu0 0.0
    %737 = vmatpush.msra.mxu0 0.0
    %738 = vmatpush.msra.mxu0 0.0
    %739 = vmatpush.msra.mxu0 0.0
    %740 = vmatpush.msra.mxu0 %v717
    %741 = vmatpush.msra.mxu0 %v715
    %742 = vmatmul.f32.gmra.mxu0 %v721
    %v743 = vpop.f32.mrf.mxu0
    %v744 = vadd.f32 0.0, %v743
    %745 = vmatmul.f32.gmra.mxu0 %v724
    %v746 = vpop.f32.mrf.mxu0
    %v747 = vadd.f32 0.0, %v746
    %748 = vdwg.mxu0
    %v750 = vsel %vm282, %v744, 0
    %v753 = vsel %vm282, %v747, 0
    %755 = vmatpush.msra.mxu0 0.0
    %756 = vmatpush.msra.mxu0 0.0
    %757 = vmatpush.msra.mxu0 0.0
    %758 = vmatpush.msra.mxu0 0.0
    %759 = vmatpush.msra.mxu0 0.0
    %760 = vmatpush.msra.mxu0 0.0
    %761 = vmatpush.msra.mxu0 0.0
    %762 = vmatpush.msra.mxu0 0.0
    %763 = vmatpush.msra.mxu0 0.0
    %764 = vmatpush.msra.mxu0 0.0
    %765 = vmatpush.msra.mxu0 0.0
    %766 = vmatpush.msra.mxu0 0.0
    %767 = vmatpush.msra.mxu0 0.0
    %768 = vmatpush.msra.mxu0 0.0
    %769 = vmatpush.msra.mxu0 0.0
    %770 = vmatpush.msra.mxu0 %v47
    %771 = vmatmul.f32.gmra.mxu0 %v750
    %v772 = vpop.f32.mrf.mxu0
    %v773 = vadd.f32 0.0, %v772
    %774 = vmatmul.f32.gmra.mxu0 %v753
    %v775 = vpop.f32.mrf.mxu0
    %v776 = vadd.f32 0.0, %v775
    %777 = vdwg.mxu0
    %v778 = vadd.f32 %v651, %v773
    %v779 = vadd.f32 %v652, %v776
    %v780 = vperm.slane %v48, 0
    %v781 = vadd.f32 %v778, %v780
    %v782 = vadd.f32 %v779, %v780
    %v783 = vadd.f32 %v240, %v781
    %v784 = vadd.f32 %v243, %v782
    %v785 = vsel %vm246, %v783, 0.0
    %786 = vadd.xlane.f32.xlu0 %v785
    %v787 = vpop.xlane.xlu0 %786
    %v788 = vsel %vm246, %v784, 0.0
    %789 = vadd.xlane.f32.xlu0 %v788
    %v790 = vpop.xlane.xlu0 %789
    %v791 = vrcp.pop 32.0
    %v792 = vmul.f32 32.0, %v791
    %v793 = vsub.f32 1.0, %v792
    %v794 = vmul.f32 %v791, %v793
    %v795 = vadd.f32 %v791, %v794
    %vm796 = vweird.f32 %v791
    %v797 = vsel %vm796, %v791, %v795
    %v798 = vmul.f32 %v787, %v797
    %v799 = vmul.f32 %v790, %v797
    %v800 = vsub.f32 %v783, %v798
    %v801 = vsub.f32 %v784, %v799
    %v802 = vmul.f32 %v800, %v800
    %v803 = vmul.f32 %v801, %v801
    %v804 = vsel %vm246, %v802, 0.0
    %805 = vadd.xlane.f32.xlu0 %v804
    %v806 = vpop.xlane.xlu0 %805
    %v807 = vsel %vm246, %v803, 0.0
    %808 = vadd.xlane.f32.xlu0 %v807
    %v809 = vpop.xlane.xlu0 %808
    %v810 = vmul.f32 %v806, %v797
    %v811 = vmul.f32 %v809, %v797
    %v812 = vadd.f32 %v810, 1e-05
    %v813 = vadd.f32 %v811, 1e-05
    %v814 = vrsqrt.pop %v812
    %v815 = vmul.f32 %v814, %v812
    %v816 = vmul.f32 %v815, %v814
    %v817 = vmul.f32 0.5, %v816
    %v818 = vsub.f32 1.5, %v817
    %v819 = vmul.f32 %v814, %v818
    %vm820 = vweird.f32 %v812
    %vm821 = vweird.f32 %v814
    %vm822 = vmor %vm820, %vm821
    %v823 = vsel %vm822, %v814, %v819
    %v824 = vrsqrt.pop %v813
    %v825 = vmul.f32 %v824, %v813
    %v826 = vmul.f32 %v825, %v824
    %v827 = vmul.f32 0.5, %v826
    %v828 = vsub.f32 1.5, %v827
    %v829 = vmul.f32 %v824, %v828
    %vm830 = vweird.f32 %v813
    %vm831 = vweird.f32 %v824
    %vm832 = vmor %vm830, %vm831
    %v833 = vsel %vm832, %v824, %v829
    %v834 = vmul.f32 %v800, %v823
    %v835 = vmul.f32 %v801, %v833
    %v836 = vperm.slane %v38, 0
    %v837 = vmul.f32 %v834, %v836
    %v838 = vmul.f32 %v835, %v836
    %840 = vrot.lane.b32.xlu0 %v836, 96
    %v841 = vpop.permute.xlu0 %840
    %v843 = vadd.f32 %v837, %v841
    %v844 = vadd.f32 %v838, %v841
    %v845 = vperm.slane %v53, 0
    %v847 = vsel %vm246, %v843, 0
    %v850 = vsel %vm246, %v844, 0
    %852 = vmatpush.msra.mxu0 0.0
    %853 = vmatpush.msra.mxu0 0.0
    %854 = vmatpush.msra.mxu0 0.0
    %855 = vmatpush.msra.mxu0 0.0
    %856 = vmatpush.msra.mxu0 0.0
    %857 = vmatpush.msra.mxu0 0.0
    %858 = vmatpush.msra.mxu0 0.0
    %859 = vmatpush.msra.mxu0 0.0
    %860 = vmatpush.msra.mxu0 0.0
    %861 = vmatpush.msra.mxu0 0.0
    %862 = vmatpush.msra.mxu0 0.0
    %863 = vmatpush.msra.mxu0 0.0
    %864 = vmatpush.msra.mxu0 %v52
    %865 = vmatpush.msra.mxu0 %v51
    %866 = vmatpush.msra.mxu0 %v50
    %867 = vmatpush.msra.mxu0 %v49
    %868 = vmatmul.f32.gmra.mxu0 %v847
    %v869 = vpop.f32.mrf.mxu0
    %v870 = vadd.f32 %v845, %v869
    %871 = vmatmul.f32.gmra.mxu0 %v850
    %v872 = vpop.f32.mrf.mxu0
    %v873 = vadd.f32 %v845, %v872
    %874 = vdwg.mxu0
    %v875 = vmul.f32 %v870, 0.5
    %v876 = vmul.f32 %v873, 0.5
    %v877 = vmul.f32 %v870, %v870
    %v878 = vmul.f32 %v873, %v873
    %v879 = vmul.f32 %v877, %v870
    %v880 = vmul.f32 %v878, %v873
    %v881 = vmul.f32 %v879, 0.044715
    %v882 = vmul.f32 %v880, 0.044715
    %v883 = vadd.f32 %v870, %v881
    %v884 = vadd.f32 %v873, %v882
    %v885 = vmul.f32 %v883, 0.7978846
    %v886 = vmul.f32 %v884, 0.7978846
    %v887 = vtanh.pop %v885
    %v888 = vtanh.pop %v886
    %v889 = vadd.f32 %v887, 1.0
    %v890 = vadd.f32 %v888, 1.0
    %v891 = vmul.f32 %v875, %v889
    %v892 = vmul.f32 %v876, %v890
    %v893 = vperm.slane %v62, 0
    %vm894 = vcmask 523264
    %v896 = vsel %vm894, %v891, 0
    %v899 = vsel %vm894, %v892, 0
    %901 = vmatpush.msra.mxu0 0.0
    %902 = vmatpush.msra.mxu0 0.0
    %903 = vmatpush.msra.mxu0 0.0
    %904 = vmatpush.msra.mxu0 0.0
    %905 = vmatpush.msra.mxu0 0.0
    %906 = vmatpush.msra.mxu0 0.0
    %907 = vmatpush.msra.mxu0 0.0
    %908 = vmatpush.msra.mxu0 0.0
    %909 = vmatpush.msra.mxu0 %v61
    %910 = vmatpush.msra.mxu0 %v60
    %911 = vmatpush.msra.mxu0 %v59
    %912 = vmatpush.msra.mxu0 %v58
    %913 = vmatpush.msra.mxu0 %v57
    %914 = vmatpush.msra.mxu0 %v56
    %915 = vmatpush.msra.mxu0 %v55
    %916 = vmatpush.msra.mxu0 %v54
    %917 = vmatmul.f32.gmra.mxu0 %v896
    %v918 = vpop.f32.mrf.mxu0
    %v919 = vadd.f32 %v893, %v918
    %920 = vmatmul.f32.gmra.mxu0 %v899
    %v921 = vpop.f32.mrf.mxu0
    %v922 = vadd.f32 %v893, %v921
    %923 = vdwg.mxu0
    %v924 = vadd.f32 %v843, %v919
    %v925 = vadd.f32 %v844, %v922
    %v926 = vsel %vm246, %v924, 0.0
    %927 = vadd.xlane.f32.xlu0 %v926
    %v928 = vpop.xlane.xlu0 %927
    %v929 = vsel %vm246, %v925, 0.0
    %930 = vadd.xlane.f32.xlu0 %v929
    %v931 = vpop.xlane.xlu0 %930
    %v932 = vmul.f32 %v928, %v797
    %v933 = vmul.f32 %v931, %v797
    %v934 = vsub.f32 %v924, %v932
    %v935 = vsub.f32 %v925, %v933
    %v936 = vmul.f32 %v934, %v934
    %v937 = vmul.f32 %v935, %v935
    %v938 = vsel %vm246, %v936, 0.0
    %939 = vadd.xlane.f32.xlu0 %v938
    %v940 = vpop.xlane.xlu0 %939
    %v941 = vsel %vm246, %v937, 0.0
    %942 = vadd.xlane.f32.xlu0 %v941
    %v943 = vpop.xlane.xlu0 %942
    %v944 = vmul.f32 %v940, %v797
    %v945 = vmul.f32 %v943, %v797
    %v946 = vadd.f32 %v944, 1e-05
    %v947 = vadd.f32 %v945, 1e-05
    %v948 = vrsqrt.pop %v946
    %v949 = vmul.f32 %v948, %v946
    %v950 = vmul.f32 %v949, %v948
    %v951 = vmul.f32 0.5, %v950
    %v952 = vsub.f32 1.5, %v951
    %v953 = vmul.f32 %v948, %v952
    %vm954 = vweird.f32 %v946
    %vm955 = vweird.f32 %v948
    %vm956 = vmor %vm954, %vm955
    %v957 = vsel %vm956, %v948, %v953
    %v958 = vrsqrt.pop %v947
    %v959 = vmul.f32 %v958, %v947
    %v960 = vmul.f32 %v959, %v958
    %v961 = vmul.f32 0.5, %v960
    %v962 = vsub.f32 1.5, %v961
    %v963 = vmul.f32 %v958, %v962
    %vm964 = vweird.f32 %v947
    %vm965 = vweird.f32 %v958
    %vm966 = vmor %vm964, %vm965
    %v967 = vsel %vm966, %v958, %v963
    %v968 = vmul.f32 %v934, %v957
    %v969 = vmul.f32 %v935, %v967
    %v970 = vperm.slane %v38, 1
    %v971 = vmul.f32 %v968, %v970
    %v972 = vmul.f32 %v969, %v970
    %974 = vrot.lane.b32.xlu0 %v970, 96
    %v975 = vpop.permute.xlu0 %974
    %v977 = vadd.f32 %v971, %v975
    %v978 = vadd.f32 %v972, %v975
    %v979 = vperm.slane %v82, 0
    %v981 = vsel %vm246, %v977, 0
    %v984 = vsel %vm246, %v978, 0
    %986 = vmatpush.msra.mxu0 0.0
    %987 = vmatpush.msra.mxu0 0.0
    %988 = vmatpush.msra.mxu0 0.0
    %989 = vmatpush.msra.mxu0 0.0
    %990 = vmatpush.msra.mxu0 0.0
    %991 = vmatpush.msra.mxu0 0.0
    %992 = vmatpush.msra.mxu0 0.0
    %993 = vmatpush.msra.mxu0 0.0
    %994 = vmatpush.msra.mxu0 0.0
    %995 = vmatpush.msra.mxu0 0.0
    %996 = vmatpush.msra.mxu0 0.0
    %997 = vmatpush.msra.mxu0 0.0
    %998 = vmatpush.msra.mxu0 %v81
    %999 = vmatpush.msra.mxu0 %v80
    %1000 = vmatpush.msra.mxu0 %v79
    %1001 = vmatpush.msra.mxu0 %v78
    %1002 = vmatmul.f32.gmra.mxu0 %v981
    %v1003 = vpop.f32.mrf.mxu0
    %v1004 = vadd.f32 %v979, %v1003
    %1005 = vmatmul.f32.gmra.mxu0 %v984
    %v1006 = vpop.f32.mrf.mxu0
    %v1007 = vadd.f32 %v979, %v1006
    %1008 = vdwg.mxu0
    %1009 = vset.pattern.permute.xlu0 0
    %1010 = vperm.xlu0 %1009, %v110
    %v1011 = vpop.permute.xlu0 %1010
    %vm1012 = vcmp.eq.s32.totalorder %v1011, %v116
    %v1013 = vsel %vm1012, 1, 0
    %v1014 = vcvt.s32.f32 %v1013
    %v1016 = vsel %vm211, %v1014, 0
    %1018 = vmatpush.msra.mxu0 0.0
    %1019 = vmatpush.msra.mxu0 0.0
    %1020 = vmatpush.msra.mxu0 0.0
    %1021 = vmatpush.msra.mxu0 0.0
    %1022 = vmatpush.msra.mxu0 0.0
    %1023 = vmatpush.msra.mxu0 0.0
    %1024 = vmatpush.msra.mxu0 0.0
    %1025 = vmatpush.msra.mxu0 0.0
    %1026 = vmatpush.msra.mxu0 0.0
    %1027 = vmatpush.msra.mxu0 %v220
    %1028 = vmatpush.msra.mxu0 %v35
    %1029 = vmatpush.msra.mxu0 %v34
    %1030 = vmatpush.msra.mxu0 %v33
    %1031 = vmatpush.msra.mxu0 %v32
    %1032 = vmatpush.msra.mxu0 %v31
    %1033 = vmatpush.msra.mxu0 %v30
    %1034 = vmatmul.f32.gmra.mxu0 %v1016
    %v1035 = vpop.f32.mrf.mxu0
    %v1036 = vadd.f32 0.0, %v1035
    %1037 = vdwg.mxu0
    %v1038 = vmul.u32 %v116, 5
    %vm1039 = vcmp.eq.s32.totalorder %v113, %v1038
    %vm1040 = vcmp.eq.s32.totalorder %v114, %v1038
    %v1041 = vsel %vm1039, 1, 0
    %v1042 = vsel %vm1040, 1, 0
    %v1043 = vcvt.s32.f32 %v1041
    %v1044 = vcvt.s32.f32 %v1042
    %vm1045 = vcmp.eq.s32.totalorder %v113, 0
    %vm1046 = vcmp.eq.s32.totalorder %v114, 0
    %vm1047 = vmor %vm117, %vm1045
    %vm1048 = vmor %vm118, %vm1046
    %vm1049 = vcmp.eq.s32.totalorder %v113, 5
    %vm1050 = vcmp.eq.s32.totalorder %v114, 5
    %vm1051 = vmor %vm1047, %vm1049
    %vm1052 = vmor %vm1048, %vm1050
    %vm1053 = vcmask 15360
    %v1055 = vsel %vm1053, %v1043, 0
    %v1058 = vsel %vm1053, %v1044, 0
    %v1061 = vsel %vm218, %v1036, 0
    %1063 = vmatpush.msra.mxu0 0.0
    %1064 = vmatpush.msra.mxu0 0.0
    %1065 = vmatpush.msra.mxu0 0.0
    %1066 = vmatpush.msra.mxu0 0.0
    %1067 = vmatpush.msra.mxu0 0.0
    %1068 = vmatpush.msra.mxu0 0.0
    %1069 = vmatpush.msra.mxu0 0.0
    %1070 = vmatpush.msra.mxu0 0.0
    %1071 = vmatpush.msra.mxu0 0.0
    %1072 = vmatpush.msra.mxu0 0.0
    %1073 = vmatpush.msra.mxu0 0.0
    %1074 = vmatpush.msra.mxu0 0.0
    %1075 = vmatpush.msra.mxu0 0.0
    %1076 = vmatpush.msra.mxu0 0.0
    %1077 = vmatpush.msra.mxu0 0.0
    %1078 = vmatpush.msra.mxu0 %v1061
    %1079 = vmatmul.f32.gmra.mxu0 %v1055
    %v1080 = vpop.f32.mrf.mxu0
    %v1081 = vadd.f32 0.0, %v1080
    %1082 = vmatmul.f32.gmra.mxu0 %v1058
    %v1083 = vpop.f32.mrf.mxu0
    %v1084 = vadd.f32 0.0, %v1083
    %1085 = vdwg.mxu0
    %v1086 = vsel %vm1051, 1, 0
    %v1087 = vsel %vm1052, 1, 0
    %vm1088 = vcmp.eq.s32.totalorder %v1086, 1
    %vm1089 = vcmp.eq.s32.totalorder %v1087, 1
    %v1090 = vperm.slane %v30, 1
    %v1091 = vsel %vm1088, %v1081, %v1090
    %v1092 = vsel %vm1089, %v1084, %v1090
    %v1094 = vrot.slane %v37, 3
    %vm1096 = vcmask 1044480
    %v1097 = vsel %vm1096, %v37, %v1094
    %v1098 = vadd.f32 %v1091, %v1097
    %v1099 = vadd.f32 %v1092, %v1094
    %vm1100 = vcmp.eq.s32.totalorder %v116, 0
    %v1101 = vsel %vm1100, %v1011, 1
    %v1102 = vperm.slane %v67, 0
    %v1104 = vsel %vm246, %v1098, 0
    %v1107 = vsel %vm246, %v1099, 0
    %1109 = vmatpush.msra.mxu0 0.0
    %1110 = vmatpush.msra.mxu0 0.0
    %1111 = vmatpush.msra.mxu0 0.0
    %1112 = vmatpush.msra.mxu0 0.0
    %1113 = vmatpush.msra.mxu0 0.0
    %1114 = vmatpush.msra.mxu0 0.0
    %1115 = vmatpush.msra.mxu0 0.0
    %1116 = vmatpush.msra.mxu0 0.0
    %1117 = vmatpush.msra.mxu0 0.0
    %1118 = vmatpush.msra.mxu0 0.0
    %1119 = vmatpush.msra.mxu0 0.0
    %1120 = vmatpush.msra.mxu0 0.0
    %1121 = vmatpush.msra.mxu0 %v66
    %1122 = vmatpush.msra.mxu0 %v65
    %1123 = vmatpush.msra.mxu0 %v64
    %1124 = vmatpush.msra.mxu0 %v63
    %1125 = vmatmul.f32.gmra.mxu0 %v1104
    %v1126 = vpop.f32.mrf.mxu0
    %v1127 = vadd.f32 %v1102, %v1126
    %1128 = vmatmul.f32.gmra.mxu0 %v1107
    %v1129 = vpop.f32.mrf.mxu0
    %v1130 = vadd.f32 %v1102, %v1129
    %1131 = vdwg.mxu0
    %1134 = vrot.lane.b32.xlu0 %v1127, 96
    %v1135 = vpop.permute.xlu0 %1134
    %1136 = vrot.lane.b32.xlu0 %v1130, 96
    %v1137 = vpop.permute.xlu0 %1136
    %v1138 = vsel %vm282, %v1127, 0
    %v1140 = vsel %vm282, %v1130, 0
    %v1142 = vsel %vm282, %v1135, 0
    %v1144 = vsel %vm282, %v1137, 0
    %1146 = vmatpush.xpose.msra.mxu0 0.0
    %1147 = vmatpush.xpose.msra.mxu0 0.0
    %1148 = vmatpush.xpose.msra.mxu0 0.0
    %1149 = vmatpush.xpose.msra.mxu0 0.0
    %1150 = vmatpush.xpose.msra.mxu0 0.0
    %1151 = vmatpush.xpose.msra.mxu0 0.0
    %1152 = vmatpush.xpose.msra.mxu0 0.0
    %1153 = vmatpush.xpose.msra.mxu0 0.0
    %1154 = vmatpush.xpose.msra.mxu0 0.0
    %1155 = vmatpush.xpose.msra.mxu0 0.0
    %1156 = vmatpush.xpose.msra.mxu0 0.0
    %1157 = vmatpush.xpose.msra.mxu0 0.0
    %1158 = vmatpush.xpose.msra.mxu0 0.0
    %1159 = vmatpush.xpose.msra.mxu0 0.0
    %1160 = vmatpush.xpose.msra.mxu0 %v1144
    %1161 = vmatpush.xpose.msra.mxu0 %v1142
    %1162 = vmatmul.f32.gmra.mxu0 %v1138
    %v1163 = vpop.f32.mrf.mxu0
    %v1164 = vadd.f32 %v183, %v1163
    %1165 = vmatmul.f32.gmra.mxu0 %v1140
    %v1166 = vpop.f32.mrf.mxu0
    %v1167 = vadd.f32 %v184, %v1166
    %1168 = vdwg.mxu0
    %vm1169 = vcmask 80896
    %v1170 = vsel %vm1169, %v1164, -inf
    %1171 = vmax.xlane.f32.xlu0 %v1170
    %v1172 = vpop.xlane.xlu0 %1171
    %vm1173 = vcmask 74752
    %v1174 = vsel %vm1173, %v1167, -inf
    %1175 = vmax.xlane.f32.xlu0 %v1174
    %v1176 = vpop.xlane.xlu0 %1175
    %v1177 = vsub.f32 %v1164, %v1172
    %v1178 = vsub.f32 %v1167, %v1176
    %v1179 = vmul.f32 %v1177, 1.442695
    %v1180 = vpow.pop %v1179
    %v1181 = vmul.f32 %v1178, 1.442695
    %v1182 = vpow.pop %v1181
    %v1183 = vsel %vm1169, %v1180, 0.0
    %1184 = vadd.xlane.f32.xlu0 %v1183
    %v1185 = vpop.xlane.xlu0 %1184
    %v1186 = vsel %vm1173, %v1182, 0.0
    %1187 = vadd.xlane.f32.xlu0 %v1186
    %v1188 = vpop.xlane.xlu0 %1187
    %v1189 = vrcp.pop %v1185
    %v1190 = vrcp.pop %v1188
    %v1191 = vmul.f32 %v1180, %v1189
    %v1192 = vmul.f32 %v1182, %v1190
    %1193 = vrot.lane.b32.xlu0 %v1127, 64
    %v1194 = vpop.permute.xlu0 %1193
    %1195 = vrot.lane.b32.xlu0 %v1130, 64
    %v1196 = vpop.permute.xlu0 %1195
    %v1199 = vsel %vm1169, %v1191, 0
    %v1202 = vsel %vm1169, %v1192, 0
    %v1204 = vsel %vm218, %v1196, 0
    %1206 = vmatpush.msra.mxu0 0.0
    %1207 = vmatpush.msra.mxu0 0.0
    %1208 = vmatpush.msra.mxu0 0.0
    %1209 = vmatpush.msra.mxu0 0.0
    %1210 = vmatpush.msra.mxu0 0.0
    %1211 = vmatpush.msra.mxu0 0.0
    %1212 = vmatpush.msra.mxu0 0.0
    %1213 = vmatpush.msra.mxu0 0.0
    %1214 = vmatpush.msra.mxu0 0.0
    %1215 = vmatpush.msra.mxu0 0.0
    %1216 = vmatpush.msra.mxu0 0.0
    %1217 = vmatpush.msra.mxu0 0.0
    %1218 = vmatpush.msra.mxu0 0.0
    %1219 = vmatpush.msra.mxu0 0.0
    %1220 = vmatpush.msra.mxu0 %v1204
    %1221 = vmatpush.msra.mxu0 %v1194
    %1222 = vmatmul.f32.gmra.mxu0 %v1199
    %v1223 = vpop.f32.mrf.mxu0
    %v1224 = vadd.f32 0.0, %v1223
    %1225 = vmatmul.f32.gmra.mxu0 %v1202
    %v1226 = vpop.f32.mrf.mxu0
    %v1227 = vadd.f32 0.0, %v1226
    %1228 = vdwg.mxu0
    %1229 = vrot.lane.b32.xlu0 %v1127, 120
    %v1230 = vpop.permute.xlu0 %1229
    %1231 = vrot.lane.b32.xlu0 %v1130, 120
    %v1232 = vpop.permute.xlu0 %1231
    %1233 = vrot.lane.b32.xlu0 %v1127, 88
    %v1234 = vpop.permute.xlu0 %1233
    %1235 = vrot.lane.b32.xlu0 %v1130, 88
    %v1236 = vpop.permute.xlu0 %1235
    %v1237 = vsel %vm282, %v1230, 0
    %v1239 = vsel %vm282, %v1232, 0
    %v1241 = vsel %vm282, %v1234, 0
    %v1243 = vsel %vm282, %v1236, 0
    %1245 = vmatpush.xpose.msra.mxu0 0.0
    %1246 = vmatpush.xpose.msra.mxu0 0.0
    %1247 = vmatpush.xpose.msra.mxu0 0.0
    %1248 = vmatpush.xpose.msra.mxu0 0.0
    %1249 = vmatpush.xpose.msra.mxu0 0.0
    %1250 = vmatpush.xpose.msra.mxu0 0.0
    %1251 = vmatpush.xpose.msra.mxu0 0.0
    %1252 = vmatpush.xpose.msra.mxu0 0.0
    %1253 = vmatpush.xpose.msra.mxu0 0.0
    %1254 = vmatpush.xpose.msra.mxu0 0.0
    %1255 = vmatpush.xpose.msra.mxu0 0.0
    %1256 = vmatpush.xpose.msra.mxu0 0.0
    %1257 = vmatpush.xpose.msra.mxu0 0.0
    %1258 = vmatpush.xpose.msra.mxu0 0.0
    %1259 = vmatpush.xpose.msra.mxu0 %v1243
    %1260 = vmatpush.xpose.msra.mxu0 %v1241
    %1261 = vmatmul.f32.gmra.mxu0 %v1237
    %v1262 = vpop.f32.mrf.mxu0
    %v1263 = vadd.f32 %v183, %v1262
    %1264 = vmatmul.f32.gmra.mxu0 %v1239
    %v1265 = vpop.f32.mrf.mxu0
    %v1266 = vadd.f32 %v184, %v1265
    %1267 = vdwg.mxu0
    %v1268 = vsel %vm1169, %v1263, -inf
    %1269 = vmax.xlane.f32.xlu0 %v1268
    %v1270 = vpop.xlane.xlu0 %1269
    %v1271 = vsel %vm1173, %v1266, -inf
    %1272 = vmax.xlane.f32.xlu0 %v1271
    %v1273 = vpop.xlane.xlu0 %1272
    %v1274 = vsub.f32 %v1263, %v1270
    %v1275 = vsub.f32 %v1266, %v1273
    %v1276 = vmul.f32 %v1274, 1.442695
    %v1277 = vpow.pop %v1276
    %v1278 = vmul.f32 %v1275, 1.442695
    %v1279 = vpow.pop %v1278
    %v1280 = vsel %vm1169, %v1277, 0.0
    %1281 = vadd.xlane.f32.xlu0 %v1280
    %v1282 = vpop.xlane.xlu0 %1281
    %v1283 = vsel %vm1173, %v1279, 0.0
    %1284 = vadd.xlane.f32.xlu0 %v1283
    %v1285 = vpop.xlane.xlu0 %1284
    %v1286 = vrcp.pop %v1282
    %v1287 = vrcp.pop %v1285
    %v1288 = vmul.f32 %v1277, %v1286
    %v1289 = vmul.f32 %v1279, %v1287
    %1290 = vrot.lane.b32.xlu0 %v1127, 56
    %v1291 = vpop.permute.xlu0 %1290
    %1292 = vrot.lane.b32.xlu0 %v1130, 56
    %v1293 = vpop.permute.xlu0 %1292
    %v1296 = vsel %vm1169, %v1288, 0
    %v1299 = vsel %vm1169, %v1289, 0
    %v1301 = vsel %vm218, %v1293, 0
    %1303 = vmatpush.msra.mxu0 0.0
    %1304 = vmatpush.msra.mxu0 0.0
    %1305 = vmatpush.msra.mxu0 0.0
    %1306 = vmatpush.msra.mxu0 0.0
    %1307 = vmatpush.msra.mxu0 0.0
    %1308 = vmatpush.msra.mxu0 0.0
    %1309 = vmatpush.msra.mxu0 0.0
    %1310 = vmatpush.msra.mxu0 0.0
    %1311 = vmatpush.msra.mxu0 0.0
    %1312 = vmatpush.msra.mxu0 0.0
    %1313 = vmatpush.msra.mxu0 0.0
    %1314 = vmatpush.msra.mxu0 0.0
    %1315 = vmatpush.msra.mxu0 0.0
    %1316 = vmatpush.msra.mxu0 0.0
    %1317 = vmatpush.msra.mxu0 %v1301
    %1318 = vmatpush.msra.mxu0 %v1291
    %1319 = vmatmul.f32.gmra.mxu0 %v1296
    %v1320 = vpop.f32.mrf.mxu0
    %v1321 = vadd.f32 0.0, %v1320
    %1322 = vmatmul.f32.gmra.mxu0 %v1299
    %v1323 = vpop.f32.mrf.mxu0
    %v1324 = vadd.f32 0.0, %v1323
    %1325 = vdwg.mxu0
    %v1327 = vsel %vm282, %v1321, 0
    %v1330 = vsel %vm282, %v1324, 0
    %1332 = vmatpush.msra.mxu0 0.0
    %1333 = vmatpush.msra.mxu0 0.0
    %1334 = vmatpush.msra.mxu0 0.0
    %1335 = vmatpush.msra.mxu0 0.0
    %1336 = vmatpush.msra.mxu0 0.0
    %1337 = vmatpush.msra.mxu0 0.0
    %1338 = vmatpush.msra.mxu0 0.0
    %1339 = vmatpush.msra.mxu0 0.0
    %1340 = vmatpush.msra.mxu0 0.0
    %1341 = vmatpush.msra.mxu0 0.0
    %1342 = vmatpush.msra.mxu0 0.0
    %1343 = vmatpush.msra.mxu0 0.0
    %1344 = vmatpush.msra.mxu0 0.0
    %1345 = vmatpush.msra.mxu0 0.0
    %1346 = vmatpush.msra.mxu0 0.0
    %1347 = vmatpush.msra.mxu0 %v69
    %1348 = vmatmul.f32.gmra.mxu0 %v1327
    %v1349 = vpop.f32.mrf.mxu0
    %v1350 = vadd.f32 0.0, %v1349
    %1351 = vmatmul.f32.gmra.mxu0 %v1330
    %v1352 = vpop.f32.mrf.mxu0
    %v1353 = vadd.f32 0.0, %v1352
    %1354 = vdwg.mxu0
    %v1356 = vsel %vm282, %v1224, 0
    %v1359 = vsel %vm282, %v1227, 0
    %1361 = vmatpush.msra.mxu0 0.0
    %1362 = vmatpush.msra.mxu0 0.0
    %1363 = vmatpush.msra.mxu0 0.0
    %1364 = vmatpush.msra.mxu0 0.0
    %1365 = vmatpush.msra.mxu0 0.0
    %1366 = vmatpush.msra.mxu0 0.0
    %1367 = vmatpush.msra.mxu0 0.0
    %1368 = vmatpush.msra.mxu0 0.0
    %1369 = vmatpush.msra.mxu0 0.0
    %1370 = vmatpush.msra.mxu0 0.0
    %1371 = vmatpush.msra.mxu0 0.0
    %1372 = vmatpush.msra.mxu0 0.0
    %1373 = vmatpush.msra.mxu0 0.0
    %1374 = vmatpush.msra.mxu0 0.0
    %1375 = vmatpush.msra.mxu0 0.0
    %1376 = vmatpush.msra.mxu0 %v68
    %1377 = vmatmul.f32.gmra.mxu0 %v1356
    %v1378 = vpop.f32.mrf.mxu0
    %v1379 = vadd.f32 %v1350, %v1378
    %1380 = vmatmul.f32.gmra.mxu0 %v1359
    %v1381 = vpop.f32.mrf.mxu0
    %v1382 = vadd.f32 %v1353, %v1381
    %1383 = vdwg.mxu0
    %1384 = vrot.lane.b32.xlu0 %v1127, 112
    %v1385 = vpop.permute.xlu0 %1384
    %1386 = vrot.lane.b32.xlu0 %v1130, 112
    %v1387 = vpop.permute.xlu0 %1386
    %1388 = vrot.lane.b32.xlu0 %v1127, 80
    %v1389 = vpop.permute.xlu0 %1388
    %1390 = vrot.lane.b32.xlu0 %v1130, 80
    %v1391 = vpop.permute.xlu0 %1390
    %v1392 = vsel %vm282, %v1385, 0
    %v1394 = vsel %vm282, %v1387, 0
    %v1396 = vsel %vm282, %v1389, 0
    %v1398 = vsel %vm282, %v1391, 0
    %1400 = vmatpush.xpose.msra.mxu0 0.0
    %1401 = vmatpush.xpose.msra.mxu0 0.0
    %1402 = vmatpush.xpose.msra.mxu0 0.0
    %1403 = vmatpush.xpose.msra.mxu0 0.0
    %1404 = vmatpush.xpose.msra.mxu0 0.0
    %1405 = vmatpush.xpose.msra.mxu0 0.0
    %1406 = vmatpush.xpose.msra.mxu0 0.0
    %1407 = vmatpush.xpose.msra.mxu0 0.0
    %1408 = vmatpush.xpose.msra.mxu0 0.0
    %1409 = vmatpush.xpose.msra.mxu0 0.0
    %1410 = vmatpush.xpose.msra.mxu0 0.0
    %1411 = vmatpush.xpose.msra.mxu0 0.0
    %1412 = vmatpush.xpose.msra.mxu0 0.0
    %1413 = vmatpush.xpose.msra.mxu0 0.0
    %1414 = vmatpush.xpose.msra.mxu0 %v1398
    %1415 = vmatpush.xpose.msra.mxu0 %v1396
    %1416 = vmatmul.f32.gmra.mxu0 %v1392
    %v1417 = vpop.f32.mrf.mxu0
    %v1418 = vadd.f32 %v183, %v1417
    %1419 = vmatmul.f32.gmra.mxu0 %v1394
    %v1420 = vpop.f32.mrf.mxu0
    %v1421 = vadd.f32 %v184, %v1420
    %1422 = vdwg.mxu0
    %v1423 = vsel %vm1169, %v1418, -inf
    %1424 = vmax.xlane.f32.xlu0 %v1423
    %v1425 = vpop.xlane.xlu0 %1424
    %v1426 = vsel %vm1173, %v1421, -inf
    %1427 = vmax.xlane.f32.xlu0 %v1426
    %v1428 = vpop.xlane.xlu0 %1427
    %v1429 = vsub.f32 %v1418, %v1425
    %v1430 = vsub.f32 %v1421, %v1428
    %v1431 = vmul.f32 %v1429, 1.442695
    %v1432 = vpow.pop %v1431
    %v1433 = vmul.f32 %v1430, 1.442695
    %v1434 = vpow.pop %v1433
    %v1435 = vsel %vm1169, %v1432, 0.0
    %1436 = vadd.xlane.f32.xlu0 %v1435
    %v1437 = vpop.xlane.xlu0 %1436
    %v1438 = vsel %vm1173, %v1434, 0.0
    %1439 = vadd.xlane.f32.xlu0 %v1438
    %v1440 = vpop.xlane.xlu0 %1439
    %v1441 = vrcp.pop %v1437
    %v1442 = vrcp.pop %v1440
    %v1443 = vmul.f32 %v1432, %v1441
    %v1444 = vmul.f32 %v1434, %v1442
    %1445 = vrot.lane.b32.xlu0 %v1127, 48
    %v1446 = vpop.permute.xlu0 %1445
    %1447 = vrot.lane.b32.xlu0 %v1130, 48
    %v1448 = vpop.permute.xlu0 %1447
    %v1451 = vsel %vm1169, %v1443, 0
    %v1454 = vsel %vm1169, %v1444, 0
    %v1456 = vsel %vm218, %v1448, 0
    %1458 = vmatpush.msra.mxu0 0.0
    %1459 = vmatpush.msra.mxu0 0.0
    %1460 = vmatpush.msra.mxu0 0.0
    %1461 = vmatpush.msra.mxu0 0.0
    %1462 = vmatpush.msra.mxu0 0.0
    %1463 = vmatpush.msra.mxu0 0.0
    %1464 = vmatpush.msra.mxu0 0.0
    %1465 = vmatpush.msra.mxu0 0.0
    %1466 = vmatpush.msra.mxu0 0.0
    %1467 = vmatpush.msra.mxu0 0.0
    %1468 = vmatpush.msra.mxu0 0.0
    %1469 = vmatpush.msra.mxu0 0.0
    %1470 = vmatpush.msra.mxu0 0.0
    %1471 = vmatpush.msra.mxu0 0.0
    %1472 = vmatpush.msra.mxu0 %v1456
    %1473 = vmatpush.msra.mxu0 %v1446
    %1474 = vmatmul.f32.gmra.mxu0 %v1451
    %v1475 = vpop.f32.mrf.mxu0
    %v1476 = vadd.f32 0.0, %v1475
    %1477 = vmatmul.f32.gmra.mxu0 %v1454
    %v1478 = vpop.f32.mrf.mxu0
    %v1479 = vadd.f32 0.0, %v1478
    %1480 = vdwg.mxu0
    %v1482 = vsel %vm282, %v1476, 0
    %v1485 = vsel %vm282, %v1479, 0
    %1487 = vmatpush.msra.mxu0 0.0
    %1488 = vmatpush.msra.mxu0 0.0
    %1489 = vmatpush.msra.mxu0 0.0
    %1490 = vmatpush.msra.mxu0 0.0
    %1491 = vmatpush.msra.mxu0 0.0
    %1492 = vmatpush.msra.mxu0 0.0
    %1493 = vmatpush.msra.mxu0 0.0
    %1494 = vmatpush.msra.mxu0 0.0
    %1495 = vmatpush.msra.mxu0 0.0
    %1496 = vmatpush.msra.mxu0 0.0
    %1497 = vmatpush.msra.mxu0 0.0
    %1498 = vmatpush.msra.mxu0 0.0
    %1499 = vmatpush.msra.mxu0 0.0
    %1500 = vmatpush.msra.mxu0 0.0
    %1501 = vmatpush.msra.mxu0 0.0
    %1502 = vmatpush.msra.mxu0 %v70
    %1503 = vmatmul.f32.gmra.mxu0 %v1482
    %v1504 = vpop.f32.mrf.mxu0
    %v1505 = vadd.f32 0.0, %v1504
    %1506 = vmatmul.f32.gmra.mxu0 %v1485
    %v1507 = vpop.f32.mrf.mxu0
    %v1508 = vadd.f32 0.0, %v1507
    %1509 = vdwg.mxu0
    %v1510 = vadd.f32 %v1379, %v1505
    %v1511 = vadd.f32 %v1382, %v1508
    %1512 = vrot.lane.b32.xlu0 %v1127, 104
    %v1513 = vpop.permute.xlu0 %1512
    %1514 = vrot.lane.b32.xlu0 %v1130, 104
    %v1515 = vpop.permute.xlu0 %1514
    %1516 = vrot.lane.b32.xlu0 %v1127, 72
    %v1517 = vpop.permute.xlu0 %1516
    %1518 = vrot.lane.b32.xlu0 %v1130, 72
    %v1519 = vpop.permute.xlu0 %1518
    %v1520 = vsel %vm282, %v1513, 0
    %v1522 = vsel %vm282, %v1515, 0
    %v1524 = vsel %vm282, %v1517, 0
    %v1526 = vsel %vm282, %v1519, 0
    %1528 = vmatpush.xpose.msra.mxu0 0.0
    %1529 = vmatpush.xpose.msra.mxu0 0.0
    %1530 = vmatpush.xpose.msra.mxu0 0.0
    %1531 = vmatpush.xpose.msra.mxu0 0.0
    %1532 = vmatpush.xpose.msra.mxu0 0.0
    %1533 = vmatpush.xpose.msra.mxu0 0.0
    %1534 = vmatpush.xpose.msra.mxu0 0.0
    %1535 = vmatpush.xpose.msra.mxu0 0.0
    %1536 = vmatpush.xpose.msra.mxu0 0.0
    %1537 = vmatpush.xpose.msra.mxu0 0.0
    %1538 = vmatpush.xpose.msra.mxu0 0.0
    %1539 = vmatpush.xpose.msra.mxu0 0.0
    %1540 = vmatpush.xpose.msra.mxu0 0.0
    %1541 = vmatpush.xpose.msra.mxu0 0.0
    %1542 = vmatpush.xpose.msra.mxu0 %v1526
    %1543 = vmatpush.xpose.msra.mxu0 %v1524
    %1544 = vmatmul.f32.gmra.mxu0 %v1520
    %v1545 = vpop.f32.mrf.mxu0
    %v1546 = vadd.f32 %v183, %v1545
    %1547 = vmatmul.f32.gmra.mxu0 %v1522
    %v1548 = vpop.f32.mrf.mxu0
    %v1549 = vadd.f32 %v184, %v1548
    %1550 = vdwg.mxu0
    %v1551 = vsel %vm1169, %v1546, -inf
    %1552 = vmax.xlane.f32.xlu0 %v1551
    %v1553 = vpop.xlane.xlu0 %1552
    %v1554 = vsel %vm1173, %v1549, -inf
    %1555 = vmax.xlane.f32.xlu0 %v1554
    %v1556 = vpop.xlane.xlu0 %1555
    %v1557 = vsub.f32 %v1546, %v1553
    %v1558 = vsub.f32 %v1549, %v1556
    %v1559 = vmul.f32 %v1557, 1.442695
    %v1560 = vpow.pop %v1559
    %v1561 = vmul.f32 %v1558, 1.442695
    %v1562 = vpow.pop %v1561
    %v1563 = vsel %vm1169, %v1560, 0.0
    %1564 = vadd.xlane.f32.xlu0 %v1563
    %v1565 = vpop.xlane.xlu0 %1564
    %v1566 = vsel %vm1173, %v1562, 0.0
    %1567 = vadd.xlane.f32.xlu0 %v1566
    %v1568 = vpop.xlane.xlu0 %1567
    %v1569 = vrcp.pop %v1565
    %v1570 = vrcp.pop %v1568
    %v1571 = vmul.f32 %v1560, %v1569
    %v1572 = vmul.f32 %v1562, %v1570
    %1573 = vrot.lane.b32.xlu0 %v1127, 40
    %v1574 = vpop.permute.xlu0 %1573
    %1575 = vrot.lane.b32.xlu0 %v1130, 40
    %v1576 = vpop.permute.xlu0 %1575
    %v1579 = vsel %vm1169, %v1571, 0
    %v1582 = vsel %vm1169, %v1572, 0
    %v1584 = vsel %vm218, %v1576, 0
    %1586 = vmatpush.msra.mxu0 0.0
    %1587 = vmatpush.msra.mxu0 0.0
    %1588 = vmatpush.msra.mxu0 0.0
    %1589 = vmatpush.msra.mxu0 0.0
    %1590 = vmatpush.msra.mxu0 0.0
    %1591 = vmatpush.msra.mxu0 0.0
    %1592 = vmatpush.msra.mxu0 0.0
    %1593 = vmatpush.msra.mxu0 0.0
    %1594 = vmatpush.msra.mxu0 0.0
    %1595 = vmatpush.msra.mxu0 0.0
    %1596 = vmatpush.msra.mxu0 0.0
    %1597 = vmatpush.msra.mxu0 0.0
    %1598 = vmatpush.msra.mxu0 0.0
    %1599 = vmatpush.msra.mxu0 0.0
    %1600 = vmatpush.msra.mxu0 %v1584
    %1601 = vmatpush.msra.mxu0 %v1574
    %1602 = vmatmul.f32.gmra.mxu0 %v1579
    %v1603 = vpop.f32.mrf.mxu0
    %v1604 = vadd.f32 0.0, %v1603
    %1605 = vmatmul.f32.gmra.mxu0 %v1582
    %v1606 = vpop.f32.mrf.mxu0
    %v1607 = vadd.f32 0.0, %v1606
    %1608 = vdwg.mxu0
    %v1610 = vsel %vm282, %v1604, 0
    %v1613 = vsel %vm282, %v1607, 0
    %1615 = vmatpush.msra.mxu0 0.0
    %1616 = vmatpush.msra.mxu0 0.0
    %1617 = vmatpush.msra.mxu0 0.0
    %1618 = vmatpush.msra.mxu0 0.0
    %1619 = vmatpush.msra.mxu0 0.0
    %1620 = vmatpush.msra.mxu0 0.0
    %1621 = vmatpush.msra.mxu0 0.0
    %1622 = vmatpush.msra.mxu0 0.0
    %1623 = vmatpush.msra.mxu0 0.0
    %1624 = vmatpush.msra.mxu0 0.0
    %1625 = vmatpush.msra.mxu0 0.0
    %1626 = vmatpush.msra.mxu0 0.0
    %1627 = vmatpush.msra.mxu0 0.0
    %1628 = vmatpush.msra.mxu0 0.0
    %1629 = vmatpush.msra.mxu0 0.0
    %1630 = vmatpush.msra.mxu0 %v71
    %1631 = vmatmul.f32.gmra.mxu0 %v1610
    %v1632 = vpop.f32.mrf.mxu0
    %v1633 = vadd.f32 0.0, %v1632
    %1634 = vmatmul.f32.gmra.mxu0 %v1613
    %v1635 = vpop.f32.mrf.mxu0
    %v1636 = vadd.f32 0.0, %v1635
    %1637 = vdwg.mxu0
    %v1638 = vadd.f32 %v1510, %v1633
    %v1639 = vadd.f32 %v1511, %v1636
    %v1640 = vperm.slane %v72, 0
    %v1641 = vadd.f32 %v1638, %v1640
    %v1642 = vadd.f32 %v1639, %v1640
    %v1643 = vadd.f32 %v1098, %v1641
    %v1644 = vadd.f32 %v1099, %v1642
    %v1645 = vsel %vm246, %v1643, 0.0
    %1646 = vadd.xlane.f32.xlu0 %v1645
    %v1647 = vpop.xlane.xlu0 %1646
    %vm1648 = vcmask 254976
    %v1649 = vsel %vm1648, %v1644, 0.0
    %1650 = vadd.xlane.f32.xlu0 %v1649
    %v1651 = vpop.xlane.xlu0 %1650
    %v1652 = vmul.f32 %v1647, %v797
    %v1653 = vmul.f32 %v1651, %v797
    %v1654 = vsub.f32 %v1643, %v1652
    %v1655 = vsub.f32 %v1644, %v1653
    %v1656 = vmul.f32 %v1654, %v1654
    %v1657 = vmul.f32 %v1655, %v1655
    %v1658 = vsel %vm246, %v1656, 0.0
    %1659 = vadd.xlane.f32.xlu0 %v1658
    %v1660 = vpop.xlane.xlu0 %1659
    %v1661 = vsel %vm1648, %v1657, 0.0
    %1662 = vadd.xlane.f32.xlu0 %v1661
    %v1663 = vpop.xlane.xlu0 %1662
    %v1664 = vmul.f32 %v1660, %v797
    %v1665 = vmul.f32 %v1663, %v797
    %v1666 = vadd.f32 %v1664, 1e-05
    %v1667 = vadd.f32 %v1665, 1e-05
    %v1668 = vrsqrt.pop %v1666
    %v1669 = vmul.f32 %v1668, %v1666
    %v1670 = vmul.f32 %v1669, %v1668
    %v1671 = vmul.f32 0.5, %v1670
    %v1672 = vsub.f32 1.5, %v1671
    %v1673 = vmul.f32 %v1668, %v1672
    %vm1674 = vweird.f32 %v1666
    %vm1675 = vweird.f32 %v1668
    %vm1676 = vmor %vm1674, %vm1675
    %v1677 = vsel %vm1676, %v1668, %v1673
    %v1678 = vrsqrt.pop %v1667
    %v1679 = vmul.f32 %v1678, %v1667
    %v1680 = vmul.f32 %v1679, %v1678
    %v1681 = vmul.f32 0.5, %v1680
    %v1682 = vsub.f32 1.5, %v1681
    %v1683 = vmul.f32 %v1678, %v1682
    %vm1684 = vweird.f32 %v1667
    %vm1685 = vweird.f32 %v1678
    %vm1686 = vmor %vm1684, %vm1685
    %v1687 = vsel %vm1686, %v1678, %v1683
    %v1688 = vmul.f32 %v1654, %v1677
    %v1689 = vmul.f32 %v1655, %v1687
    %v1690 = vperm.slane %v38, 2
    %v1691 = vmul.f32 %v1688, %v1690
    %v1692 = vmul.f32 %v1689, %v1690
    %1694 = vrot.lane.b32.xlu0 %v1690, 96
    %v1695 = vpop.permute.xlu0 %1694
    %v1697 = vadd.f32 %v1691, %v1695
    %v1698 = vadd.f32 %v1692, %v1695
    %v1699 = vperm.slane %v77, 0
    %v1701 = vsel %vm246, %v1697, 0
    %v1704 = vsel %vm246, %v1698, 0
    %1706 = vmatpush.msra.mxu0 0.0
    %1707 = vmatpush.msra.mxu0 0.0
    %1708 = vmatpush.msra.mxu0 0.0
    %1709 = vmatpush.msra.mxu0 0.0
    %1710 = vmatpush.msra.mxu0 0.0
    %1711 = vmatpush.msra.mxu0 0.0
    %1712 = vmatpush.msra.mxu0 0.0
    %1713 = vmatpush.msra.mxu0 0.0
    %1714 = vmatpush.msra.mxu0 0.0
    %1715 = vmatpush.msra.mxu0 0.0
    %1716 = vmatpush.msra.mxu0 0.0
    %1717 = vmatpush.msra.mxu0 0.0
    %1718 = vmatpush.msra.mxu0 %v76
    %1719 = vmatpush.msra.mxu0 %v75
    %1720 = vmatpush.msra.mxu0 %v74
    %1721 = vmatpush.msra.mxu0 %v73
    %1722 = vmatmul.f32.gmra.mxu0 %v1701
    %v1723 = vpop.f32.mrf.mxu0
    %v1724 = vadd.f32 %v1699, %v1723
    %1725 = vmatmul.f32.gmra.mxu0 %v1704
    %v1726 = vpop.f32.mrf.mxu0
    %v1727 = vadd.f32 %v1699, %v1726
    %1728 = vdwg.mxu0
    %v1730 = vsel %vm282, %v1724, 0
    %v1733 = vsel %vm282, %v1727, 0
    %v1736 = vsel %vm282, %v1004, 0
    %v1739 = vsel %vm282, %v1007, 0
    %1741 = vmatpush.xpose.msra.mxu0 0.0
    %1742 = vmatpush.xpose.msra.mxu0 0.0
    %1743 = vmatpush.xpose.msra.mxu0 0.0
    %1744 = vmatpush.xpose.msra.mxu0 0.0
    %1745 = vmatpush.xpose.msra.mxu0 0.0
    %1746 = vmatpush.xpose.msra.mxu0 0.0
    %1747 = vmatpush.xpose.msra.mxu0 0.0
    %1748 = vmatpush.xpose.msra.mxu0 0.0
    %1749 = vmatpush.xpose.msra.mxu0 0.0
    %1750 = vmatpush.xpose.msra.mxu0 0.0
    %1751 = vmatpush.xpose.msra.mxu0 0.0
    %1752 = vmatpush.xpose.msra.mxu0 0.0
    %1753 = vmatpush.xpose.msra.mxu0 0.0
    %1754 = vmatpush.xpose.msra.mxu0 0.0
    %1755 = vmatpush.xpose.msra.mxu0 %v1739
    %1756 = vmatpush.xpose.msra.mxu0 %v1736
    %1757 = vmatmul.f32.gmra.mxu0 %v1730
    %v1758 = vpop.f32.mrf.mxu0
    %v1759 = vadd.f32 %v197, %v1758
    %1760 = vmatmul.f32.gmra.mxu0 %v1733
    %v1761 = vpop.f32.mrf.mxu0
    %v1762 = vadd.f32 %v198, %v1761
    %1763 = vdwg.mxu0
    %v1764 = vsel %vm314, %v1759, -inf
    %1765 = vmax.xlane.f32.xlu0 %v1764
    %v1766 = vpop.xlane.xlu0 %1765
    %vm1767 = vcmask 123904
    %v1768 = vsel %vm1767, %v1762, -inf
    %1769 = vmax.xlane.f32.xlu0 %v1768
    %v1770 = vpop.xlane.xlu0 %1769
    %v1771 = vsub.f32 %v1759, %v1766
    %v1772 = vsub.f32 %v1762, %v1770
    %v1773 = vmul.f32 %v1771, 1.442695
    %v1774 = vpow.pop %v1773
    %v1775 = vmul.f32 %v1772, 1.442695
    %v1776 = vpow.pop %v1775
    %v1777 = vsel %vm314, %v1774, 0.0
    %1778 = vadd.xlane.f32.xlu0 %v1777
    %v1779 = vpop.xlane.xlu0 %1778
    %v1780 = vsel %vm1767, %v1776, 0.0
    %1781 = vadd.xlane.f32.xlu0 %v1780
    %v1782 = vpop.xlane.xlu0 %1781
    %v1783 = vrcp.pop %v1779
    %v1784 = vrcp.pop %v1782
    %v1785 = vmul.f32 %v1774, %v1783
    %v1786 = vmul.f32 %v1776, %v1784
    %1787 = vrot.lane.b32.xlu0 %v1004, 96
    %v1788 = vpop.permute.xlu0 %1787
    %1789 = vrot.lane.b32.xlu0 %v1007, 96
    %v1790 = vpop.permute.xlu0 %1789
    %v1794 = vsel %vm314, %v1785, 0
    %v1797 = vsel %vm314, %v1786, 0
    %1799 = vmatpush.msra.mxu0 0.0
    %1800 = vmatpush.msra.mxu0 0.0
    %1801 = vmatpush.msra.mxu0 0.0
    %1802 = vmatpush.msra.mxu0 0.0
    %1803 = vmatpush.msra.mxu0 0.0
    %1804 = vmatpush.msra.mxu0 0.0
    %1805 = vmatpush.msra.mxu0 0.0
    %1806 = vmatpush.msra.mxu0 0.0
    %1807 = vmatpush.msra.mxu0 0.0
    %1808 = vmatpush.msra.mxu0 0.0
    %1809 = vmatpush.msra.mxu0 0.0
    %1810 = vmatpush.msra.mxu0 0.0
    %1811 = vmatpush.msra.mxu0 0.0
    %1812 = vmatpush.msra.mxu0 0.0
    %1813 = vmatpush.msra.mxu0 %v1790
    %1814 = vmatpush.msra.mxu0 %v1788
    %1815 = vmatmul.f32.gmra.mxu0 %v1794
    %v1816 = vpop.f32.mrf.mxu0
    %v1817 = vadd.f32 0.0, %v1816
    %1818 = vmatmul.f32.gmra.mxu0 %v1797
    %v1819 = vpop.f32.mrf.mxu0
    %v1820 = vadd.f32 0.0, %v1819
    %1821 = vdwg.mxu0
    %1822 = vrot.lane.b32.xlu0 %v1724, 120
    %v1823 = vpop.permute.xlu0 %1822
    %1824 = vrot.lane.b32.xlu0 %v1727, 120
    %v1825 = vpop.permute.xlu0 %1824
    %1826 = vrot.lane.b32.xlu0 %v1004, 120
    %v1827 = vpop.permute.xlu0 %1826
    %1828 = vrot.lane.b32.xlu0 %v1007, 120
    %v1829 = vpop.permute.xlu0 %1828
    %v1830 = vsel %vm282, %v1823, 0
    %v1832 = vsel %vm282, %v1825, 0
    %v1834 = vsel %vm282, %v1827, 0
    %v1836 = vsel %vm282, %v1829, 0
    %1838 = vmatpush.xpose.msra.mxu0 0.0
    %1839 = vmatpush.xpose.msra.mxu0 0.0
    %1840 = vmatpush.xpose.msra.mxu0 0.0
    %1841 = vmatpush.xpose.msra.mxu0 0.0
    %1842 = vmatpush.xpose.msra.mxu0 0.0
    %1843 = vmatpush.xpose.msra.mxu0 0.0
    %1844 = vmatpush.xpose.msra.mxu0 0.0
    %1845 = vmatpush.xpose.msra.mxu0 0.0
    %1846 = vmatpush.xpose.msra.mxu0 0.0
    %1847 = vmatpush.xpose.msra.mxu0 0.0
    %1848 = vmatpush.xpose.msra.mxu0 0.0
    %1849 = vmatpush.xpose.msra.mxu0 0.0
    %1850 = vmatpush.xpose.msra.mxu0 0.0
    %1851 = vmatpush.xpose.msra.mxu0 0.0
    %1852 = vmatpush.xpose.msra.mxu0 %v1836
    %1853 = vmatpush.xpose.msra.mxu0 %v1834
    %1854 = vmatmul.f32.gmra.mxu0 %v1830
    %v1855 = vpop.f32.mrf.mxu0
    %v1856 = vadd.f32 %v197, %v1855
    %1857 = vmatmul.f32.gmra.mxu0 %v1832
    %v1858 = vpop.f32.mrf.mxu0
    %v1859 = vadd.f32 %v198, %v1858
    %1860 = vdwg.mxu0
    %v1861 = vsel %vm314, %v1856, -inf
    %1862 = vmax.xlane.f32.xlu0 %v1861
    %v1863 = vpop.xlane.xlu0 %1862
    %v1864 = vsel %vm1767, %v1859, -inf
    %1865 = vmax.xlane.f32.xlu0 %v1864
    %v1866 = vpop.xlane.xlu0 %1865
    %v1867 = vsub.f32 %v1856, %v1863
    %v1868 = vsub.f32 %v1859, %v1866
    %v1869 = vmul.f32 %v1867, 1.442695
    %v1870 = vpow.pop %v1869
    %v1871 = vmul.f32 %v1868, 1.442695
    %v1872 = vpow.pop %v1871
    %v1873 = vsel %vm314, %v1870, 0.0
    %1874 = vadd.xlane.f32.xlu0 %v1873
    %v1875 = vpop.xlane.xlu0 %1874
    %v1876 = vsel %vm1767, %v1872, 0.0
    %1877 = vadd.xlane.f32.xlu0 %v1876
    %v1878 = vpop.xlane.xlu0 %1877
    %v1879 = vrcp.pop %v1875
    %v1880 = vrcp.pop %v1878
    %v1881 = vmul.f32 %v1870, %v1879
    %v1882 = vmul.f32 %v1872, %v1880
    %1883 = vrot.lane.b32.xlu0 %v1004, 88
    %v1884 = vpop.permute.xlu0 %1883
    %1885 = vrot.lane.b32.xlu0 %v1007, 88
    %v1886 = vpop.permute.xlu0 %1885
    %v1890 = vsel %vm314, %v1881, 0
    %v1893 = vsel %vm314, %v1882, 0
    %1895 = vmatpush.msra.mxu0 0.0
    %1896 = vmatpush.msra.mxu0 0.0
    %1897 = vmatpush.msra.mxu0 0.0
    %1898 = vmatpush.msra.mxu0 0.0
    %1899 = vmatpush.msra.mxu0 0.0
    %1900 = vmatpush.msra.mxu0 0.0
    %1901 = vmatpush.msra.mxu0 0.0
    %1902 = vmatpush.msra.mxu0 0.0
    %1903 = vmatpush.msra.mxu0 0.0
    %1904 = vmatpush.msra.mxu0 0.0
    %1905 = vmatpush.msra.mxu0 0.0
    %1906 = vmatpush.msra.mxu0 0.0
    %1907 = vmatpush.msra.mxu0 0.0
    %1908 = vmatpush.msra.mxu0 0.0
    %1909 = vmatpush.msra.mxu0 %v1886
    %1910 = vmatpush.msra.mxu0 %v1884
    %1911 = vmatmul.f32.gmra.mxu0 %v1890
    %v1912 = vpop.f32.mrf.mxu0
    %v1913 = vadd.f32 0.0, %v1912
    %1914 = vmatmul.f32.gmra.mxu0 %v1893
    %v1915 = vpop.f32.mrf.mxu0
    %v1916 = vadd.f32 0.0, %v1915
    %1917 = vdwg.mxu0
    %v1919 = vsel %vm282, %v1913, 0
    %v1922 = vsel %vm282, %v1916, 0
    %1924 = vmatpush.msra.mxu0 0.0
    %1925 = vmatpush.msra.mxu0 0.0
    %1926 = vmatpush.msra.mxu0 0.0
    %1927 = vmatpush.msra.mxu0 0.0
    %1928 = vmatpush.msra.mxu0 0.0
    %1929 = vmatpush.msra.mxu0 0.0
    %1930 = vmatpush.msra.mxu0 0.0
    %1931 = vmatpush.msra.mxu0 0.0
    %1932 = vmatpush.msra.mxu0 0.0
    %1933 = vmatpush.msra.mxu0 0.0
    %1934 = vmatpush.msra.mxu0 0.0
    %1935 = vmatpush.msra.mxu0 0.0
    %1936 = vmatpush.msra.mxu0 0.0
    %1937 = vmatpush.msra.mxu0 0.0
    %1938 = vmatpush.msra.mxu0 0.0
    %1939 = vmatpush.msra.mxu0 %v84
    %1940 = vmatmul.f32.gmra.mxu0 %v1919
    %v1941 = vpop.f32.mrf.mxu0
    %v1942 = vadd.f32 0.0, %v1941
    %1943 = vmatmul.f32.gmra.mxu0 %v1922
    %v1944 = vpop.f32.mrf.mxu0
    %v1945 = vadd.f32 0.0, %v1944
    %1946 = vdwg.mxu0
    %v1948 = vsel %vm282, %v1817, 0
    %v1951 = vsel %vm282, %v1820, 0
    %1953 = vmatpush.msra.mxu0 0.0
    %1954 = vmatpush.msra.mxu0 0.0
    %1955 = vmatpush.msra.mxu0 0.0
    %1956 = vmatpush.msra.mxu0 0.0
    %1957 = vmatpush.msra.mxu0 0.0
    %1958 = vmatpush.msra.mxu0 0.0
    %1959 = vmatpush.msra.mxu0 0.0
    %1960 = vmatpush.msra.mxu0 0.0
    %1961 = vmatpush.msra.mxu0 0.0
    %1962 = vmatpush.msra.mxu0 0.0
    %1963 = vmatpush.msra.mxu0 0.0
    %1964 = vmatpush.msra.mxu0 0.0
    %1965 = vmatpush.msra.mxu0 0.0
    %1966 = vmatpush.msra.mxu0 0.0
    %1967 = vmatpush.msra.mxu0 0.0
    %1968 = vmatpush.msra.mxu0 %v83
    %1969 = vmatmul.f32.gmra.mxu0 %v1948
    %v1970 = vpop.f32.mrf.mxu0
    %v1971 = vadd.f32 %v1942, %v1970
    %1972 = vmatmul.f32.gmra.mxu0 %v1951
    %v1973 = vpop.f32.mrf.mxu0
    %v1974 = vadd.f32 %v1945, %v1973
    %1975 = vdwg.mxu0
    %1976 = vrot.lane.b32.xlu0 %v1724, 112
    %v1977 = vpop.permute.xlu0 %1976
    %1978 = vrot.lane.b32.xlu0 %v1727, 112
    %v1979 = vpop.permute.xlu0 %1978
    %1980 = vrot.lane.b32.xlu0 %v1004, 112
    %v1981 = vpop.permute.xlu0 %1980
    %1982 = vrot.lane.b32.xlu0 %v1007, 112
    %v1983 = vpop.permute.xlu0 %1982
    %v1984 = vsel %vm282, %v1977, 0
    %v1986 = vsel %vm282, %v1979, 0
    %v1988 = vsel %vm282, %v1981, 0
    %v1990 = vsel %vm282, %v1983, 0
    %1992 = vmatpush.xpose.msra.mxu0 0.0
    %1993 = vmatpush.xpose.msra.mxu0 0.0
    %1994 = vmatpush.xpose.msra.mxu0 0.0
    %1995 = vmatpush.xpose.msra.mxu0 0.0
    %1996 = vmatpush.xpose.msra.mxu0 0.0
    %1997 = vmatpush.xpose.msra.mxu0 0.0
    %1998 = vmatpush.xpose.msra.mxu0 0.0
    %1999 = vmatpush.xpose.msra.mxu0 0.0
    %2000 = vmatpush.xpose.msra.mxu0 0.0
    %2001 = vmatpush.xpose.msra.mxu0 0.0
    %2002 = vmatpush.xpose.msra.mxu0 0.0
    %2003 = vmatpush.xpose.msra.mxu0 0.0
    %2004 = vmatpush.xpose.msra.mxu0 0.0
    %2005 = vmatpush.xpose.msra.mxu0 0.0
    %2006 = vmatpush.xpose.msra.mxu0 %v1990
    %2007 = vmatpush.xpose.msra.mxu0 %v1988
    %2008 = vmatmul.f32.gmra.mxu0 %v1984
    %v2009 = vpop.f32.mrf.mxu0
    %v2010 = vadd.f32 %v197, %v2009
    %2011 = vmatmul.f32.gmra.mxu0 %v1986
    %v2012 = vpop.f32.mrf.mxu0
    %v2013 = vadd.f32 %v198, %v2012
    %2014 = vdwg.mxu0
    %v2015 = vsel %vm314, %v2010, -inf
    %2016 = vmax.xlane.f32.xlu0 %v2015
    %v2017 = vpop.xlane.xlu0 %2016
    %v2018 = vsel %vm1767, %v2013, -inf
    %2019 = vmax.xlane.f32.xlu0 %v2018
    %v2020 = vpop.xlane.xlu0 %2019
    %v2021 = vsub.f32 %v2010, %v2017
    %v2022 = vsub.f32 %v2013, %v2020
    %v2023 = vmul.f32 %v2021, 1.442695
    %v2024 = vpow.pop %v2023
    %v2025 = vmul.f32 %v2022, 1.442695
    %v2026 = vpow.pop %v2025
    %v2027 = vsel %vm314, %v2024, 0.0
    %2028 = vadd.xlane.f32.xlu0 %v2027
    %v2029 = vpop.xlane.xlu0 %2028
    %v2030 = vsel %vm1767, %v2026, 0.0
    %2031 = vadd.xlane.f32.xlu0 %v2030
    %v2032 = vpop.xlane.xlu0 %2031
    %v2033 = vrcp.pop %v2029
    %v2034 = vrcp.pop %v2032
    %v2035 = vmul.f32 %v2024, %v2033
    %v2036 = vmul.f32 %v2026, %v2034
    %2037 = vrot.lane.b32.xlu0 %v1004, 80
    %v2038 = vpop.permute.xlu0 %2037
    %2039 = vrot.lane.b32.xlu0 %v1007, 80
    %v2040 = vpop.permute.xlu0 %2039
    %v2044 = vsel %vm314, %v2035, 0
    %v2047 = vsel %vm314, %v2036, 0
    %2049 = vmatpush.msra.mxu0 0.0
    %2050 = vmatpush.msra.mxu0 0.0
    %2051 = vmatpush.msra.mxu0 0.0
    %2052 = vmatpush.msra.mxu0 0.0
    %2053 = vmatpush.msra.mxu0 0.0
    %2054 = vmatpush.msra.mxu0 0.0
    %2055 = vmatpush.msra.mxu0 0.0
    %2056 = vmatpush.msra.mxu0 0.0
    %2057 = vmatpush.msra.mxu0 0.0
    %2058 = vmatpush.msra.mxu0 0.0
    %2059 = vmatpush.msra.mxu0 0.0
    %2060 = vmatpush.msra.mxu0 0.0
    %2061 = vmatpush.msra.mxu0 0.0
    %2062 = vmatpush.msra.mxu0 0.0
    %2063 = vmatpush.msra.mxu0 %v2040
    %2064 = vmatpush.msra.mxu0 %v2038
    %2065 = vmatmul.f32.gmra.mxu0 %v2044
    %v2066 = vpop.f32.mrf.mxu0
    %v2067 = vadd.f32 0.0, %v2066
    %2068 = vmatmul.f32.gmra.mxu0 %v2047
    %v2069 = vpop.f32.mrf.mxu0
    %v2070 = vadd.f32 0.0, %v2069
    %2071 = vdwg.mxu0
    %v2073 = vsel %vm282, %v2067, 0
    %v2076 = vsel %vm282, %v2070, 0
    %2078 = vmatpush.msra.mxu0 0.0
    %2079 = vmatpush.msra.mxu0 0.0
    %2080 = vmatpush.msra.mxu0 0.0
    %2081 = vmatpush.msra.mxu0 0.0
    %2082 = vmatpush.msra.mxu0 0.0
    %2083 = vmatpush.msra.mxu0 0.0
    %2084 = vmatpush.msra.mxu0 0.0
    %2085 = vmatpush.msra.mxu0 0.0
    %2086 = vmatpush.msra.mxu0 0.0
    %2087 = vmatpush.msra.mxu0 0.0
    %2088 = vmatpush.msra.mxu0 0.0
    %2089 = vmatpush.msra.mxu0 0.0
    %2090 = vmatpush.msra.mxu0 0.0
    %2091 = vmatpush.msra.mxu0 0.0
    %2092 = vmatpush.msra.mxu0 0.0
    %2093 = vmatpush.msra.mxu0 %v85
    %2094 = vmatmul.f32.gmra.mxu0 %v2073
    %v2095 = vpop.f32.mrf.mxu0
    %v2096 = vadd.f32 0.0, %v2095
    %2097 = vmatmul.f32.gmra.mxu0 %v2076
    %v2098 = vpop.f32.mrf.mxu0
    %v2099 = vadd.f32 0.0, %v2098
    %2100 = vdwg.mxu0
    %v2101 = vadd.f32 %v1971, %v2096
    %v2102 = vadd.f32 %v1974, %v2099
    %2103 = vrot.lane.b32.xlu0 %v1724, 104
    %v2104 = vpop.permute.xlu0 %2103
    %2105 = vrot.lane.b32.xlu0 %v1727, 104
    %v2106 = vpop.permute.xlu0 %2105
    %2107 = vrot.lane.b32.xlu0 %v1004, 104
    %v2108 = vpop.permute.xlu0 %2107
    %2109 = vrot.lane.b32.xlu0 %v1007, 104
    %v2110 = vpop.permute.xlu0 %2109
    %v2111 = vsel %vm282, %v2104, 0
    %v2113 = vsel %vm282, %v2106, 0
    %v2115 = vsel %vm282, %v2108, 0
    %v2117 = vsel %vm282, %v2110, 0
    %2119 = vmatpush.xpose.msra.mxu0 0.0
    %2120 = vmatpush.xpose.msra.mxu0 0.0
    %2121 = vmatpush.xpose.msra.mxu0 0.0
    %2122 = vmatpush.xpose.msra.mxu0 0.0
    %2123 = vmatpush.xpose.msra.mxu0 0.0
    %2124 = vmatpush.xpose.msra.mxu0 0.0
    %2125 = vmatpush.xpose.msra.mxu0 0.0
    %2126 = vmatpush.xpose.msra.mxu0 0.0
    %2127 = vmatpush.xpose.msra.mxu0 0.0
    %2128 = vmatpush.xpose.msra.mxu0 0.0
    %2129 = vmatpush.xpose.msra.mxu0 0.0
    %2130 = vmatpush.xpose.msra.mxu0 0.0
    %2131 = vmatpush.xpose.msra.mxu0 0.0
    %2132 = vmatpush.xpose.msra.mxu0 0.0
    %2133 = vmatpush.xpose.msra.mxu0 %v2117
    %2134 = vmatpush.xpose.msra.mxu0 %v2115
    %2135 = vmatmul.f32.gmra.mxu0 %v2111
    %v2136 = vpop.f32.mrf.mxu0
    %v2137 = vadd.f32 %v197, %v2136
    %2138 = vmatmul.f32.gmra.mxu0 %v2113
    %v2139 = vpop.f32.mrf.mxu0
    %v2140 = vadd.f32 %v198, %v2139
    %2141 = vdwg.mxu0
    %v2142 = vsel %vm314, %v2137, -inf
    %2143 = vmax.xlane.f32.xlu0 %v2142
    %v2144 = vpop.xlane.xlu0 %2143
    %v2145 = vsel %vm1767, %v2140, -inf
    %2146 = vmax.xlane.f32.xlu0 %v2145
    %v2147 = vpop.xlane.xlu0 %2146
    %v2148 = vsub.f32 %v2137, %v2144
    %v2149 = vsub.f32 %v2140, %v2147
    %v2150 = vmul.f32 %v2148, 1.442695
    %v2151 = vpow.pop %v2150
    %v2152 = vmul.f32 %v2149, 1.442695
    %v2153 = vpow.pop %v2152
    %v2154 = vsel %vm314, %v2151, 0.0
    %2155 = vadd.xlane.f32.xlu0 %v2154
    %v2156 = vpop.xlane.xlu0 %2155
    %v2157 = vsel %vm1767, %v2153, 0.0
    %2158 = vadd.xlane.f32.xlu0 %v2157
    %v2159 = vpop.xlane.xlu0 %2158
    %v2160 = vrcp.pop %v2156
    %v2161 = vrcp.pop %v2159
    %v2162 = vmul.f32 %v2151, %v2160
    %v2163 = vmul.f32 %v2153, %v2161
    %2164 = vrot.lane.b32.xlu0 %v1004, 72
    %v2165 = vpop.permute.xlu0 %2164
    %2166 = vrot.lane.b32.xlu0 %v1007, 72
    %v2167 = vpop.permute.xlu0 %2166
    %v2171 = vsel %vm314, %v2162, 0
    %v2174 = vsel %vm314, %v2163, 0
    %2176 = vmatpush.msra.mxu0 0.0
    %2177 = vmatpush.msra.mxu0 0.0
    %2178 = vmatpush.msra.mxu0 0.0
    %2179 = vmatpush.msra.mxu0 0.0
    %2180 = vmatpush.msra.mxu0 0.0
    %2181 = vmatpush.msra.mxu0 0.0
    %2182 = vmatpush.msra.mxu0 0.0
    %2183 = vmatpush.msra.mxu0 0.0
    %2184 = vmatpush.msra.mxu0 0.0
    %2185 = vmatpush.msra.mxu0 0.0
    %2186 = vmatpush.msra.mxu0 0.0
    %2187 = vmatpush.msra.mxu0 0.0
    %2188 = vmatpush.msra.mxu0 0.0
    %2189 = vmatpush.msra.mxu0 0.0
    %2190 = vmatpush.msra.mxu0 %v2167
    %2191 = vmatpush.msra.mxu0 %v2165
    %2192 = vmatmul.f32.gmra.mxu0 %v2171
    %v2193 = vpop.f32.mrf.mxu0
    %v2194 = vadd.f32 0.0, %v2193
    %2195 = vmatmul.f32.gmra.mxu0 %v2174
    %v2196 = vpop.f32.mrf.mxu0
    %v2197 = vadd.f32 0.0, %v2196
    %2198 = vdwg.mxu0
    %v2200 = vsel %vm282, %v2194, 0
    %v2203 = vsel %vm282, %v2197, 0
    %2205 = vmatpush.msra.mxu0 0.0
    %2206 = vmatpush.msra.mxu0 0.0
    %2207 = vmatpush.msra.mxu0 0.0
    %2208 = vmatpush.msra.mxu0 0.0
    %2209 = vmatpush.msra.mxu0 0.0
    %2210 = vmatpush.msra.mxu0 0.0
    %2211 = vmatpush.msra.mxu0 0.0
    %2212 = vmatpush.msra.mxu0 0.0
    %2213 = vmatpush.msra.mxu0 0.0
    %2214 = vmatpush.msra.mxu0 0.0
    %2215 = vmatpush.msra.mxu0 0.0
    %2216 = vmatpush.msra.mxu0 0.0
    %2217 = vmatpush.msra.mxu0 0.0
    %2218 = vmatpush.msra.mxu0 0.0
    %2219 = vmatpush.msra.mxu0 0.0
    %2220 = vmatpush.msra.mxu0 %v86
    %2221 = vmatmul.f32.gmra.mxu0 %v2200
    %v2222 = vpop.f32.mrf.mxu0
    %v2223 = vadd.f32 0.0, %v2222
    %2224 = vmatmul.f32.gmra.mxu0 %v2203
    %v2225 = vpop.f32.mrf.mxu0
    %v2226 = vadd.f32 0.0, %v2225
    %2227 = vdwg.mxu0
    %v2228 = vadd.f32 %v2101, %v2223
    %v2229 = vadd.f32 %v2102, %v2226
    %v2230 = vperm.slane %v87, 0
    %v2231 = vadd.f32 %v2228, %v2230
    %v2232 = vadd.f32 %v2229, %v2230
    %v2233 = vadd.f32 %v1697, %v2231
    %v2234 = vadd.f32 %v1698, %v2232
    %v2235 = vsel %vm246, %v2233, 0.0
    %2236 = vadd.xlane.f32.xlu0 %v2235
    %v2237 = vpop.xlane.xlu0 %2236
    %v2238 = vsel %vm1648, %v2234, 0.0
    %2239 = vadd.xlane.f32.xlu0 %v2238
    %v2240 = vpop.xlane.xlu0 %2239
    %v2241 = vmul.f32 %v2237, %v797
    %v2242 = vmul.f32 %v2240, %v797
    %v2243 = vsub.f32 %v2233, %v2241
    %v2244 = vsub.f32 %v2234, %v2242
    %v2245 = vmul.f32 %v2243, %v2243
    %v2246 = vmul.f32 %v2244, %v2244
    %v2247 = vsel %vm246, %v2245, 0.0
    %2248 = vadd.xlane.f32.xlu0 %v2247
    %v2249 = vpop.xlane.xlu0 %2248
    %v2250 = vsel %vm1648, %v2246, 0.0
    %2251 = vadd.xlane.f32.xlu0 %v2250
    %v2252 = vpop.xlane.xlu0 %2251
    %v2253 = vmul.f32 %v2249, %v797
    %v2254 = vmul.f32 %v2252, %v797
    %v2255 = vadd.f32 %v2253, 1e-05
    %v2256 = vadd.f32 %v2254, 1e-05
    %v2257 = vrsqrt.pop %v2255
    %v2258 = vmul.f32 %v2257, %v2255
    %v2259 = vmul.f32 %v2258, %v2257
    %v2260 = vmul.f32 0.5, %v2259
    %v2261 = vsub.f32 1.5, %v2260
    %v2262 = vmul.f32 %v2257, %v2261
    %vm2263 = vweird.f32 %v2255
    %vm2264 = vweird.f32 %v2257
    %vm2265 = vmor %vm2263, %vm2264
    %v2266 = vsel %vm2265, %v2257, %v2262
    %v2267 = vrsqrt.pop %v2256
    %v2268 = vmul.f32 %v2267, %v2256
    %v2269 = vmul.f32 %v2268, %v2267
    %v2270 = vmul.f32 0.5, %v2269
    %v2271 = vsub.f32 1.5, %v2270
    %v2272 = vmul.f32 %v2267, %v2271
    %vm2273 = vweird.f32 %v2256
    %vm2274 = vweird.f32 %v2267
    %vm2275 = vmor %vm2273, %vm2274
    %v2276 = vsel %vm2275, %v2267, %v2272
    %v2277 = vmul.f32 %v2243, %v2266
    %v2278 = vmul.f32 %v2244, %v2276
    %v2279 = vperm.slane %v38, 3
    %v2280 = vmul.f32 %v2277, %v2279
    %v2281 = vmul.f32 %v2278, %v2279
    %2283 = vrot.lane.b32.xlu0 %v2279, 96
    %v2284 = vpop.permute.xlu0 %2283
    %v2286 = vadd.f32 %v2280, %v2284
    %v2287 = vadd.f32 %v2281, %v2284
    %v2288 = vperm.slane %v92, 0
    %v2290 = vsel %vm246, %v2286, 0
    %v2293 = vsel %vm246, %v2287, 0
    %2295 = vmatpush.msra.mxu0 0.0
    %2296 = vmatpush.msra.mxu0 0.0
    %2297 = vmatpush.msra.mxu0 0.0
    %2298 = vmatpush.msra.mxu0 0.0
    %2299 = vmatpush.msra.mxu0 0.0
    %2300 = vmatpush.msra.mxu0 0.0
    %2301 = vmatpush.msra.mxu0 0.0
    %2302 = vmatpush.msra.mxu0 0.0
    %2303 = vmatpush.msra.mxu0 0.0
    %2304 = vmatpush.msra.mxu0 0.0
    %2305 = vmatpush.msra.mxu0 0.0
    %2306 = vmatpush.msra.mxu0 0.0
    %2307 = vmatpush.msra.mxu0 %v91
    %2308 = vmatpush.msra.mxu0 %v90
    %2309 = vmatpush.msra.mxu0 %v89
    %2310 = vmatpush.msra.mxu0 %v88
    %2311 = vmatmul.f32.gmra.mxu0 %v2290
    %v2312 = vpop.f32.mrf.mxu0
    %v2313 = vadd.f32 %v2288, %v2312
    %2314 = vmatmul.f32.gmra.mxu0 %v2293
    %v2315 = vpop.f32.mrf.mxu0
    %v2316 = vadd.f32 %v2288, %v2315
    %2317 = vdwg.mxu0
    %v2318 = vmul.f32 %v2313, 0.5
    %v2319 = vmul.f32 %v2316, 0.5
    %v2320 = vmul.f32 %v2313, %v2313
    %v2321 = vmul.f32 %v2316, %v2316
    %v2322 = vmul.f32 %v2320, %v2313
    %v2323 = vmul.f32 %v2321, %v2316
    %v2324 = vmul.f32 %v2322, 0.044715
    %v2325 = vmul.f32 %v2323, 0.044715
    %v2326 = vadd.f32 %v2313, %v2324
    %v2327 = vadd.f32 %v2316, %v2325
    %v2328 = vmul.f32 %v2326, 0.7978846
    %v2329 = vmul.f32 %v2327, 0.7978846
    %v2330 = vtanh.pop %v2328
    %v2331 = vtanh.pop %v2329
    %v2332 = vadd.f32 %v2330, 1.0
    %v2333 = vadd.f32 %v2331, 1.0
    %v2334 = vmul.f32 %v2318, %v2332
    %v2335 = vmul.f32 %v2319, %v2333
    %v2336 = vperm.slane %v101, 0
    %v2338 = vsel %vm894, %v2334, 0
    %v2341 = vsel %vm894, %v2335, 0
    %2343 = vmatpush.msra.mxu0 0.0
    %2344 = vmatpush.msra.mxu0 0.0
    %2345 = vmatpush.msra.mxu0 0.0
    %2346 = vmatpush.msra.mxu0 0.0
    %2347 = vmatpush.msra.mxu0 0.0
    %2348 = vmatpush.msra.mxu0 0.0
    %2349 = vmatpush.msra.mxu0 0.0
    %2350 = vmatpush.msra.mxu0 0.0
    %2351 = vmatpush.msra.mxu0 %v100
    %2352 = vmatpush.msra.mxu0 %v99
    %2353 = vmatpush.msra.mxu0 %v98
    %2354 = vmatpush.msra.mxu0 %v97
    %2355 = vmatpush.msra.mxu0 %v96
    %2356 = vmatpush.msra.mxu0 %v95
    %2357 = vmatpush.msra.mxu0 %v94
    %2358 = vmatpush.msra.mxu0 %v93
    %2359 = vmatmul.f32.gmra.mxu0 %v2338
    %v2360 = vpop.f32.mrf.mxu0
    %v2361 = vadd.f32 %v2336, %v2360
    %2362 = vmatmul.f32.gmra.mxu0 %v2341
    %v2363 = vpop.f32.mrf.mxu0
    %v2364 = vadd.f32 %v2336, %v2363
    %2365 = vdwg.mxu0
    %v2366 = vadd.f32 %v2286, %v2361
    %v2367 = vadd.f32 %v2287, %v2364
    %v2368 = vsel %vm246, %v2366, 0.0
    %2369 = vadd.xlane.f32.xlu0 %v2368
    %v2370 = vpop.xlane.xlu0 %2369
    %v2371 = vsel %vm1648, %v2367, 0.0
    %2372 = vadd.xlane.f32.xlu0 %v2371
    %v2373 = vpop.xlane.xlu0 %2372
    %v2374 = vmul.f32 %v2370, %v797
    %v2375 = vmul.f32 %v2373, %v797
    %v2376 = vsub.f32 %v2366, %v2374
    %v2377 = vsub.f32 %v2367, %v2375
    %v2378 = vmul.f32 %v2376, %v2376
    %v2379 = vmul.f32 %v2377, %v2377
    %v2380 = vsel %vm246, %v2378, 0.0
    %2381 = vadd.xlane.f32.xlu0 %v2380
    %v2382 = vpop.xlane.xlu0 %2381
    %v2383 = vsel %vm1648, %v2379, 0.0
    %2384 = vadd.xlane.f32.xlu0 %v2383
    %v2385 = vpop.xlane.xlu0 %2384
    %v2386 = vmul.f32 %v2382, %v797
    %v2387 = vmul.f32 %v2385, %v797
    %v2388 = vadd.f32 %v2386, 1e-05
    %v2389 = vadd.f32 %v2387, 1e-05
    %v2390 = vrsqrt.pop %v2388
    %v2391 = vmul.f32 %v2390, %v2388
    %v2392 = vmul.f32 %v2391, %v2390
    %v2393 = vmul.f32 0.5, %v2392
    %v2394 = vsub.f32 1.5, %v2393
    %v2395 = vmul.f32 %v2390, %v2394
    %vm2396 = vweird.f32 %v2388
    %vm2397 = vweird.f32 %v2390
    %vm2398 = vmor %vm2396, %vm2397
    %v2399 = vsel %vm2398, %v2390, %v2395
    %v2400 = vrsqrt.pop %v2389
    %v2401 = vmul.f32 %v2400, %v2389
    %v2402 = vmul.f32 %v2401, %v2400
    %v2403 = vmul.f32 0.5, %v2402
    %v2404 = vsub.f32 1.5, %v2403
    %v2405 = vmul.f32 %v2400, %v2404
    %vm2406 = vweird.f32 %v2389
    %vm2407 = vweird.f32 %v2400
    %vm2408 = vmor %vm2406, %vm2407
    %v2409 = vsel %vm2408, %v2400, %v2405
    %v2410 = vmul.f32 %v2376, %v2399
    %v2411 = vmul.f32 %v2377, %v2409
    %v2412 = vperm.slane %v38, 4
    %v2413 = vmul.f32 %v2410, %v2412
    %v2414 = vmul.f32 %v2411, %v2412
    %2416 = vrot.lane.b32.xlu0 %v2412, 96
    %v2417 = vpop.permute.xlu0 %2416
    %v2419 = vadd.f32 %v2413, %v2417
    %v2420 = vadd.f32 %v2414, %v2417
    %v2421 = vmul.u32 %v113, 5
    %vm2422 = vcmp.eq.s32.totalorder %v116, %v2421
    %v2423 = vsel %vm2422, 1, 0
    %v2424 = vcvt.s32.f32 %v2423
    %v2426 = vsel %vm1169, %v2424, 0
    %v2429 = vsel %vm218, %v2420, 0
    %2431 = vmatpush.msra.mxu0 0.0
    %2432 = vmatpush.msra.mxu0 0.0
    %2433 = vmatpush.msra.mxu0 0.0
    %2434 = vmatpush.msra.mxu0 0.0
    %2435 = vmatpush.msra.mxu0 0.0
    %2436 = vmatpush.msra.mxu0 0.0
    %2437 = vmatpush.msra.mxu0 0.0
    %2438 = vmatpush.msra.mxu0 0.0
    %2439 = vmatpush.msra.mxu0 0.0
    %2440 = vmatpush.msra.mxu0 0.0
    %2441 = vmatpush.msra.mxu0 0.0
    %2442 = vmatpush.msra.mxu0 0.0
    %2443 = vmatpush.msra.mxu0 0.0
    %2444 = vmatpush.msra.mxu0 0.0
    %2445 = vmatpush.msra.mxu0 %v2429
    %2446 = vmatpush.msra.mxu0 %v2419
    %2447 = vmatmul.f32.gmra.mxu0 %v2426
    %v2448 = vpop.f32.mrf.mxu0
    %v2449 = vadd.f32 0.0, %v2448
    %2450 = vdwg.mxu0
    %v2451 = vperm.slane %v106, 0
    %v2453 = vsel %vm246, %v2449, 0
    %2455 = vmatpush.msra.mxu0 0.0
    %2456 = vmatpush.msra.mxu0 0.0
    %2457 = vmatpush.msra.mxu0 0.0
    %2458 = vmatpush.msra.mxu0 0.0
    %2459 = vmatpush.msra.mxu0 0.0
    %2460 = vmatpush.msra.mxu0 0.0
    %2461 = vmatpush.msra.mxu0 0.0
    %2462 = vmatpush.msra.mxu0 0.0
    %2463 = vmatpush.msra.mxu0 0.0
    %2464 = vmatpush.msra.mxu0 0.0
    %2465 = vmatpush.msra.mxu0 0.0
    %2466 = vmatpush.msra.mxu0 0.0
    %2467 = vmatpush.msra.mxu0 %v105
    %2468 = vmatpush.msra.mxu0 %v104
    %2469 = vmatpush.msra.mxu0 %v103
    %2470 = vmatpush.msra.mxu0 %v102
    %2471 = vmatmul.f32.gmra.mxu0 %v2453
    %v2472 = vpop.f32.mrf.mxu0
    %v2473 = vadd.f32 %v2451, %v2472
    %2474 = vdwg.mxu0
    %vm2475 = vcmask 402432
    %v2476 = vsel %vm2475, %v2473, -inf
    %2477 = vmax.xlane.f32.xlu0 %v2476
    %v2478 = vpop.xlane.xlu0 %2477
    %vm2479 = vcmp.ge.f32.partialorder %v2473, %v2478
    %v2480 = vsel %vm2479, %v116, 50
    %v2481 = vsel %vm2475, %v2480, 2147483647
    %v2482 = vand.u32 %v2481, 65535
    %v2483 = vshra.s32 %v2481, 16
    %v2484 = vcvt.s32.f32 %v2482
    %v2485 = vcvt.s32.f32 %v2483
    %2486 = vmin.xlane.f32.xlu0 %v2485
    %v2487 = vpop.xlane.xlu0 %2486
    %vm2488 = vcmp.eq.f32.partialorder %v2485, %v2487
    %v2489 = vsel %vm2488, %v2484, inf
    %2490 = vmin.xlane.f32.xlu0 %v2489
    %v2491 = vpop.xlane.xlu0 %2490
    %v2492 = vcvt.f32.s32 %v2491
    %v2493 = vcvt.f32.s32 %v2487
    %v2494 = vshll.u32 %v2493, 16
    %v2495 = vadd.s32 %v2494, %v2492
    %vm2496 = vcmp.eq.s32.totalorder %v2495, 2
    %v2497 = vsel %vm2496, 1, 0
    %vm2498 = vcmp.eq.s32.totalorder %v116, 1
    %v2499 = vsel %vm2498, %v2495, %v1101
    %vm2500 = vcmp.eq.s32.totalorder %v2495, %v116
    %v2501 = vsel %vm2500, 1, 0
    %v2502 = vcvt.s32.f32 %v2501
    %v2503 = vperm.slane %v37, 1
    %v2505 = vsel %vm211, %v2502, 0
    %2507 = vmatpush.msra.mxu0 0.0
    %2508 = vmatpush.msra.mxu0 0.0
    %2509 = vmatpush.msra.mxu0 0.0
    %2510 = vmatpush.msra.mxu0 0.0
    %2511 = vmatpush.msra.mxu0 0.0
    %2512 = vmatpush.msra.mxu0 0.0
    %2513 = vmatpush.msra.mxu0 0.0
    %2514 = vmatpush.msra.mxu0 0.0
    %2515 = vmatpush.msra.mxu0 0.0
    %2516 = vmatpush.msra.mxu0 %v220
    %2517 = vmatpush.msra.mxu0 %v35
    %2518 = vmatpush.msra.mxu0 %v34
    %2519 = vmatpush.msra.mxu0 %v33
    %2520 = vmatpush.msra.mxu0 %v32
    %2521 = vmatpush.msra.mxu0 %v31
    %2522 = vmatpush.msra.mxu0 %v30
    %2523 = vmatmul.f32.gmra.mxu0 %v2505
    %v2524 = vpop.f32.mrf.mxu0
    %v2525 = vadd.f32 %v2503, %v2524
    %2526 = vdwg.mxu0
    %v2527 = vadd.s32 %v1038, 1
    %vm2528 = vcmp.eq.s32.totalorder %v113, %v2527
    %vm2529 = vcmp.eq.s32.totalorder %v114, %v2527
    %v2530 = vsel %vm2528, 1, 0
    %v2531 = vsel %vm2529, 1, 0
    %v2532 = vcvt.s32.f32 %v2530
    %v2533 = vcvt.s32.f32 %v2531
    %vm2534 = vcmp.eq.s32.totalorder %v113, 1
    %vm2535 = vcmp.eq.s32.totalorder %v114, 1
    %vm2536 = vmor %vm117, %vm2534
    %vm2537 = vmor %vm118, %vm2535
    %vm2538 = vcmp.eq.s32.totalorder %v113, 6
    %vm2539 = vcmp.eq.s32.totalorder %v114, 6
    %vm2540 = vmor %vm2536, %vm2538
    %vm2541 = vmor %vm2537, %vm2539
    %v2543 = vsel %vm1053, %v2532, 0
    %v2546 = vsel %vm1053, %v2533, 0
    %v2549 = vsel %vm218, %v2525, 0
    %2551 = vmatpush.msra.mxu0 0.0
    %2552 = vmatpush.msra.mxu0 0.0
    %2553 = vmatpush.msra.mxu0 0.0
    %2554 = vmatpush.msra.mxu0 0.0
    %2555 = vmatpush.msra.mxu0 0.0
    %2556 = vmatpush.msra.mxu0 0.0
    %2557 = vmatpush.msra.mxu0 0.0
    %2558 = vmatpush.msra.mxu0 0.0
    %2559 = vmatpush.msra.mxu0 0.0
    %2560 = vmatpush.msra.mxu0 0.0
    %2561 = vmatpush.msra.mxu0 0.0
    %2562 = vmatpush.msra.mxu0 0.0
    %2563 = vmatpush.msra.mxu0 0.0
    %2564 = vmatpush.msra.mxu0 0.0
    %2565 = vmatpush.msra.mxu0 0.0
    %2566 = vmatpush.msra.mxu0 %v2549
    %2567 = vmatmul.f32.gmra.mxu0 %v2543
    %v2568 = vpop.f32.mrf.mxu0
    %v2569 = vadd.f32 0.0, %v2568
    %2570 = vmatmul.f32.gmra.mxu0 %v2546
    %v2571 = vpop.f32.mrf.mxu0
    %v2572 = vadd.f32 0.0, %v2571
    %2573 = vdwg.mxu0
    %v2574 = vsel %vm2540, 1, 0
    %v2575 = vsel %vm2541, 1, 0
    %vm2576 = vcmp.eq.s32.totalorder %v2574, 1
    %vm2577 = vcmp.eq.s32.totalorder %v2575, 1
    %v2578 = vsel %vm2576, %v2569, %v1098
    %v2579 = vsel %vm2577, %v2572, %v1099
    %v2581 = vsel %vm246, %v2578, 0
    %v2584 = vsel %vm246, %v2579, 0
    %2586 = vmatpush.msra.mxu0 0.0
    %2587 = vmatpush.msra.mxu0 0.0
    %2588 = vmatpush.msra.mxu0 0.0
    %2589 = vmatpush.msra.mxu0 0.0
    %2590 = vmatpush.msra.mxu0 0.0
    %2591 = vmatpush.msra.mxu0 0.0
    %2592 = vmatpush.msra.mxu0 0.0
    %2593 = vmatpush.msra.mxu0 0.0
    %2594 = vmatpush.msra.mxu0 0.0
    %2595 = vmatpush.msra.mxu0 0.0
    %2596 = vmatpush.msra.mxu0 0.0
    %2597 = vmatpush.msra.mxu0 0.0
    %2598 = vmatpush.msra.mxu0 %v66
    %2599 = vmatpush.msra.mxu0 %v65
    %2600 = vmatpush.msra.mxu0 %v64
    %2601 = vmatpush.msra.mxu0 %v63
    %2602 = vmatmul.f32.gmra.mxu0 %v2581
    %v2603 = vpop.f32.mrf.mxu0
    %v2604 = vadd.f32 %v1102, %v2603
    %2605 = vmatmul.f32.gmra.mxu0 %v2584
    %v2606 = vpop.f32.mrf.mxu0
    %v2607 = vadd.f32 %v1102, %v2606
    %2608 = vdwg.mxu0
    %2611 = vrot.lane.b32.xlu0 %v2604, 96
    %v2612 = vpop.permute.xlu0 %2611
    %2613 = vrot.lane.b32.xlu0 %v2607, 96
    %v2614 = vpop.permute.xlu0 %2613
    %v2615 = vsel %vm282, %v2604, 0
    %v2617 = vsel %vm282, %v2607, 0
    %v2619 = vsel %vm282, %v2612, 0
    %v2621 = vsel %vm282, %v2614, 0
    %2623 = vmatpush.xpose.msra.mxu0 0.0
    %2624 = vmatpush.xpose.msra.mxu0 0.0
    %2625 = vmatpush.xpose.msra.mxu0 0.0
    %2626 = vmatpush.xpose.msra.mxu0 0.0
    %2627 = vmatpush.xpose.msra.mxu0 0.0
    %2628 = vmatpush.xpose.msra.mxu0 0.0
    %2629 = vmatpush.xpose.msra.mxu0 0.0
    %2630 = vmatpush.xpose.msra.mxu0 0.0
    %2631 = vmatpush.xpose.msra.mxu0 0.0
    %2632 = vmatpush.xpose.msra.mxu0 0.0
    %2633 = vmatpush.xpose.msra.mxu0 0.0
    %2634 = vmatpush.xpose.msra.mxu0 0.0
    %2635 = vmatpush.xpose.msra.mxu0 0.0
    %2636 = vmatpush.xpose.msra.mxu0 0.0
    %2637 = vmatpush.xpose.msra.mxu0 %v2621
    %2638 = vmatpush.xpose.msra.mxu0 %v2619
    %2639 = vmatmul.f32.gmra.mxu0 %v2615
    %v2640 = vpop.f32.mrf.mxu0
    %v2641 = vadd.f32 %v183, %v2640
    %2642 = vmatmul.f32.gmra.mxu0 %v2617
    %v2643 = vpop.f32.mrf.mxu0
    %v2644 = vadd.f32 %v184, %v2643
    %2645 = vdwg.mxu0
    %v2646 = vsel %vm1169, %v2641, -inf
    %2647 = vmax.xlane.f32.xlu0 %v2646
    %v2648 = vpop.xlane.xlu0 %2647
    %v2649 = vsel %vm1173, %v2644, -inf
    %2650 = vmax.xlane.f32.xlu0 %v2649
    %v2651 = vpop.xlane.xlu0 %2650
    %v2652 = vsub.f32 %v2641, %v2648
    %v2653 = vsub.f32 %v2644, %v2651
    %v2654 = vmul.f32 %v2652, 1.442695
    %v2655 = vpow.pop %v2654
    %v2656 = vmul.f32 %v2653, 1.442695
    %v2657 = vpow.pop %v2656
    %v2658 = vsel %vm1169, %v2655, 0.0
    %2659 = vadd.xlane.f32.xlu0 %v2658
    %v2660 = vpop.xlane.xlu0 %2659
    %v2661 = vsel %vm1173, %v2657, 0.0
    %2662 = vadd.xlane.f32.xlu0 %v2661
    %v2663 = vpop.xlane.xlu0 %2662
    %v2664 = vrcp.pop %v2660
    %v2665 = vrcp.pop %v2663
    %v2666 = vmul.f32 %v2655, %v2664
    %v2667 = vmul.f32 %v2657, %v2665
    %2668 = vrot.lane.b32.xlu0 %v2604, 64
    %v2669 = vpop.permute.xlu0 %2668
    %2670 = vrot.lane.b32.xlu0 %v2607, 64
    %v2671 = vpop.permute.xlu0 %2670
    %v2674 = vsel %vm1169, %v2666, 0
    %v2677 = vsel %vm1169, %v2667, 0
    %v2679 = vsel %vm218, %v2671, 0
    %2681 = vmatpush.msra.mxu0 0.0
    %2682 = vmatpush.msra.mxu0 0.0
    %2683 = vmatpush.msra.mxu0 0.0
    %2684 = vmatpush.msra.mxu0 0.0
    %2685 = vmatpush.msra.mxu0 0.0
    %2686 = vmatpush.msra.mxu0 0.0
    %2687 = vmatpush.msra.mxu0 0.0
    %2688 = vmatpush.msra.mxu0 0.0
    %2689 = vmatpush.msra.mxu0 0.0
    %2690 = vmatpush.msra.mxu0 0.0
    %2691 = vmatpush.msra.mxu0 0.0
    %2692 = vmatpush.msra.mxu0 0.0
    %2693 = vmatpush.msra.mxu0 0.0
    %2694 = vmatpush.msra.mxu0 0.0
    %2695 = vmatpush.msra.mxu0 %v2679
    %2696 = vmatpush.msra.mxu0 %v2669
    %2697 = vmatmul.f32.gmra.mxu0 %v2674
    %v2698 = vpop.f32.mrf.mxu0
    %v2699 = vadd.f32 0.0, %v2698
    %2700 = vmatmul.f32.gmra.mxu0 %v2677
    %v2701 = vpop.f32.mrf.mxu0
    %v2702 = vadd.f32 0.0, %v2701
    %2703 = vdwg.mxu0
    %2704 = vrot.lane.b32.xlu0 %v2604, 120
    %v2705 = vpop.permute.xlu0 %2704
    %2706 = vrot.lane.b32.xlu0 %v2607, 120
    %v2707 = vpop.permute.xlu0 %2706
    %2708 = vrot.lane.b32.xlu0 %v2604, 88
    %v2709 = vpop.permute.xlu0 %2708
    %2710 = vrot.lane.b32.xlu0 %v2607, 88
    %v2711 = vpop.permute.xlu0 %2710
    %v2712 = vsel %vm282, %v2705, 0
    %v2714 = vsel %vm282, %v2707, 0
    %v2716 = vsel %vm282, %v2709, 0
    %v2718 = vsel %vm282, %v2711, 0
    %2720 = vmatpush.xpose.msra.mxu0 0.0
    %2721 = vmatpush.xpose.msra.mxu0 0.0
    %2722 = vmatpush.xpose.msra.mxu0 0.0
    %2723 = vmatpush.xpose.msra.mxu0 0.0
    %2724 = vmatpush.xpose.msra.mxu0 0.0
    %2725 = vmatpush.xpose.msra.mxu0 0.0
    %2726 = vmatpush.xpose.msra.mxu0 0.0
    %2727 = vmatpush.xpose.msra.mxu0 0.0
    %2728 = vmatpush.xpose.msra.mxu0 0.0
    %2729 = vmatpush.xpose.msra.mxu0 0.0
    %2730 = vmatpush.xpose.msra.mxu0 0.0
    %2731 = vmatpush.xpose.msra.mxu0 0.0
    %2732 = vmatpush.xpose.msra.mxu0 0.0
    %2733 = vmatpush.xpose.msra.mxu0 0.0
    %2734 = vmatpush.xpose.msra.mxu0 %v2718
    %2735 = vmatpush.xpose.msra.mxu0 %v2716
    %2736 = vmatmul.f32.gmra.mxu0 %v2712
    %v2737 = vpop.f32.mrf.mxu0
    %v2738 = vadd.f32 %v183, %v2737
    %2739 = vmatmul.f32.gmra.mxu0 %v2714
    %v2740 = vpop.f32.mrf.mxu0
    %v2741 = vadd.f32 %v184, %v2740
    %2742 = vdwg.mxu0
    %v2743 = vsel %vm1169, %v2738, -inf
    %2744 = vmax.xlane.f32.xlu0 %v2743
    %v2745 = vpop.xlane.xlu0 %2744
    %v2746 = vsel %vm1173, %v2741, -inf
    %2747 = vmax.xlane.f32.xlu0 %v2746
    %v2748 = vpop.xlane.xlu0 %2747
    %v2749 = vsub.f32 %v2738, %v2745
    %v2750 = vsub.f32 %v2741, %v2748
    %v2751 = vmul.f32 %v2749, 1.442695
    %v2752 = vpow.pop %v2751
    %v2753 = vmul.f32 %v2750, 1.442695
    %v2754 = vpow.pop %v2753
    %v2755 = vsel %vm1169, %v2752, 0.0
    %2756 = vadd.xlane.f32.xlu0 %v2755
    %v2757 = vpop.xlane.xlu0 %2756
    %v2758 = vsel %vm1173, %v2754, 0.0
    %2759 = vadd.xlane.f32.xlu0 %v2758
    %v2760 = vpop.xlane.xlu0 %2759
    %v2761 = vrcp.pop %v2757
    %v2762 = vrcp.pop %v2760
    %v2763 = vmul.f32 %v2752, %v2761
    %v2764 = vmul.f32 %v2754, %v2762
    %2765 = vrot.lane.b32.xlu0 %v2604, 56
    %v2766 = vpop.permute.xlu0 %2765
    %2767 = vrot.lane.b32.xlu0 %v2607, 56
    %v2768 = vpop.permute.xlu0 %2767
    %v2771 = vsel %vm1169, %v2763, 0
    %v2774 = vsel %vm1169, %v2764, 0
    %v2776 = vsel %vm218, %v2768, 0
    %2778 = vmatpush.msra.mxu0 0.0
    %2779 = vmatpush.msra.mxu0 0.0
    %2780 = vmatpush.msra.mxu0 0.0
    %2781 = vmatpush.msra.mxu0 0.0
    %2782 = vmatpush.msra.mxu0 0.0
    %2783 = vmatpush.msra.mxu0 0.0
    %2784 = vmatpush.msra.mxu0 0.0
    %2785 = vmatpush.msra.mxu0 0.0
    %2786 = vmatpush.msra.mxu0 0.0
    %2787 = vmatpush.msra.mxu0 0.0
    %2788 = vmatpush.msra.mxu0 0.0
    %2789 = vmatpush.msra.mxu0 0.0
    %2790 = vmatpush.msra.mxu0 0.0
    %2791 = vmatpush.msra.mxu0 0.0
    %2792 = vmatpush.msra.mxu0 %v2776
    %2793 = vmatpush.msra.mxu0 %v2766
    %2794 = vmatmul.f32.gmra.mxu0 %v2771
    %v2795 = vpop.f32.mrf.mxu0
    %v2796 = vadd.f32 0.0, %v2795
    %2797 = vmatmul.f32.gmra.mxu0 %v2774
    %v2798 = vpop.f32.mrf.mxu0
    %v2799 = vadd.f32 0.0, %v2798
    %2800 = vdwg.mxu0
    %v2802 = vsel %vm282, %v2796, 0
    %v2805 = vsel %vm282, %v2799, 0
    %2807 = vmatpush.msra.mxu0 0.0
    %2808 = vmatpush.msra.mxu0 0.0
    %2809 = vmatpush.msra.mxu0 0.0
    %2810 = vmatpush.msra.mxu0 0.0
    %2811 = vmatpush.msra.mxu0 0.0
    %2812 = vmatpush.msra.mxu0 0.0
    %2813 = vmatpush.msra.mxu0 0.0
    %2814 = vmatpush.msra.mxu0 0.0
    %2815 = vmatpush.msra.mxu0 0.0
    %2816 = vmatpush.msra.mxu0 0.0
    %2817 = vmatpush.msra.mxu0 0.0
    %2818 = vmatpush.msra.mxu0 0.0
    %2819 = vmatpush.msra.mxu0 0.0
    %2820 = vmatpush.msra.mxu0 0.0
    %2821 = vmatpush.msra.mxu0 0.0
    %2822 = vmatpush.msra.mxu0 %v69
    %2823 = vmatmul.f32.gmra.mxu0 %v2802
    %v2824 = vpop.f32.mrf.mxu0
    %v2825 = vadd.f32 0.0, %v2824
    %2826 = vmatmul.f32.gmra.mxu0 %v2805
    %v2827 = vpop.f32.mrf.mxu0
    %v2828 = vadd.f32 0.0, %v2827
    %2829 = vdwg.mxu0
    %v2831 = vsel %vm282, %v2699, 0
    %v2834 = vsel %vm282, %v2702, 0
    %2836 = vmatpush.msra.mxu0 0.0
    %2837 = vmatpush.msra.mxu0 0.0
    %2838 = vmatpush.msra.mxu0 0.0
    %2839 = vmatpush.msra.mxu0 0.0
    %2840 = vmatpush.msra.mxu0 0.0
    %2841 = vmatpush.msra.mxu0 0.0
    %2842 = vmatpush.msra.mxu0 0.0
    %2843 = vmatpush.msra.mxu0 0.0
    %2844 = vmatpush.msra.mxu0 0.0
    %2845 = vmatpush.msra.mxu0 0.0
    %2846 = vmatpush.msra.mxu0 0.0
    %2847 = vmatpush.msra.mxu0 0.0
    %2848 = vmatpush.msra.mxu0 0.0
    %2849 = vmatpush.msra.mxu0 0.0
    %2850 = vmatpush.msra.mxu0 0.0
    %2851 = vmatpush.msra.mxu0 %v68
    %2852 = vmatmul.f32.gmra.mxu0 %v2831
    %v2853 = vpop.f32.mrf.mxu0
    %v2854 = vadd.f32 %v2825, %v2853
    %2855 = vmatmul.f32.gmra.mxu0 %v2834
    %v2856 = vpop.f32.mrf.mxu0
    %v2857 = vadd.f32 %v2828, %v2856
    %2858 = vdwg.mxu0
    %2859 = vrot.lane.b32.xlu0 %v2604, 112
    %v2860 = vpop.permute.xlu0 %2859
    %2861 = vrot.lane.b32.xlu0 %v2607, 112
    %v2862 = vpop.permute.xlu0 %2861
    %2863 = vrot.lane.b32.xlu0 %v2604, 80
    %v2864 = vpop.permute.xlu0 %2863
    %2865 = vrot.lane.b32.xlu0 %v2607, 80
    %v2866 = vpop.permute.xlu0 %2865
    %v2867 = vsel %vm282, %v2860, 0
    %v2869 = vsel %vm282, %v2862, 0
    %v2871 = vsel %vm282, %v2864, 0
    %v2873 = vsel %vm282, %v2866, 0
    %2875 = vmatpush.xpose.msra.mxu0 0.0
    %2876 = vmatpush.xpose.msra.mxu0 0.0
    %2877 = vmatpush.xpose.msra.mxu0 0.0
    %2878 = vmatpush.xpose.msra.mxu0 0.0
    %2879 = vmatpush.xpose.msra.mxu0 0.0
    %2880 = vmatpush.xpose.msra.mxu0 0.0
    %2881 = vmatpush.xpose.msra.mxu0 0.0
    %2882 = vmatpush.xpose.msra.mxu0 0.0
    %2883 = vmatpush.xpose.msra.mxu0 0.0
    %2884 = vmatpush.xpose.msra.mxu0 0.0
    %2885 = vmatpush.xpose.msra.mxu0 0.0
    %2886 = vmatpush.xpose.msra.mxu0 0.0
    %2887 = vmatpush.xpose.msra.mxu0 0.0
    %2888 = vmatpush.xpose.msra.mxu0 0.0
    %2889 = vmatpush.xpose.msra.mxu0 %v2873
    %2890 = vmatpush.xpose.msra.mxu0 %v2871
    %2891 = vmatmul.f32.gmra.mxu0 %v2867
    %v2892 = vpop.f32.mrf.mxu0
    %v2893 = vadd.f32 %v183, %v2892
    %2894 = vmatmul.f32.gmra.mxu0 %v2869
    %v2895 = vpop.f32.mrf.mxu0
    %v2896 = vadd.f32 %v184, %v2895
    %2897 = vdwg.mxu0
    %v2898 = vsel %vm1169, %v2893, -inf
    %2899 = vmax.xlane.f32.xlu0 %v2898
    %v2900 = vpop.xlane.xlu0 %2899
    %v2901 = vsel %vm1173, %v2896, -inf
    %2902 = vmax.xlane.f32.xlu0 %v2901
    %v2903 = vpop.xlane.xlu0 %2902
    %v2904 = vsub.f32 %v2893, %v2900
    %v2905 = vsub.f32 %v2896, %v2903
    %v2906 = vmul.f32 %v2904, 1.442695
    %v2907 = vpow.pop %v2906
    %v2908 = vmul.f32 %v2905, 1.442695
    %v2909 = vpow.pop %v2908
    %v2910 = vsel %vm1169, %v2907, 0.0
    %2911 = vadd.xlane.f32.xlu0 %v2910
    %v2912 = vpop.xlane.xlu0 %2911
    %v2913 = vsel %vm1173, %v2909, 0.0
    %2914 = vadd.xlane.f32.xlu0 %v2913
    %v2915 = vpop.xlane.xlu0 %2914
    %v2916 = vrcp.pop %v2912
    %v2917 = vrcp.pop %v2915
    %v2918 = vmul.f32 %v2907, %v2916
    %v2919 = vmul.f32 %v2909, %v2917
    %2920 = vrot.lane.b32.xlu0 %v2604, 48
    %v2921 = vpop.permute.xlu0 %2920
    %2922 = vrot.lane.b32.xlu0 %v2607, 48
    %v2923 = vpop.permute.xlu0 %2922
    %v2926 = vsel %vm1169, %v2918, 0
    %v2929 = vsel %vm1169, %v2919, 0
    %v2931 = vsel %vm218, %v2923, 0
    %2933 = vmatpush.msra.mxu0 0.0
    %2934 = vmatpush.msra.mxu0 0.0
    %2935 = vmatpush.msra.mxu0 0.0
    %2936 = vmatpush.msra.mxu0 0.0
    %2937 = vmatpush.msra.mxu0 0.0
    %2938 = vmatpush.msra.mxu0 0.0
    %2939 = vmatpush.msra.mxu0 0.0
    %2940 = vmatpush.msra.mxu0 0.0
    %2941 = vmatpush.msra.mxu0 0.0
    %2942 = vmatpush.msra.mxu0 0.0
    %2943 = vmatpush.msra.mxu0 0.0
    %2944 = vmatpush.msra.mxu0 0.0
    %2945 = vmatpush.msra.mxu0 0.0
    %2946 = vmatpush.msra.mxu0 0.0
    %2947 = vmatpush.msra.mxu0 %v2931
    %2948 = vmatpush.msra.mxu0 %v2921
    %2949 = vmatmul.f32.gmra.mxu0 %v2926
    %v2950 = vpop.f32.mrf.mxu0
    %v2951 = vadd.f32 0.0, %v2950
    %2952 = vmatmul.f32.gmra.mxu0 %v2929
    %v2953 = vpop.f32.mrf.mxu0
    %v2954 = vadd.f32 0.0, %v2953
    %2955 = vdwg.mxu0
    %v2957 = vsel %vm282, %v2951, 0
    %v2960 = vsel %vm282, %v2954, 0
    %2962 = vmatpush.msra.mxu0 0.0
    %2963 = vmatpush.msra.mxu0 0.0
    %2964 = vmatpush.msra.mxu0 0.0
    %2965 = vmatpush.msra.mxu0 0.0
    %2966 = vmatpush.msra.mxu0 0.0
    %2967 = vmatpush.msra.mxu0 0.0
    %2968 = vmatpush.msra.mxu0 0.0
    %2969 = vmatpush.msra.mxu0 0.0
    %2970 = vmatpush.msra.mxu0 0.0
    %2971 = vmatpush.msra.mxu0 0.0
    %2972 = vmatpush.msra.mxu0 0.0
    %2973 = vmatpush.msra.mxu0 0.0
    %2974 = vmatpush.msra.mxu0 0.0
    %2975 = vmatpush.msra.mxu0 0.0
    %2976 = vmatpush.msra.mxu0 0.0
    %2977 = vmatpush.msra.mxu0 %v70
    %2978 = vmatmul.f32.gmra.mxu0 %v2957
    %v2979 = vpop.f32.mrf.mxu0
    %v2980 = vadd.f32 0.0, %v2979
    %2981 = vmatmul.f32.gmra.mxu0 %v2960
    %v2982 = vpop.f32.mrf.mxu0
    %v2983 = vadd.f32 0.0, %v2982
    %2984 = vdwg.mxu0
    %v2985 = vadd.f32 %v2854, %v2980
    %v2986 = vadd.f32 %v2857, %v2983
    %2987 = vrot.lane.b32.xlu0 %v2604, 104
    %v2988 = vpop.permute.xlu0 %2987
    %2989 = vrot.lane.b32.xlu0 %v2607, 104
    %v2990 = vpop.permute.xlu0 %2989
    %2991 = vrot.lane.b32.xlu0 %v2604, 72
    %v2992 = vpop.permute.xlu0 %2991
    %2993 = vrot.lane.b32.xlu0 %v2607, 72
    %v2994 = vpop.permute.xlu0 %2993
    %v2995 = vsel %vm282, %v2988, 0
    %v2997 = vsel %vm282, %v2990, 0
    %v2999 = vsel %vm282, %v2992, 0
    %v3001 = vsel %vm282, %v2994, 0
    %3003 = vmatpush.xpose.msra.mxu0 0.0
    %3004 = vmatpush.xpose.msra.mxu0 0.0
    %3005 = vmatpush.xpose.msra.mxu0 0.0
    %3006 = vmatpush.xpose.msra.mxu0 0.0
    %3007 = vmatpush.xpose.msra.mxu0 0.0
    %3008 = vmatpush.xpose.msra.mxu0 0.0
    %3009 = vmatpush.xpose.msra.mxu0 0.0
    %3010 = vmatpush.xpose.msra.mxu0 0.0
    %3011 = vmatpush.xpose.msra.mxu0 0.0
    %3012 = vmatpush.xpose.msra.mxu0 0.0
    %3013 = vmatpush.xpose.msra.mxu0 0.0
    %3014 = vmatpush.xpose.msra.mxu0 0.0
    %3015 = vmatpush.xpose.msra.mxu0 0.0
    %3016 = vmatpush.xpose.msra.mxu0 0.0
    %3017 = vmatpush.xpose.msra.mxu0 %v3001
    %3018 = vmatpush.xpose.msra.mxu0 %v2999
    %3019 = vmatmul.f32.gmra.mxu0 %v2995
    %v3020 = vpop.f32.mrf.mxu0
    %v3021 = vadd.f32 %v183, %v3020
    %3022 = vmatmul.f32.gmra.mxu0 %v2997
    %v3023 = vpop.f32.mrf.mxu0
    %v3024 = vadd.f32 %v184, %v3023
    %3025 = vdwg.mxu0
    %v3026 = vsel %vm1169, %v3021, -inf
    %3027 = vmax.xlane.f32.xlu0 %v3026
    %v3028 = vpop.xlane.xlu0 %3027
    %v3029 = vsel %vm1173, %v3024, -inf
    %3030 = vmax.xlane.f32.xlu0 %v3029
    %v3031 = vpop.xlane.xlu0 %3030
    %v3032 = vsub.f32 %v3021, %v3028
    %v3033 = vsub.f32 %v3024, %v3031
    %v3034 = vmul.f32 %v3032, 1.442695
    %v3035 = vpow.pop %v3034
    %v3036 = vmul.f32 %v3033, 1.442695
    %v3037 = vpow.pop %v3036
    %v3038 = vsel %vm1169, %v3035, 0.0
    %3039 = vadd.xlane.f32.xlu0 %v3038
    %v3040 = vpop.xlane.xlu0 %3039
    %v3041 = vsel %vm1173, %v3037, 0.0
    %3042 = vadd.xlane.f32.xlu0 %v3041
    %v3043 = vpop.xlane.xlu0 %3042
    %v3044 = vrcp.pop %v3040
    %v3045 = vrcp.pop %v3043
    %v3046 = vmul.f32 %v3035, %v3044
    %v3047 = vmul.f32 %v3037, %v3045
    %3048 = vrot.lane.b32.xlu0 %v2604, 40
    %v3049 = vpop.permute.xlu0 %3048
    %3050 = vrot.lane.b32.xlu0 %v2607, 40
    %v3051 = vpop.permute.xlu0 %3050
    %v3054 = vsel %vm1169, %v3046, 0
    %v3057 = vsel %vm1169, %v3047, 0
    %v3059 = vsel %vm218, %v3051, 0
    %3061 = vmatpush.msra.mxu0 0.0
    %3062 = vmatpush.msra.mxu0 0.0
    %3063 = vmatpush.msra.mxu0 0.0
    %3064 = vmatpush.msra.mxu0 0.0
    %3065 = vmatpush.msra.mxu0 0.0
    %3066 = vmatpush.msra.mxu0 0.0
    %3067 = vmatpush.msra.mxu0 0.0
    %3068 = vmatpush.msra.mxu0 0.0
    %3069 = vmatpush.msra.mxu0 0.0
    %3070 = vmatpush.msra.mxu0 0.0
    %3071 = vmatpush.msra.mxu0 0.0
    %3072 = vmatpush.msra.mxu0 0.0
    %3073 = vmatpush.msra.mxu0 0.0
    %3074 = vmatpush.msra.mxu0 0.0
    %3075 = vmatpush.msra.mxu0 %v3059
    %3076 = vmatpush.msra.mxu0 %v3049
    %3077 = vmatmul.f32.gmra.mxu0 %v3054
    %v3078 = vpop.f32.mrf.mxu0
    %v3079 = vadd.f32 0.0, %v3078
    %3080 = vmatmul.f32.gmra.mxu0 %v3057
    %v3081 = vpop.f32.mrf.mxu0
    %v3082 = vadd.f32 0.0, %v3081
    %3083 = vdwg.mxu0
    %v3085 = vsel %vm282, %v3079, 0
    %v3088 = vsel %vm282, %v3082, 0
    %3090 = vmatpush.msra.mxu0 0.0
    %3091 = vmatpush.msra.mxu0 0.0
    %3092 = vmatpush.msra.mxu0 0.0
    %3093 = vmatpush.msra.mxu0 0.0
    %3094 = vmatpush.msra.mxu0 0.0
    %3095 = vmatpush.msra.mxu0 0.0
    %3096 = vmatpush.msra.mxu0 0.0
    %3097 = vmatpush.msra.mxu0 0.0
    %3098 = vmatpush.msra.mxu0 0.0
    %3099 = vmatpush.msra.mxu0 0.0
    %3100 = vmatpush.msra.mxu0 0.0
    %3101 = vmatpush.msra.mxu0 0.0
    %3102 = vmatpush.msra.mxu0 0.0
    %3103 = vmatpush.msra.mxu0 0.0
    %3104 = vmatpush.msra.mxu0 0.0
    %3105 = vmatpush.msra.mxu0 %v71
    %3106 = vmatmul.f32.gmra.mxu0 %v3085
    %v3107 = vpop.f32.mrf.mxu0
    %v3108 = vadd.f32 0.0, %v3107
    %3109 = vmatmul.f32.gmra.mxu0 %v3088
    %v3110 = vpop.f32.mrf.mxu0
    %v3111 = vadd.f32 0.0, %v3110
    %3112 = vdwg.mxu0
    %v3113 = vadd.f32 %v2985, %v3108
    %v3114 = vadd.f32 %v2986, %v3111
    %v3115 = vadd.f32 %v3113, %v1640
    %v3116 = vadd.f32 %v3114, %v1640
    %v3117 = vadd.f32 %v2578, %v3115
    %v3118 = vadd.f32 %v2579, %v3116
    %v3119 = vsel %vm246, %v3117, 0.0
    %3120 = vadd.xlane.f32.xlu0 %v3119
    %v3121 = vpop.xlane.xlu0 %3120
    %v3122 = vsel %vm1648, %v3118, 0.0
    %3123 = vadd.xlane.f32.xlu0 %v3122
    %v3124 = vpop.xlane.xlu0 %3123
    %v3125 = vmul.f32 %v3121, %v797
    %v3126 = vmul.f32 %v3124, %v797
    %v3127 = vsub.f32 %v3117, %v3125
    %v3128 = vsub.f32 %v3118, %v3126
    %v3129 = vmul.f32 %v3127, %v3127
    %v3130 = vmul.f32 %v3128, %v3128
    %v3131 = vsel %vm246, %v3129, 0.0
    %3132 = vadd.xlane.f32.xlu0 %v3131
    %v3133 = vpop.xlane.xlu0 %3132
    %v3134 = vsel %vm1648, %v3130, 0.0
    %3135 = vadd.xlane.f32.xlu0 %v3134
    %v3136 = vpop.xlane.xlu0 %3135
    %v3137 = vmul.f32 %v3133, %v797
    %v3138 = vmul.f32 %v3136, %v797
    %v3139 = vadd.f32 %v3137, 1e-05
    %v3140 = vadd.f32 %v3138, 1e-05
    %v3141 = vrsqrt.pop %v3139
    %v3142 = vmul.f32 %v3141, %v3139
    %v3143 = vmul.f32 %v3142, %v3141
    %v3144 = vmul.f32 0.5, %v3143
    %v3145 = vsub.f32 1.5, %v3144
    %v3146 = vmul.f32 %v3141, %v3145
    %vm3147 = vweird.f32 %v3139
    %vm3148 = vweird.f32 %v3141
    %vm3149 = vmor %vm3147, %vm3148
    %v3150 = vsel %vm3149, %v3141, %v3146
    %v3151 = vrsqrt.pop %v3140
    %v3152 = vmul.f32 %v3151, %v3140
    %v3153 = vmul.f32 %v3152, %v3151
    %v3154 = vmul.f32 0.5, %v3153
    %v3155 = vsub.f32 1.5, %v3154
    %v3156 = vmul.f32 %v3151, %v3155
    %vm3157 = vweird.f32 %v3140
    %vm3158 = vweird.f32 %v3151
    %vm3159 = vmor %vm3157, %vm3158
    %v3160 = vsel %vm3159, %v3151, %v3156
    %v3161 = vmul.f32 %v3127, %v3150
    %v3162 = vmul.f32 %v3128, %v3160
    %v3163 = vmul.f32 %v3161, %v1690
    %v3164 = vmul.f32 %v3162, %v1690
    %v3165 = vadd.f32 %v3163, %v1695
    %v3166 = vadd.f32 %v3164, %v1695
    %v3168 = vsel %vm246, %v3165, 0
    %v3171 = vsel %vm246, %v3166, 0
    %3173 = vmatpush.msra.mxu0 0.0
    %3174 = vmatpush.msra.mxu0 0.0
    %3175 = vmatpush.msra.mxu0 0.0
    %3176 = vmatpush.msra.mxu0 0.0
    %3177 = vmatpush.msra.mxu0 0.0
    %3178 = vmatpush.msra.mxu0 0.0
    %3179 = vmatpush.msra.mxu0 0.0
    %3180 = vmatpush.msra.mxu0 0.0
    %3181 = vmatpush.msra.mxu0 0.0
    %3182 = vmatpush.msra.mxu0 0.0
    %3183 = vmatpush.msra.mxu0 0.0
    %3184 = vmatpush.msra.mxu0 0.0
    %3185 = vmatpush.msra.mxu0 %v76
    %3186 = vmatpush.msra.mxu0 %v75
    %3187 = vmatpush.msra.mxu0 %v74
    %3188 = vmatpush.msra.mxu0 %v73
    %3189 = vmatmul.f32.gmra.mxu0 %v3168
    %v3190 = vpop.f32.mrf.mxu0
    %v3191 = vadd.f32 %v1699, %v3190
    %3192 = vmatmul.f32.gmra.mxu0 %v3171
    %v3193 = vpop.f32.mrf.mxu0
    %v3194 = vadd.f32 %v1699, %v3193
    %3195 = vdwg.mxu0
    %v3197 = vsel %vm282, %v3191, 0
    %v3200 = vsel %vm282, %v3194, 0
    %3202 = vmatpush.xpose.msra.mxu0 0.0
    %3203 = vmatpush.xpose.msra.mxu0 0.0
    %3204 = vmatpush.xpose.msra.mxu0 0.0
    %3205 = vmatpush.xpose.msra.mxu0 0.0
    %3206 = vmatpush.xpose.msra.mxu0 0.0
    %3207 = vmatpush.xpose.msra.mxu0 0.0
    %3208 = vmatpush.xpose.msra.mxu0 0.0
    %3209 = vmatpush.xpose.msra.mxu0 0.0
    %3210 = vmatpush.xpose.msra.mxu0 0.0
    %3211 = vmatpush.xpose.msra.mxu0 0.0
    %3212 = vmatpush.xpose.msra.mxu0 0.0
    %3213 = vmatpush.xpose.msra.mxu0 0.0
    %3214 = vmatpush.xpose.msra.mxu0 0.0
    %3215 = vmatpush.xpose.msra.mxu0 0.0
    %3216 = vmatpush.xpose.msra.mxu0 %v1739
    %3217 = vmatpush.xpose.msra.mxu0 %v1736
    %3218 = vmatmul.f32.gmra.mxu0 %v3197
    %v3219 = vpop.f32.mrf.mxu0
    %v3220 = vadd.f32 %v197, %v3219
    %3221 = vmatmul.f32.gmra.mxu0 %v3200
    %v3222 = vpop.f32.mrf.mxu0
    %v3223 = vadd.f32 %v198, %v3222
    %3224 = vdwg.mxu0
    %v3225 = vsel %vm314, %v3220, -inf
    %3226 = vmax.xlane.f32.xlu0 %v3225
    %v3227 = vpop.xlane.xlu0 %3226
    %v3228 = vsel %vm1767, %v3223, -inf
    %3229 = vmax.xlane.f32.xlu0 %v3228
    %v3230 = vpop.xlane.xlu0 %3229
    %v3231 = vsub.f32 %v3220, %v3227
    %v3232 = vsub.f32 %v3223, %v3230
    %v3233 = vmul.f32 %v3231, 1.442695
    %v3234 = vpow.pop %v3233
    %v3235 = vmul.f32 %v3232, 1.442695
    %v3236 = vpow.pop %v3235
    %v3237 = vsel %vm314, %v3234, 0.0
    %3238 = vadd.xlane.f32.xlu0 %v3237
    %v3239 = vpop.xlane.xlu0 %3238
    %v3240 = vsel %vm1767, %v3236, 0.0
    %3241 = vadd.xlane.f32.xlu0 %v3240
    %v3242 = vpop.xlane.xlu0 %3241
    %v3243 = vrcp.pop %v3239
    %v3244 = vrcp.pop %v3242
    %v3245 = vmul.f32 %v3234, %v3243
    %v3246 = vmul.f32 %v3236, %v3244
    %v3248 = vsel %vm314, %v3245, 0
    %v3251 = vsel %vm314, %v3246, 0
    %3253 = vmatpush.msra.mxu0 0.0
    %3254 = vmatpush.msra.mxu0 0.0
    %3255 = vmatpush.msra.mxu0 0.0
    %3256 = vmatpush.msra.mxu0 0.0
    %3257 = vmatpush.msra.mxu0 0.0
    %3258 = vmatpush.msra.mxu0 0.0
    %3259 = vmatpush.msra.mxu0 0.0
    %3260 = vmatpush.msra.mxu0 0.0
    %3261 = vmatpush.msra.mxu0 0.0
    %3262 = vmatpush.msra.mxu0 0.0
    %3263 = vmatpush.msra.mxu0 0.0
    %3264 = vmatpush.msra.mxu0 0.0
    %3265 = vmatpush.msra.mxu0 0.0
    %3266 = vmatpush.msra.mxu0 0.0
    %3267 = vmatpush.msra.mxu0 %v1790
    %3268 = vmatpush.msra.mxu0 %v1788
    %3269 = vmatmul.f32.gmra.mxu0 %v3248
    %v3270 = vpop.f32.mrf.mxu0
    %v3271 = vadd.f32 0.0, %v3270
    %3272 = vmatmul.f32.gmra.mxu0 %v3251
    %v3273 = vpop.f32.mrf.mxu0
    %v3274 = vadd.f32 0.0, %v3273
    %3275 = vdwg.mxu0
    %3276 = vrot.lane.b32.xlu0 %v3191, 120
    %v3277 = vpop.permute.xlu0 %3276
    %3278 = vrot.lane.b32.xlu0 %v3194, 120
    %v3279 = vpop.permute.xlu0 %3278
    %v3280 = vsel %vm282, %v3277, 0
    %v3282 = vsel %vm282, %v3279, 0
    %3284 = vmatpush.xpose.msra.mxu0 0.0
    %3285 = vmatpush.xpose.msra.mxu0 0.0
    %3286 = vmatpush.xpose.msra.mxu0 0.0
    %3287 = vmatpush.xpose.msra.mxu0 0.0
    %3288 = vmatpush.xpose.msra.mxu0 0.0
    %3289 = vmatpush.xpose.msra.mxu0 0.0
    %3290 = vmatpush.xpose.msra.mxu0 0.0
    %3291 = vmatpush.xpose.msra.mxu0 0.0
    %3292 = vmatpush.xpose.msra.mxu0 0.0
    %3293 = vmatpush.xpose.msra.mxu0 0.0
    %3294 = vmatpush.xpose.msra.mxu0 0.0
    %3295 = vmatpush.xpose.msra.mxu0 0.0
    %3296 = vmatpush.xpose.msra.mxu0 0.0
    %3297 = vmatpush.xpose.msra.mxu0 0.0
    %3298 = vmatpush.xpose.msra.mxu0 %v1836
    %3299 = vmatpush.xpose.msra.mxu0 %v1834
    %3300 = vmatmul.f32.gmra.mxu0 %v3280
    %v3301 = vpop.f32.mrf.mxu0
    %v3302 = vadd.f32 %v197, %v3301
    %3303 = vmatmul.f32.gmra.mxu0 %v3282
    %v3304 = vpop.f32.mrf.mxu0
    %v3305 = vadd.f32 %v198, %v3304
    %3306 = vdwg.mxu0
    %v3307 = vsel %vm314, %v3302, -inf
    %3308 = vmax.xlane.f32.xlu0 %v3307
    %v3309 = vpop.xlane.xlu0 %3308
    %v3310 = vsel %vm1767, %v3305, -inf
    %3311 = vmax.xlane.f32.xlu0 %v3310
    %v3312 = vpop.xlane.xlu0 %3311
    %v3313 = vsub.f32 %v3302, %v3309
    %v3314 = vsub.f32 %v3305, %v3312
    %v3315 = vmul.f32 %v3313, 1.442695
    %v3316 = vpow.pop %v3315
    %v3317 = vmul.f32 %v3314, 1.442695
    %v3318 = vpow.pop %v3317
    %v3319 = vsel %vm314, %v3316, 0.0
    %3320 = vadd.xlane.f32.xlu0 %v3319
    %v3321 = vpop.xlane.xlu0 %3320
    %v3322 = vsel %vm1767, %v3318, 0.0
    %3323 = vadd.xlane.f32.xlu0 %v3322
    %v3324 = vpop.xlane.xlu0 %3323
    %v3325 = vrcp.pop %v3321
    %v3326 = vrcp.pop %v3324
    %v3327 = vmul.f32 %v3316, %v3325
    %v3328 = vmul.f32 %v3318, %v3326
    %v3330 = vsel %vm314, %v3327, 0
    %v3333 = vsel %vm314, %v3328, 0
    %3335 = vmatpush.msra.mxu0 0.0
    %3336 = vmatpush.msra.mxu0 0.0
    %3337 = vmatpush.msra.mxu0 0.0
    %3338 = vmatpush.msra.mxu0 0.0
    %3339 = vmatpush.msra.mxu0 0.0
    %3340 = vmatpush.msra.mxu0 0.0
    %3341 = vmatpush.msra.mxu0 0.0
    %3342 = vmatpush.msra.mxu0 0.0
    %3343 = vmatpush.msra.mxu0 0.0
    %3344 = vmatpush.msra.mxu0 0.0
    %3345 = vmatpush.msra.mxu0 0.0
    %3346 = vmatpush.msra.mxu0 0.0
    %3347 = vmatpush.msra.mxu0 0.0
    %3348 = vmatpush.msra.mxu0 0.0
    %3349 = vmatpush.msra.mxu0 %v1886
    %3350 = vmatpush.msra.mxu0 %v1884
    %3351 = vmatmul.f32.gmra.mxu0 %v3330
    %v3352 = vpop.f32.mrf.mxu0
    %v3353 = vadd.f32 0.0, %v3352
    %3354 = vmatmul.f32.gmra.mxu0 %v3333
    %v3355 = vpop.f32.mrf.mxu0
    %v3356 = vadd.f32 0.0, %v3355
    %3357 = vdwg.mxu0
    %v3359 = vsel %vm282, %v3353, 0
    %v3362 = vsel %vm282, %v3356, 0
    %3364 = vmatpush.msra.mxu0 0.0
    %3365 = vmatpush.msra.mxu0 0.0
    %3366 = vmatpush.msra.mxu0 0.0
    %3367 = vmatpush.msra.mxu0 0.0
    %3368 = vmatpush.msra.mxu0 0.0
    %3369 = vmatpush.msra.mxu0 0.0
    %3370 = vmatpush.msra.mxu0 0.0
    %3371 = vmatpush.msra.mxu0 0.0
    %3372 = vmatpush.msra.mxu0 0.0
    %3373 = vmatpush.msra.mxu0 0.0
    %3374 = vmatpush.msra.mxu0 0.0
    %3375 = vmatpush.msra.mxu0 0.0
    %3376 = vmatpush.msra.mxu0 0.0
    %3377 = vmatpush.msra.mxu0 0.0
    %3378 = vmatpush.msra.mxu0 0.0
    %3379 = vmatpush.msra.mxu0 %v84
    %3380 = vmatmul.f32.gmra.mxu0 %v3359
    %v3381 = vpop.f32.mrf.mxu0
    %v3382 = vadd.f32 0.0, %v3381
    %3383 = vmatmul.f32.gmra.mxu0 %v3362
    %v3384 = vpop.f32.mrf.mxu0
    %v3385 = vadd.f32 0.0, %v3384
    %3386 = vdwg.mxu0
    %v3388 = vsel %vm282, %v3271, 0
    %v3391 = vsel %vm282, %v3274, 0
    %3393 = vmatpush.msra.mxu0 0.0
    %3394 = vmatpush.msra.mxu0 0.0
    %3395 = vmatpush.msra.mxu0 0.0
    %3396 = vmatpush.msra.mxu0 0.0
    %3397 = vmatpush.msra.mxu0 0.0
    %3398 = vmatpush.msra.mxu0 0.0
    %3399 = vmatpush.msra.mxu0 0.0
    %3400 = vmatpush.msra.mxu0 0.0
    %3401 = vmatpush.msra.mxu0 0.0
    %3402 = vmatpush.msra.mxu0 0.0
    %3403 = vmatpush.msra.mxu0 0.0
    %3404 = vmatpush.msra.mxu0 0.0
    %3405 = vmatpush.msra.mxu0 0.0
    %3406 = vmatpush.msra.mxu0 0.0
    %3407 = vmatpush.msra.mxu0 0.0
    %3408 = vmatpush.msra.mxu0 %v83
    %3409 = vmatmul.f32.gmra.mxu0 %v3388
    %v3410 = vpop.f32.mrf.mxu0
    %v3411 = vadd.f32 %v3382, %v3410
    %3412 = vmatmul.f32.gmra.mxu0 %v3391
    %v3413 = vpop.f32.mrf.mxu0
    %v3414 = vadd.f32 %v3385, %v3413
    %3415 = vdwg.mxu0
    %3416 = vrot.lane.b32.xlu0 %v3191, 112
    %v3417 = vpop.permute.xlu0 %3416
    %3418 = vrot.lane.b32.xlu0 %v3194, 112
    %v3419 = vpop.permute.xlu0 %3418
    %v3420 = vsel %vm282, %v3417, 0
    %v3422 = vsel %vm282, %v3419, 0
    %3424 = vmatpush.xpose.msra.mxu0 0.0
    %3425 = vmatpush.xpose.msra.mxu0 0.0
    %3426 = vmatpush.xpose.msra.mxu0 0.0
    %3427 = vmatpush.xpose.msra.mxu0 0.0
    %3428 = vmatpush.xpose.msra.mxu0 0.0
    %3429 = vmatpush.xpose.msra.mxu0 0.0
    %3430 = vmatpush.xpose.msra.mxu0 0.0
    %3431 = vmatpush.xpose.msra.mxu0 0.0
    %3432 = vmatpush.xpose.msra.mxu0 0.0
    %3433 = vmatpush.xpose.msra.mxu0 0.0
    %3434 = vmatpush.xpose.msra.mxu0 0.0
    %3435 = vmatpush.xpose.msra.mxu0 0.0
    %3436 = vmatpush.xpose.msra.mxu0 0.0
    %3437 = vmatpush.xpose.msra.mxu0 0.0
    %3438 = vmatpush.xpose.msra.mxu0 %v1990
    %3439 = vmatpush.xpose.msra.mxu0 %v1988
    %3440 = vmatmul.f32.gmra.mxu0 %v3420
    %v3441 = vpop.f32.mrf.mxu0
    %v3442 = vadd.f32 %v197, %v3441
    %3443 = vmatmul.f32.gmra.mxu0 %v3422
    %v3444 = vpop.f32.mrf.mxu0
    %v3445 = vadd.f32 %v198, %v3444
    %3446 = vdwg.mxu0
    %v3447 = vsel %vm314, %v3442, -inf
    %3448 = vmax.xlane.f32.xlu0 %v3447
    %v3449 = vpop.xlane.xlu0 %3448
    %v3450 = vsel %vm1767, %v3445, -inf
    %3451 = vmax.xlane.f32.xlu0 %v3450
    %v3452 = vpop.xlane.xlu0 %3451
    %v3453 = vsub.f32 %v3442, %v3449
    %v3454 = vsub.f32 %v3445, %v3452
    %v3455 = vmul.f32 %v3453, 1.442695
    %v3456 = vpow.pop %v3455
    %v3457 = vmul.f32 %v3454, 1.442695
    %v3458 = vpow.pop %v3457
    %v3459 = vsel %vm314, %v3456, 0.0
    %3460 = vadd.xlane.f32.xlu0 %v3459
    %v3461 = vpop.xlane.xlu0 %3460
    %v3462 = vsel %vm1767, %v3458, 0.0
    %3463 = vadd.xlane.f32.xlu0 %v3462
    %v3464 = vpop.xlane.xlu0 %3463
    %v3465 = vrcp.pop %v3461
    %v3466 = vrcp.pop %v3464
    %v3467 = vmul.f32 %v3456, %v3465
    %v3468 = vmul.f32 %v3458, %v3466
    %v3470 = vsel %vm314, %v3467, 0
    %v3473 = vsel %vm314, %v3468, 0
    %3475 = vmatpush.msra.mxu0 0.0
    %3476 = vmatpush.msra.mxu0 0.0
    %3477 = vmatpush.msra.mxu0 0.0
    %3478 = vmatpush.msra.mxu0 0.0
    %3479 = vmatpush.msra.mxu0 0.0
    %3480 = vmatpush.msra.mxu0 0.0
    %3481 = vmatpush.msra.mxu0 0.0
    %3482 = vmatpush.msra.mxu0 0.0
    %3483 = vmatpush.msra.mxu0 0.0
    %3484 = vmatpush.msra.mxu0 0.0
    %3485 = vmatpush.msra.mxu0 0.0
    %3486 = vmatpush.msra.mxu0 0.0
    %3487 = vmatpush.msra.mxu0 0.0
    %3488 = vmatpush.msra.mxu0 0.0
    %3489 = vmatpush.msra.mxu0 %v2040
    %3490 = vmatpush.msra.mxu0 %v2038
    %3491 = vmatmul.f32.gmra.mxu0 %v3470
    %v3492 = vpop.f32.mrf.mxu0
    %v3493 = vadd.f32 0.0, %v3492
    %3494 = vmatmul.f32.gmra.mxu0 %v3473
    %v3495 = vpop.f32.mrf.mxu0
    %v3496 = vadd.f32 0.0, %v3495
    %3497 = vdwg.mxu0
    %v3499 = vsel %vm282, %v3493, 0
    %v3502 = vsel %vm282, %v3496, 0
    %3504 = vmatpush.msra.mxu0 0.0
    %3505 = vmatpush.msra.mxu0 0.0
    %3506 = vmatpush.msra.mxu0 0.0
    %3507 = vmatpush.msra.mxu0 0.0
    %3508 = vmatpush.msra.mxu0 0.0
    %3509 = vmatpush.msra.mxu0 0.0
    %3510 = vmatpush.msra.mxu0 0.0
    %3511 = vmatpush.msra.mxu0 0.0
    %3512 = vmatpush.msra.mxu0 0.0
    %3513 = vmatpush.msra.mxu0 0.0
    %3514 = vmatpush.msra.mxu0 0.0
    %3515 = vmatpush.msra.mxu0 0.0
    %3516 = vmatpush.msra.mxu0 0.0
    %3517 = vmatpush.msra.mxu0 0.0
    %3518 = vmatpush.msra.mxu0 0.0
    %3519 = vmatpush.msra.mxu0 %v85
    %3520 = vmatmul.f32.gmra.mxu0 %v3499
    %v3521 = vpop.f32.mrf.mxu0
    %v3522 = vadd.f32 0.0, %v3521
    %3523 = vmatmul.f32.gmra.mxu0 %v3502
    %v3524 = vpop.f32.mrf.mxu0
    %v3525 = vadd.f32 0.0, %v3524
    %3526 = vdwg.mxu0
    %v3527 = vadd.f32 %v3411, %v3522
    %v3528 = vadd.f32 %v3414, %v3525
    %3529 = vrot.lane.b32.xlu0 %v3191, 104
    %v3530 = vpop.permute.xlu0 %3529
    %3531 = vrot.lane.b32.xlu0 %v3194, 104
    %v3532 = vpop.permute.xlu0 %3531
    %v3533 = vsel %vm282, %v3530, 0
    %v3535 = vsel %vm282, %v3532, 0
    %3537 = vmatpush.xpose.msra.mxu0 0.0
    %3538 = vmatpush.xpose.msra.mxu0 0.0
    %3539 = vmatpush.xpose.msra.mxu0 0.0
    %3540 = vmatpush.xpose.msra.mxu0 0.0
    %3541 = vmatpush.xpose.msra.mxu0 0.0
    %3542 = vmatpush.xpose.msra.mxu0 0.0
    %3543 = vmatpush.xpose.msra.mxu0 0.0
    %3544 = vmatpush.xpose.msra.mxu0 0.0
    %3545 = vmatpush.xpose.msra.mxu0 0.0
    %3546 = vmatpush.xpose.msra.mxu0 0.0
    %3547 = vmatpush.xpose.msra.mxu0 0.0
    %3548 = vmatpush.xpose.msra.mxu0 0.0
    %3549 = vmatpush.xpose.msra.mxu0 0.0
    %3550 = vmatpush.xpose.msra.mxu0 0.0
    %3551 = vmatpush.xpose.msra.mxu0 %v2117
    %3552 = vmatpush.xpose.msra.mxu0 %v2115
    %3553 = vmatmul.f32.gmra.mxu0 %v3533
    %v3554 = vpop.f32.mrf.mxu0
    %v3555 = vadd.f32 %v197, %v3554
    %3556 = vmatmul.f32.gmra.mxu0 %v3535
    %v3557 = vpop.f32.mrf.mxu0
    %v3558 = vadd.f32 %v198, %v3557
    %3559 = vdwg.mxu0
    %v3560 = vsel %vm314, %v3555, -inf
    %3561 = vmax.xlane.f32.xlu0 %v3560
    %v3562 = vpop.xlane.xlu0 %3561
    %v3563 = vsel %vm1767, %v3558, -inf
    %3564 = vmax.xlane.f32.xlu0 %v3563
    %v3565 = vpop.xlane.xlu0 %3564
    %v3566 = vsub.f32 %v3555, %v3562
    %v3567 = vsub.f32 %v3558, %v3565
    %v3568 = vmul.f32 %v3566, 1.442695
    %v3569 = vpow.pop %v3568
    %v3570 = vmul.f32 %v3567, 1.442695
    %v3571 = vpow.pop %v3570
    %v3572 = vsel %vm314, %v3569, 0.0
    %3573 = vadd.xlane.f32.xlu0 %v3572
    %v3574 = vpop.xlane.xlu0 %3573
    %v3575 = vsel %vm1767, %v3571, 0.0
    %3576 = vadd.xlane.f32.xlu0 %v3575
    %v3577 = vpop.xlane.xlu0 %3576
    %v3578 = vrcp.pop %v3574
    %v3579 = vrcp.pop %v3577
    %v3580 = vmul.f32 %v3569, %v3578
    %v3581 = vmul.f32 %v3571, %v3579
    %v3583 = vsel %vm314, %v3580, 0
    %v3586 = vsel %vm314, %v3581, 0
    %3588 = vmatpush.msra.mxu0 0.0
    %3589 = vmatpush.msra.mxu0 0.0
    %3590 = vmatpush.msra.mxu0 0.0
    %3591 = vmatpush.msra.mxu0 0.0
    %3592 = vmatpush.msra.mxu0 0.0
    %3593 = vmatpush.msra.mxu0 0.0
    %3594 = vmatpush.msra.mxu0 0.0
    %3595 = vmatpush.msra.mxu0 0.0
    %3596 = vmatpush.msra.mxu0 0.0
    %3597 = vmatpush.msra.mxu0 0.0
    %3598 = vmatpush.msra.mxu0 0.0
    %3599 = vmatpush.msra.mxu0 0.0
    %3600 = vmatpush.msra.mxu0 0.0
    %3601 = vmatpush.msra.mxu0 0.0
    %3602 = vmatpush.msra.mxu0 %v2167
    %3603 = vmatpush.msra.mxu0 %v2165
    %3604 = vmatmul.f32.gmra.mxu0 %v3583
    %v3605 = vpop.f32.mrf.mxu0
    %v3606 = vadd.f32 0.0, %v3605
    %3607 = vmatmul.f32.gmra.mxu0 %v3586
    %v3608 = vpop.f32.mrf.mxu0
    %v3609 = vadd.f32 0.0, %v3608
    %3610 = vdwg.mxu0
    %v3612 = vsel %vm282, %v3606, 0
    %v3615 = vsel %vm282, %v3609, 0
    %3617 = vmatpush.msra.mxu0 0.0
    %3618 = vmatpush.msra.mxu0 0.0
    %3619 = vmatpush.msra.mxu0 0.0
    %3620 = vmatpush.msra.mxu0 0.0
    %3621 = vmatpush.msra.mxu0 0.0
    %3622 = vmatpush.msra.mxu0 0.0
    %3623 = vmatpush.msra.mxu0 0.0
    %3624 = vmatpush.msra.mxu0 0.0
    %3625 = vmatpush.msra.mxu0 0.0
    %3626 = vmatpush.msra.mxu0 0.0
    %3627 = vmatpush.msra.mxu0 0.0
    %3628 = vmatpush.msra.mxu0 0.0
    %3629 = vmatpush.msra.mxu0 0.0
    %3630 = vmatpush.msra.mxu0 0.0
    %3631 = vmatpush.msra.mxu0 0.0
    %3632 = vmatpush.msra.mxu0 %v86
    %3633 = vmatmul.f32.gmra.mxu0 %v3612
    %v3634 = vpop.f32.mrf.mxu0
    %v3635 = vadd.f32 0.0, %v3634
    %3636 = vmatmul.f32.gmra.mxu0 %v3615
    %v3637 = vpop.f32.mrf.mxu0
    %v3638 = vadd.f32 0.0, %v3637
    %3639 = vdwg.mxu0
    %v3640 = vadd.f32 %v3527, %v3635
    %v3641 = vadd.f32 %v3528, %v3638
    %v3642 = vadd.f32 %v3640, %v2230
    %v3643 = vadd.f32 %v3641, %v2230
    %v3644 = vadd.f32 %v3165, %v3642
    %v3645 = vadd.f32 %v3166, %v3643
    %v3646 = vsel %vm246, %v3644, 0.0
    %3647 = vadd.xlane.f32.xlu0 %v3646
    %v3648 = vpop.xlane.xlu0 %3647
    %v3649 = vsel %vm1648, %v3645, 0.0
    %3650 = vadd.xlane.f32.xlu0 %v3649
    %v3651 = vpop.xlane.xlu0 %3650
    %v3652 = vmul.f32 %v3648, %v797
    %v3653 = vmul.f32 %v3651, %v797
    %v3654 = vsub.f32 %v3644, %v3652
    %v3655 = vsub.f32 %v3645, %v3653
    %v3656 = vmul.f32 %v3654, %v3654
    %v3657 = vmul.f32 %v3655, %v3655
    %v3658 = vsel %vm246, %v3656, 0.0
    %3659 = vadd.xlane.f32.xlu0 %v3658
    %v3660 = vpop.xlane.xlu0 %3659
    %v3661 = vsel %vm1648, %v3657, 0.0
    %3662 = vadd.xlane.f32.xlu0 %v3661
    %v3663 = vpop.xlane.xlu0 %3662
    %v3664 = vmul.f32 %v3660, %v797
    %v3665 = vmul.f32 %v3663, %v797
    %v3666 = vadd.f32 %v3664, 1e-05
    %v3667 = vadd.f32 %v3665, 1e-05
    %v3668 = vrsqrt.pop %v3666
    %v3669 = vmul.f32 %v3668, %v3666
    %v3670 = vmul.f32 %v3669, %v3668
    %v3671 = vmul.f32 0.5, %v3670
    %v3672 = vsub.f32 1.5, %v3671
    %v3673 = vmul.f32 %v3668, %v3672
    %vm3674 = vweird.f32 %v3666
    %vm3675 = vweird.f32 %v3668
    %vm3676 = vmor %vm3674, %vm3675
    %v3677 = vsel %vm3676, %v3668, %v3673
    %v3678 = vrsqrt.pop %v3667
    %v3679 = vmul.f32 %v3678, %v3667
    %v3680 = vmul.f32 %v3679, %v3678
    %v3681 = vmul.f32 0.5, %v3680
    %v3682 = vsub.f32 1.5, %v3681
    %v3683 = vmul.f32 %v3678, %v3682
    %vm3684 = vweird.f32 %v3667
    %vm3685 = vweird.f32 %v3678
    %vm3686 = vmor %vm3684, %vm3685
    %v3687 = vsel %vm3686, %v3678, %v3683
    %v3688 = vmul.f32 %v3654, %v3677
    %v3689 = vmul.f32 %v3655, %v3687
    %v3690 = vmul.f32 %v3688, %v2279
    %v3691 = vmul.f32 %v3689, %v2279
    %v3692 = vadd.f32 %v3690, %v2284
    %v3693 = vadd.f32 %v3691, %v2284
    %v3695 = vsel %vm246, %v3692, 0
    %v3698 = vsel %vm246, %v3693, 0
    %3700 = vmatpush.msra.mxu0 0.0
    %3701 = vmatpush.msra.mxu0 0.0
    %3702 = vmatpush.msra.mxu0 0.0
    %3703 = vmatpush.msra.mxu0 0.0
    %3704 = vmatpush.msra.mxu0 0.0
    %3705 = vmatpush.msra.mxu0 0.0
    %3706 = vmatpush.msra.mxu0 0.0
    %3707 = vmatpush.msra.mxu0 0.0
    %3708 = vmatpush.msra.mxu0 0.0
    %3709 = vmatpush.msra.mxu0 0.0
    %3710 = vmatpush.msra.mxu0 0.0
    %3711 = vmatpush.msra.mxu0 0.0
    %3712 = vmatpush.msra.mxu0 %v91
    %3713 = vmatpush.msra.mxu0 %v90
    %3714 = vmatpush.msra.mxu0 %v89
    %3715 = vmatpush.msra.mxu0 %v88
    %3716 = vmatmul.f32.gmra.mxu0 %v3695
    %v3717 = vpop.f32.mrf.mxu0
    %v3718 = vadd.f32 %v2288, %v3717
    %3719 = vmatmul.f32.gmra.mxu0 %v3698
    %v3720 = vpop.f32.mrf.mxu0
    %v3721 = vadd.f32 %v2288, %v3720
    %3722 = vdwg.mxu0
    %v3723 = vmul.f32 %v3718, 0.5
    %v3724 = vmul.f32 %v3721, 0.5
    %v3725 = vmul.f32 %v3718, %v3718
    %v3726 = vmul.f32 %v3721, %v3721
    %v3727 = vmul.f32 %v3725, %v3718
    %v3728 = vmul.f32 %v3726, %v3721
    %v3729 = vmul.f32 %v3727, 0.044715
    %v3730 = vmul.f32 %v3728, 0.044715
    %v3731 = vadd.f32 %v3718, %v3729
    %v3732 = vadd.f32 %v3721, %v3730
    %v3733 = vmul.f32 %v3731, 0.7978846
    %v3734 = vmul.f32 %v3732, 0.7978846
    %v3735 = vtanh.pop %v3733
    %v3736 = vtanh.pop %v3734
    %v3737 = vadd.f32 %v3735, 1.0
    %v3738 = vadd.f32 %v3736, 1.0
    %v3739 = vmul.f32 %v3723, %v3737
    %v3740 = vmul.f32 %v3724, %v3738
    %v3742 = vsel %vm894, %v3739, 0
    %v3745 = vsel %vm894, %v3740, 0
    %3747 = vmatpush.msra.mxu0 0.0
    %3748 = vmatpush.msra.mxu0 0.0
    %3749 = vmatpush.msra.mxu0 0.0
    %3750 = vmatpush.msra.mxu0 0.0
    %3751 = vmatpush.msra.mxu0 0.0
    %3752 = vmatpush.msra.mxu0 0.0
    %3753 = vmatpush.msra.mxu0 0.0
    %3754 = vmatpush.msra.mxu0 0.0
    %3755 = vmatpush.msra.mxu0 %v100
    %3756 = vmatpush.msra.mxu0 %v99
    %3757 = vmatpush.msra.mxu0 %v98
    %3758 = vmatpush.msra.mxu0 %v97
    %3759 = vmatpush.msra.mxu0 %v96
    %3760 = vmatpush.msra.mxu0 %v95
    %3761 = vmatpush.msra.mxu0 %v94
    %3762 = vmatpush.msra.mxu0 %v93
    %3763 = vmatmul.f32.gmra.mxu0 %v3742
    %v3764 = vpop.f32.mrf.mxu0
    %v3765 = vadd.f32 %v2336, %v3764
    %3766 = vmatmul.f32.gmra.mxu0 %v3745
    %v3767 = vpop.f32.mrf.mxu0
    %v3768 = vadd.f32 %v2336, %v3767
    %3769 = vdwg.mxu0
    %v3770 = vadd.f32 %v3692, %v3765
    %v3771 = vadd.f32 %v3693, %v3768
    %v3772 = vsel %vm246, %v3770, 0.0
    %3773 = vadd.xlane.f32.xlu0 %v3772
    %v3774 = vpop.xlane.xlu0 %3773
    %v3775 = vsel %vm1648, %v3771, 0.0
    %3776 = vadd.xlane.f32.xlu0 %v3775
    %v3777 = vpop.xlane.xlu0 %3776
    %v3778 = vmul.f32 %v3774, %v797
    %v3779 = vmul.f32 %v3777, %v797
    %v3780 = vsub.f32 %v3770, %v3778
    %v3781 = vsub.f32 %v3771, %v3779
    %v3782 = vmul.f32 %v3780, %v3780
    %v3783 = vmul.f32 %v3781, %v3781
    %v3784 = vsel %vm246, %v3782, 0.0
    %3785 = vadd.xlane.f32.xlu0 %v3784
    %v3786 = vpop.xlane.xlu0 %3785
    %v3787 = vsel %vm1648, %v3783, 0.0
    %3788 = vadd.xlane.f32.xlu0 %v3787
    %v3789 = vpop.xlane.xlu0 %3788
    %v3790 = vmul.f32 %v3786, %v797
    %v3791 = vmul.f32 %v3789, %v797
    %v3792 = vadd.f32 %v3790, 1e-05
    %v3793 = vadd.f32 %v3791, 1e-05
    %v3794 = vrsqrt.pop %v3792
    %v3795 = vmul.f32 %v3794, %v3792
    %v3796 = vmul.f32 %v3795, %v3794
    %v3797 = vmul.f32 0.5, %v3796
    %v3798 = vsub.f32 1.5, %v3797
    %v3799 = vmul.f32 %v3794, %v3798
    %vm3800 = vweird.f32 %v3792
    %vm3801 = vweird.f32 %v3794
    %vm3802 = vmor %vm3800, %vm3801
    %v3803 = vsel %vm3802, %v3794, %v3799
    %v3804 = vrsqrt.pop %v3793
    %v3805 = vmul.f32 %v3804, %v3793
    %v3806 = vmul.f32 %v3805, %v3804
    %v3807 = vmul.f32 0.5, %v3806
    %v3808 = vsub.f32 1.5, %v3807
    %v3809 = vmul.f32 %v3804, %v3808
    %vm3810 = vweird.f32 %v3793
    %vm3811 = vweird.f32 %v3804
    %vm3812 = vmor %vm3810, %vm3811
    %v3813 = vsel %vm3812, %v3804, %v3809
    %v3814 = vmul.f32 %v3780, %v3803
    %v3815 = vmul.f32 %v3781, %v3813
    %v3816 = vmul.f32 %v3814, %v2412
    %v3817 = vmul.f32 %v3815, %v2412
    %v3818 = vadd.f32 %v3816, %v2417
    %v3819 = vadd.f32 %v3817, %v2417
    %v3820 = vadd.s32 %v2421, 1
    %vm3821 = vcmp.eq.s32.totalorder %v116, %v3820
    %v3822 = vsel %vm3821, 1, 0
    %v3823 = vcvt.s32.f32 %v3822
    %v3825 = vsel %vm1169, %v3823, 0
    %v3828 = vsel %vm218, %v3819, 0
    %3830 = vmatpush.msra.mxu0 0.0
    %3831 = vmatpush.msra.mxu0 0.0
    %3832 = vmatpush.msra.mxu0 0.0
    %3833 = vmatpush.msra.mxu0 0.0
    %3834 = vmatpush.msra.mxu0 0.0
    %3835 = vmatpush.msra.mxu0 0.0
    %3836 = vmatpush.msra.mxu0 0.0
    %3837 = vmatpush.msra.mxu0 0.0
    %3838 = vmatpush.msra.mxu0 0.0
    %3839 = vmatpush.msra.mxu0 0.0
    %3840 = vmatpush.msra.mxu0 0.0
    %3841 = vmatpush.msra.mxu0 0.0
    %3842 = vmatpush.msra.mxu0 0.0
    %3843 = vmatpush.msra.mxu0 0.0
    %3844 = vmatpush.msra.mxu0 %v3828
    %3845 = vmatpush.msra.mxu0 %v3818
    %3846 = vmatmul.f32.gmra.mxu0 %v3825
    %v3847 = vpop.f32.mrf.mxu0
    %v3848 = vadd.f32 0.0, %v3847
    %3849 = vdwg.mxu0
    %v3851 = vsel %vm246, %v3848, 0
    %3853 = vmatpush.msra.mxu0 0.0
    %3854 = vmatpush.msra.mxu0 0.0
    %3855 = vmatpush.msra.mxu0 0.0
    %3856 = vmatpush.msra.mxu0 0.0
    %3857 = vmatpush.msra.mxu0 0.0
    %3858 = vmatpush.msra.mxu0 0.0
    %3859 = vmatpush.msra.mxu0 0.0
    %3860 = vmatpush.msra.mxu0 0.0
    %3861 = vmatpush.msra.mxu0 0.0
    %3862 = vmatpush.msra.mxu0 0.0
    %3863 = vmatpush.msra.mxu0 0.0
    %3864 = vmatpush.msra.mxu0 0.0
    %3865 = vmatpush.msra.mxu0 %v105
    %3866 = vmatpush.msra.mxu0 %v104
    %3867 = vmatpush.msra.mxu0 %v103
    %3868 = vmatpush.msra.mxu0 %v102
    %3869 = vmatmul.f32.gmra.mxu0 %v3851
    %v3870 = vpop.f32.mrf.mxu0
    %v3871 = vadd.f32 %v2451, %v3870
    %3872 = vdwg.mxu0
    %v3873 = vsel %vm2475, %v3871, -inf
    %3874 = vmax.xlane.f32.xlu0 %v3873
    %v3875 = vpop.xlane.xlu0 %3874
    %vm3876 = vcmp.ge.f32.partialorder %v3871, %v3875
    %v3877 = vsel %vm3876, %v116, 50
    %v3878 = vsel %vm2475, %v3877, 2147483647
    %v3879 = vand.u32 %v3878, 65535
    %v3880 = vshra.s32 %v3878, 16
    %v3881 = vcvt.s32.f32 %v3879
    %v3882 = vcvt.s32.f32 %v3880
    %3883 = vmin.xlane.f32.xlu0 %v3882
    %v3884 = vpop.xlane.xlu0 %3883
    %vm3885 = vcmp.eq.f32.partialorder %v3882, %v3884
    %v3886 = vsel %vm3885, %v3881, inf
    %3887 = vmin.xlane.f32.xlu0 %v3886
    %v3888 = vpop.xlane.xlu0 %3887
    %v3889 = vcvt.f32.s32 %v3888
    %v3890 = vcvt.f32.s32 %v3884
    %v3891 = vshll.u32 %v3890, 16
    %v3892 = vadd.s32 %v3891, %v3889
    %vm3893 = vcmp.gt.s32.totalorder %v2497, 0
    %v3894 = vsel %vm3893, 1, %v3892
    %vm3895 = vcmp.eq.s32.totalorder %v3894, 2
    %vm3896 = vmor %vm2496, %vm3895
    %v3897 = vsel %vm3896, 1, 0
    %vm3898 = vcmp.eq.s32.totalorder %v116, 2
    %v3899 = vsel %vm3898, %v3894, %v2499
    %vm3900 = vcmp.eq.s32.totalorder %v3894, %v116
    %v3901 = vsel %vm3900, 1, 0
    %v3902 = vcvt.s32.f32 %v3901
    %v3903 = vperm.slane %v37, 2
    %v3905 = vsel %vm211, %v3902, 0
    %3907 = vmatpush.msra.mxu0 0.0
    %3908 = vmatpush.msra.mxu0 0.0
    %3909 = vmatpush.msra.mxu0 0.0
    %3910 = vmatpush.msra.mxu0 0.0
    %3911 = vmatpush.msra.mxu0 0.0
    %3912 = vmatpush.msra.mxu0 0.0
    %3913 = vmatpush.msra.mxu0 0.0
    %3914 = vmatpush.msra.mxu0 0.0
    %3915 = vmatpush.msra.mxu0 0.0
    %3916 = vmatpush.msra.mxu0 %v220
    %3917 = vmatpush.msra.mxu0 %v35
    %3918 = vmatpush.msra.mxu0 %v34
    %3919 = vmatpush.msra.mxu0 %v33
    %3920 = vmatpush.msra.mxu0 %v32
    %3921 = vmatpush.msra.mxu0 %v31
    %3922 = vmatpush.msra.mxu0 %v30
    %3923 = vmatmul.f32.gmra.mxu0 %v3905
    %v3924 = vpop.f32.mrf.mxu0
    %v3925 = vadd.f32 %v3903, %v3924
    %3926 = vdwg.mxu0
    %v3927 = vadd.s32 %v1038, 2
    %vm3928 = vcmp.eq.s32.totalorder %v113, %v3927
    %vm3929 = vcmp.eq.s32.totalorder %v114, %v3927
    %v3930 = vsel %vm3928, 1, 0
    %v3931 = vsel %vm3929, 1, 0
    %v3932 = vcvt.s32.f32 %v3930
    %v3933 = vcvt.s32.f32 %v3931
    %vm3934 = vcmp.eq.s32.totalorder %v113, 2
    %vm3935 = vcmp.eq.s32.totalorder %v114, 2
    %vm3936 = vmor %vm117, %vm3934
    %vm3937 = vmor %vm118, %vm3935
    %vm3938 = vcmp.eq.s32.totalorder %v113, 7
    %vm3939 = vcmp.eq.s32.totalorder %v114, 7
    %vm3940 = vmor %vm3936, %vm3938
    %vm3941 = vmor %vm3937, %vm3939
    %v3943 = vsel %vm1053, %v3932, 0
    %v3946 = vsel %vm1053, %v3933, 0
    %v3949 = vsel %vm218, %v3925, 0
    %3951 = vmatpush.msra.mxu0 0.0
    %3952 = vmatpush.msra.mxu0 0.0
    %3953 = vmatpush.msra.mxu0 0.0
    %3954 = vmatpush.msra.mxu0 0.0
    %3955 = vmatpush.msra.mxu0 0.0
    %3956 = vmatpush.msra.mxu0 0.0
    %3957 = vmatpush.msra.mxu0 0.0
    %3958 = vmatpush.msra.mxu0 0.0
    %3959 = vmatpush.msra.mxu0 0.0
    %3960 = vmatpush.msra.mxu0 0.0
    %3961 = vmatpush.msra.mxu0 0.0
    %3962 = vmatpush.msra.mxu0 0.0
    %3963 = vmatpush.msra.mxu0 0.0
    %3964 = vmatpush.msra.mxu0 0.0
    %3965 = vmatpush.msra.mxu0 0.0
    %3966 = vmatpush.msra.mxu0 %v3949
    %3967 = vmatmul.f32.gmra.mxu0 %v3943
    %v3968 = vpop.f32.mrf.mxu0
    %v3969 = vadd.f32 0.0, %v3968
    %3970 = vmatmul.f32.gmra.mxu0 %v3946
    %v3971 = vpop.f32.mrf.mxu0
    %v3972 = vadd.f32 0.0, %v3971
    %3973 = vdwg.mxu0
    %v3974 = vsel %vm3940, 1, 0
    %v3975 = vsel %vm3941, 1, 0
    %vm3976 = vcmp.eq.s32.totalorder %v3974, 1
    %vm3977 = vcmp.eq.s32.totalorder %v3975, 1
    %v3978 = vsel %vm3976, %v3969, %v2578
    %v3979 = vsel %vm3977, %v3972, %v2579
    %v3981 = vsel %vm246, %v3978, 0
    %v3984 = vsel %vm246, %v3979, 0
    %3986 = vmatpush.msra.mxu0 0.0
    %3987 = vmatpush.msra.mxu0 0.0
    %3988 = vmatpush.msra.mxu0 0.0
    %3989 = vmatpush.msra.mxu0 0.0
    %3990 = vmatpush.msra.mxu0 0.0
    %3991 = vmatpush.msra.mxu0 0.0
    %3992 = vmatpush.msra.mxu0 0.0
    %3993 = vmatpush.msra.mxu0 0.0
    %3994 = vmatpush.msra.mxu0 0.0
    %3995 = vmatpush.msra.mxu0 0.0
    %3996 = vmatpush.msra.mxu0 0.0
    %3997 = vmatpush.msra.mxu0 0.0
    %3998 = vmatpush.msra.mxu0 %v66
    %3999 = vmatpush.msra.mxu0 %v65
    %4000 = vmatpush.msra.mxu0 %v64
    %4001 = vmatpush.msra.mxu0 %v63
    %4002 = vmatmul.f32.gmra.mxu0 %v3981
    %v4003 = vpop.f32.mrf.mxu0
    %v4004 = vadd.f32 %v1102, %v4003
    %4005 = vmatmul.f32.gmra.mxu0 %v3984
    %v4006 = vpop.f32.mrf.mxu0
    %v4007 = vadd.f32 %v1102, %v4006
    %4008 = vdwg.mxu0
    %4011 = vrot.lane.b32.xlu0 %v4004, 96
    %v4012 = vpop.permute.xlu0 %4011
    %4013 = vrot.lane.b32.xlu0 %v4007, 96
    %v4014 = vpop.permute.xlu0 %4013
    %v4015 = vsel %vm282, %v4004, 0
    %v4017 = vsel %vm282, %v4007, 0
    %v4019 = vsel %vm282, %v4012, 0
    %v4021 = vsel %vm282, %v4014, 0
    %4023 = vmatpush.xpose.msra.mxu0 0.0
    %4024 = vmatpush.xpose.msra.mxu0 0.0
    %4025 = vmatpush.xpose.msra.mxu0 0.0
    %4026 = vmatpush.xpose.msra.mxu0 0.0
    %4027 = vmatpush.xpose.msra.mxu0 0.0
    %4028 = vmatpush.xpose.msra.mxu0 0.0
    %4029 = vmatpush.xpose.msra.mxu0 0.0
    %4030 = vmatpush.xpose.msra.mxu0 0.0
    %4031 = vmatpush.xpose.msra.mxu0 0.0
    %4032 = vmatpush.xpose.msra.mxu0 0.0
    %4033 = vmatpush.xpose.msra.mxu0 0.0
    %4034 = vmatpush.xpose.msra.mxu0 0.0
    %4035 = vmatpush.xpose.msra.mxu0 0.0
    %4036 = vmatpush.xpose.msra.mxu0 0.0
    %4037 = vmatpush.xpose.msra.mxu0 %v4021
    %4038 = vmatpush.xpose.msra.mxu0 %v4019
    %4039 = vmatmul.f32.gmra.mxu0 %v4015
    %v4040 = vpop.f32.mrf.mxu0
    %v4041 = vadd.f32 %v183, %v4040
    %4042 = vmatmul.f32.gmra.mxu0 %v4017
    %v4043 = vpop.f32.mrf.mxu0
    %v4044 = vadd.f32 %v184, %v4043
    %4045 = vdwg.mxu0
    %v4046 = vsel %vm1169, %v4041, -inf
    %4047 = vmax.xlane.f32.xlu0 %v4046
    %v4048 = vpop.xlane.xlu0 %4047
    %v4049 = vsel %vm1173, %v4044, -inf
    %4050 = vmax.xlane.f32.xlu0 %v4049
    %v4051 = vpop.xlane.xlu0 %4050
    %v4052 = vsub.f32 %v4041, %v4048
    %v4053 = vsub.f32 %v4044, %v4051
    %v4054 = vmul.f32 %v4052, 1.442695
    %v4055 = vpow.pop %v4054
    %v4056 = vmul.f32 %v4053, 1.442695
    %v4057 = vpow.pop %v4056
    %v4058 = vsel %vm1169, %v4055, 0.0
    %4059 = vadd.xlane.f32.xlu0 %v4058
    %v4060 = vpop.xlane.xlu0 %4059
    %v4061 = vsel %vm1173, %v4057, 0.0
    %4062 = vadd.xlane.f32.xlu0 %v4061
    %v4063 = vpop.xlane.xlu0 %4062
    %v4064 = vrcp.pop %v4060
    %v4065 = vrcp.pop %v4063
    %v4066 = vmul.f32 %v4055, %v4064
    %v4067 = vmul.f32 %v4057, %v4065
    %4068 = vrot.lane.b32.xlu0 %v4004, 64
    %v4069 = vpop.permute.xlu0 %4068
    %4070 = vrot.lane.b32.xlu0 %v4007, 64
    %v4071 = vpop.permute.xlu0 %4070
    %v4074 = vsel %vm1169, %v4066, 0
    %v4077 = vsel %vm1169, %v4067, 0
    %v4079 = vsel %vm218, %v4071, 0
    %4081 = vmatpush.msra.mxu0 0.0
    %4082 = vmatpush.msra.mxu0 0.0
    %4083 = vmatpush.msra.mxu0 0.0
    %4084 = vmatpush.msra.mxu0 0.0
    %4085 = vmatpush.msra.mxu0 0.0
    %4086 = vmatpush.msra.mxu0 0.0
    %4087 = vmatpush.msra.mxu0 0.0
    %4088 = vmatpush.msra.mxu0 0.0
    %4089 = vmatpush.msra.mxu0 0.0
    %4090 = vmatpush.msra.mxu0 0.0
    %4091 = vmatpush.msra.mxu0 0.0
    %4092 = vmatpush.msra.mxu0 0.0
    %4093 = vmatpush.msra.mxu0 0.0
    %4094 = vmatpush.msra.mxu0 0.0
    %4095 = vmatpush.msra.mxu0 %v4079
    %4096 = vmatpush.msra.mxu0 %v4069
    %4097 = vmatmul.f32.gmra.mxu0 %v4074
    %v4098 = vpop.f32.mrf.mxu0
    %v4099 = vadd.f32 0.0, %v4098
    %4100 = vmatmul.f32.gmra.mxu0 %v4077
    %v4101 = vpop.f32.mrf.mxu0
    %v4102 = vadd.f32 0.0, %v4101
    %4103 = vdwg.mxu0
    %4104 = vrot.lane.b32.xlu0 %v4004, 120
    %v4105 = vpop.permute.xlu0 %4104
    %4106 = vrot.lane.b32.xlu0 %v4007, 120
    %v4107 = vpop.permute.xlu0 %4106
    %4108 = vrot.lane.b32.xlu0 %v4004, 88
    %v4109 = vpop.permute.xlu0 %4108
    %4110 = vrot.lane.b32.xlu0 %v4007, 88
    %v4111 = vpop.permute.xlu0 %4110
    %v4112 = vsel %vm282, %v4105, 0
    %v4114 = vsel %vm282, %v4107, 0
    %v4116 = vsel %vm282, %v4109, 0
    %v4118 = vsel %vm282, %v4111, 0
    %4120 = vmatpush.xpose.msra.mxu0 0.0
    %4121 = vmatpush.xpose.msra.mxu0 0.0
    %4122 = vmatpush.xpose.msra.mxu0 0.0
    %4123 = vmatpush.xpose.msra.mxu0 0.0
    %4124 = vmatpush.xpose.msra.mxu0 0.0
    %4125 = vmatpush.xpose.msra.mxu0 0.0
    %4126 = vmatpush.xpose.msra.mxu0 0.0
    %4127 = vmatpush.xpose.msra.mxu0 0.0
    %4128 = vmatpush.xpose.msra.mxu0 0.0
    %4129 = vmatpush.xpose.msra.mxu0 0.0
    %4130 = vmatpush.xpose.msra.mxu0 0.0
    %4131 = vmatpush.xpose.msra.mxu0 0.0
    %4132 = vmatpush.xpose.msra.mxu0 0.0
    %4133 = vmatpush.xpose.msra.mxu0 0.0
    %4134 = vmatpush.xpose.msra.mxu0 %v4118
    %4135 = vmatpush.xpose.msra.mxu0 %v4116
    %4136 = vmatmul.f32.gmra.mxu0 %v4112
    %v4137 = vpop.f32.mrf.mxu0
    %v4138 = vadd.f32 %v183, %v4137
    %4139 = vmatmul.f32.gmra.mxu0 %v4114
    %v4140 = vpop.f32.mrf.mxu0
    %v4141 = vadd.f32 %v184, %v4140
    %4142 = vdwg.mxu0
    %v4143 = vsel %vm1169, %v4138, -inf
    %4144 = vmax.xlane.f32.xlu0 %v4143
    %v4145 = vpop.xlane.xlu0 %4144
    %v4146 = vsel %vm1173, %v4141, -inf
    %4147 = vmax.xlane.f32.xlu0 %v4146
    %v4148 = vpop.xlane.xlu0 %4147
    %v4149 = vsub.f32 %v4138, %v4145
    %v4150 = vsub.f32 %v4141, %v4148
    %v4151 = vmul.f32 %v4149, 1.442695
    %v4152 = vpow.pop %v4151
    %v4153 = vmul.f32 %v4150, 1.442695
    %v4154 = vpow.pop %v4153
    %v4155 = vsel %vm1169, %v4152, 0.0
    %4156 = vadd.xlane.f32.xlu0 %v4155
    %v4157 = vpop.xlane.xlu0 %4156
    %v4158 = vsel %vm1173, %v4154, 0.0
    %4159 = vadd.xlane.f32.xlu0 %v4158
    %v4160 = vpop.xlane.xlu0 %4159
    %v4161 = vrcp.pop %v4157
    %v4162 = vrcp.pop %v4160
    %v4163 = vmul.f32 %v4152, %v4161
    %v4164 = vmul.f32 %v4154, %v4162
    %4165 = vrot.lane.b32.xlu0 %v4004, 56
    %v4166 = vpop.permute.xlu0 %4165
    %4167 = vrot.lane.b32.xlu0 %v4007, 56
    %v4168 = vpop.permute.xlu0 %4167
    %v4171 = vsel %vm1169, %v4163, 0
    %v4174 = vsel %vm1169, %v4164, 0
    %v4176 = vsel %vm218, %v4168, 0
    %4178 = vmatpush.msra.mxu0 0.0
    %4179 = vmatpush.msra.mxu0 0.0
    %4180 = vmatpush.msra.mxu0 0.0
    %4181 = vmatpush.msra.mxu0 0.0
    %4182 = vmatpush.msra.mxu0 0.0
    %4183 = vmatpush.msra.mxu0 0.0
    %4184 = vmatpush.msra.mxu0 0.0
    %4185 = vmatpush.msra.mxu0 0.0
    %4186 = vmatpush.msra.mxu0 0.0
    %4187 = vmatpush.msra.mxu0 0.0
    %4188 = vmatpush.msra.mxu0 0.0
    %4189 = vmatpush.msra.mxu0 0.0
    %4190 = vmatpush.msra.mxu0 0.0
    %4191 = vmatpush.msra.mxu0 0.0
    %4192 = vmatpush.msra.mxu0 %v4176
    %4193 = vmatpush.msra.mxu0 %v4166
    %4194 = vmatmul.f32.gmra.mxu0 %v4171
    %v4195 = vpop.f32.mrf.mxu0
    %v4196 = vadd.f32 0.0, %v4195
    %4197 = vmatmul.f32.gmra.mxu0 %v4174
    %v4198 = vpop.f32.mrf.mxu0
    %v4199 = vadd.f32 0.0, %v4198
    %4200 = vdwg.mxu0
    %v4202 = vsel %vm282, %v4196, 0
    %v4205 = vsel %vm282, %v4199, 0
    %4207 = vmatpush.msra.mxu0 0.0
    %4208 = vmatpush.msra.mxu0 0.0
    %4209 = vmatpush.msra.mxu0 0.0
    %4210 = vmatpush.msra.mxu0 0.0
    %4211 = vmatpush.msra.mxu0 0.0
    %4212 = vmatpush.msra.mxu0 0.0
    %4213 = vmatpush.msra.mxu0 0.0
    %4214 = vmatpush.msra.mxu0 0.0
    %4215 = vmatpush.msra.mxu0 0.0
    %4216 = vmatpush.msra.mxu0 0.0
    %4217 = vmatpush.msra.mxu0 0.0
    %4218 = vmatpush.msra.mxu0 0.0
    %4219 = vmatpush.msra.mxu0 0.0
    %4220 = vmatpush.msra.mxu0 0.0
    %4221 = vmatpush.msra.mxu0 0.0
    %4222 = vmatpush.msra.mxu0 %v69
    %4223 = vmatmul.f32.gmra.mxu0 %v4202
    %v4224 = vpop.f32.mrf.mxu0
    %v4225 = vadd.f32 0.0, %v4224
    %4226 = vmatmul.f32.gmra.mxu0 %v4205
    %v4227 = vpop.f32.mrf.mxu0
    %v4228 = vadd.f32 0.0, %v4227
    %4229 = vdwg.mxu0
    %v4231 = vsel %vm282, %v4099, 0
    %v4234 = vsel %vm282, %v4102, 0
    %4236 = vmatpush.msra.mxu0 0.0
    %4237 = vmatpush.msra.mxu0 0.0
    %4238 = vmatpush.msra.mxu0 0.0
    %4239 = vmatpush.msra.mxu0 0.0
    %4240 = vmatpush.msra.mxu0 0.0
    %4241 = vmatpush.msra.mxu0 0.0
    %4242 = vmatpush.msra.mxu0 0.0
    %4243 = vmatpush.msra.mxu0 0.0
    %4244 = vmatpush.msra.mxu0 0.0
    %4245 = vmatpush.msra.mxu0 0.0
    %4246 = vmatpush.msra.mxu0 0.0
    %4247 = vmatpush.msra.mxu0 0.0
    %4248 = vmatpush.msra.mxu0 0.0
    %4249 = vmatpush.msra.mxu0 0.0
    %4250 = vmatpush.msra.mxu0 0.0
    %4251 = vmatpush.msra.mxu0 %v68
    %4252 = vmatmul.f32.gmra.mxu0 %v4231
    %v4253 = vpop.f32.mrf.mxu0
    %v4254 = vadd.f32 %v4225, %v4253
    %4255 = vmatmul.f32.gmra.mxu0 %v4234
    %v4256 = vpop.f32.mrf.mxu0
    %v4257 = vadd.f32 %v4228, %v4256
    %4258 = vdwg.mxu0
    %4259 = vrot.lane.b32.xlu0 %v4004, 112
    %v4260 = vpop.permute.xlu0 %4259
    %4261 = vrot.lane.b32.xlu0 %v4007, 112
    %v4262 = vpop.permute.xlu0 %4261
    %4263 = vrot.lane.b32.xlu0 %v4004, 80
    %v4264 = vpop.permute.xlu0 %4263
    %4265 = vrot.lane.b32.xlu0 %v4007, 80
    %v4266 = vpop.permute.xlu0 %4265
    %v4267 = vsel %vm282, %v4260, 0
    %v4269 = vsel %vm282, %v4262, 0
    %v4271 = vsel %vm282, %v4264, 0
    %v4273 = vsel %vm282, %v4266, 0
    %4275 = vmatpush.xpose.msra.mxu0 0.0
    %4276 = vmatpush.xpose.msra.mxu0 0.0
    %4277 = vmatpush.xpose.msra.mxu0 0.0
    %4278 = vmatpush.xpose.msra.mxu0 0.0
    %4279 = vmatpush.xpose.msra.mxu0 0.0
    %4280 = vmatpush.xpose.msra.mxu0 0.0
    %4281 = vmatpush.xpose.msra.mxu0 0.0
    %4282 = vmatpush.xpose.msra.mxu0 0.0
    %4283 = vmatpush.xpose.msra.mxu0 0.0
    %4284 = vmatpush.xpose.msra.mxu0 0.0
    %4285 = vmatpush.xpose.msra.mxu0 0.0
    %4286 = vmatpush.xpose.msra.mxu0 0.0
    %4287 = vmatpush.xpose.msra.mxu0 0.0
    %4288 = vmatpush.xpose.msra.mxu0 0.0
    %4289 = vmatpush.xpose.msra.mxu0 %v4273
    %4290 = vmatpush.xpose.msra.mxu0 %v4271
    %4291 = vmatmul.f32.gmra.mxu0 %v4267
    %v4292 = vpop.f32.mrf.mxu0
    %v4293 = vadd.f32 %v183, %v4292
    %4294 = vmatmul.f32.gmra.mxu0 %v4269
    %v4295 = vpop.f32.mrf.mxu0
    %v4296 = vadd.f32 %v184, %v4295
    %4297 = vdwg.mxu0
    %v4298 = vsel %vm1169, %v4293, -inf
    %4299 = vmax.xlane.f32.xlu0 %v4298
    %v4300 = vpop.xlane.xlu0 %4299
    %v4301 = vsel %vm1173, %v4296, -inf
    %4302 = vmax.xlane.f32.xlu0 %v4301
    %v4303 = vpop.xlane.xlu0 %4302
    %v4304 = vsub.f32 %v4293, %v4300
    %v4305 = vsub.f32 %v4296, %v4303
    %v4306 = vmul.f32 %v4304, 1.442695
    %v4307 = vpow.pop %v4306
    %v4308 = vmul.f32 %v4305, 1.442695
    %v4309 = vpow.pop %v4308
    %v4310 = vsel %vm1169, %v4307, 0.0
    %4311 = vadd.xlane.f32.xlu0 %v4310
    %v4312 = vpop.xlane.xlu0 %4311
    %v4313 = vsel %vm1173, %v4309, 0.0
    %4314 = vadd.xlane.f32.xlu0 %v4313
    %v4315 = vpop.xlane.xlu0 %4314
    %v4316 = vrcp.pop %v4312
    %v4317 = vrcp.pop %v4315
    %v4318 = vmul.f32 %v4307, %v4316
    %v4319 = vmul.f32 %v4309, %v4317
    %4320 = vrot.lane.b32.xlu0 %v4004, 48
    %v4321 = vpop.permute.xlu0 %4320
    %4322 = vrot.lane.b32.xlu0 %v4007, 48
    %v4323 = vpop.permute.xlu0 %4322
    %v4326 = vsel %vm1169, %v4318, 0
    %v4329 = vsel %vm1169, %v4319, 0
    %v4331 = vsel %vm218, %v4323, 0
    %4333 = vmatpush.msra.mxu0 0.0
    %4334 = vmatpush.msra.mxu0 0.0
    %4335 = vmatpush.msra.mxu0 0.0
    %4336 = vmatpush.msra.mxu0 0.0
    %4337 = vmatpush.msra.mxu0 0.0
    %4338 = vmatpush.msra.mxu0 0.0
    %4339 = vmatpush.msra.mxu0 0.0
    %4340 = vmatpush.msra.mxu0 0.0
    %4341 = vmatpush.msra.mxu0 0.0
    %4342 = vmatpush.msra.mxu0 0.0
    %4343 = vmatpush.msra.mxu0 0.0
    %4344 = vmatpush.msra.mxu0 0.0
    %4345 = vmatpush.msra.mxu0 0.0
    %4346 = vmatpush.msra.mxu0 0.0
    %4347 = vmatpush.msra.mxu0 %v4331
    %4348 = vmatpush.msra.mxu0 %v4321
    %4349 = vmatmul.f32.gmra.mxu0 %v4326
    %v4350 = vpop.f32.mrf.mxu0
    %v4351 = vadd.f32 0.0, %v4350
    %4352 = vmatmul.f32.gmra.mxu0 %v4329
    %v4353 = vpop.f32.mrf.mxu0
    %v4354 = vadd.f32 0.0, %v4353
    %4355 = vdwg.mxu0
    %v4357 = vsel %vm282, %v4351, 0
    %v4360 = vsel %vm282, %v4354, 0
    %4362 = vmatpush.msra.mxu0 0.0
    %4363 = vmatpush.msra.mxu0 0.0
    %4364 = vmatpush.msra.mxu0 0.0
    %4365 = vmatpush.msra.mxu0 0.0
    %4366 = vmatpush.msra.mxu0 0.0
    %4367 = vmatpush.msra.mxu0 0.0
    %4368 = vmatpush.msra.mxu0 0.0
    %4369 = vmatpush.msra.mxu0 0.0
    %4370 = vmatpush.msra.mxu0 0.0
    %4371 = vmatpush.msra.mxu0 0.0
    %4372 = vmatpush.msra.mxu0 0.0
    %4373 = vmatpush.msra.mxu0 0.0
    %4374 = vmatpush.msra.mxu0 0.0
    %4375 = vmatpush.msra.mxu0 0.0
    %4376 = vmatpush.msra.mxu0 0.0
    %4377 = vmatpush.msra.mxu0 %v70
    %4378 = vmatmul.f32.gmra.mxu0 %v4357
    %v4379 = vpop.f32.mrf.mxu0
    %v4380 = vadd.f32 0.0, %v4379
    %4381 = vmatmul.f32.gmra.mxu0 %v4360
    %v4382 = vpop.f32.mrf.mxu0
    %v4383 = vadd.f32 0.0, %v4382
    %4384 = vdwg.mxu0
    %v4385 = vadd.f32 %v4254, %v4380
    %v4386 = vadd.f32 %v4257, %v4383
    %4387 = vrot.lane.b32.xlu0 %v4004, 104
    %v4388 = vpop.permute.xlu0 %4387
    %4389 = vrot.lane.b32.xlu0 %v4007, 104
    %v4390 = vpop.permute.xlu0 %4389
    %4391 = vrot.lane.b32.xlu0 %v4004, 72
    %v4392 = vpop.permute.xlu0 %4391
    %4393 = vrot.lane.b32.xlu0 %v4007, 72
    %v4394 = vpop.permute.xlu0 %4393
    %v4395 = vsel %vm282, %v4388, 0
    %v4397 = vsel %vm282, %v4390, 0
    %v4399 = vsel %vm282, %v4392, 0
    %v4401 = vsel %vm282, %v4394, 0
    %4403 = vmatpush.xpose.msra.mxu0 0.0
    %4404 = vmatpush.xpose.msra.mxu0 0.0
    %4405 = vmatpush.xpose.msra.mxu0 0.0
    %4406 = vmatpush.xpose.msra.mxu0 0.0
    %4407 = vmatpush.xpose.msra.mxu0 0.0
    %4408 = vmatpush.xpose.msra.mxu0 0.0
    %4409 = vmatpush.xpose.msra.mxu0 0.0
    %4410 = vmatpush.xpose.msra.mxu0 0.0
    %4411 = vmatpush.xpose.msra.mxu0 0.0
    %4412 = vmatpush.xpose.msra.mxu0 0.0
    %4413 = vmatpush.xpose.msra.mxu0 0.0
    %4414 = vmatpush.xpose.msra.mxu0 0.0
    %4415 = vmatpush.xpose.msra.mxu0 0.0
    %4416 = vmatpush.xpose.msra.mxu0 0.0
    %4417 = vmatpush.xpose.msra.mxu0 %v4401
    %4418 = vmatpush.xpose.msra.mxu0 %v4399
    %4419 = vmatmul.f32.gmra.mxu0 %v4395
    %v4420 = vpop.f32.mrf.mxu0
    %v4421 = vadd.f32 %v183, %v4420
    %4422 = vmatmul.f32.gmra.mxu0 %v4397
    %v4423 = vpop.f32.mrf.mxu0
    %v4424 = vadd.f32 %v184, %v4423
    %4425 = vdwg.mxu0
    %v4426 = vsel %vm1169, %v4421, -inf
    %4427 = vmax.xlane.f32.xlu0 %v4426
    %v4428 = vpop.xlane.xlu0 %4427
    %v4429 = vsel %vm1173, %v4424, -inf
    %4430 = vmax.xlane.f32.xlu0 %v4429
    %v4431 = vpop.xlane.xlu0 %4430
    %v4432 = vsub.f32 %v4421, %v4428
    %v4433 = vsub.f32 %v4424, %v4431
    %v4434 = vmul.f32 %v4432, 1.442695
    %v4435 = vpow.pop %v4434
    %v4436 = vmul.f32 %v4433, 1.442695
    %v4437 = vpow.pop %v4436
    %v4438 = vsel %vm1169, %v4435, 0.0
    %4439 = vadd.xlane.f32.xlu0 %v4438
    %v4440 = vpop.xlane.xlu0 %4439
    %v4441 = vsel %vm1173, %v4437, 0.0
    %4442 = vadd.xlane.f32.xlu0 %v4441
    %v4443 = vpop.xlane.xlu0 %4442
    %v4444 = vrcp.pop %v4440
    %v4445 = vrcp.pop %v4443
    %v4446 = vmul.f32 %v4435, %v4444
    %v4447 = vmul.f32 %v4437, %v4445
    %4448 = vrot.lane.b32.xlu0 %v4004, 40
    %v4449 = vpop.permute.xlu0 %4448
    %4450 = vrot.lane.b32.xlu0 %v4007, 40
    %v4451 = vpop.permute.xlu0 %4450
    %v4454 = vsel %vm1169, %v4446, 0
    %v4457 = vsel %vm1169, %v4447, 0
    %v4459 = vsel %vm218, %v4451, 0
    %4461 = vmatpush.msra.mxu0 0.0
    %4462 = vmatpush.msra.mxu0 0.0
    %4463 = vmatpush.msra.mxu0 0.0
    %4464 = vmatpush.msra.mxu0 0.0
    %4465 = vmatpush.msra.mxu0 0.0
    %4466 = vmatpush.msra.mxu0 0.0
    %4467 = vmatpush.msra.mxu0 0.0
    %4468 = vmatpush.msra.mxu0 0.0
    %4469 = vmatpush.msra.mxu0 0.0
    %4470 = vmatpush.msra.mxu0 0.0
    %4471 = vmatpush.msra.mxu0 0.0
    %4472 = vmatpush.msra.mxu0 0.0
    %4473 = vmatpush.msra.mxu0 0.0
    %4474 = vmatpush.msra.mxu0 0.0
    %4475 = vmatpush.msra.mxu0 %v4459
    %4476 = vmatpush.msra.mxu0 %v4449
    %4477 = vmatmul.f32.gmra.mxu0 %v4454
    %v4478 = vpop.f32.mrf.mxu0
    %v4479 = vadd.f32 0.0, %v4478
    %4480 = vmatmul.f32.gmra.mxu0 %v4457
    %v4481 = vpop.f32.mrf.mxu0
    %v4482 = vadd.f32 0.0, %v4481
    %4483 = vdwg.mxu0
    %v4485 = vsel %vm282, %v4479, 0
    %v4488 = vsel %vm282, %v4482, 0
    %4490 = vmatpush.msra.mxu0 0.0
    %4491 = vmatpush.msra.mxu0 0.0
    %4492 = vmatpush.msra.mxu0 0.0
    %4493 = vmatpush.msra.mxu0 0.0
    %4494 = vmatpush.msra.mxu0 0.0
    %4495 = vmatpush.msra.mxu0 0.0
    %4496 = vmatpush.msra.mxu0 0.0
    %4497 = vmatpush.msra.mxu0 0.0
    %4498 = vmatpush.msra.mxu0 0.0
    %4499 = vmatpush.msra.mxu0 0.0
    %4500 = vmatpush.msra.mxu0 0.0
    %4501 = vmatpush.msra.mxu0 0.0
    %4502 = vmatpush.msra.mxu0 0.0
    %4503 = vmatpush.msra.mxu0 0.0
    %4504 = vmatpush.msra.mxu0 0.0
    %4505 = vmatpush.msra.mxu0 %v71
    %4506 = vmatmul.f32.gmra.mxu0 %v4485
    %v4507 = vpop.f32.mrf.mxu0
    %v4508 = vadd.f32 0.0, %v4507
    %4509 = vmatmul.f32.gmra.mxu0 %v4488
    %v4510 = vpop.f32.mrf.mxu0
    %v4511 = vadd.f32 0.0, %v4510
    %4512 = vdwg.mxu0
    %v4513 = vadd.f32 %v4385, %v4508
    %v4514 = vadd.f32 %v4386, %v4511
    %v4515 = vadd.f32 %v4513, %v1640
    %v4516 = vadd.f32 %v4514, %v1640
    %v4517 = vadd.f32 %v3978, %v4515
    %v4518 = vadd.f32 %v3979, %v4516
    %v4519 = vsel %vm246, %v4517, 0.0
    %4520 = vadd.xlane.f32.xlu0 %v4519
    %v4521 = vpop.xlane.xlu0 %4520
    %v4522 = vsel %vm1648, %v4518, 0.0
    %4523 = vadd.xlane.f32.xlu0 %v4522
    %v4524 = vpop.xlane.xlu0 %4523
    %v4525 = vmul.f32 %v4521, %v797
    %v4526 = vmul.f32 %v4524, %v797
    %v4527 = vsub.f32 %v4517, %v4525
    %v4528 = vsub.f32 %v4518, %v4526
    %v4529 = vmul.f32 %v4527, %v4527
    %v4530 = vmul.f32 %v4528, %v4528
    %v4531 = vsel %vm246, %v4529, 0.0
    %4532 = vadd.xlane.f32.xlu0 %v4531
    %v4533 = vpop.xlane.xlu0 %4532
    %v4534 = vsel %vm1648, %v4530, 0.0
    %4535 = vadd.xlane.f32.xlu0 %v4534
    %v4536 = vpop.xlane.xlu0 %4535
    %v4537 = vmul.f32 %v4533, %v797
    %v4538 = vmul.f32 %v4536, %v797
    %v4539 = vadd.f32 %v4537, 1e-05
    %v4540 = vadd.f32 %v4538, 1e-05
    %v4541 = vrsqrt.pop %v4539
    %v4542 = vmul.f32 %v4541, %v4539
    %v4543 = vmul.f32 %v4542, %v4541
    %v4544 = vmul.f32 0.5, %v4543
    %v4545 = vsub.f32 1.5, %v4544
    %v4546 = vmul.f32 %v4541, %v4545
    %vm4547 = vweird.f32 %v4539
    %vm4548 = vweird.f32 %v4541
    %vm4549 = vmor %vm4547, %vm4548
    %v4550 = vsel %vm4549, %v4541, %v4546
    %v4551 = vrsqrt.pop %v4540
    %v4552 = vmul.f32 %v4551, %v4540
    %v4553 = vmul.f32 %v4552, %v4551
    %v4554 = vmul.f32 0.5, %v4553
    %v4555 = vsub.f32 1.5, %v4554
    %v4556 = vmul.f32 %v4551, %v4555
    %vm4557 = vweird.f32 %v4540
    %vm4558 = vweird.f32 %v4551
    %vm4559 = vmor %vm4557, %vm4558
    %v4560 = vsel %vm4559, %v4551, %v4556
    %v4561 = vmul.f32 %v4527, %v4550
    %v4562 = vmul.f32 %v4528, %v4560
    %v4563 = vmul.f32 %v4561, %v1690
    %v4564 = vmul.f32 %v4562, %v1690
    %v4565 = vadd.f32 %v4563, %v1695
    %v4566 = vadd.f32 %v4564, %v1695
    %v4568 = vsel %vm246, %v4565, 0
    %v4571 = vsel %vm246, %v4566, 0
    %4573 = vmatpush.msra.mxu0 0.0
    %4574 = vmatpush.msra.mxu0 0.0
    %4575 = vmatpush.msra.mxu0 0.0
    %4576 = vmatpush.msra.mxu0 0.0
    %4577 = vmatpush.msra.mxu0 0.0
    %4578 = vmatpush.msra.mxu0 0.0
    %4579 = vmatpush.msra.mxu0 0.0
    %4580 = vmatpush.msra.mxu0 0.0
    %4581 = vmatpush.msra.mxu0 0.0
    %4582 = vmatpush.msra.mxu0 0.0
    %4583 = vmatpush.msra.mxu0 0.0
    %4584 = vmatpush.msra.mxu0 0.0
    %4585 = vmatpush.msra.mxu0 %v76
    %4586 = vmatpush.msra.mxu0 %v75
    %4587 = vmatpush.msra.mxu0 %v74
    %4588 = vmatpush.msra.mxu0 %v73
    %4589 = vmatmul.f32.gmra.mxu0 %v4568
    %v4590 = vpop.f32.mrf.mxu0
    %v4591 = vadd.f32 %v1699, %v4590
    %4592 = vmatmul.f32.gmra.mxu0 %v4571
    %v4593 = vpop.f32.mrf.mxu0
    %v4594 = vadd.f32 %v1699, %v4593
    %4595 = vdwg.mxu0
    %v4597 = vsel %vm282, %v4591, 0
    %v4600 = vsel %vm282, %v4594, 0
    %4602 = vmatpush.xpose.msra.mxu0 0.0
    %4603 = vmatpush.xpose.msra.mxu0 0.0
    %4604 = vmatpush.xpose.msra.mxu0 0.0
    %4605 = vmatpush.xpose.msra.mxu0 0.0
    %4606 = vmatpush.xpose.msra.mxu0 0.0
    %4607 = vmatpush.xpose.msra.mxu0 0.0
    %4608 = vmatpush.xpose.msra.mxu0 0.0
    %4609 = vmatpush.xpose.msra.mxu0 0.0
    %4610 = vmatpush.xpose.msra.mxu0 0.0
    %4611 = vmatpush.xpose.msra.mxu0 0.0
    %4612 = vmatpush.xpose.msra.mxu0 0.0
    %4613 = vmatpush.xpose.msra.mxu0 0.0
    %4614 = vmatpush.xpose.msra.mxu0 0.0
    %4615 = vmatpush.xpose.msra.mxu0 0.0
    %4616 = vmatpush.xpose.msra.mxu0 %v1739
    %4617 = vmatpush.xpose.msra.mxu0 %v1736
    %4618 = vmatmul.f32.gmra.mxu0 %v4597
    %v4619 = vpop.f32.mrf.mxu0
    %v4620 = vadd.f32 %v197, %v4619
    %4621 = vmatmul.f32.gmra.mxu0 %v4600
    %v4622 = vpop.f32.mrf.mxu0
    %v4623 = vadd.f32 %v198, %v4622
    %4624 = vdwg.mxu0
    %v4625 = vsel %vm314, %v4620, -inf
    %4626 = vmax.xlane.f32.xlu0 %v4625
    %v4627 = vpop.xlane.xlu0 %4626
    %v4628 = vsel %vm1767, %v4623, -inf
    %4629 = vmax.xlane.f32.xlu0 %v4628
    %v4630 = vpop.xlane.xlu0 %4629
    %v4631 = vsub.f32 %v4620, %v4627
    %v4632 = vsub.f32 %v4623, %v4630
    %v4633 = vmul.f32 %v4631, 1.442695
    %v4634 = vpow.pop %v4633
    %v4635 = vmul.f32 %v4632, 1.442695
    %v4636 = vpow.pop %v4635
    %v4637 = vsel %vm314, %v4634, 0.0
    %4638 = vadd.xlane.f32.xlu0 %v4637
    %v4639 = vpop.xlane.xlu0 %4638
    %v4640 = vsel %vm1767, %v4636, 0.0
    %4641 = vadd.xlane.f32.xlu0 %v4640
    %v4642 = vpop.xlane.xlu0 %4641
    %v4643 = vrcp.pop %v4639
    %v4644 = vrcp.pop %v4642
    %v4645 = vmul.f32 %v4634, %v4643
    %v4646 = vmul.f32 %v4636, %v4644
    %v4648 = vsel %vm314, %v4645, 0
    %v4651 = vsel %vm314, %v4646, 0
    %4653 = vmatpush.msra.mxu0 0.0
    %4654 = vmatpush.msra.mxu0 0.0
    %4655 = vmatpush.msra.mxu0 0.0
    %4656 = vmatpush.msra.mxu0 0.0
    %4657 = vmatpush.msra.mxu0 0.0
    %4658 = vmatpush.msra.mxu0 0.0
    %4659 = vmatpush.msra.mxu0 0.0
    %4660 = vmatpush.msra.mxu0 0.0
    %4661 = vmatpush.msra.mxu0 0.0
    %4662 = vmatpush.msra.mxu0 0.0
    %4663 = vmatpush.msra.mxu0 0.0
    %4664 = vmatpush.msra.mxu0 0.0
    %4665 = vmatpush.msra.mxu0 0.0
    %4666 = vmatpush.msra.mxu0 0.0
    %4667 = vmatpush.msra.mxu0 %v1790
    %4668 = vmatpush.msra.mxu0 %v1788
    %4669 = vmatmul.f32.gmra.mxu0 %v4648
    %v4670 = vpop.f32.mrf.mxu0
    %v4671 = vadd.f32 0.0, %v4670
    %4672 = vmatmul.f32.gmra.mxu0 %v4651
    %v4673 = vpop.f32.mrf.mxu0
    %v4674 = vadd.f32 0.0, %v4673
    %4675 = vdwg.mxu0
    %4676 = vrot.lane.b32.xlu0 %v4591, 120
    %v4677 = vpop.permute.xlu0 %4676
    %4678 = vrot.lane.b32.xlu0 %v4594, 120
    %v4679 = vpop.permute.xlu0 %4678
    %v4680 = vsel %vm282, %v4677, 0
    %v4682 = vsel %vm282, %v4679, 0
    %4684 = vmatpush.xpose.msra.mxu0 0.0
    %4685 = vmatpush.xpose.msra.mxu0 0.0
    %4686 = vmatpush.xpose.msra.mxu0 0.0
    %4687 = vmatpush.xpose.msra.mxu0 0.0
    %4688 = vmatpush.xpose.msra.mxu0 0.0
    %4689 = vmatpush.xpose.msra.mxu0 0.0
    %4690 = vmatpush.xpose.msra.mxu0 0.0
    %4691 = vmatpush.xpose.msra.mxu0 0.0
    %4692 = vmatpush.xpose.msra.mxu0 0.0
    %4693 = vmatpush.xpose.msra.mxu0 0.0
    %4694 = vmatpush.xpose.msra.mxu0 0.0
    %4695 = vmatpush.xpose.msra.mxu0 0.0
    %4696 = vmatpush.xpose.msra.mxu0 0.0
    %4697 = vmatpush.xpose.msra.mxu0 0.0
    %4698 = vmatpush.xpose.msra.mxu0 %v1836
    %4699 = vmatpush.xpose.msra.mxu0 %v1834
    %4700 = vmatmul.f32.gmra.mxu0 %v4680
    %v4701 = vpop.f32.mrf.mxu0
    %v4702 = vadd.f32 %v197, %v4701
    %4703 = vmatmul.f32.gmra.mxu0 %v4682
    %v4704 = vpop.f32.mrf.mxu0
    %v4705 = vadd.f32 %v198, %v4704
    %4706 = vdwg.mxu0
    %v4707 = vsel %vm314, %v4702, -inf
    %4708 = vmax.xlane.f32.xlu0 %v4707
    %v4709 = vpop.xlane.xlu0 %4708
    %v4710 = vsel %vm1767, %v4705, -inf
    %4711 = vmax.xlane.f32.xlu0 %v4710
    %v4712 = vpop.xlane.xlu0 %4711
    %v4713 = vsub.f32 %v4702, %v4709
    %v4714 = vsub.f32 %v4705, %v4712
    %v4715 = vmul.f32 %v4713, 1.442695
    %v4716 = vpow.pop %v4715
    %v4717 = vmul.f32 %v4714, 1.442695
    %v4718 = vpow.pop %v4717
    %v4719 = vsel %vm314, %v4716, 0.0
    %4720 = vadd.xlane.f32.xlu0 %v4719
    %v4721 = vpop.xlane.xlu0 %4720
    %v4722 = vsel %vm1767, %v4718, 0.0
    %4723 = vadd.xlane.f32.xlu0 %v4722
    %v4724 = vpop.xlane.xlu0 %4723
    %v4725 = vrcp.pop %v4721
    %v4726 = vrcp.pop %v4724
    %v4727 = vmul.f32 %v4716, %v4725
    %v4728 = vmul.f32 %v4718, %v4726
    %v4730 = vsel %vm314, %v4727, 0
    %v4733 = vsel %vm314, %v4728, 0
    %4735 = vmatpush.msra.mxu0 0.0
    %4736 = vmatpush.msra.mxu0 0.0
    %4737 = vmatpush.msra.mxu0 0.0
    %4738 = vmatpush.msra.mxu0 0.0
    %4739 = vmatpush.msra.mxu0 0.0
    %4740 = vmatpush.msra.mxu0 0.0
    %4741 = vmatpush.msra.mxu0 0.0
    %4742 = vmatpush.msra.mxu0 0.0
    %4743 = vmatpush.msra.mxu0 0.0
    %4744 = vmatpush.msra.mxu0 0.0
    %4745 = vmatpush.msra.mxu0 0.0
    %4746 = vmatpush.msra.mxu0 0.0
    %4747 = vmatpush.msra.mxu0 0.0
    %4748 = vmatpush.msra.mxu0 0.0
    %4749 = vmatpush.msra.mxu0 %v1886
    %4750 = vmatpush.msra.mxu0 %v1884
    %4751 = vmatmul.f32.gmra.mxu0 %v4730
    %v4752 = vpop.f32.mrf.mxu0
    %v4753 = vadd.f32 0.0, %v4752
    %4754 = vmatmul.f32.gmra.mxu0 %v4733
    %v4755 = vpop.f32.mrf.mxu0
    %v4756 = vadd.f32 0.0, %v4755
    %4757 = vdwg.mxu0
    %v4759 = vsel %vm282, %v4753, 0
    %v4762 = vsel %vm282, %v4756, 0
    %4764 = vmatpush.msra.mxu0 0.0
    %4765 = vmatpush.msra.mxu0 0.0
    %4766 = vmatpush.msra.mxu0 0.0
    %4767 = vmatpush.msra.mxu0 0.0
    %4768 = vmatpush.msra.mxu0 0.0
    %4769 = vmatpush.msra.mxu0 0.0
    %4770 = vmatpush.msra.mxu0 0.0
    %4771 = vmatpush.msra.mxu0 0.0
    %4772 = vmatpush.msra.mxu0 0.0
    %4773 = vmatpush.msra.mxu0 0.0
    %4774 = vmatpush.msra.mxu0 0.0
    %4775 = vmatpush.msra.mxu0 0.0
    %4776 = vmatpush.msra.mxu0 0.0
    %4777 = vmatpush.msra.mxu0 0.0
    %4778 = vmatpush.msra.mxu0 0.0
    %4779 = vmatpush.msra.mxu0 %v84
    %4780 = vmatmul.f32.gmra.mxu0 %v4759
    %v4781 = vpop.f32.mrf.mxu0
    %v4782 = vadd.f32 0.0, %v4781
    %4783 = vmatmul.f32.gmra.mxu0 %v4762
    %v4784 = vpop.f32.mrf.mxu0
    %v4785 = vadd.f32 0.0, %v4784
    %4786 = vdwg.mxu0
    %v4788 = vsel %vm282, %v4671, 0
    %v4791 = vsel %vm282, %v4674, 0
    %4793 = vmatpush.msra.mxu0 0.0
    %4794 = vmatpush.msra.mxu0 0.0
    %4795 = vmatpush.msra.mxu0 0.0
    %4796 = vmatpush.msra.mxu0 0.0
    %4797 = vmatpush.msra.mxu0 0.0
    %4798 = vmatpush.msra.mxu0 0.0
    %4799 = vmatpush.msra.mxu0 0.0
    %4800 = vmatpush.msra.mxu0 0.0
    %4801 = vmatpush.msra.mxu0 0.0
    %4802 = vmatpush.msra.mxu0 0.0
    %4803 = vmatpush.msra.mxu0 0.0
    %4804 = vmatpush.msra.mxu0 0.0
    %4805 = vmatpush.msra.mxu0 0.0
    %4806 = vmatpush.msra.mxu0 0.0
    %4807 = vmatpush.msra.mxu0 0.0
    %4808 = vmatpush.msra.mxu0 %v83
    %4809 = vmatmul.f32.gmra.mxu0 %v4788
    %v4810 = vpop.f32.mrf.mxu0
    %v4811 = vadd.f32 %v4782, %v4810
    %4812 = vmatmul.f32.gmra.mxu0 %v4791
    %v4813 = vpop.f32.mrf.mxu0
    %v4814 = vadd.f32 %v4785, %v4813
    %4815 = vdwg.mxu0
    %4816 = vrot.lane.b32.xlu0 %v4591, 112
    %v4817 = vpop.permute.xlu0 %4816
    %4818 = vrot.lane.b32.xlu0 %v4594, 112
    %v4819 = vpop.permute.xlu0 %4818
    %v4820 = vsel %vm282, %v4817, 0
    %v4822 = vsel %vm282, %v4819, 0
    %4824 = vmatpush.xpose.msra.mxu0 0.0
    %4825 = vmatpush.xpose.msra.mxu0 0.0
    %4826 = vmatpush.xpose.msra.mxu0 0.0
    %4827 = vmatpush.xpose.msra.mxu0 0.0
    %4828 = vmatpush.xpose.msra.mxu0 0.0
    %4829 = vmatpush.xpose.msra.mxu0 0.0
    %4830 = vmatpush.xpose.msra.mxu0 0.0
    %4831 = vmatpush.xpose.msra.mxu0 0.0
    %4832 = vmatpush.xpose.msra.mxu0 0.0
    %4833 = vmatpush.xpose.msra.mxu0 0.0
    %4834 = vmatpush.xpose.msra.mxu0 0.0
    %4835 = vmatpush.xpose.msra.mxu0 0.0
    %4836 = vmatpush.xpose.msra.mxu0 0.0
    %4837 = vmatpush.xpose.msra.mxu0 0.0
    %4838 = vmatpush.xpose.msra.mxu0 %v1990
    %4839 = vmatpush.xpose.msra.mxu0 %v1988
    %4840 = vmatmul.f32.gmra.mxu0 %v4820
    %v4841 = vpop.f32.mrf.mxu0
    %v4842 = vadd.f32 %v197, %v4841
    %4843 = vmatmul.f32.gmra.mxu0 %v4822
    %v4844 = vpop.f32.mrf.mxu0
    %v4845 = vadd.f32 %v198, %v4844
    %4846 = vdwg.mxu0
    %v4847 = vsel %vm314, %v4842, -inf
    %4848 = vmax.xlane.f32.xlu0 %v4847
    %v4849 = vpop.xlane.xlu0 %4848
    %v4850 = vsel %vm1767, %v4845, -inf
    %4851 = vmax.xlane.f32.xlu0 %v4850
    %v4852 = vpop.xlane.xlu0 %4851
    %v4853 = vsub.f32 %v4842, %v4849
    %v4854 = vsub.f32 %v4845, %v4852
    %v4855 = vmul.f32 %v4853, 1.442695
    %v4856 = vpow.pop %v4855
    %v4857 = vmul.f32 %v4854, 1.442695
    %v4858 = vpow.pop %v4857
    %v4859 = vsel %vm314, %v4856, 0.0
    %4860 = vadd.xlane.f32.xlu0 %v4859
    %v4861 = vpop.xlane.xlu0 %4860
    %v4862 = vsel %vm1767, %v4858, 0.0
    %4863 = vadd.xlane.f32.xlu0 %v4862
    %v4864 = vpop.xlane.xlu0 %4863
    %v4865 = vrcp.pop %v4861
    %v4866 = vrcp.pop %v4864
    %v4867 = vmul.f32 %v4856, %v4865
    %v4868 = vmul.f32 %v4858, %v4866
    %v4870 = vsel %vm314, %v4867, 0
    %v4873 = vsel %vm314, %v4868, 0
    %4875 = vmatpush.msra.mxu0 0.0
    %4876 = vmatpush.msra.mxu0 0.0
    %4877 = vmatpush.msra.mxu0 0.0
    %4878 = vmatpush.msra.mxu0 0.0
    %4879 = vmatpush.msra.mxu0 0.0
    %4880 = vmatpush.msra.mxu0 0.0
    %4881 = vmatpush.msra.mxu0 0.0
    %4882 = vmatpush.msra.mxu0 0.0
    %4883 = vmatpush.msra.mxu0 0.0
    %4884 = vmatpush.msra.mxu0 0.0
    %4885 = vmatpush.msra.mxu0 0.0
    %4886 = vmatpush.msra.mxu0 0.0
    %4887 = vmatpush.msra.mxu0 0.0
    %4888 = vmatpush.msra.mxu0 0.0
    %4889 = vmatpush.msra.mxu0 %v2040
    %4890 = vmatpush.msra.mxu0 %v2038
    %4891 = vmatmul.f32.gmra.mxu0 %v4870
    %v4892 = vpop.f32.mrf.mxu0
    %v4893 = vadd.f32 0.0, %v4892
    %4894 = vmatmul.f32.gmra.mxu0 %v4873
    %v4895 = vpop.f32.mrf.mxu0
    %v4896 = vadd.f32 0.0, %v4895
    %4897 = vdwg.mxu0
    %v4899 = vsel %vm282, %v4893, 0
    %v4902 = vsel %vm282, %v4896, 0
    %4904 = vmatpush.msra.mxu0 0.0
    %4905 = vmatpush.msra.mxu0 0.0
    %4906 = vmatpush.msra.mxu0 0.0
    %4907 = vmatpush.msra.mxu0 0.0
    %4908 = vmatpush.msra.mxu0 0.0
    %4909 = vmatpush.msra.mxu0 0.0
    %4910 = vmatpush.msra.mxu0 0.0
    %4911 = vmatpush.msra.mxu0 0.0
    %4912 = vmatpush.msra.mxu0 0.0
    %4913 = vmatpush.msra.mxu0 0.0
    %4914 = vmatpush.msra.mxu0 0.0
    %4915 = vmatpush.msra.mxu0 0.0
    %4916 = vmatpush.msra.mxu0 0.0
    %4917 = vmatpush.msra.mxu0 0.0
    %4918 = vmatpush.msra.mxu0 0.0
    %4919 = vmatpush.msra.mxu0 %v85
    %4920 = vmatmul.f32.gmra.mxu0 %v4899
    %v4921 = vpop.f32.mrf.mxu0
    %v4922 = vadd.f32 0.0, %v4921
    %4923 = vmatmul.f32.gmra.mxu0 %v4902
    %v4924 = vpop.f32.mrf.mxu0
    %v4925 = vadd.f32 0.0, %v4924
    %4926 = vdwg.mxu0
    %v4927 = vadd.f32 %v4811, %v4922
    %v4928 = vadd.f32 %v4814, %v4925
    %4929 = vrot.lane.b32.xlu0 %v4591, 104
    %v4930 = vpop.permute.xlu0 %4929
    %4931 = vrot.lane.b32.xlu0 %v4594, 104
    %v4932 = vpop.permute.xlu0 %4931
    %v4933 = vsel %vm282, %v4930, 0
    %v4935 = vsel %vm282, %v4932, 0
    %4937 = vmatpush.xpose.msra.mxu0 0.0
    %4938 = vmatpush.xpose.msra.mxu0 0.0
    %4939 = vmatpush.xpose.msra.mxu0 0.0
    %4940 = vmatpush.xpose.msra.mxu0 0.0
    %4941 = vmatpush.xpose.msra.mxu0 0.0
    %4942 = vmatpush.xpose.msra.mxu0 0.0
    %4943 = vmatpush.xpose.msra.mxu0 0.0
    %4944 = vmatpush.xpose.msra.mxu0 0.0
    %4945 = vmatpush.xpose.msra.mxu0 0.0
    %4946 = vmatpush.xpose.msra.mxu0 0.0
    %4947 = vmatpush.xpose.msra.mxu0 0.0
    %4948 = vmatpush.xpose.msra.mxu0 0.0
    %4949 = vmatpush.xpose.msra.mxu0 0.0
    %4950 = vmatpush.xpose.msra.mxu0 0.0
    %4951 = vmatpush.xpose.msra.mxu0 %v2117
    %4952 = vmatpush.xpose.msra.mxu0 %v2115
    %4953 = vmatmul.f32.gmra.mxu0 %v4933
    %v4954 = vpop.f32.mrf.mxu0
    %v4955 = vadd.f32 %v197, %v4954
    %4956 = vmatmul.f32.gmra.mxu0 %v4935
    %v4957 = vpop.f32.mrf.mxu0
    %v4958 = vadd.f32 %v198, %v4957
    %4959 = vdwg.mxu0
    %v4960 = vsel %vm314, %v4955, -inf
    %4961 = vmax.xlane.f32.xlu0 %v4960
    %v4962 = vpop.xlane.xlu0 %4961
    %v4963 = vsel %vm1767, %v4958, -inf
    %4964 = vmax.xlane.f32.xlu0 %v4963
    %v4965 = vpop.xlane.xlu0 %4964
    %v4966 = vsub.f32 %v4955, %v4962
    %v4967 = vsub.f32 %v4958, %v4965
    %v4968 = vmul.f32 %v4966, 1.442695
    %v4969 = vpow.pop %v4968
    %v4970 = vmul.f32 %v4967, 1.442695
    %v4971 = vpow.pop %v4970
    %v4972 = vsel %vm314, %v4969, 0.0
    %4973 = vadd.xlane.f32.xlu0 %v4972
    %v4974 = vpop.xlane.xlu0 %4973
    %v4975 = vsel %vm1767, %v4971, 0.0
    %4976 = vadd.xlane.f32.xlu0 %v4975
    %v4977 = vpop.xlane.xlu0 %4976
    %v4978 = vrcp.pop %v4974
    %v4979 = vrcp.pop %v4977
    %v4980 = vmul.f32 %v4969, %v4978
    %v4981 = vmul.f32 %v4971, %v4979
    %v4983 = vsel %vm314, %v4980, 0
    %v4986 = vsel %vm314, %v4981, 0
    %4988 = vmatpush.msra.mxu0 0.0
    %4989 = vmatpush.msra.mxu0 0.0
    %4990 = vmatpush.msra.mxu0 0.0
    %4991 = vmatpush.msra.mxu0 0.0
    %4992 = vmatpush.msra.mxu0 0.0
    %4993 = vmatpush.msra.mxu0 0.0
    %4994 = vmatpush.msra.mxu0 0.0
    %4995 = vmatpush.msra.mxu0 0.0
    %4996 = vmatpush.msra.mxu0 0.0
    %4997 = vmatpush.msra.mxu0 0.0
    %4998 = vmatpush.msra.mxu0 0.0
    %4999 = vmatpush.msra.mxu0 0.0
    %5000 = vmatpush.msra.mxu0 0.0
    %5001 = vmatpush.msra.mxu0 0.0
    %5002 = vmatpush.msra.mxu0 %v2167
    %5003 = vmatpush.msra.mxu0 %v2165
    %5004 = vmatmul.f32.gmra.mxu0 %v4983
    %v5005 = vpop.f32.mrf.mxu0
    %v5006 = vadd.f32 0.0, %v5005
    %5007 = vmatmul.f32.gmra.mxu0 %v4986
    %v5008 = vpop.f32.mrf.mxu0
    %v5009 = vadd.f32 0.0, %v5008
    %5010 = vdwg.mxu0
    %v5012 = vsel %vm282, %v5006, 0
    %v5015 = vsel %vm282, %v5009, 0
    %5017 = vmatpush.msra.mxu0 0.0
    %5018 = vmatpush.msra.mxu0 0.0
    %5019 = vmatpush.msra.mxu0 0.0
    %5020 = vmatpush.msra.mxu0 0.0
    %5021 = vmatpush.msra.mxu0 0.0
    %5022 = vmatpush.msra.mxu0 0.0
    %5023 = vmatpush.msra.mxu0 0.0
    %5024 = vmatpush.msra.mxu0 0.0
    %5025 = vmatpush.msra.mxu0 0.0
    %5026 = vmatpush.msra.mxu0 0.0
    %5027 = vmatpush.msra.mxu0 0.0
    %5028 = vmatpush.msra.mxu0 0.0
    %5029 = vmatpush.msra.mxu0 0.0
    %5030 = vmatpush.msra.mxu0 0.0
    %5031 = vmatpush.msra.mxu0 0.0
    %5032 = vmatpush.msra.mxu0 %v86
    %5033 = vmatmul.f32.gmra.mxu0 %v5012
    %v5034 = vpop.f32.mrf.mxu0
    %v5035 = vadd.f32 0.0, %v5034
    %5036 = vmatmul.f32.gmra.mxu0 %v5015
    %v5037 = vpop.f32.mrf.mxu0
    %v5038 = vadd.f32 0.0, %v5037
    %5039 = vdwg.mxu0
    %v5040 = vadd.f32 %v4927, %v5035
    %v5041 = vadd.f32 %v4928, %v5038
    %v5042 = vadd.f32 %v5040, %v2230
    %v5043 = vadd.f32 %v5041, %v2230
    %v5044 = vadd.f32 %v4565, %v5042
    %v5045 = vadd.f32 %v4566, %v5043
    %v5046 = vsel %vm246, %v5044, 0.0
    %5047 = vadd.xlane.f32.xlu0 %v5046
    %v5048 = vpop.xlane.xlu0 %5047
    %v5049 = vsel %vm1648, %v5045, 0.0
    %5050 = vadd.xlane.f32.xlu0 %v5049
    %v5051 = vpop.xlane.xlu0 %5050
    %v5052 = vmul.f32 %v5048, %v797
    %v5053 = vmul.f32 %v5051, %v797
    %v5054 = vsub.f32 %v5044, %v5052
    %v5055 = vsub.f32 %v5045, %v5053
    %v5056 = vmul.f32 %v5054, %v5054
    %v5057 = vmul.f32 %v5055, %v5055
    %v5058 = vsel %vm246, %v5056, 0.0
    %5059 = vadd.xlane.f32.xlu0 %v5058
    %v5060 = vpop.xlane.xlu0 %5059
    %v5061 = vsel %vm1648, %v5057, 0.0
    %5062 = vadd.xlane.f32.xlu0 %v5061
    %v5063 = vpop.xlane.xlu0 %5062
    %v5064 = vmul.f32 %v5060, %v797
    %v5065 = vmul.f32 %v5063, %v797
    %v5066 = vadd.f32 %v5064, 1e-05
    %v5067 = vadd.f32 %v5065, 1e-05
    %v5068 = vrsqrt.pop %v5066
    %v5069 = vmul.f32 %v5068, %v5066
    %v5070 = vmul.f32 %v5069, %v5068
    %v5071 = vmul.f32 0.5, %v5070
    %v5072 = vsub.f32 1.5, %v5071
    %v5073 = vmul.f32 %v5068, %v5072
    %vm5074 = vweird.f32 %v5066
    %vm5075 = vweird.f32 %v5068
    %vm5076 = vmor %vm5074, %vm5075
    %v5077 = vsel %vm5076, %v5068, %v5073
    %v5078 = vrsqrt.pop %v5067
    %v5079 = vmul.f32 %v5078, %v5067
    %v5080 = vmul.f32 %v5079, %v5078
    %v5081 = vmul.f32 0.5, %v5080
    %v5082 = vsub.f32 1.5, %v5081
    %v5083 = vmul.f32 %v5078, %v5082
    %vm5084 = vweird.f32 %v5067
    %vm5085 = vweird.f32 %v5078
    %vm5086 = vmor %vm5084, %vm5085
    %v5087 = vsel %vm5086, %v5078, %v5083
    %v5088 = vmul.f32 %v5054, %v5077
    %v5089 = vmul.f32 %v5055, %v5087
    %v5090 = vmul.f32 %v5088, %v2279
    %v5091 = vmul.f32 %v5089, %v2279
    %v5092 = vadd.f32 %v5090, %v2284
    %v5093 = vadd.f32 %v5091, %v2284
    %v5095 = vsel %vm246, %v5092, 0
    %v5098 = vsel %vm246, %v5093, 0
    %5100 = vmatpush.msra.mxu0 0.0
    %5101 = vmatpush.msra.mxu0 0.0
    %5102 = vmatpush.msra.mxu0 0.0
    %5103 = vmatpush.msra.mxu0 0.0
    %5104 = vmatpush.msra.mxu0 0.0
    %5105 = vmatpush.msra.mxu0 0.0
    %5106 = vmatpush.msra.mxu0 0.0
    %5107 = vmatpush.msra.mxu0 0.0
    %5108 = vmatpush.msra.mxu0 0.0
    %5109 = vmatpush.msra.mxu0 0.0
    %5110 = vmatpush.msra.mxu0 0.0
    %5111 = vmatpush.msra.mxu0 0.0
    %5112 = vmatpush.msra.mxu0 %v91
    %5113 = vmatpush.msra.mxu0 %v90
    %5114 = vmatpush.msra.mxu0 %v89
    %5115 = vmatpush.msra.mxu0 %v88
    %5116 = vmatmul.f32.gmra.mxu0 %v5095
    %v5117 = vpop.f32.mrf.mxu0
    %v5118 = vadd.f32 %v2288, %v5117
    %5119 = vmatmul.f32.gmra.mxu0 %v5098
    %v5120 = vpop.f32.mrf.mxu0
    %v5121 = vadd.f32 %v2288, %v5120
    %5122 = vdwg.mxu0
    %v5123 = vmul.f32 %v5118, 0.5
    %v5124 = vmul.f32 %v5121, 0.5
    %v5125 = vmul.f32 %v5118, %v5118
    %v5126 = vmul.f32 %v5121, %v5121
    %v5127 = vmul.f32 %v5125, %v5118
    %v5128 = vmul.f32 %v5126, %v5121
    %v5129 = vmul.f32 %v5127, 0.044715
    %v5130 = vmul.f32 %v5128, 0.044715
    %v5131 = vadd.f32 %v5118, %v5129
    %v5132 = vadd.f32 %v5121, %v5130
    %v5133 = vmul.f32 %v5131, 0.7978846
    %v5134 = vmul.f32 %v5132, 0.7978846
    %v5135 = vtanh.pop %v5133
    %v5136 = vtanh.pop %v5134
    %v5137 = vadd.f32 %v5135, 1.0
    %v5138 = vadd.f32 %v5136, 1.0
    %v5139 = vmul.f32 %v5123, %v5137
    %v5140 = vmul.f32 %v5124, %v5138
    %v5142 = vsel %vm894, %v5139, 0
    %v5145 = vsel %vm894, %v5140, 0
    %5147 = vmatpush.msra.mxu0 0.0
    %5148 = vmatpush.msra.mxu0 0.0
    %5149 = vmatpush.msra.mxu0 0.0
    %5150 = vmatpush.msra.mxu0 0.0
    %5151 = vmatpush.msra.mxu0 0.0
    %5152 = vmatpush.msra.mxu0 0.0
    %5153 = vmatpush.msra.mxu0 0.0
    %5154 = vmatpush.msra.mxu0 0.0
    %5155 = vmatpush.msra.mxu0 %v100
    %5156 = vmatpush.msra.mxu0 %v99
    %5157 = vmatpush.msra.mxu0 %v98
    %5158 = vmatpush.msra.mxu0 %v97
    %5159 = vmatpush.msra.mxu0 %v96
    %5160 = vmatpush.msra.mxu0 %v95
    %5161 = vmatpush.msra.mxu0 %v94
    %5162 = vmatpush.msra.mxu0 %v93
    %5163 = vmatmul.f32.gmra.mxu0 %v5142
    %v5164 = vpop.f32.mrf.mxu0
    %v5165 = vadd.f32 %v2336, %v5164
    %5166 = vmatmul.f32.gmra.mxu0 %v5145
    %v5167 = vpop.f32.mrf.mxu0
    %v5168 = vadd.f32 %v2336, %v5167
    %5169 = vdwg.mxu0
    %v5170 = vadd.f32 %v5092, %v5165
    %v5171 = vadd.f32 %v5093, %v5168
    %v5172 = vsel %vm246, %v5170, 0.0
    %5173 = vadd.xlane.f32.xlu0 %v5172
    %v5174 = vpop.xlane.xlu0 %5173
    %v5175 = vsel %vm1648, %v5171, 0.0
    %5176 = vadd.xlane.f32.xlu0 %v5175
    %v5177 = vpop.xlane.xlu0 %5176
    %v5178 = vmul.f32 %v5174, %v797
    %v5179 = vmul.f32 %v5177, %v797
    %v5180 = vsub.f32 %v5170, %v5178
    %v5181 = vsub.f32 %v5171, %v5179
    %v5182 = vmul.f32 %v5180, %v5180
    %v5183 = vmul.f32 %v5181, %v5181
    %v5184 = vsel %vm246, %v5182, 0.0
    %5185 = vadd.xlane.f32.xlu0 %v5184
    %v5186 = vpop.xlane.xlu0 %5185
    %v5187 = vsel %vm1648, %v5183, 0.0
    %5188 = vadd.xlane.f32.xlu0 %v5187
    %v5189 = vpop.xlane.xlu0 %5188
    %v5190 = vmul.f32 %v5186, %v797
    %v5191 = vmul.f32 %v5189, %v797
    %v5192 = vadd.f32 %v5190, 1e-05
    %v5193 = vadd.f32 %v5191, 1e-05
    %v5194 = vrsqrt.pop %v5192
    %v5195 = vmul.f32 %v5194, %v5192
    %v5196 = vmul.f32 %v5195, %v5194
    %v5197 = vmul.f32 0.5, %v5196
    %v5198 = vsub.f32 1.5, %v5197
    %v5199 = vmul.f32 %v5194, %v5198
    %vm5200 = vweird.f32 %v5192
    %vm5201 = vweird.f32 %v5194
    %vm5202 = vmor %vm5200, %vm5201
    %v5203 = vsel %vm5202, %v5194, %v5199
    %v5204 = vrsqrt.pop %v5193
    %v5205 = vmul.f32 %v5204, %v5193
    %v5206 = vmul.f32 %v5205, %v5204
    %v5207 = vmul.f32 0.5, %v5206
    %v5208 = vsub.f32 1.5, %v5207
    %v5209 = vmul.f32 %v5204, %v5208
    %vm5210 = vweird.f32 %v5193
    %vm5211 = vweird.f32 %v5204
    %vm5212 = vmor %vm5210, %vm5211
    %v5213 = vsel %vm5212, %v5204, %v5209
    %v5214 = vmul.f32 %v5180, %v5203
    %v5215 = vmul.f32 %v5181, %v5213
    %v5216 = vmul.f32 %v5214, %v2412
    %v5217 = vmul.f32 %v5215, %v2412
    %v5218 = vadd.f32 %v5216, %v2417
    %v5219 = vadd.f32 %v5217, %v2417
    %v5220 = vadd.s32 %v2421, 2
    %vm5221 = vcmp.eq.s32.totalorder %v116, %v5220
    %v5222 = vsel %vm5221, 1, 0
    %v5223 = vcvt.s32.f32 %v5222
    %v5225 = vsel %vm1169, %v5223, 0
    %v5228 = vsel %vm218, %v5219, 0
    %5230 = vmatpush.msra.mxu0 0.0
    %5231 = vmatpush.msra.mxu0 0.0
    %5232 = vmatpush.msra.mxu0 0.0
    %5233 = vmatpush.msra.mxu0 0.0
    %5234 = vmatpush.msra.mxu0 0.0
    %5235 = vmatpush.msra.mxu0 0.0
    %5236 = vmatpush.msra.mxu0 0.0
    %5237 = vmatpush.msra.mxu0 0.0
    %5238 = vmatpush.msra.mxu0 0.0
    %5239 = vmatpush.msra.mxu0 0.0
    %5240 = vmatpush.msra.mxu0 0.0
    %5241 = vmatpush.msra.mxu0 0.0
    %5242 = vmatpush.msra.mxu0 0.0
    %5243 = vmatpush.msra.mxu0 0.0
    %5244 = vmatpush.msra.mxu0 %v5228
    %5245 = vmatpush.msra.mxu0 %v5218
    %5246 = vmatmul.f32.gmra.mxu0 %v5225
    %v5247 = vpop.f32.mrf.mxu0
    %v5248 = vadd.f32 0.0, %v5247
    %5249 = vdwg.mxu0
    %v5251 = vsel %vm246, %v5248, 0
    %5253 = vmatpush.msra.mxu0 0.0
    %5254 = vmatpush.msra.mxu0 0.0
    %5255 = vmatpush.msra.mxu0 0.0
    %5256 = vmatpush.msra.mxu0 0.0
    %5257 = vmatpush.msra.mxu0 0.0
    %5258 = vmatpush.msra.mxu0 0.0
    %5259 = vmatpush.msra.mxu0 0.0
    %5260 = vmatpush.msra.mxu0 0.0
    %5261 = vmatpush.msra.mxu0 0.0
    %5262 = vmatpush.msra.mxu0 0.0
    %5263 = vmatpush.msra.mxu0 0.0
    %5264 = vmatpush.msra.mxu0 0.0
    %5265 = vmatpush.msra.mxu0 %v105
    %5266 = vmatpush.msra.mxu0 %v104
    %5267 = vmatpush.msra.mxu0 %v103
    %5268 = vmatpush.msra.mxu0 %v102
    %5269 = vmatmul.f32.gmra.mxu0 %v5251
    %v5270 = vpop.f32.mrf.mxu0
    %v5271 = vadd.f32 %v2451, %v5270
    %5272 = vdwg.mxu0
    %v5273 = vsel %vm2475, %v5271, -inf
    %5274 = vmax.xlane.f32.xlu0 %v5273
    %v5275 = vpop.xlane.xlu0 %5274
    %vm5276 = vcmp.ge.f32.partialorder %v5271, %v5275
    %v5277 = vsel %vm5276, %v116, 50
    %v5278 = vsel %vm2475, %v5277, 2147483647
    %v5279 = vand.u32 %v5278, 65535
    %v5280 = vshra.s32 %v5278, 16
    %v5281 = vcvt.s32.f32 %v5279
    %v5282 = vcvt.s32.f32 %v5280
    %5283 = vmin.xlane.f32.xlu0 %v5282
    %v5284 = vpop.xlane.xlu0 %5283
    %vm5285 = vcmp.eq.f32.partialorder %v5282, %v5284
    %v5286 = vsel %vm5285, %v5281, inf
    %5287 = vmin.xlane.f32.xlu0 %v5286
    %v5288 = vpop.xlane.xlu0 %5287
    %v5289 = vcvt.f32.s32 %v5288
    %v5290 = vcvt.f32.s32 %v5284
    %v5291 = vshll.u32 %v5290, 16
    %v5292 = vadd.s32 %v5291, %v5289
    %vm5293 = vcmp.gt.s32.totalorder %v3897, 0
    %v5294 = vsel %vm5293, 1, %v5292
    %vm5295 = vcmp.eq.s32.totalorder %v5294, 2
    %vm5296 = vmor %vm3896, %vm5295
    %v5297 = vsel %vm5296, 1, 0
    %vm5298 = vcmp.eq.s32.totalorder %v116, 3
    %v5299 = vsel %vm5298, %v5294, %v3899
    %vm5300 = vcmp.eq.s32.totalorder %v5294, %v116
    %v5301 = vsel %vm5300, 1, 0
    %v5302 = vcvt.s32.f32 %v5301
    %v5303 = vperm.slane %v37, 3
    %v5305 = vsel %vm211, %v5302, 0
    %5307 = vmatpush.msra.mxu0 0.0
    %5308 = vmatpush.msra.mxu0 0.0
    %5309 = vmatpush.msra.mxu0 0.0
    %5310 = vmatpush.msra.mxu0 0.0
    %5311 = vmatpush.msra.mxu0 0.0
    %5312 = vmatpush.msra.mxu0 0.0
    %5313 = vmatpush.msra.mxu0 0.0
    %5314 = vmatpush.msra.mxu0 0.0
    %5315 = vmatpush.msra.mxu0 0.0
    %5316 = vmatpush.msra.mxu0 %v220
    %5317 = vmatpush.msra.mxu0 %v35
    %5318 = vmatpush.msra.mxu0 %v34
    %5319 = vmatpush.msra.mxu0 %v33
    %5320 = vmatpush.msra.mxu0 %v32
    %5321 = vmatpush.msra.mxu0 %v31
    %5322 = vmatpush.msra.mxu0 %v30
    %5323 = vmatmul.f32.gmra.mxu0 %v5305
    %v5324 = vpop.f32.mrf.mxu0
    %v5325 = vadd.f32 %v5303, %v5324
    %5326 = vdwg.mxu0
    %v5327 = vadd.s32 %v1038, 3
    %vm5328 = vcmp.eq.s32.totalorder %v113, %v5327
    %vm5329 = vcmp.eq.s32.totalorder %v114, %v5327
    %v5330 = vsel %vm5328, 1, 0
    %v5331 = vsel %vm5329, 1, 0
    %v5332 = vcvt.s32.f32 %v5330
    %v5333 = vcvt.s32.f32 %v5331
    %vm5334 = vcmp.eq.s32.totalorder %v113, 3
    %vm5335 = vcmp.eq.s32.totalorder %v114, 3
    %vm5336 = vmor %vm117, %vm5334
    %vm5337 = vmor %vm118, %vm5335
    %vm5338 = vcmp.eq.s32.totalorder %v113, 8
    %vm5339 = vcmp.eq.s32.totalorder %v114, 8
    %vm5340 = vmor %vm5336, %vm5338
    %vm5341 = vmor %vm5337, %vm5339
    %v5343 = vsel %vm1053, %v5332, 0
    %v5346 = vsel %vm1053, %v5333, 0
    %v5349 = vsel %vm218, %v5325, 0
    %5351 = vmatpush.msra.mxu0 0.0
    %5352 = vmatpush.msra.mxu0 0.0
    %5353 = vmatpush.msra.mxu0 0.0
    %5354 = vmatpush.msra.mxu0 0.0
    %5355 = vmatpush.msra.mxu0 0.0
    %5356 = vmatpush.msra.mxu0 0.0
    %5357 = vmatpush.msra.mxu0 0.0
    %5358 = vmatpush.msra.mxu0 0.0
    %5359 = vmatpush.msra.mxu0 0.0
    %5360 = vmatpush.msra.mxu0 0.0
    %5361 = vmatpush.msra.mxu0 0.0
    %5362 = vmatpush.msra.mxu0 0.0
    %5363 = vmatpush.msra.mxu0 0.0
    %5364 = vmatpush.msra.mxu0 0.0
    %5365 = vmatpush.msra.mxu0 0.0
    %5366 = vmatpush.msra.mxu0 %v5349
    %5367 = vmatmul.f32.gmra.mxu0 %v5343
    %v5368 = vpop.f32.mrf.mxu0
    %v5369 = vadd.f32 0.0, %v5368
    %5370 = vmatmul.f32.gmra.mxu0 %v5346
    %v5371 = vpop.f32.mrf.mxu0
    %v5372 = vadd.f32 0.0, %v5371
    %5373 = vdwg.mxu0
    %v5374 = vsel %vm5340, 1, 0
    %v5375 = vsel %vm5341, 1, 0
    %vm5376 = vcmp.eq.s32.totalorder %v5374, 1
    %vm5377 = vcmp.eq.s32.totalorder %v5375, 1
    %v5378 = vsel %vm5376, %v5369, %v3978
    %v5379 = vsel %vm5377, %v5372, %v3979
    %v5381 = vsel %vm246, %v5378, 0
    %v5384 = vsel %vm246, %v5379, 0
    %5386 = vmatpush.msra.mxu0 0.0
    %5387 = vmatpush.msra.mxu0 0.0
    %5388 = vmatpush.msra.mxu0 0.0
    %5389 = vmatpush.msra.mxu0 0.0
    %5390 = vmatpush.msra.mxu0 0.0
    %5391 = vmatpush.msra.mxu0 0.0
    %5392 = vmatpush.msra.mxu0 0.0
    %5393 = vmatpush.msra.mxu0 0.0
    %5394 = vmatpush.msra.mxu0 0.0
    %5395 = vmatpush.msra.mxu0 0.0
    %5396 = vmatpush.msra.mxu0 0.0
    %5397 = vmatpush.msra.mxu0 0.0
    %5398 = vmatpush.msra.mxu0 %v66
    %5399 = vmatpush.msra.mxu0 %v65
    %5400 = vmatpush.msra.mxu0 %v64
    %5401 = vmatpush.msra.mxu0 %v63
    %5402 = vmatmul.f32.gmra.mxu0 %v5381
    %v5403 = vpop.f32.mrf.mxu0
    %v5404 = vadd.f32 %v1102, %v5403
    %5405 = vmatmul.f32.gmra.mxu0 %v5384
    %v5406 = vpop.f32.mrf.mxu0
    %v5407 = vadd.f32 %v1102, %v5406
    %5408 = vdwg.mxu0
    %5411 = vrot.lane.b32.xlu0 %v5404, 96
    %v5412 = vpop.permute.xlu0 %5411
    %5413 = vrot.lane.b32.xlu0 %v5407, 96
    %v5414 = vpop.permute.xlu0 %5413
    %v5415 = vsel %vm282, %v5404, 0
    %v5417 = vsel %vm282, %v5407, 0
    %v5419 = vsel %vm282, %v5412, 0
    %v5421 = vsel %vm282, %v5414, 0
    %5423 = vmatpush.xpose.msra.mxu0 0.0
    %5424 = vmatpush.xpose.msra.mxu0 0.0
    %5425 = vmatpush.xpose.msra.mxu0 0.0
    %5426 = vmatpush.xpose.msra.mxu0 0.0
    %5427 = vmatpush.xpose.msra.mxu0 0.0
    %5428 = vmatpush.xpose.msra.mxu0 0.0
    %5429 = vmatpush.xpose.msra.mxu0 0.0
    %5430 = vmatpush.xpose.msra.mxu0 0.0
    %5431 = vmatpush.xpose.msra.mxu0 0.0
    %5432 = vmatpush.xpose.msra.mxu0 0.0
    %5433 = vmatpush.xpose.msra.mxu0 0.0
    %5434 = vmatpush.xpose.msra.mxu0 0.0
    %5435 = vmatpush.xpose.msra.mxu0 0.0
    %5436 = vmatpush.xpose.msra.mxu0 0.0
    %5437 = vmatpush.xpose.msra.mxu0 %v5421
    %5438 = vmatpush.xpose.msra.mxu0 %v5419
    %5439 = vmatmul.f32.gmra.mxu0 %v5415
    %v5440 = vpop.f32.mrf.mxu0
    %v5441 = vadd.f32 %v183, %v5440
    %5442 = vmatmul.f32.gmra.mxu0 %v5417
    %v5443 = vpop.f32.mrf.mxu0
    %v5444 = vadd.f32 %v184, %v5443
    %5445 = vdwg.mxu0
    %v5446 = vsel %vm1169, %v5441, -inf
    %5447 = vmax.xlane.f32.xlu0 %v5446
    %v5448 = vpop.xlane.xlu0 %5447
    %v5449 = vsel %vm1173, %v5444, -inf
    %5450 = vmax.xlane.f32.xlu0 %v5449
    %v5451 = vpop.xlane.xlu0 %5450
    %v5452 = vsub.f32 %v5441, %v5448
    %v5453 = vsub.f32 %v5444, %v5451
    %v5454 = vmul.f32 %v5452, 1.442695
    %v5455 = vpow.pop %v5454
    %v5456 = vmul.f32 %v5453, 1.442695
    %v5457 = vpow.pop %v5456
    %v5458 = vsel %vm1169, %v5455, 0.0
    %5459 = vadd.xlane.f32.xlu0 %v5458
    %v5460 = vpop.xlane.xlu0 %5459
    %v5461 = vsel %vm1173, %v5457, 0.0
    %5462 = vadd.xlane.f32.xlu0 %v5461
    %v5463 = vpop.xlane.xlu0 %5462
    %v5464 = vrcp.pop %v5460
    %v5465 = vrcp.pop %v5463
    %v5466 = vmul.f32 %v5455, %v5464
    %v5467 = vmul.f32 %v5457, %v5465
    %5468 = vrot.lane.b32.xlu0 %v5404, 64
    %v5469 = vpop.permute.xlu0 %5468
    %5470 = vrot.lane.b32.xlu0 %v5407, 64
    %v5471 = vpop.permute.xlu0 %5470
    %v5474 = vsel %vm1169, %v5466, 0
    %v5477 = vsel %vm1169, %v5467, 0
    %v5479 = vsel %vm218, %v5471, 0
    %5481 = vmatpush.msra.mxu0 0.0
    %5482 = vmatpush.msra.mxu0 0.0
    %5483 = vmatpush.msra.mxu0 0.0
    %5484 = vmatpush.msra.mxu0 0.0
    %5485 = vmatpush.msra.mxu0 0.0
    %5486 = vmatpush.msra.mxu0 0.0
    %5487 = vmatpush.msra.mxu0 0.0
    %5488 = vmatpush.msra.mxu0 0.0
    %5489 = vmatpush.msra.mxu0 0.0
    %5490 = vmatpush.msra.mxu0 0.0
    %5491 = vmatpush.msra.mxu0 0.0
    %5492 = vmatpush.msra.mxu0 0.0
    %5493 = vmatpush.msra.mxu0 0.0
    %5494 = vmatpush.msra.mxu0 0.0
    %5495 = vmatpush.msra.mxu0 %v5479
    %5496 = vmatpush.msra.mxu0 %v5469
    %5497 = vmatmul.f32.gmra.mxu0 %v5474
    %v5498 = vpop.f32.mrf.mxu0
    %v5499 = vadd.f32 0.0, %v5498
    %5500 = vmatmul.f32.gmra.mxu0 %v5477
    %v5501 = vpop.f32.mrf.mxu0
    %v5502 = vadd.f32 0.0, %v5501
    %5503 = vdwg.mxu0
    %5504 = vrot.lane.b32.xlu0 %v5404, 120
    %v5505 = vpop.permute.xlu0 %5504
    %5506 = vrot.lane.b32.xlu0 %v5407, 120
    %v5507 = vpop.permute.xlu0 %5506
    %5508 = vrot.lane.b32.xlu0 %v5404, 88
    %v5509 = vpop.permute.xlu0 %5508
    %5510 = vrot.lane.b32.xlu0 %v5407, 88
    %v5511 = vpop.permute.xlu0 %5510
    %v5512 = vsel %vm282, %v5505, 0
    %v5514 = vsel %vm282, %v5507, 0
    %v5516 = vsel %vm282, %v5509, 0
    %v5518 = vsel %vm282, %v5511, 0
    %5520 = vmatpush.xpose.msra.mxu0 0.0
    %5521 = vmatpush.xpose.msra.mxu0 0.0
    %5522 = vmatpush.xpose.msra.mxu0 0.0
    %5523 = vmatpush.xpose.msra.mxu0 0.0
    %5524 = vmatpush.xpose.msra.mxu0 0.0
    %5525 = vmatpush.xpose.msra.mxu0 0.0
    %5526 = vmatpush.xpose.msra.mxu0 0.0
    %5527 = vmatpush.xpose.msra.mxu0 0.0
    %5528 = vmatpush.xpose.msra.mxu0 0.0
    %5529 = vmatpush.xpose.msra.mxu0 0.0
    %5530 = vmatpush.xpose.msra.mxu0 0.0
    %5531 = vmatpush.xpose.msra.mxu0 0.0
    %5532 = vmatpush.xpose.msra.mxu0 0.0
    %5533 = vmatpush.xpose.msra.mxu0 0.0
    %5534 = vmatpush.xpose.msra.mxu0 %v5518
    %5535 = vmatpush.xpose.msra.mxu0 %v5516
    %5536 = vmatmul.f32.gmra.mxu0 %v5512
    %v5537 = vpop.f32.mrf.mxu0
    %v5538 = vadd.f32 %v183, %v5537
    %5539 = vmatmul.f32.gmra.mxu0 %v5514
    %v5540 = vpop.f32.mrf.mxu0
    %v5541 = vadd.f32 %v184, %v5540
    %5542 = vdwg.mxu0
    %v5543 = vsel %vm1169, %v5538, -inf
    %5544 = vmax.xlane.f32.xlu0 %v5543
    %v5545 = vpop.xlane.xlu0 %5544
    %v5546 = vsel %vm1173, %v5541, -inf
    %5547 = vmax.xlane.f32.xlu0 %v5546
    %v5548 = vpop.xlane.xlu0 %5547
    %v5549 = vsub.f32 %v5538, %v5545
    %v5550 = vsub.f32 %v5541, %v5548
    %v5551 = vmul.f32 %v5549, 1.442695
    %v5552 = vpow.pop %v5551
    %v5553 = vmul.f32 %v5550, 1.442695
    %v5554 = vpow.pop %v5553
    %v5555 = vsel %vm1169, %v5552, 0.0
    %5556 = vadd.xlane.f32.xlu0 %v5555
    %v5557 = vpop.xlane.xlu0 %5556
    %v5558 = vsel %vm1173, %v5554, 0.0
    %5559 = vadd.xlane.f32.xlu0 %v5558
    %v5560 = vpop.xlane.xlu0 %5559
    %v5561 = vrcp.pop %v5557
    %v5562 = vrcp.pop %v5560
    %v5563 = vmul.f32 %v5552, %v5561
    %v5564 = vmul.f32 %v5554, %v5562
    %5565 = vrot.lane.b32.xlu0 %v5404, 56
    %v5566 = vpop.permute.xlu0 %5565
    %5567 = vrot.lane.b32.xlu0 %v5407, 56
    %v5568 = vpop.permute.xlu0 %5567
    %v5571 = vsel %vm1169, %v5563, 0
    %v5574 = vsel %vm1169, %v5564, 0
    %v5576 = vsel %vm218, %v5568, 0
    %5578 = vmatpush.msra.mxu0 0.0
    %5579 = vmatpush.msra.mxu0 0.0
    %5580 = vmatpush.msra.mxu0 0.0
    %5581 = vmatpush.msra.mxu0 0.0
    %5582 = vmatpush.msra.mxu0 0.0
    %5583 = vmatpush.msra.mxu0 0.0
    %5584 = vmatpush.msra.mxu0 0.0
    %5585 = vmatpush.msra.mxu0 0.0
    %5586 = vmatpush.msra.mxu0 0.0
    %5587 = vmatpush.msra.mxu0 0.0
    %5588 = vmatpush.msra.mxu0 0.0
    %5589 = vmatpush.msra.mxu0 0.0
    %5590 = vmatpush.msra.mxu0 0.0
    %5591 = vmatpush.msra.mxu0 0.0
    %5592 = vmatpush.msra.mxu0 %v5576
    %5593 = vmatpush.msra.mxu0 %v5566
    %5594 = vmatmul.f32.gmra.mxu0 %v5571
    %v5595 = vpop.f32.mrf.mxu0
    %v5596 = vadd.f32 0.0, %v5595
    %5597 = vmatmul.f32.gmra.mxu0 %v5574
    %v5598 = vpop.f32.mrf.mxu0
    %v5599 = vadd.f32 0.0, %v5598
    %5600 = vdwg.mxu0
    %v5602 = vsel %vm282, %v5596, 0
    %v5605 = vsel %vm282, %v5599, 0
    %5607 = vmatpush.msra.mxu0 0.0
    %5608 = vmatpush.msra.mxu0 0.0
    %5609 = vmatpush.msra.mxu0 0.0
    %5610 = vmatpush.msra.mxu0 0.0
    %5611 = vmatpush.msra.mxu0 0.0
    %5612 = vmatpush.msra.mxu0 0.0
    %5613 = vmatpush.msra.mxu0 0.0
    %5614 = vmatpush.msra.mxu0 0.0
    %5615 = vmatpush.msra.mxu0 0.0
    %5616 = vmatpush.msra.mxu0 0.0
    %5617 = vmatpush.msra.mxu0 0.0
    %5618 = vmatpush.msra.mxu0 0.0
    %5619 = vmatpush.msra.mxu0 0.0
    %5620 = vmatpush.msra.mxu0 0.0
    %5621 = vmatpush.msra.mxu0 0.0
    %5622 = vmatpush.msra.mxu0 %v69
    %5623 = vmatmul.f32.gmra.mxu0 %v5602
    %v5624 = vpop.f32.mrf.mxu0
    %v5625 = vadd.f32 0.0, %v5624
    %5626 = vmatmul.f32.gmra.mxu0 %v5605
    %v5627 = vpop.f32.mrf.mxu0
    %v5628 = vadd.f32 0.0, %v5627
    %5629 = vdwg.mxu0
    %v5631 = vsel %vm282, %v5499, 0
    %v5634 = vsel %vm282, %v5502, 0
    %5636 = vmatpush.msra.mxu0 0.0
    %5637 = vmatpush.msra.mxu0 0.0
    %5638 = vmatpush.msra.mxu0 0.0
    %5639 = vmatpush.msra.mxu0 0.0
    %5640 = vmatpush.msra.mxu0 0.0
    %5641 = vmatpush.msra.mxu0 0.0
    %5642 = vmatpush.msra.mxu0 0.0
    %5643 = vmatpush.msra.mxu0 0.0
    %5644 = vmatpush.msra.mxu0 0.0
    %5645 = vmatpush.msra.mxu0 0.0
    %5646 = vmatpush.msra.mxu0 0.0
    %5647 = vmatpush.msra.mxu0 0.0
    %5648 = vmatpush.msra.mxu0 0.0
    %5649 = vmatpush.msra.mxu0 0.0
    %5650 = vmatpush.msra.mxu0 0.0
    %5651 = vmatpush.msra.mxu0 %v68
    %5652 = vmatmul.f32.gmra.mxu0 %v5631
    %v5653 = vpop.f32.mrf.mxu0
    %v5654 = vadd.f32 %v5625, %v5653
    %5655 = vmatmul.f32.gmra.mxu0 %v5634
    %v5656 = vpop.f32.mrf.mxu0
    %v5657 = vadd.f32 %v5628, %v5656
    %5658 = vdwg.mxu0
    %5659 = vrot.lane.b32.xlu0 %v5404, 112
    %v5660 = vpop.permute.xlu0 %5659
    %5661 = vrot.lane.b32.xlu0 %v5407, 112
    %v5662 = vpop.permute.xlu0 %5661
    %5663 = vrot.lane.b32.xlu0 %v5404, 80
    %v5664 = vpop.permute.xlu0 %5663
    %5665 = vrot.lane.b32.xlu0 %v5407, 80
    %v5666 = vpop.permute.xlu0 %5665
    %v5667 = vsel %vm282, %v5660, 0
    %v5669 = vsel %vm282, %v5662, 0
    %v5671 = vsel %vm282, %v5664, 0
    %v5673 = vsel %vm282, %v5666, 0
    %5675 = vmatpush.xpose.msra.mxu0 0.0
    %5676 = vmatpush.xpose.msra.mxu0 0.0
    %5677 = vmatpush.xpose.msra.mxu0 0.0
    %5678 = vmatpush.xpose.msra.mxu0 0.0
    %5679 = vmatpush.xpose.msra.mxu0 0.0
    %5680 = vmatpush.xpose.msra.mxu0 0.0
    %5681 = vmatpush.xpose.msra.mxu0 0.0
    %5682 = vmatpush.xpose.msra.mxu0 0.0
    %5683 = vmatpush.xpose.msra.mxu0 0.0
    %5684 = vmatpush.xpose.msra.mxu0 0.0
    %5685 = vmatpush.xpose.msra.mxu0 0.0
    %5686 = vmatpush.xpose.msra.mxu0 0.0
    %5687 = vmatpush.xpose.msra.mxu0 0.0
    %5688 = vmatpush.xpose.msra.mxu0 0.0
    %5689 = vmatpush.xpose.msra.mxu0 %v5673
    %5690 = vmatpush.xpose.msra.mxu0 %v5671
    %5691 = vmatmul.f32.gmra.mxu0 %v5667
    %v5692 = vpop.f32.mrf.mxu0
    %v5693 = vadd.f32 %v183, %v5692
    %5694 = vmatmul.f32.gmra.mxu0 %v5669
    %v5695 = vpop.f32.mrf.mxu0
    %v5696 = vadd.f32 %v184, %v5695
    %5697 = vdwg.mxu0
    %v5698 = vsel %vm1169, %v5693, -inf
    %5699 = vmax.xlane.f32.xlu0 %v5698
    %v5700 = vpop.xlane.xlu0 %5699
    %v5701 = vsel %vm1173, %v5696, -inf
    %5702 = vmax.xlane.f32.xlu0 %v5701
    %v5703 = vpop.xlane.xlu0 %5702
    %v5704 = vsub.f32 %v5693, %v5700
    %v5705 = vsub.f32 %v5696, %v5703
    %v5706 = vmul.f32 %v5704, 1.442695
    %v5707 = vpow.pop %v5706
    %v5708 = vmul.f32 %v5705, 1.442695
    %v5709 = vpow.pop %v5708
    %v5710 = vsel %vm1169, %v5707, 0.0
    %5711 = vadd.xlane.f32.xlu0 %v5710
    %v5712 = vpop.xlane.xlu0 %5711
    %v5713 = vsel %vm1173, %v5709, 0.0
    %5714 = vadd.xlane.f32.xlu0 %v5713
    %v5715 = vpop.xlane.xlu0 %5714
    %v5716 = vrcp.pop %v5712
    %v5717 = vrcp.pop %v5715
    %v5718 = vmul.f32 %v5707, %v5716
    %v5719 = vmul.f32 %v5709, %v5717
    %5720 = vrot.lane.b32.xlu0 %v5404, 48
    %v5721 = vpop.permute.xlu0 %5720
    %5722 = vrot.lane.b32.xlu0 %v5407, 48
    %v5723 = vpop.permute.xlu0 %5722
    %v5726 = vsel %vm1169, %v5718, 0
    %v5729 = vsel %vm1169, %v5719, 0
    %v5731 = vsel %vm218, %v5723, 0
    %5733 = vmatpush.msra.mxu0 0.0
    %5734 = vmatpush.msra.mxu0 0.0
    %5735 = vmatpush.msra.mxu0 0.0
    %5736 = vmatpush.msra.mxu0 0.0
    %5737 = vmatpush.msra.mxu0 0.0
    %5738 = vmatpush.msra.mxu0 0.0
    %5739 = vmatpush.msra.mxu0 0.0
    %5740 = vmatpush.msra.mxu0 0.0
    %5741 = vmatpush.msra.mxu0 0.0
    %5742 = vmatpush.msra.mxu0 0.0
    %5743 = vmatpush.msra.mxu0 0.0
    %5744 = vmatpush.msra.mxu0 0.0
    %5745 = vmatpush.msra.mxu0 0.0
    %5746 = vmatpush.msra.mxu0 0.0
    %5747 = vmatpush.msra.mxu0 %v5731
    %5748 = vmatpush.msra.mxu0 %v5721
    %5749 = vmatmul.f32.gmra.mxu0 %v5726
    %v5750 = vpop.f32.mrf.mxu0
    %v5751 = vadd.f32 0.0, %v5750
    %5752 = vmatmul.f32.gmra.mxu0 %v5729
    %v5753 = vpop.f32.mrf.mxu0
    %v5754 = vadd.f32 0.0, %v5753
    %5755 = vdwg.mxu0
    %v5757 = vsel %vm282, %v5751, 0
    %v5760 = vsel %vm282, %v5754, 0
    %5762 = vmatpush.msra.mxu0 0.0
    %5763 = vmatpush.msra.mxu0 0.0
    %5764 = vmatpush.msra.mxu0 0.0
    %5765 = vmatpush.msra.mxu0 0.0
    %5766 = vmatpush.msra.mxu0 0.0
    %5767 = vmatpush.msra.mxu0 0.0
    %5768 = vmatpush.msra.mxu0 0.0
    %5769 = vmatpush.msra.mxu0 0.0
    %5770 = vmatpush.msra.mxu0 0.0
    %5771 = vmatpush.msra.mxu0 0.0
    %5772 = vmatpush.msra.mxu0 0.0
    %5773 = vmatpush.msra.mxu0 0.0
    %5774 = vmatpush.msra.mxu0 0.0
    %5775 = vmatpush.msra.mxu0 0.0
    %5776 = vmatpush.msra.mxu0 0.0
    %5777 = vmatpush.msra.mxu0 %v70
    %5778 = vmatmul.f32.gmra.mxu0 %v5757
    %v5779 = vpop.f32.mrf.mxu0
    %v5780 = vadd.f32 0.0, %v5779
    %5781 = vmatmul.f32.gmra.mxu0 %v5760
    %v5782 = vpop.f32.mrf.mxu0
    %v5783 = vadd.f32 0.0, %v5782
    %5784 = vdwg.mxu0
    %v5785 = vadd.f32 %v5654, %v5780
    %v5786 = vadd.f32 %v5657, %v5783
    %5787 = vrot.lane.b32.xlu0 %v5404, 104
    %v5788 = vpop.permute.xlu0 %5787
    %5789 = vrot.lane.b32.xlu0 %v5407, 104
    %v5790 = vpop.permute.xlu0 %5789
    %5791 = vrot.lane.b32.xlu0 %v5404, 72
    %v5792 = vpop.permute.xlu0 %5791
    %5793 = vrot.lane.b32.xlu0 %v5407, 72
    %v5794 = vpop.permute.xlu0 %5793
    %v5795 = vsel %vm282, %v5788, 0
    %v5797 = vsel %vm282, %v5790, 0
    %v5799 = vsel %vm282, %v5792, 0
    %v5801 = vsel %vm282, %v5794, 0
    %5803 = vmatpush.xpose.msra.mxu0 0.0
    %5804 = vmatpush.xpose.msra.mxu0 0.0
    %5805 = vmatpush.xpose.msra.mxu0 0.0
    %5806 = vmatpush.xpose.msra.mxu0 0.0
    %5807 = vmatpush.xpose.msra.mxu0 0.0
    %5808 = vmatpush.xpose.msra.mxu0 0.0
    %5809 = vmatpush.xpose.msra.mxu0 0.0
    %5810 = vmatpush.xpose.msra.mxu0 0.0
    %5811 = vmatpush.xpose.msra.mxu0 0.0
    %5812 = vmatpush.xpose.msra.mxu0 0.0
    %5813 = vmatpush.xpose.msra.mxu0 0.0
    %5814 = vmatpush.xpose.msra.mxu0 0.0
    %5815 = vmatpush.xpose.msra.mxu0 0.0
    %5816 = vmatpush.xpose.msra.mxu0 0.0
    %5817 = vmatpush.xpose.msra.mxu0 %v5801
    %5818 = vmatpush.xpose.msra.mxu0 %v5799
    %5819 = vmatmul.f32.gmra.mxu0 %v5795
    %v5820 = vpop.f32.mrf.mxu0
    %v5821 = vadd.f32 %v183, %v5820
    %5822 = vmatmul.f32.gmra.mxu0 %v5797
    %v5823 = vpop.f32.mrf.mxu0
    %v5824 = vadd.f32 %v184, %v5823
    %5825 = vdwg.mxu0
    %v5826 = vsel %vm1169, %v5821, -inf
    %5827 = vmax.xlane.f32.xlu0 %v5826
    %v5828 = vpop.xlane.xlu0 %5827
    %v5829 = vsel %vm1173, %v5824, -inf
    %5830 = vmax.xlane.f32.xlu0 %v5829
    %v5831 = vpop.xlane.xlu0 %5830
    %v5832 = vsub.f32 %v5821, %v5828
    %v5833 = vsub.f32 %v5824, %v5831
    %v5834 = vmul.f32 %v5832, 1.442695
    %v5835 = vpow.pop %v5834
    %v5836 = vmul.f32 %v5833, 1.442695
    %v5837 = vpow.pop %v5836
    %v5838 = vsel %vm1169, %v5835, 0.0
    %5839 = vadd.xlane.f32.xlu0 %v5838
    %v5840 = vpop.xlane.xlu0 %5839
    %v5841 = vsel %vm1173, %v5837, 0.0
    %5842 = vadd.xlane.f32.xlu0 %v5841
    %v5843 = vpop.xlane.xlu0 %5842
    %v5844 = vrcp.pop %v5840
    %v5845 = vrcp.pop %v5843
    %v5846 = vmul.f32 %v5835, %v5844
    %v5847 = vmul.f32 %v5837, %v5845
    %5848 = vrot.lane.b32.xlu0 %v5404, 40
    %v5849 = vpop.permute.xlu0 %5848
    %5850 = vrot.lane.b32.xlu0 %v5407, 40
    %v5851 = vpop.permute.xlu0 %5850
    %v5854 = vsel %vm1169, %v5846, 0
    %v5857 = vsel %vm1169, %v5847, 0
    %v5859 = vsel %vm218, %v5851, 0
    %5861 = vmatpush.msra.mxu0 0.0
    %5862 = vmatpush.msra.mxu0 0.0
    %5863 = vmatpush.msra.mxu0 0.0
    %5864 = vmatpush.msra.mxu0 0.0
    %5865 = vmatpush.msra.mxu0 0.0
    %5866 = vmatpush.msra.mxu0 0.0
    %5867 = vmatpush.msra.mxu0 0.0
    %5868 = vmatpush.msra.mxu0 0.0
    %5869 = vmatpush.msra.mxu0 0.0
    %5870 = vmatpush.msra.mxu0 0.0
    %5871 = vmatpush.msra.mxu0 0.0
    %5872 = vmatpush.msra.mxu0 0.0
    %5873 = vmatpush.msra.mxu0 0.0
    %5874 = vmatpush.msra.mxu0 0.0
    %5875 = vmatpush.msra.mxu0 %v5859
    %5876 = vmatpush.msra.mxu0 %v5849
    %5877 = vmatmul.f32.gmra.mxu0 %v5854
    %v5878 = vpop.f32.mrf.mxu0
    %v5879 = vadd.f32 0.0, %v5878
    %5880 = vmatmul.f32.gmra.mxu0 %v5857
    %v5881 = vpop.f32.mrf.mxu0
    %v5882 = vadd.f32 0.0, %v5881
    %5883 = vdwg.mxu0
    %v5885 = vsel %vm282, %v5879, 0
    %v5888 = vsel %vm282, %v5882, 0
    %5890 = vmatpush.msra.mxu0 0.0
    %5891 = vmatpush.msra.mxu0 0.0
    %5892 = vmatpush.msra.mxu0 0.0
    %5893 = vmatpush.msra.mxu0 0.0
    %5894 = vmatpush.msra.mxu0 0.0
    %5895 = vmatpush.msra.mxu0 0.0
    %5896 = vmatpush.msra.mxu0 0.0
    %5897 = vmatpush.msra.mxu0 0.0
    %5898 = vmatpush.msra.mxu0 0.0
    %5899 = vmatpush.msra.mxu0 0.0
    %5900 = vmatpush.msra.mxu0 0.0
    %5901 = vmatpush.msra.mxu0 0.0
    %5902 = vmatpush.msra.mxu0 0.0
    %5903 = vmatpush.msra.mxu0 0.0
    %5904 = vmatpush.msra.mxu0 0.0
    %5905 = vmatpush.msra.mxu0 %v71
    %5906 = vmatmul.f32.gmra.mxu0 %v5885
    %v5907 = vpop.f32.mrf.mxu0
    %v5908 = vadd.f32 0.0, %v5907
    %5909 = vmatmul.f32.gmra.mxu0 %v5888
    %v5910 = vpop.f32.mrf.mxu0
    %v5911 = vadd.f32 0.0, %v5910
    %5912 = vdwg.mxu0
    %v5913 = vadd.f32 %v5785, %v5908
    %v5914 = vadd.f32 %v5786, %v5911
    %v5915 = vadd.f32 %v5913, %v1640
    %v5916 = vadd.f32 %v5914, %v1640
    %v5917 = vadd.f32 %v5378, %v5915
    %v5918 = vadd.f32 %v5379, %v5916
    %v5919 = vsel %vm246, %v5917, 0.0
    %5920 = vadd.xlane.f32.xlu0 %v5919
    %v5921 = vpop.xlane.xlu0 %5920
    %v5922 = vsel %vm1648, %v5918, 0.0
    %5923 = vadd.xlane.f32.xlu0 %v5922
    %v5924 = vpop.xlane.xlu0 %5923
    %v5925 = vmul.f32 %v5921, %v797
    %v5926 = vmul.f32 %v5924, %v797
    %v5927 = vsub.f32 %v5917, %v5925
    %v5928 = vsub.f32 %v5918, %v5926
    %v5929 = vmul.f32 %v5927, %v5927
    %v5930 = vmul.f32 %v5928, %v5928
    %v5931 = vsel %vm246, %v5929, 0.0
    %5932 = vadd.xlane.f32.xlu0 %v5931
    %v5933 = vpop.xlane.xlu0 %5932
    %v5934 = vsel %vm1648, %v5930, 0.0
    %5935 = vadd.xlane.f32.xlu0 %v5934
    %v5936 = vpop.xlane.xlu0 %5935
    %v5937 = vmul.f32 %v5933, %v797
    %v5938 = vmul.f32 %v5936, %v797
    %v5939 = vadd.f32 %v5937, 1e-05
    %v5940 = vadd.f32 %v5938, 1e-05
    %v5941 = vrsqrt.pop %v5939
    %v5942 = vmul.f32 %v5941, %v5939
    %v5943 = vmul.f32 %v5942, %v5941
    %v5944 = vmul.f32 0.5, %v5943
    %v5945 = vsub.f32 1.5, %v5944
    %v5946 = vmul.f32 %v5941, %v5945
    %vm5947 = vweird.f32 %v5939
    %vm5948 = vweird.f32 %v5941
    %vm5949 = vmor %vm5947, %vm5948
    %v5950 = vsel %vm5949, %v5941, %v5946
    %v5951 = vrsqrt.pop %v5940
    %v5952 = vmul.f32 %v5951, %v5940
    %v5953 = vmul.f32 %v5952, %v5951
    %v5954 = vmul.f32 0.5, %v5953
    %v5955 = vsub.f32 1.5, %v5954
    %v5956 = vmul.f32 %v5951, %v5955
    %vm5957 = vweird.f32 %v5940
    %vm5958 = vweird.f32 %v5951
    %vm5959 = vmor %vm5957, %vm5958
    %v5960 = vsel %vm5959, %v5951, %v5956
    %v5961 = vmul.f32 %v5927, %v5950
    %v5962 = vmul.f32 %v5928, %v5960
    %v5963 = vmul.f32 %v5961, %v1690
    %v5964 = vmul.f32 %v5962, %v1690
    %v5965 = vadd.f32 %v5963, %v1695
    %v5966 = vadd.f32 %v5964, %v1695
    %v5968 = vsel %vm246, %v5965, 0
    %v5971 = vsel %vm246, %v5966, 0
    %5973 = vmatpush.msra.mxu0 0.0
    %5974 = vmatpush.msra.mxu0 0.0
    %5975 = vmatpush.msra.mxu0 0.0
    %5976 = vmatpush.msra.mxu0 0.0
    %5977 = vmatpush.msra.mxu0 0.0
    %5978 = vmatpush.msra.mxu0 0.0
    %5979 = vmatpush.msra.mxu0 0.0
    %5980 = vmatpush.msra.mxu0 0.0
    %5981 = vmatpush.msra.mxu0 0.0
    %5982 = vmatpush.msra.mxu0 0.0
    %5983 = vmatpush.msra.mxu0 0.0
    %5984 = vmatpush.msra.mxu0 0.0
    %5985 = vmatpush.msra.mxu0 %v76
    %5986 = vmatpush.msra.mxu0 %v75
    %5987 = vmatpush.msra.mxu0 %v74
    %5988 = vmatpush.msra.mxu0 %v73
    %5989 = vmatmul.f32.gmra.mxu0 %v5968
    %v5990 = vpop.f32.mrf.mxu0
    %v5991 = vadd.f32 %v1699, %v5990
    %5992 = vmatmul.f32.gmra.mxu0 %v5971
    %v5993 = vpop.f32.mrf.mxu0
    %v5994 = vadd.f32 %v1699, %v5993
    %5995 = vdwg.mxu0
    %v5997 = vsel %vm282, %v5991, 0
    %v6000 = vsel %vm282, %v5994, 0
    %6002 = vmatpush.xpose.msra.mxu0 0.0
    %6003 = vmatpush.xpose.msra.mxu0 0.0
    %6004 = vmatpush.xpose.msra.mxu0 0.0
    %6005 = vmatpush.xpose.msra.mxu0 0.0
    %6006 = vmatpush.xpose.msra.mxu0 0.0
    %6007 = vmatpush.xpose.msra.mxu0 0.0
    %6008 = vmatpush.xpose.msra.mxu0 0.0
    %6009 = vmatpush.xpose.msra.mxu0 0.0
    %6010 = vmatpush.xpose.msra.mxu0 0.0
    %6011 = vmatpush.xpose.msra.mxu0 0.0
    %6012 = vmatpush.xpose.msra.mxu0 0.0
    %6013 = vmatpush.xpose.msra.mxu0 0.0
    %6014 = vmatpush.xpose.msra.mxu0 0.0
    %6015 = vmatpush.xpose.msra.mxu0 0.0
    %6016 = vmatpush.xpose.msra.mxu0 %v1739
    %6017 = vmatpush.xpose.msra.mxu0 %v1736
    %6018 = vmatmul.f32.gmra.mxu0 %v5997
    %v6019 = vpop.f32.mrf.mxu0
    %v6020 = vadd.f32 %v197, %v6019
    %6021 = vmatmul.f32.gmra.mxu0 %v6000
    %v6022 = vpop.f32.mrf.mxu0
    %v6023 = vadd.f32 %v198, %v6022
    %6024 = vdwg.mxu0
    %v6025 = vsel %vm314, %v6020, -inf
    %6026 = vmax.xlane.f32.xlu0 %v6025
    %v6027 = vpop.xlane.xlu0 %6026
    %v6028 = vsel %vm1767, %v6023, -inf
    %6029 = vmax.xlane.f32.xlu0 %v6028
    %v6030 = vpop.xlane.xlu0 %6029
    %v6031 = vsub.f32 %v6020, %v6027
    %v6032 = vsub.f32 %v6023, %v6030
    %v6033 = vmul.f32 %v6031, 1.442695
    %v6034 = vpow.pop %v6033
    %v6035 = vmul.f32 %v6032, 1.442695
    %v6036 = vpow.pop %v6035
    %v6037 = vsel %vm314, %v6034, 0.0
    %6038 = vadd.xlane.f32.xlu0 %v6037
    %v6039 = vpop.xlane.xlu0 %6038
    %v6040 = vsel %vm1767, %v6036, 0.0
    %6041 = vadd.xlane.f32.xlu0 %v6040
    %v6042 = vpop.xlane.xlu0 %6041
    %v6043 = vrcp.pop %v6039
    %v6044 = vrcp.pop %v6042
    %v6045 = vmul.f32 %v6034, %v6043
    %v6046 = vmul.f32 %v6036, %v6044
    %v6048 = vsel %vm314, %v6045, 0
    %v6051 = vsel %vm314, %v6046, 0
    %6053 = vmatpush.msra.mxu0 0.0
    %6054 = vmatpush.msra.mxu0 0.0
    %6055 = vmatpush.msra.mxu0 0.0
    %6056 = vmatpush.msra.mxu0 0.0
    %6057 = vmatpush.msra.mxu0 0.0
    %6058 = vmatpush.msra.mxu0 0.0
    %6059 = vmatpush.msra.mxu0 0.0
    %6060 = vmatpush.msra.mxu0 0.0
    %6061 = vmatpush.msra.mxu0 0.0
    %6062 = vmatpush.msra.mxu0 0.0
    %6063 = vmatpush.msra.mxu0 0.0
    %6064 = vmatpush.msra.mxu0 0.0
    %6065 = vmatpush.msra.mxu0 0.0
    %6066 = vmatpush.msra.mxu0 0.0
    %6067 = vmatpush.msra.mxu0 %v1790
    %6068 = vmatpush.msra.mxu0 %v1788
    %6069 = vmatmul.f32.gmra.mxu0 %v6048
    %v6070 = vpop.f32.mrf.mxu0
    %v6071 = vadd.f32 0.0, %v6070
    %6072 = vmatmul.f32.gmra.mxu0 %v6051
    %v6073 = vpop.f32.mrf.mxu0
    %v6074 = vadd.f32 0.0, %v6073
    %6075 = vdwg.mxu0
    %6076 = vrot.lane.b32.xlu0 %v5991, 120
    %v6077 = vpop.permute.xlu0 %6076
    %6078 = vrot.lane.b32.xlu0 %v5994, 120
    %v6079 = vpop.permute.xlu0 %6078
    %v6080 = vsel %vm282, %v6077, 0
    %v6082 = vsel %vm282, %v6079, 0
    %6084 = vmatpush.xpose.msra.mxu0 0.0
    %6085 = vmatpush.xpose.msra.mxu0 0.0
    %6086 = vmatpush.xpose.msra.mxu0 0.0
    %6087 = vmatpush.xpose.msra.mxu0 0.0
    %6088 = vmatpush.xpose.msra.mxu0 0.0
    %6089 = vmatpush.xpose.msra.mxu0 0.0
    %6090 = vmatpush.xpose.msra.mxu0 0.0
    %6091 = vmatpush.xpose.msra.mxu0 0.0
    %6092 = vmatpush.xpose.msra.mxu0 0.0
    %6093 = vmatpush.xpose.msra.mxu0 0.0
    %6094 = vmatpush.xpose.msra.mxu0 0.0
    %6095 = vmatpush.xpose.msra.mxu0 0.0
    %6096 = vmatpush.xpose.msra.mxu0 0.0
    %6097 = vmatpush.xpose.msra.mxu0 0.0
    %6098 = vmatpush.xpose.msra.mxu0 %v1836
    %6099 = vmatpush.xpose.msra.mxu0 %v1834
    %6100 = vmatmul.f32.gmra.mxu0 %v6080
    %v6101 = vpop.f32.mrf.mxu0
    %v6102 = vadd.f32 %v197, %v6101
    %6103 = vmatmul.f32.gmra.mxu0 %v6082
    %v6104 = vpop.f32.mrf.mxu0
    %v6105 = vadd.f32 %v198, %v6104
    %6106 = vdwg.mxu0
    %v6107 = vsel %vm314, %v6102, -inf
    %6108 = vmax.xlane.f32.xlu0 %v6107
    %v6109 = vpop.xlane.xlu0 %6108
    %v6110 = vsel %vm1767, %v6105, -inf
    %6111 = vmax.xlane.f32.xlu0 %v6110
    %v6112 = vpop.xlane.xlu0 %6111
    %v6113 = vsub.f32 %v6102, %v6109
    %v6114 = vsub.f32 %v6105, %v6112
    %v6115 = vmul.f32 %v6113, 1.442695
    %v6116 = vpow.pop %v6115
    %v6117 = vmul.f32 %v6114, 1.442695
    %v6118 = vpow.pop %v6117
    %v6119 = vsel %vm314, %v6116, 0.0
    %6120 = vadd.xlane.f32.xlu0 %v6119
    %v6121 = vpop.xlane.xlu0 %6120
    %v6122 = vsel %vm1767, %v6118, 0.0
    %6123 = vadd.xlane.f32.xlu0 %v6122
    %v6124 = vpop.xlane.xlu0 %6123
    %v6125 = vrcp.pop %v6121
    %v6126 = vrcp.pop %v6124
    %v6127 = vmul.f32 %v6116, %v6125
    %v6128 = vmul.f32 %v6118, %v6126
    %v6130 = vsel %vm314, %v6127, 0
    %v6133 = vsel %vm314, %v6128, 0
    %6135 = vmatpush.msra.mxu0 0.0
    %6136 = vmatpush.msra.mxu0 0.0
    %6137 = vmatpush.msra.mxu0 0.0
    %6138 = vmatpush.msra.mxu0 0.0
    %6139 = vmatpush.msra.mxu0 0.0
    %6140 = vmatpush.msra.mxu0 0.0
    %6141 = vmatpush.msra.mxu0 0.0
    %6142 = vmatpush.msra.mxu0 0.0
    %6143 = vmatpush.msra.mxu0 0.0
    %6144 = vmatpush.msra.mxu0 0.0
    %6145 = vmatpush.msra.mxu0 0.0
    %6146 = vmatpush.msra.mxu0 0.0
    %6147 = vmatpush.msra.mxu0 0.0
    %6148 = vmatpush.msra.mxu0 0.0
    %6149 = vmatpush.msra.mxu0 %v1886
    %6150 = vmatpush.msra.mxu0 %v1884
    %6151 = vmatmul.f32.gmra.mxu0 %v6130
    %v6152 = vpop.f32.mrf.mxu0
    %v6153 = vadd.f32 0.0, %v6152
    %6154 = vmatmul.f32.gmra.mxu0 %v6133
    %v6155 = vpop.f32.mrf.mxu0
    %v6156 = vadd.f32 0.0, %v6155
    %6157 = vdwg.mxu0
    %v6159 = vsel %vm282, %v6153, 0
    %v6162 = vsel %vm282, %v6156, 0
    %6164 = vmatpush.msra.mxu0 0.0
    %6165 = vmatpush.msra.mxu0 0.0
    %6166 = vmatpush.msra.mxu0 0.0
    %6167 = vmatpush.msra.mxu0 0.0
    %6168 = vmatpush.msra.mxu0 0.0
    %6169 = vmatpush.msra.mxu0 0.0
    %6170 = vmatpush.msra.mxu0 0.0
    %6171 = vmatpush.msra.mxu0 0.0
    %6172 = vmatpush.msra.mxu0 0.0
    %6173 = vmatpush.msra.mxu0 0.0
    %6174 = vmatpush.msra.mxu0 0.0
    %6175 = vmatpush.msra.mxu0 0.0
    %6176 = vmatpush.msra.mxu0 0.0
    %6177 = vmatpush.msra.mxu0 0.0
    %6178 = vmatpush.msra.mxu0 0.0
    %6179 = vmatpush.msra.mxu0 %v84
    %6180 = vmatmul.f32.gmra.mxu0 %v6159
    %v6181 = vpop.f32.mrf.mxu0
    %v6182 = vadd.f32 0.0, %v6181
    %6183 = vmatmul.f32.gmra.mxu0 %v6162
    %v6184 = vpop.f32.mrf.mxu0
    %v6185 = vadd.f32 0.0, %v6184
    %6186 = vdwg.mxu0
    %v6188 = vsel %vm282, %v6071, 0
    %v6191 = vsel %vm282, %v6074, 0
    %6193 = vmatpush.msra.mxu0 0.0
    %6194 = vmatpush.msra.mxu0 0.0
    %6195 = vmatpush.msra.mxu0 0.0
    %6196 = vmatpush.msra.mxu0 0.0
    %6197 = vmatpush.msra.mxu0 0.0
    %6198 = vmatpush.msra.mxu0 0.0
    %6199 = vmatpush.msra.mxu0 0.0
    %6200 = vmatpush.msra.mxu0 0.0
    %6201 = vmatpush.msra.mxu0 0.0
    %6202 = vmatpush.msra.mxu0 0.0
    %6203 = vmatpush.msra.mxu0 0.0
    %6204 = vmatpush.msra.mxu0 0.0
    %6205 = vmatpush.msra.mxu0 0.0
    %6206 = vmatpush.msra.mxu0 0.0
    %6207 = vmatpush.msra.mxu0 0.0
    %6208 = vmatpush.msra.mxu0 %v83
    %6209 = vmatmul.f32.gmra.mxu0 %v6188
    %v6210 = vpop.f32.mrf.mxu0
    %v6211 = vadd.f32 %v6182, %v6210
    %6212 = vmatmul.f32.gmra.mxu0 %v6191
    %v6213 = vpop.f32.mrf.mxu0
    %v6214 = vadd.f32 %v6185, %v6213
    %6215 = vdwg.mxu0
    %6216 = vrot.lane.b32.xlu0 %v5991, 112
    %v6217 = vpop.permute.xlu0 %6216
    %6218 = vrot.lane.b32.xlu0 %v5994, 112
    %v6219 = vpop.permute.xlu0 %6218
    %v6220 = vsel %vm282, %v6217, 0
    %v6222 = vsel %vm282, %v6219, 0
    %6224 = vmatpush.xpose.msra.mxu0 0.0
    %6225 = vmatpush.xpose.msra.mxu0 0.0
    %6226 = vmatpush.xpose.msra.mxu0 0.0
    %6227 = vmatpush.xpose.msra.mxu0 0.0
    %6228 = vmatpush.xpose.msra.mxu0 0.0
    %6229 = vmatpush.xpose.msra.mxu0 0.0
    %6230 = vmatpush.xpose.msra.mxu0 0.0
    %6231 = vmatpush.xpose.msra.mxu0 0.0
    %6232 = vmatpush.xpose.msra.mxu0 0.0
    %6233 = vmatpush.xpose.msra.mxu0 0.0
    %6234 = vmatpush.xpose.msra.mxu0 0.0
    %6235 = vmatpush.xpose.msra.mxu0 0.0
    %6236 = vmatpush.xpose.msra.mxu0 0.0
    %6237 = vmatpush.xpose.msra.mxu0 0.0
    %6238 = vmatpush.xpose.msra.mxu0 %v1990
    %6239 = vmatpush.xpose.msra.mxu0 %v1988
    %6240 = vmatmul.f32.gmra.mxu0 %v6220
    %v6241 = vpop.f32.mrf.mxu0
    %v6242 = vadd.f32 %v197, %v6241
    %6243 = vmatmul.f32.gmra.mxu0 %v6222
    %v6244 = vpop.f32.mrf.mxu0
    %v6245 = vadd.f32 %v198, %v6244
    %6246 = vdwg.mxu0
    %v6247 = vsel %vm314, %v6242, -inf
    %6248 = vmax.xlane.f32.xlu0 %v6247
    %v6249 = vpop.xlane.xlu0 %6248
    %v6250 = vsel %vm1767, %v6245, -inf
    %6251 = vmax.xlane.f32.xlu0 %v6250
    %v6252 = vpop.xlane.xlu0 %6251
    %v6253 = vsub.f32 %v6242, %v6249
    %v6254 = vsub.f32 %v6245, %v6252
    %v6255 = vmul.f32 %v6253, 1.442695
    %v6256 = vpow.pop %v6255
    %v6257 = vmul.f32 %v6254, 1.442695
    %v6258 = vpow.pop %v6257
    %v6259 = vsel %vm314, %v6256, 0.0
    %6260 = vadd.xlane.f32.xlu0 %v6259
    %v6261 = vpop.xlane.xlu0 %6260
    %v6262 = vsel %vm1767, %v6258, 0.0
    %6263 = vadd.xlane.f32.xlu0 %v6262
    %v6264 = vpop.xlane.xlu0 %6263
    %v6265 = vrcp.pop %v6261
    %v6266 = vrcp.pop %v6264
    %v6267 = vmul.f32 %v6256, %v6265
    %v6268 = vmul.f32 %v6258, %v6266
    %v6270 = vsel %vm314, %v6267, 0
    %v6273 = vsel %vm314, %v6268, 0
    %6275 = vmatpush.msra.mxu0 0.0
    %6276 = vmatpush.msra.mxu0 0.0
    %6277 = vmatpush.msra.mxu0 0.0
    %6278 = vmatpush.msra.mxu0 0.0
    %6279 = vmatpush.msra.mxu0 0.0
    %6280 = vmatpush.msra.mxu0 0.0
    %6281 = vmatpush.msra.mxu0 0.0
    %6282 = vmatpush.msra.mxu0 0.0
    %6283 = vmatpush.msra.mxu0 0.0
    %6284 = vmatpush.msra.mxu0 0.0
    %6285 = vmatpush.msra.mxu0 0.0
    %6286 = vmatpush.msra.mxu0 0.0
    %6287 = vmatpush.msra.mxu0 0.0
    %6288 = vmatpush.msra.mxu0 0.0
    %6289 = vmatpush.msra.mxu0 %v2040
    %6290 = vmatpush.msra.mxu0 %v2038
    %6291 = vmatmul.f32.gmra.mxu0 %v6270
    %v6292 = vpop.f32.mrf.mxu0
    %v6293 = vadd.f32 0.0, %v6292
    %6294 = vmatmul.f32.gmra.mxu0 %v6273
    %v6295 = vpop.f32.mrf.mxu0
    %v6296 = vadd.f32 0.0, %v6295
    %6297 = vdwg.mxu0
    %v6299 = vsel %vm282, %v6293, 0
    %v6302 = vsel %vm282, %v6296, 0
    %6304 = vmatpush.msra.mxu0 0.0
    %6305 = vmatpush.msra.mxu0 0.0
    %6306 = vmatpush.msra.mxu0 0.0
    %6307 = vmatpush.msra.mxu0 0.0
    %6308 = vmatpush.msra.mxu0 0.0
    %6309 = vmatpush.msra.mxu0 0.0
    %6310 = vmatpush.msra.mxu0 0.0
    %6311 = vmatpush.msra.mxu0 0.0
    %6312 = vmatpush.msra.mxu0 0.0
    %6313 = vmatpush.msra.mxu0 0.0
    %6314 = vmatpush.msra.mxu0 0.0
    %6315 = vmatpush.msra.mxu0 0.0
    %6316 = vmatpush.msra.mxu0 0.0
    %6317 = vmatpush.msra.mxu0 0.0
    %6318 = vmatpush.msra.mxu0 0.0
    %6319 = vmatpush.msra.mxu0 %v85
    %6320 = vmatmul.f32.gmra.mxu0 %v6299
    %v6321 = vpop.f32.mrf.mxu0
    %v6322 = vadd.f32 0.0, %v6321
    %6323 = vmatmul.f32.gmra.mxu0 %v6302
    %v6324 = vpop.f32.mrf.mxu0
    %v6325 = vadd.f32 0.0, %v6324
    %6326 = vdwg.mxu0
    %v6327 = vadd.f32 %v6211, %v6322
    %v6328 = vadd.f32 %v6214, %v6325
    %6329 = vrot.lane.b32.xlu0 %v5991, 104
    %v6330 = vpop.permute.xlu0 %6329
    %6331 = vrot.lane.b32.xlu0 %v5994, 104
    %v6332 = vpop.permute.xlu0 %6331
    %v6333 = vsel %vm282, %v6330, 0
    %v6335 = vsel %vm282, %v6332, 0
    %6337 = vmatpush.xpose.msra.mxu0 0.0
    %6338 = vmatpush.xpose.msra.mxu0 0.0
    %6339 = vmatpush.xpose.msra.mxu0 0.0
    %6340 = vmatpush.xpose.msra.mxu0 0.0
    %6341 = vmatpush.xpose.msra.mxu0 0.0
    %6342 = vmatpush.xpose.msra.mxu0 0.0
    %6343 = vmatpush.xpose.msra.mxu0 0.0
    %6344 = vmatpush.xpose.msra.mxu0 0.0
    %6345 = vmatpush.xpose.msra.mxu0 0.0
    %6346 = vmatpush.xpose.msra.mxu0 0.0
    %6347 = vmatpush.xpose.msra.mxu0 0.0
    %6348 = vmatpush.xpose.msra.mxu0 0.0
    %6349 = vmatpush.xpose.msra.mxu0 0.0
    %6350 = vmatpush.xpose.msra.mxu0 0.0
    %6351 = vmatpush.xpose.msra.mxu0 %v2117
    %6352 = vmatpush.xpose.msra.mxu0 %v2115
    %6353 = vmatmul.f32.gmra.mxu0 %v6333
    %v6354 = vpop.f32.mrf.mxu0
    %v6355 = vadd.f32 %v197, %v6354
    %6356 = vmatmul.f32.gmra.mxu0 %v6335
    %v6357 = vpop.f32.mrf.mxu0
    %v6358 = vadd.f32 %v198, %v6357
    %6359 = vdwg.mxu0
    %v6360 = vsel %vm314, %v6355, -inf
    %6361 = vmax.xlane.f32.xlu0 %v6360
    %v6362 = vpop.xlane.xlu0 %6361
    %v6363 = vsel %vm1767, %v6358, -inf
    %6364 = vmax.xlane.f32.xlu0 %v6363
    %v6365 = vpop.xlane.xlu0 %6364
    %v6366 = vsub.f32 %v6355, %v6362
    %v6367 = vsub.f32 %v6358, %v6365
    %v6368 = vmul.f32 %v6366, 1.442695
    %v6369 = vpow.pop %v6368
    %v6370 = vmul.f32 %v6367, 1.442695
    %v6371 = vpow.pop %v6370
    %v6372 = vsel %vm314, %v6369, 0.0
    %6373 = vadd.xlane.f32.xlu0 %v6372
    %v6374 = vpop.xlane.xlu0 %6373
    %v6375 = vsel %vm1767, %v6371, 0.0
    %6376 = vadd.xlane.f32.xlu0 %v6375
    %v6377 = vpop.xlane.xlu0 %6376
    %v6378 = vrcp.pop %v6374
    %v6379 = vrcp.pop %v6377
    %v6380 = vmul.f32 %v6369, %v6378
    %v6381 = vmul.f32 %v6371, %v6379
    %v6383 = vsel %vm314, %v6380, 0
    %v6386 = vsel %vm314, %v6381, 0
    %6388 = vmatpush.msra.mxu0 0.0
    %6389 = vmatpush.msra.mxu0 0.0
    %6390 = vmatpush.msra.mxu0 0.0
    %6391 = vmatpush.msra.mxu0 0.0
    %6392 = vmatpush.msra.mxu0 0.0
    %6393 = vmatpush.msra.mxu0 0.0
    %6394 = vmatpush.msra.mxu0 0.0
    %6395 = vmatpush.msra.mxu0 0.0
    %6396 = vmatpush.msra.mxu0 0.0
    %6397 = vmatpush.msra.mxu0 0.0
    %6398 = vmatpush.msra.mxu0 0.0
    %6399 = vmatpush.msra.mxu0 0.0
    %6400 = vmatpush.msra.mxu0 0.0
    %6401 = vmatpush.msra.mxu0 0.0
    %6402 = vmatpush.msra.mxu0 %v2167
    %6403 = vmatpush.msra.mxu0 %v2165
    %6404 = vmatmul.f32.gmra.mxu0 %v6383
    %v6405 = vpop.f32.mrf.mxu0
    %v6406 = vadd.f32 0.0, %v6405
    %6407 = vmatmul.f32.gmra.mxu0 %v6386
    %v6408 = vpop.f32.mrf.mxu0
    %v6409 = vadd.f32 0.0, %v6408
    %6410 = vdwg.mxu0
    %v6412 = vsel %vm282, %v6406, 0
    %v6415 = vsel %vm282, %v6409, 0
    %6417 = vmatpush.msra.mxu0 0.0
    %6418 = vmatpush.msra.mxu0 0.0
    %6419 = vmatpush.msra.mxu0 0.0
    %6420 = vmatpush.msra.mxu0 0.0
    %6421 = vmatpush.msra.mxu0 0.0
    %6422 = vmatpush.msra.mxu0 0.0
    %6423 = vmatpush.msra.mxu0 0.0
    %6424 = vmatpush.msra.mxu0 0.0
    %6425 = vmatpush.msra.mxu0 0.0
    %6426 = vmatpush.msra.mxu0 0.0
    %6427 = vmatpush.msra.mxu0 0.0
    %6428 = vmatpush.msra.mxu0 0.0
    %6429 = vmatpush.msra.mxu0 0.0
    %6430 = vmatpush.msra.mxu0 0.0
    %6431 = vmatpush.msra.mxu0 0.0
    %6432 = vmatpush.msra.mxu0 %v86
    %6433 = vmatmul.f32.gmra.mxu0 %v6412
    %v6434 = vpop.f32.mrf.mxu0
    %v6435 = vadd.f32 0.0, %v6434
    %6436 = vmatmul.f32.gmra.mxu0 %v6415
    %v6437 = vpop.f32.mrf.mxu0
    %v6438 = vadd.f32 0.0, %v6437
    %6439 = vdwg.mxu0
    %v6440 = vadd.f32 %v6327, %v6435
    %v6441 = vadd.f32 %v6328, %v6438
    %v6442 = vadd.f32 %v6440, %v2230
    %v6443 = vadd.f32 %v6441, %v2230
    %v6444 = vadd.f32 %v5965, %v6442
    %v6445 = vadd.f32 %v5966, %v6443
    %v6446 = vsel %vm246, %v6444, 0.0
    %6447 = vadd.xlane.f32.xlu0 %v6446
    %v6448 = vpop.xlane.xlu0 %6447
    %v6449 = vsel %vm1648, %v6445, 0.0
    %6450 = vadd.xlane.f32.xlu0 %v6449
    %v6451 = vpop.xlane.xlu0 %6450
    %v6452 = vmul.f32 %v6448, %v797
    %v6453 = vmul.f32 %v6451, %v797
    %v6454 = vsub.f32 %v6444, %v6452
    %v6455 = vsub.f32 %v6445, %v6453
    %v6456 = vmul.f32 %v6454, %v6454
    %v6457 = vmul.f32 %v6455, %v6455
    %v6458 = vsel %vm246, %v6456, 0.0
    %6459 = vadd.xlane.f32.xlu0 %v6458
    %v6460 = vpop.xlane.xlu0 %6459
    %v6461 = vsel %vm1648, %v6457, 0.0
    %6462 = vadd.xlane.f32.xlu0 %v6461
    %v6463 = vpop.xlane.xlu0 %6462
    %v6464 = vmul.f32 %v6460, %v797
    %v6465 = vmul.f32 %v6463, %v797
    %v6466 = vadd.f32 %v6464, 1e-05
    %v6467 = vadd.f32 %v6465, 1e-05
    %v6468 = vrsqrt.pop %v6466
    %v6469 = vmul.f32 %v6468, %v6466
    %v6470 = vmul.f32 %v6469, %v6468
    %v6471 = vmul.f32 0.5, %v6470
    %v6472 = vsub.f32 1.5, %v6471
    %v6473 = vmul.f32 %v6468, %v6472
    %vm6474 = vweird.f32 %v6466
    %vm6475 = vweird.f32 %v6468
    %vm6476 = vmor %vm6474, %vm6475
    %v6477 = vsel %vm6476, %v6468, %v6473
    %v6478 = vrsqrt.pop %v6467
    %v6479 = vmul.f32 %v6478, %v6467
    %v6480 = vmul.f32 %v6479, %v6478
    %v6481 = vmul.f32 0.5, %v6480
    %v6482 = vsub.f32 1.5, %v6481
    %v6483 = vmul.f32 %v6478, %v6482
    %vm6484 = vweird.f32 %v6467
    %vm6485 = vweird.f32 %v6478
    %vm6486 = vmor %vm6484, %vm6485
    %v6487 = vsel %vm6486, %v6478, %v6483
    %v6488 = vmul.f32 %v6454, %v6477
    %v6489 = vmul.f32 %v6455, %v6487
    %v6490 = vmul.f32 %v6488, %v2279
    %v6491 = vmul.f32 %v6489, %v2279
    %v6492 = vadd.f32 %v6490, %v2284
    %v6493 = vadd.f32 %v6491, %v2284
    %v6495 = vsel %vm246, %v6492, 0
    %v6498 = vsel %vm246, %v6493, 0
    %6500 = vmatpush.msra.mxu0 0.0
    %6501 = vmatpush.msra.mxu0 0.0
    %6502 = vmatpush.msra.mxu0 0.0
    %6503 = vmatpush.msra.mxu0 0.0
    %6504 = vmatpush.msra.mxu0 0.0
    %6505 = vmatpush.msra.mxu0 0.0
    %6506 = vmatpush.msra.mxu0 0.0
    %6507 = vmatpush.msra.mxu0 0.0
    %6508 = vmatpush.msra.mxu0 0.0
    %6509 = vmatpush.msra.mxu0 0.0
    %6510 = vmatpush.msra.mxu0 0.0
    %6511 = vmatpush.msra.mxu0 0.0
    %6512 = vmatpush.msra.mxu0 %v91
    %6513 = vmatpush.msra.mxu0 %v90
    %6514 = vmatpush.msra.mxu0 %v89
    %6515 = vmatpush.msra.mxu0 %v88
    %6516 = vmatmul.f32.gmra.mxu0 %v6495
    %v6517 = vpop.f32.mrf.mxu0
    %v6518 = vadd.f32 %v2288, %v6517
    %6519 = vmatmul.f32.gmra.mxu0 %v6498
    %v6520 = vpop.f32.mrf.mxu0
    %v6521 = vadd.f32 %v2288, %v6520
    %6522 = vdwg.mxu0
    %v6523 = vmul.f32 %v6518, 0.5
    %v6524 = vmul.f32 %v6521, 0.5
    %v6525 = vmul.f32 %v6518, %v6518
    %v6526 = vmul.f32 %v6521, %v6521
    %v6527 = vmul.f32 %v6525, %v6518
    %v6528 = vmul.f32 %v6526, %v6521
    %v6529 = vmul.f32 %v6527, 0.044715
    %v6530 = vmul.f32 %v6528, 0.044715
    %v6531 = vadd.f32 %v6518, %v6529
    %v6532 = vadd.f32 %v6521, %v6530
    %v6533 = vmul.f32 %v6531, 0.7978846
    %v6534 = vmul.f32 %v6532, 0.7978846
    %v6535 = vtanh.pop %v6533
    %v6536 = vtanh.pop %v6534
    %v6537 = vadd.f32 %v6535, 1.0
    %v6538 = vadd.f32 %v6536, 1.0
    %v6539 = vmul.f32 %v6523, %v6537
    %v6540 = vmul.f32 %v6524, %v6538
    %v6542 = vsel %vm894, %v6539, 0
    %v6545 = vsel %vm894, %v6540, 0
    %6547 = vmatpush.msra.mxu0 0.0
    %6548 = vmatpush.msra.mxu0 0.0
    %6549 = vmatpush.msra.mxu0 0.0
    %6550 = vmatpush.msra.mxu0 0.0
    %6551 = vmatpush.msra.mxu0 0.0
    %6552 = vmatpush.msra.mxu0 0.0
    %6553 = vmatpush.msra.mxu0 0.0
    %6554 = vmatpush.msra.mxu0 0.0
    %6555 = vmatpush.msra.mxu0 %v100
    %6556 = vmatpush.msra.mxu0 %v99
    %6557 = vmatpush.msra.mxu0 %v98
    %6558 = vmatpush.msra.mxu0 %v97
    %6559 = vmatpush.msra.mxu0 %v96
    %6560 = vmatpush.msra.mxu0 %v95
    %6561 = vmatpush.msra.mxu0 %v94
    %6562 = vmatpush.msra.mxu0 %v93
    %6563 = vmatmul.f32.gmra.mxu0 %v6542
    %v6564 = vpop.f32.mrf.mxu0
    %v6565 = vadd.f32 %v2336, %v6564
    %6566 = vmatmul.f32.gmra.mxu0 %v6545
    %v6567 = vpop.f32.mrf.mxu0
    %v6568 = vadd.f32 %v2336, %v6567
    %6569 = vdwg.mxu0
    %v6570 = vadd.f32 %v6492, %v6565
    %v6571 = vadd.f32 %v6493, %v6568
    %v6572 = vsel %vm246, %v6570, 0.0
    %6573 = vadd.xlane.f32.xlu0 %v6572
    %v6574 = vpop.xlane.xlu0 %6573
    %v6575 = vsel %vm1648, %v6571, 0.0
    %6576 = vadd.xlane.f32.xlu0 %v6575
    %v6577 = vpop.xlane.xlu0 %6576
    %v6578 = vmul.f32 %v6574, %v797
    %v6579 = vmul.f32 %v6577, %v797
    %v6580 = vsub.f32 %v6570, %v6578
    %v6581 = vsub.f32 %v6571, %v6579
    %v6582 = vmul.f32 %v6580, %v6580
    %v6583 = vmul.f32 %v6581, %v6581
    %v6584 = vsel %vm246, %v6582, 0.0
    %6585 = vadd.xlane.f32.xlu0 %v6584
    %v6586 = vpop.xlane.xlu0 %6585
    %v6587 = vsel %vm1648, %v6583, 0.0
    %6588 = vadd.xlane.f32.xlu0 %v6587
    %v6589 = vpop.xlane.xlu0 %6588
    %v6590 = vmul.f32 %v6586, %v797
    %v6591 = vmul.f32 %v6589, %v797
    %v6592 = vadd.f32 %v6590, 1e-05
    %v6593 = vadd.f32 %v6591, 1e-05
    %v6594 = vrsqrt.pop %v6592
    %v6595 = vmul.f32 %v6594, %v6592
    %v6596 = vmul.f32 %v6595, %v6594
    %v6597 = vmul.f32 0.5, %v6596
    %v6598 = vsub.f32 1.5, %v6597
    %v6599 = vmul.f32 %v6594, %v6598
    %vm6600 = vweird.f32 %v6592
    %vm6601 = vweird.f32 %v6594
    %vm6602 = vmor %vm6600, %vm6601
    %v6603 = vsel %vm6602, %v6594, %v6599
    %v6604 = vrsqrt.pop %v6593
    %v6605 = vmul.f32 %v6604, %v6593
    %v6606 = vmul.f32 %v6605, %v6604
    %v6607 = vmul.f32 0.5, %v6606
    %v6608 = vsub.f32 1.5, %v6607
    %v6609 = vmul.f32 %v6604, %v6608
    %vm6610 = vweird.f32 %v6593
    %vm6611 = vweird.f32 %v6604
    %vm6612 = vmor %vm6610, %vm6611
    %v6613 = vsel %vm6612, %v6604, %v6609
    %v6614 = vmul.f32 %v6580, %v6603
    %v6615 = vmul.f32 %v6581, %v6613
    %v6616 = vmul.f32 %v6614, %v2412
    %v6617 = vmul.f32 %v6615, %v2412
    %v6618 = vadd.f32 %v6616, %v2417
    %v6619 = vadd.f32 %v6617, %v2417
    %v6620 = vadd.s32 %v2421, 3
    %vm6621 = vcmp.eq.s32.totalorder %v116, %v6620
    %v6622 = vsel %vm6621, 1, 0
    %v6623 = vcvt.s32.f32 %v6622
    %v6625 = vsel %vm1169, %v6623, 0
    %v6628 = vsel %vm218, %v6619, 0
    %6630 = vmatpush.msra.mxu0 0.0
    %6631 = vmatpush.msra.mxu0 0.0
    %6632 = vmatpush.msra.mxu0 0.0
    %6633 = vmatpush.msra.mxu0 0.0
    %6634 = vmatpush.msra.mxu0 0.0
    %6635 = vmatpush.msra.mxu0 0.0
    %6636 = vmatpush.msra.mxu0 0.0
    %6637 = vmatpush.msra.mxu0 0.0
    %6638 = vmatpush.msra.mxu0 0.0
    %6639 = vmatpush.msra.mxu0 0.0
    %6640 = vmatpush.msra.mxu0 0.0
    %6641 = vmatpush.msra.mxu0 0.0
    %6642 = vmatpush.msra.mxu0 0.0
    %6643 = vmatpush.msra.mxu0 0.0
    %6644 = vmatpush.msra.mxu0 %v6628
    %6645 = vmatpush.msra.mxu0 %v6618
    %6646 = vmatmul.f32.gmra.mxu0 %v6625
    %v6647 = vpop.f32.mrf.mxu0
    %v6648 = vadd.f32 0.0, %v6647
    %6649 = vdwg.mxu0
    %v6651 = vsel %vm246, %v6648, 0
    %6653 = vmatpush.msra.mxu0 0.0
    %6654 = vmatpush.msra.mxu0 0.0
    %6655 = vmatpush.msra.mxu0 0.0
    %6656 = vmatpush.msra.mxu0 0.0
    %6657 = vmatpush.msra.mxu0 0.0
    %6658 = vmatpush.msra.mxu0 0.0
    %6659 = vmatpush.msra.mxu0 0.0
    %6660 = vmatpush.msra.mxu0 0.0
    %6661 = vmatpush.msra.mxu0 0.0
    %6662 = vmatpush.msra.mxu0 0.0
    %6663 = vmatpush.msra.mxu0 0.0
    %6664 = vmatpush.msra.mxu0 0.0
    %6665 = vmatpush.msra.mxu0 %v105
    %6666 = vmatpush.msra.mxu0 %v104
    %6667 = vmatpush.msra.mxu0 %v103
    %6668 = vmatpush.msra.mxu0 %v102
    %6669 = vmatmul.f32.gmra.mxu0 %v6651
    %v6670 = vpop.f32.mrf.mxu0
    %v6671 = vadd.f32 %v2451, %v6670
    %6672 = vdwg.mxu0
    %v6673 = vsel %vm2475, %v6671, -inf
    %6674 = vmax.xlane.f32.xlu0 %v6673
    %v6675 = vpop.xlane.xlu0 %6674
    %vm6676 = vcmp.ge.f32.partialorder %v6671, %v6675
    %v6677 = vsel %vm6676, %v116, 50
    %v6678 = vsel %vm2475, %v6677, 2147483647
    %v6679 = vand.u32 %v6678, 65535
    %v6680 = vshra.s32 %v6678, 16
    %v6681 = vcvt.s32.f32 %v6679
    %v6682 = vcvt.s32.f32 %v6680
    %6683 = vmin.xlane.f32.xlu0 %v6682
    %v6684 = vpop.xlane.xlu0 %6683
    %vm6685 = vcmp.eq.f32.partialorder %v6682, %v6684
    %v6686 = vsel %vm6685, %v6681, inf
    %6687 = vmin.xlane.f32.xlu0 %v6686
    %v6688 = vpop.xlane.xlu0 %6687
    %v6689 = vcvt.f32.s32 %v6688
    %v6690 = vcvt.f32.s32 %v6684
    %v6691 = vshll.u32 %v6690, 16
    %v6692 = vadd.s32 %v6691, %v6689
    %vm6693 = vcmp.gt.s32.totalorder %v5297, 0
    %v6694 = vsel %vm6693, 1, %v6692
    %vm6695 = vcmp.eq.s32.totalorder %v116, 4
    %v6696 = vsel %vm6695, %v6694, %v5299
    %vm6697 = vcmask 33792
    %6698 = vst.msk [vmem:[#allocation5] sm:$0x3] %vm6697, %v6696
    %vm6699 = vcmp.ne.s32.totalorder %v110, 1
    %vm6700 = vcmp.ge.s32.totalorder %v116, 1
    %vm6701 = vmand %vm6699, %vm6700
    %vm6702 = vcmp.eq.s32.totalorder %v6696, %v110
    %vm6703 = vcmp.ne.s32.totalorder %v6696, 3
    %vm6704 = vmand %vm6702, %vm6703
    %vm6705 = vmand %vm6701, %vm6704
    %v6706 = vsel %vm6705, 1.0, 0.0
    %v6707 = vsel %vm6701, 1.0, 0.0
    %vm6708 = vmxor %vm6704, 1
    %vm6709 = vmand %vm6701, %vm6708
    %v6710 = vsel %vm6709, 1.0, 0.0
    %v6711 = vsel %vm6697, %v6706, 0.0
    %6712 = vadd.xlane.f32.xlu0 %v6711
    %v6713 = vpop.xlane.xlu0 %6712
    %v6714 = vsel %vm218, %v6713, 0.0
    %v6715 = vrot.slane %v6714, 4
    %v6716 = vadd.f32 %v6714, %v6715
    %v6717 = vrot.slane %v6716, 2
    %v6718 = vadd.f32 %v6716, %v6717
    %v6719 = vrot.slane %v6718, 1
    %v6720 = vadd.f32 %v6718, %v6719
    %v6721 = vsel %vm6697, %v6707, 0.0
    %6722 = vadd.xlane.f32.xlu0 %v6721
    %v6723 = vpop.xlane.xlu0 %6722
    %v6724 = vsel %vm218, %v6723, 0.0
    %v6725 = vrot.slane %v6724, 4
    %v6726 = vadd.f32 %v6724, %v6725
    %v6727 = vrot.slane %v6726, 2
    %v6728 = vadd.f32 %v6726, %v6727
    %v6729 = vrot.slane %v6728, 1
    %v6730 = vadd.f32 %v6728, %v6729
    %v6731 = vsel %vm6697, %v6710, 0.0
    %6732 = vadd.xlane.f32.xlu0 %v6731
    %v6733 = vpop.xlane.xlu0 %6732
    %vm6734 = vcmp.eq.f32.partialorder %v6733, 0.0
    %v6735 = vsel %vm6734, 1.0, 0.0
    %v6736 = vmax.f32 %v6730, 1.0
    %v6737 = vrcp.pop %v6736
    %v6738 = vmul.f32 %v6736, %v6737
    %v6739 = vsub.f32 1.0, %v6738
    %v6740 = vmul.f32 %v6737, %v6739
    %v6741 = vadd.f32 %v6737, %v6740
    %vm6742 = vweird.f32 %v6736
    %vm6743 = vweird.f32 %v6737
    %vm6744 = vmor %vm6742, %vm6743
    %v6745 = vsel %vm6744, %v6737, %v6741
    %v6746 = vand.u32 2147483647, %v6736
    %vm6747 = vcmp.eq.f32.partialorder %v6746, 8.507059e+37
    %v6748 = vand.u32 %v6736, 2147483648
    %v6749 = vor.u32 1.1754944e-38, %v6748
    %v6750 = vsel %vm6747, %v6749, %v6745
    %v6751 = vmul.f32 %v6720, %v6750
    %v6752 = vsel %vm218, %v6735, 0.0
    %v6753 = vrot.slane %v6752, 4
    %v6754 = vadd.f32 %v6752, %v6753
    %v6755 = vrot.slane %v6754, 2
    %v6756 = vadd.f32 %v6754, %v6755
    %v6757 = vrot.slane %v6756, 1
    %v6758 = vadd.f32 %v6756, %v6757
    %v6759 = vmul.f32 %v6758, 0.5
    %vm6760 = vcmask 7168
    %v6761 = vsel %vm6760, %v6751, %v6759
    %vm6762 = vcmask 8192
    %6763 = vst.msk [vmem:[%s3] sm:$0x1] %vm6762, %v6761
    // Predicated region
    $region14: #{bart_generator_test_forward.1} parent=1 // pred_check
      _
    $region15: #{bart_generator_test_forward.1} parent=1 // pred_check_branch
      %6765 = sbr.rel (0) target = $region17
    $region16: #{bart_generator_test_forward.1} parent=1 // pred_region
      %6767 = vsyncadd [#allocation4], 0
      %s6769 = sshll.u32 [#allocation5], 4
      %s6770 = int_to_ptr.vmem [resolvable:$true] %s6769
      %s6771 = sshll.u32 %s2, 4
      %s6772 = int_to_ptr.hbm [resolvable:$true] %s6771
      %6774 = dma.vmem_to_hbm [thread:$0]  %s6770, 32, %s6772, [#allocation4]
    $region17: #{bart_generator_test_forward.1} parent=1 // pred_fallthru
      _
    // Predicated region
    $region18: #{bart_generator_test_forward.1} parent=1 // pred_check
      _
    $region19: #{bart_generator_test_forward.1} parent=1 // pred_check_branch
      %6776 = sbr.rel (0) target = $region21
    $region20: #{bart_generator_test_forward.1} parent=1 // pred_region
      _
    $region21: #{bart_generator_test_forward.1} parent=1 // pred_fallthru
      _
    // Predicated region
    $region22: #{bart_generator_test_forward.1} parent=1 // pred_check
      _
    $region23: #{bart_generator_test_forward.1} parent=1 // pred_check_branch
      %6778 = sbr.rel (0) target = $region25
    $region24: #{bart_generator_test_forward.1} parent=1 // pred_region
      %6780 = dma.done [#allocation4], 32
    $region25: #{bart_generator_test_forward.1} parent=1 // pred_fallthru
      _
    // Predicated region
    $region26: #{bart_generator_test_forward.1} parent=1 // pred_check
      _
    $region27: #{bart_generator_test_forward.1} parent=1 // pred_check_branch
      %6782 = sbr.rel (0) target = $region29
    $region28: #{bart_generator_test_forward.1} parent=1 // pred_region
      _
    $region29: #{bart_generator_test_forward.1} parent=1 // pred_fallthru
      _
    %6783 = vsyncpa [#allocation3], 1
    %6784 = vsyncpa [#allocation4], 1

</llo_original>
